<compile_context>
chip_gen: v7x
topology: tpu7x:2x2x1
jax: 0.10.0
libtpu: 0.0.40
codegen_flags: <defaults>
</compile_context>

<pallas_src>
import jax
import jax.numpy as jnp
from jax.experimental import pallas as pl
from jax.experimental.pallas import tpu as pltpu

EPS = 1e-5


def _resnet_block_kernel(x_ref, w1_ref, w2_ref, o_ref, pad_ref):
    # x_ref  : (1, H, W, C) f32   one batch element (NHWC)
    # w1_ref : (3, 3, C, C) bf16  conv1 weights, (kh, kw, cin, cout)
    # w2_ref : (3, 3, C, C) bf16  conv2 weights
    # o_ref  : (1, H, W, C) f32   x + IN(conv2(pad(relu(IN(conv1(pad(x)))))))
    # pad_ref: (H+2, W+2, C) bf16 VMEM scratch: reflection-padded activation,
    #                             reused for both convs.
    H, W, C = o_ref.shape[1], o_ref.shape[2], o_ref.shape[3]
    inv_n = 1.0 / float(H * W)

    def fill_halo():
        # 1-pixel reflection halo built from the already-written interior
        # (matches jnp.pad mode='reflect' / nn.ReflectionPad2d(1)).
        pad_ref[0:1, 1:W + 1, :] = pad_ref[2:3, 1:W + 1, :]              # top
        pad_ref[H + 1:H + 2, 1:W + 1, :] = pad_ref[H - 1:H, 1:W + 1, :]  # bottom
        pad_ref[:, 0:1, :] = pad_ref[:, 2:3, :]                          # left  (incl. corners)
        pad_ref[:, W + 1:W + 2, :] = pad_ref[:, W - 1:W, :]              # right (incl. corners)

    def conv3x3_in(w_ref):
        # 3x3 "valid" conv over pad_ref as 9 K=C MXU matmuls; the bf16
        # operands are shifted slices read directly from the bf16 pad scratch
        # (no (H*W,3C) patch buffer, no astype in the dot), then affine-free
        # InstanceNorm with f32 centered variance.
        # Conv bias intentionally omitted: exact no-op under mean subtraction.
        acc = None
        for kh in range(3):                       # static unroll
            for kw in range(3):
                patch = pad_ref[kh:kh + H, kw:kw + W, :].reshape(H * W, C)
                term = jnp.dot(patch, w_ref[kh, kw],
                               preferred_element_type=jnp.float32)
                acc = term if acc is None else acc + term
        mean = jnp.sum(acc, axis=0, keepdims=True) * inv_n
        centered = acc - mean                     # reused for both var and norm
        var = jnp.sum(centered * centered, axis=0, keepdims=True) * inv_n
        return centered * jax.lax.rsqrt(var + EPS)    # (H*W, C) f32

    # -- stage 1: pad(x) -> conv1 -> IN -> ReLU ------------------------------
    pad_ref[1:H + 1, 1:W + 1, :] = x_ref[0].astype(jnp.bfloat16)
    fill_halo()
    h1 = jnp.maximum(conv3x3_in(w1_ref), 0.0)     # (H*W, C) f32

    # -- stage 2: pad(relu) -> conv2 -> IN -> residual add -------------------
    # ReLU output written straight into the pad interior (bf16): no full-image
    # f32 temporary and no extra full-array re-pad copy.
    pad_ref[1:H + 1, 1:W + 1, :] = h1.reshape(H, W, C).astype(jnp.bfloat16)
    fill_halo()
    h2 = conv3x3_in(w2_ref).reshape(H, W, C)

    # x_ref is re-read here instead of being held live across both convs.
    o_ref[0] = (x_ref[0].astype(jnp.float32) + h2).astype(o_ref.dtype)


def _vmem_capacity_bytes():
    # Physical VMEM per TensorCore; conservative fallback = smallest current
    # generation (v7x, 64 MiB) so we can never over-request.
    try:
        cap = getattr(pltpu.get_tpu_info(), "vmem_capacity_bytes", None)
        if cap:
            return int(cap)
    except Exception:
        pass
    return 64 << 20


def _compiler_params(H, W, C):
    # Per-grid-step VMEM estimate from the real buffers (post bf16 changes).
    f32, bf16 = 4, 2
    img_f32 = H * W * C * f32
    step_bytes = (
        2 * img_f32                          # input block, double-buffered
        + 2 * img_f32                        # output block, double-buffered
        + (H + 2) * (W + 2) * C * bf16       # bf16 padded scratch
        + 2 * 2 * 9 * C * C * bf16           # two bf16 weight slabs, double-buffered
        + 5 * img_f32                        # f32 temporaries (acc / centered / dot / staging)
        + 2 * H * W * C * bf16               # bf16 operand staging
    )
    kwargs = dict(dimension_semantics=("parallel",))
    requested = int(step_bytes * 1.5)        # margin for compiler temporaries
    if requested > (16 << 20):               # above the smallest (v5e) scoped default
        cap = _vmem_capacity_bytes()
        # Never below the larger (v6e/v7x) 32 MiB default, never above the
        # physical capacity minus headroom (critical on v7x: 64 MiB physical).
        kwargs["vmem_limit_bytes"] = int(min(max(requested, 32 << 20),
                                             cap - (8 << 20)))
    return pltpu.CompilerParams(**kwargs)


def resnet_block_forward(x_nchw, w1_oihw, b1, w2_oihw, b2):
    """out = x + conv_block(x), input/output in NCHW (PyTorch convention).

    b1/b2 are accepted for API parity with the PyTorch module but dropped:
    a conv bias immediately followed by affine-free InstanceNorm is an exact
    mathematical no-op (it cancels in the mean subtraction).
    """
    del b1, b2
    # NCHW -> NHWC (channels on the 128-lane axis).  Residual stays f32.
    x = jnp.transpose(x_nchw, (0, 2, 3, 1)).astype(jnp.float32)
    N, H, W, C = x.shape

    def pack_w(w_oihw):
        # OIHW -> (kh, kw, cin, cout) bf16: one matmul-ready (C, C) tap per (kh, kw).
        return jnp.transpose(w_oihw, (2, 3, 1, 0)).astype(jnp.bfloat16)

    w1p = pack_w(w1_oihw)
    w2p = pack_w(w2_oihw)

    # TODO(synk): for v7x batch-1 inference, add an H-tiled 'parallel' grid axis
    # (2-row halo) with cross-tile sum/sumsq InstanceNorm stats so both
    # TensorCores stay busy; with the bf16 scratch and no im2col/f32 temporaries
    # the whole-image working set already fits v7x's 64 MiB at C=256, H=W=64.
    # TODO(synk): pipeline_mode=pl.Buffered(1) on the constant-index weight specs
    # would save ~2.25 MiB of double-buffered VMEM on v7x.
    # TODO(synk): optionally feed x as bf16 (cast to f32 only at the residual)
    # to halve input DMA on v7x, if the small numerics change is acceptable.
    out = pl.pallas_call(
        _resnet_block_kernel,
        out_shape=jax.ShapeDtypeStruct((N, H, W, C), jnp.float32),
        grid=(N,),
        in_specs=[
            pl.BlockSpec((1, H, W, C), lambda n: (n, 0, 0, 0)),
            pl.BlockSpec((3, 3, C, C), lambda n: (0, 0, 0, 0)),   # resident weights
            pl.BlockSpec((3, 3, C, C), lambda n: (0, 0, 0, 0)),
        ],
        out_specs=pl.BlockSpec((1, H, W, C), lambda n: (n, 0, 0, 0)),
        scratch_shapes=[pltpu.VMEM((H + 2, W + 2, C), jnp.bfloat16)],
        compiler_params=_compiler_params(H, W, C),
    )(x, w1p, w2p)

    return jnp.transpose(out, (0, 3, 1, 2))                       # NHWC -> NCHW


# ---------------- pure-JAX reference for sanity checking ----------------
def _reference(x_nchw, w1, b1, w2, b2):
    x = jnp.transpose(x_nchw, (0, 2, 3, 1))
    w1h = jnp.transpose(w1, (2, 3, 1, 0))
    w2h = jnp.transpose(w2, (2, 3, 1, 0))

    def conv(inp, w, b):
        p = jnp.pad(inp, ((0, 0), (1, 1), (1, 1), (0, 0)), mode="reflect")
        y = jax.lax.conv_general_dilated(
            p, w, (1, 1), "VALID",
            dimension_numbers=("NHWC", "HWIO", "NHWC"))
        return y + b

    def inorm(y):
        m = jnp.mean(y, axis=(1, 2), keepdims=True)
        v = jnp.mean((y - m) ** 2, axis=(1, 2), keepdims=True)
        return (y - m) * jax.lax.rsqrt(v + EPS)

    h = jnp.maximum(inorm(conv(x, w1h, b1)), 0.0)
    out = x + inorm(conv(h, w2h, b2))
    return jnp.transpose(out, (0, 3, 1, 2))


if __name__ == "__main__":
    def run_case(N, dim, H, W, key, atol):
        k_x, k_w1, k_b1, k_w2, k_b2 = jax.random.split(key, 5)
        x = jax.random.normal(k_x, (N, dim, H, W), dtype=jnp.float32)
        bound = 1.0 / (dim * 3 * 3) ** 0.5
        w1 = jax.random.uniform(k_w1, (dim, dim, 3, 3), minval=-bound, maxval=bound)
        b1 = jax.random.uniform(k_b1, (dim,), minval=-bound, maxval=bound)
        w2 = jax.random.uniform(k_w2, (dim, dim, 3, 3), minval=-bound, maxval=bound)
        b2 = jax.random.uniform(k_b2, (dim,), minval=-bound, maxval=bound)

        out = resnet_block_forward(x, w1, b1, w2, b2)
        jax.block_until_ready(out)
        ref = _reference(x, w1, b1, w2, b2)
        assert out.shape == (N, dim, H, W)
        # Tolerance accounts for bf16 MXU operands (f32 accumulation, f32 norm).
        assert jnp.allclose(out, ref, atol=atol, rtol=5e-2), \
            f"mismatch vs reference (dim={dim}, H={H}, W={W})"

    # ResnetBlock(dim=4, padding_type='reflect', norm_layer=InstanceNorm2d,
    #             use_dropout=False, use_bias=True)  -- small-C smoke test.
    run_case(N=2, dim=4, H=16, W=16, key=jax.random.PRNGKey(0), atol=5e-2)
    # Lane-dense regime the kernel is optimized for (C >= 128); slightly looser
    # atol for the larger bf16 accumulation tail.
    run_case(N=1, dim=128, H=16, W=16, key=jax.random.PRNGKey(1), atol=1e-1)

    print("KERNEL_OK")
</pallas_src>

<mosaic_0001>
module attributes {stable_mosaic.version = 11 : i64} {
  func.func @_resnet_block_kernel(%arg0: i32, %arg1: memref<1x16x16x4xf32, #tpu.memory_space<vmem>>, %arg2: memref<3x3x4x4xbf16, #tpu.memory_space<vmem>>, %arg3: memref<3x3x4x4xbf16, #tpu.memory_space<vmem>>, %arg4: memref<1x16x16x4xf32, #tpu.memory_space<vmem>>, %arg5: memref<18x18x4xbf16, #tpu.memory_space<vmem>>) attributes {dimension_semantics = [#tpu.dimension_semantics<parallel>], iteration_bounds = array<i64: 2>, scalar_prefetch = 0 : i64, scratch_operands = 1 : i64, tpu.core_type = #tpu.core_type<tc>, window_params = [{transform_indices = @transform_0, window_bounds = array<i64: 1, 16, 16, 4>}, {pipeline_mode = #tpu.pipeline_mode<synchronous>, transform_indices = @transform_1, window_bounds = array<i64: 3, 3, 4, 4>}, {pipeline_mode = #tpu.pipeline_mode<synchronous>, transform_indices = @transform_2, window_bounds = array<i64: 3, 3, 4, 4>}, {transform_indices = @transform_3, window_bounds = array<i64: 1, 16, 16, 4>}]} {
    %c0 = arith.constant 0 : index
    %c0_0 = arith.constant 0 : index
    %c0_1 = arith.constant 0 : index
    %c0_2 = arith.constant 0 : index
    %0 = vector.load %arg1[%c0, %c0_0, %c0_1, %c0_2] : memref<1x16x16x4xf32, #tpu.memory_space<vmem>>, vector<1x16x16x4xf32>
    %1 = vector.shape_cast %0 : vector<1x16x16x4xf32> to vector<16x16x4xf32>
    %2 = arith.truncf %1 : vector<16x16x4xf32> to vector<16x16x4xbf16>
    %c1 = arith.constant 1 : index
    %c1_3 = arith.constant 1 : index
    %c0_4 = arith.constant 0 : index
    %3 = vector.load %arg5[%c1, %c1_3, %c0_4] : memref<18x18x4xbf16, #tpu.memory_space<vmem>>, vector<16x16x4xbf16>
    tpu.vector_store %arg5[%c1, %c1_3, %c0_4], %2 {strides = array<i32>} : memref<18x18x4xbf16, #tpu.memory_space<vmem>>, vector<16x16x4xbf16>,
    %c2 = arith.constant 2 : index
    %c1_5 = arith.constant 1 : index
    %c0_6 = arith.constant 0 : index
    %4 = vector.load %arg5[%c2, %c1_5, %c0_6] : memref<18x18x4xbf16, #tpu.memory_space<vmem>>, vector<1x16x4xbf16>
    %c0_7 = arith.constant 0 : index
    %c1_8 = arith.constant 1 : index
    %c0_9 = arith.constant 0 : index
    %5 = vector.load %arg5[%c0_7, %c1_8, %c0_9] : memref<18x18x4xbf16, #tpu.memory_space<vmem>>, vector<1x16x4xbf16>
    tpu.vector_store %arg5[%c0_7, %c1_8, %c0_9], %4 {strides = array<i32>} : memref<18x18x4xbf16, #tpu.memory_space<vmem>>, vector<1x16x4xbf16>,
    %c15 = arith.constant 15 : index
    %c1_10 = arith.constant 1 : index
    %c0_11 = arith.constant 0 : index
    %6 = vector.load %arg5[%c15, %c1_10, %c0_11] : memref<18x18x4xbf16, #tpu.memory_space<vmem>>, vector<1x16x4xbf16>
    %c17 = arith.constant 17 : index
    %c1_12 = arith.constant 1 : index
    %c0_13 = arith.constant 0 : index
    %7 = vector.load %arg5[%c17, %c1_12, %c0_13] : memref<18x18x4xbf16, #tpu.memory_space<vmem>>, vector<1x16x4xbf16>
    tpu.vector_store %arg5[%c17, %c1_12, %c0_13], %6 {strides = array<i32>} : memref<18x18x4xbf16, #tpu.memory_space<vmem>>, vector<1x16x4xbf16>,
    %c0_14 = arith.constant 0 : index
    %c2_15 = arith.constant 2 : index
    %c0_16 = arith.constant 0 : index
    %8 = vector.load %arg5[%c0_14, %c2_15, %c0_16] : memref<18x18x4xbf16, #tpu.memory_space<vmem>>, vector<18x1x4xbf16>
    %c0_17 = arith.constant 0 : index
    %c0_18 = arith.constant 0 : index
    %c0_19 = arith.constant 0 : index
    %9 = vector.load %arg5[%c0_17, %c0_18, %c0_19] : memref<18x18x4xbf16, #tpu.memory_space<vmem>>, vector<18x1x4xbf16>
    tpu.vector_store %arg5[%c0_17, %c0_18, %c0_19], %8 {strides = array<i32>} : memref<18x18x4xbf16, #tpu.memory_space<vmem>>, vector<18x1x4xbf16>,
    %c0_20 = arith.constant 0 : index
    %c15_21 = arith.constant 15 : index
    %c0_22 = arith.constant 0 : index
    %10 = vector.load %arg5[%c0_20, %c15_21, %c0_22] : memref<18x18x4xbf16, #tpu.memory_space<vmem>>, vector<18x1x4xbf16>
    %c0_23 = arith.constant 0 : index
    %c17_24 = arith.constant 17 : index
    %c0_25 = arith.constant 0 : index
    %11 = vector.load %arg5[%c0_23, %c17_24, %c0_25] : memref<18x18x4xbf16, #tpu.memory_space<vmem>>, vector<18x1x4xbf16>
    tpu.vector_store %arg5[%c0_23, %c17_24, %c0_25], %10 {strides = array<i32>} : memref<18x18x4xbf16, #tpu.memory_space<vmem>>, vector<18x1x4xbf16>,
    %c0_26 = arith.constant 0 : index
    %c0_27 = arith.constant 0 : index
    %c0_28 = arith.constant 0 : index
    %12 = vector.load %arg5[%c0_26, %c0_27, %c0_28] : memref<18x18x4xbf16, #tpu.memory_space<vmem>>, vector<16x16x4xbf16>
    %13 = vector.shape_cast %12 : vector<16x16x4xbf16> to vector<256x4xbf16>
    %c0_29 = arith.constant 0 : index
    %c0_30 = arith.constant 0 : index
    %c0_31 = arith.constant 0 : index
    %c0_32 = arith.constant 0 : index
    %14 = vector.load %arg2[%c0_29, %c0_30, %c0_31, %c0_32] : memref<3x3x4x4xbf16, #tpu.memory_space<vmem>>, vector<1x1x4x4xbf16>
    %15 = vector.shape_cast %14 : vector<1x1x4x4xbf16> to vector<4x4xbf16>
    %cst = arith.constant dense<0.000000e+00> : vector<256x4xf32>
    %16 = tpu.matmul %13, %15, %cst {dimension_numbers = #tpu.dot_dimension_numbers<[1], [0], [0], [1], [0, 0, 1, 1], [], []>} : vector<256x4xbf16>, vector<4x4xbf16>, vector<256x4xf32> -> vector<256x4xf32>
    %c0_33 = arith.constant 0 : index
    %c1_34 = arith.constant 1 : index
    %c0_35 = arith.constant 0 : index
    %17 = vector.load %arg5[%c0_33, %c1_34, %c0_35] : memref<18x18x4xbf16, #tpu.memory_space<vmem>>, vector<16x16x4xbf16>
    %18 = vector.shape_cast %17 : vector<16x16x4xbf16> to vector<256x4xbf16>
    %c0_36 = arith.constant 0 : index
    %c1_37 = arith.constant 1 : index
    %c0_38 = arith.constant 0 : index
    %c0_39 = arith.constant 0 : index
    %19 = vector.load %arg2[%c0_36, %c1_37, %c0_38, %c0_39] : memref<3x3x4x4xbf16, #tpu.memory_space<vmem>>, vector<1x1x4x4xbf16>
    %20 = vector.shape_cast %19 : vector<1x1x4x4xbf16> to vector<4x4xbf16>
    %cst_40 = arith.constant dense<0.000000e+00> : vector<256x4xf32>
    %21 = tpu.matmul %18, %20, %cst_40 {dimension_numbers = #tpu.dot_dimension_numbers<[1], [0], [0], [1], [0, 0, 1, 1], [], []>} : vector<256x4xbf16>, vector<4x4xbf16>, vector<256x4xf32> -> vector<256x4xf32>
    %22 = arith.addf %16, %21 : vector<256x4xf32>
    %c0_41 = arith.constant 0 : index
    %c2_42 = arith.constant 2 : index
    %c0_43 = arith.constant 0 : index
    %23 = vector.load %arg5[%c0_41, %c2_42, %c0_43] : memref<18x18x4xbf16, #tpu.memory_space<vmem>>, vector<16x16x4xbf16>
    %24 = vector.shape_cast %23 : vector<16x16x4xbf16> to vector<256x4xbf16>
    %c0_44 = arith.constant 0 : index
    %c2_45 = arith.constant 2 : index
    %c0_46 = arith.constant 0 : index
    %c0_47 = arith.constant 0 : index
    %25 = vector.load %arg2[%c0_44, %c2_45, %c0_46, %c0_47] : memref<3x3x4x4xbf16, #tpu.memory_space<vmem>>, vector<1x1x4x4xbf16>
    %26 = vector.shape_cast %25 : vector<1x1x4x4xbf16> to vector<4x4xbf16>
    %cst_48 = arith.constant dense<0.000000e+00> : vector<256x4xf32>
    %27 = tpu.matmul %24, %26, %cst_48 {dimension_numbers = #tpu.dot_dimension_numbers<[1], [0], [0], [1], [0, 0, 1, 1], [], []>} : vector<256x4xbf16>, vector<4x4xbf16>, vector<256x4xf32> -> vector<256x4xf32>
    %28 = arith.addf %22, %27 : vector<256x4xf32>
    %c1_49 = arith.constant 1 : index
    %c0_50 = arith.constant 0 : index
    %c0_51 = arith.constant 0 : index
    %29 = vector.load %arg5[%c1_49, %c0_50, %c0_51] : memref<18x18x4xbf16, #tpu.memory_space<vmem>>, vector<16x16x4xbf16>
    %30 = vector.shape_cast %29 : vector<16x16x4xbf16> to vector<256x4xbf16>
    %c1_52 = arith.constant 1 : index
    %c0_53 = arith.constant 0 : index
    %c0_54 = arith.constant 0 : index
    %c0_55 = arith.constant 0 : index
    %31 = vector.load %arg2[%c1_52, %c0_53, %c0_54, %c0_55] : memref<3x3x4x4xbf16, #tpu.memory_space<vmem>>, vector<1x1x4x4xbf16>
    %32 = vector.shape_cast %31 : vector<1x1x4x4xbf16> to vector<4x4xbf16>
    %cst_56 = arith.constant dense<0.000000e+00> : vector<256x4xf32>
    %33 = tpu.matmul %30, %32, %cst_56 {dimension_numbers = #tpu.dot_dimension_numbers<[1], [0], [0], [1], [0, 0, 1, 1], [], []>} : vector<256x4xbf16>, vector<4x4xbf16>, vector<256x4xf32> -> vector<256x4xf32>
    %34 = arith.addf %28, %33 : vector<256x4xf32>
    %c1_57 = arith.constant 1 : index
    %c1_58 = arith.constant 1 : index
    %c0_59 = arith.constant 0 : index
    %35 = vector.load %arg5[%c1_57, %c1_58, %c0_59] : memref<18x18x4xbf16, #tpu.memory_space<vmem>>, vector<16x16x4xbf16>
    %36 = vector.shape_cast %35 : vector<16x16x4xbf16> to vector<256x4xbf16>
    %c1_60 = arith.constant 1 : index
    %c1_61 = arith.constant 1 : index
    %c0_62 = arith.constant 0 : index
    %c0_63 = arith.constant 0 : index
    %37 = vector.load %arg2[%c1_60, %c1_61, %c0_62, %c0_63] : memref<3x3x4x4xbf16, #tpu.memory_space<vmem>>, vector<1x1x4x4xbf16>
    %38 = vector.shape_cast %37 : vector<1x1x4x4xbf16> to vector<4x4xbf16>
    %cst_64 = arith.constant dense<0.000000e+00> : vector<256x4xf32>
    %39 = tpu.matmul %36, %38, %cst_64 {dimension_numbers = #tpu.dot_dimension_numbers<[1], [0], [0], [1], [0, 0, 1, 1], [], []>} : vector<256x4xbf16>, vector<4x4xbf16>, vector<256x4xf32> -> vector<256x4xf32>
    %40 = arith.addf %34, %39 : vector<256x4xf32>
    %c1_65 = arith.constant 1 : index
    %c2_66 = arith.constant 2 : index
    %c0_67 = arith.constant 0 : index
    %41 = vector.load %arg5[%c1_65, %c2_66, %c0_67] : memref<18x18x4xbf16, #tpu.memory_space<vmem>>, vector<16x16x4xbf16>
    %42 = vector.shape_cast %41 : vector<16x16x4xbf16> to vector<256x4xbf16>
    %c1_68 = arith.constant 1 : index
    %c2_69 = arith.constant 2 : index
    %c0_70 = arith.constant 0 : index
    %c0_71 = arith.constant 0 : index
    %43 = vector.load %arg2[%c1_68, %c2_69, %c0_70, %c0_71] : memref<3x3x4x4xbf16, #tpu.memory_space<vmem>>, vector<1x1x4x4xbf16>
    %44 = vector.shape_cast %43 : vector<1x1x4x4xbf16> to vector<4x4xbf16>
    %cst_72 = arith.constant dense<0.000000e+00> : vector<256x4xf32>
    %45 = tpu.matmul %42, %44, %cst_72 {dimension_numbers = #tpu.dot_dimension_numbers<[1], [0], [0], [1], [0, 0, 1, 1], [], []>} : vector<256x4xbf16>, vector<4x4xbf16>, vector<256x4xf32> -> vector<256x4xf32>
    %46 = arith.addf %40, %45 : vector<256x4xf32>
    %c2_73 = arith.constant 2 : index
    %c0_74 = arith.constant 0 : index
    %c0_75 = arith.constant 0 : index
    %47 = vector.load %arg5[%c2_73, %c0_74, %c0_75] : memref<18x18x4xbf16, #tpu.memory_space<vmem>>, vector<16x16x4xbf16>
    %48 = vector.shape_cast %47 : vector<16x16x4xbf16> to vector<256x4xbf16>
    %c2_76 = arith.constant 2 : index
    %c0_77 = arith.constant 0 : index
    %c0_78 = arith.constant 0 : index
    %c0_79 = arith.constant 0 : index
    %49 = vector.load %arg2[%c2_76, %c0_77, %c0_78, %c0_79] : memref<3x3x4x4xbf16, #tpu.memory_space<vmem>>, vector<1x1x4x4xbf16>
    %50 = vector.shape_cast %49 : vector<1x1x4x4xbf16> to vector<4x4xbf16>
    %cst_80 = arith.constant dense<0.000000e+00> : vector<256x4xf32>
    %51 = tpu.matmul %48, %50, %cst_80 {dimension_numbers = #tpu.dot_dimension_numbers<[1], [0], [0], [1], [0, 0, 1, 1], [], []>} : vector<256x4xbf16>, vector<4x4xbf16>, vector<256x4xf32> -> vector<256x4xf32>
    %52 = arith.addf %46, %51 : vector<256x4xf32>
    %c2_81 = arith.constant 2 : index
    %c1_82 = arith.constant 1 : index
    %c0_83 = arith.constant 0 : index
    %53 = vector.load %arg5[%c2_81, %c1_82, %c0_83] : memref<18x18x4xbf16, #tpu.memory_space<vmem>>, vector<16x16x4xbf16>
    %54 = vector.shape_cast %53 : vector<16x16x4xbf16> to vector<256x4xbf16>
    %c2_84 = arith.constant 2 : index
    %c1_85 = arith.constant 1 : index
    %c0_86 = arith.constant 0 : index
    %c0_87 = arith.constant 0 : index
    %55 = vector.load %arg2[%c2_84, %c1_85, %c0_86, %c0_87] : memref<3x3x4x4xbf16, #tpu.memory_space<vmem>>, vector<1x1x4x4xbf16>
    %56 = vector.shape_cast %55 : vector<1x1x4x4xbf16> to vector<4x4xbf16>
    %cst_88 = arith.constant dense<0.000000e+00> : vector<256x4xf32>
    %57 = tpu.matmul %54, %56, %cst_88 {dimension_numbers = #tpu.dot_dimension_numbers<[1], [0], [0], [1], [0, 0, 1, 1], [], []>} : vector<256x4xbf16>, vector<4x4xbf16>, vector<256x4xf32> -> vector<256x4xf32>
    %58 = arith.addf %52, %57 : vector<256x4xf32>
    %c2_89 = arith.constant 2 : index
    %c2_90 = arith.constant 2 : index
    %c0_91 = arith.constant 0 : index
    %59 = vector.load %arg5[%c2_89, %c2_90, %c0_91] : memref<18x18x4xbf16, #tpu.memory_space<vmem>>, vector<16x16x4xbf16>
    %60 = vector.shape_cast %59 : vector<16x16x4xbf16> to vector<256x4xbf16>
    %c2_92 = arith.constant 2 : index
    %c2_93 = arith.constant 2 : index
    %c0_94 = arith.constant 0 : index
    %c0_95 = arith.constant 0 : index
    %61 = vector.load %arg2[%c2_92, %c2_93, %c0_94, %c0_95] : memref<3x3x4x4xbf16, #tpu.memory_space<vmem>>, vector<1x1x4x4xbf16>
    %62 = vector.shape_cast %61 : vector<1x1x4x4xbf16> to vector<4x4xbf16>
    %cst_96 = arith.constant dense<0.000000e+00> : vector<256x4xf32>
    %63 = tpu.matmul %60, %62, %cst_96 {dimension_numbers = #tpu.dot_dimension_numbers<[1], [0], [0], [1], [0, 0, 1, 1], [], []>} : vector<256x4xbf16>, vector<4x4xbf16>, vector<256x4xf32> -> vector<256x4xf32>
    %64 = arith.addf %58, %63 : vector<256x4xf32>
    %cst_97 = arith.constant dense<0.000000e+00> : vector<4xf32>
    %65 = vector.multi_reduction <add>, %64, %cst_97 [0] : vector<256x4xf32> to vector<4xf32>
    %66 = vector.shape_cast %65 : vector<4xf32> to vector<1x4xf32>
    %cst_98 = arith.constant 3.906250e-03 : f32
    %67 = vector.broadcast %cst_98 : f32 to vector<1x4xf32>
    %68 = arith.mulf %66, %67 : vector<1x4xf32>
    %69 = vector.broadcast %68 : vector<1x4xf32> to vector<256x4xf32>
    %70 = arith.subf %64, %69 : vector<256x4xf32>
    %71 = arith.mulf %70, %70 : vector<256x4xf32>
    %cst_99 = arith.constant dense<0.000000e+00> : vector<4xf32>
    %72 = vector.multi_reduction <add>, %71, %cst_99 [0] : vector<256x4xf32> to vector<4xf32>
    %73 = vector.shape_cast %72 : vector<4xf32> to vector<1x4xf32>
    %cst_100 = arith.constant 3.906250e-03 : f32
    %74 = vector.broadcast %cst_100 : f32 to vector<1x4xf32>
    %75 = arith.mulf %73, %74 : vector<1x4xf32>
    %cst_101 = arith.constant 9.99999974E-6 : f32
    %76 = vector.broadcast %cst_101 : f32 to vector<1x4xf32>
    %77 = arith.addf %75, %76 : vector<1x4xf32>
    %78 = math.rsqrt %77 : vector<1x4xf32>
    %79 = vector.broadcast %78 : vector<1x4xf32> to vector<256x4xf32>
    %80 = arith.mulf %70, %79 : vector<256x4xf32>
    %cst_102 = arith.constant 0.000000e+00 : f32
    %81 = vector.broadcast %cst_102 : f32 to vector<256x4xf32>
    %82 = arith.maximumf %80, %81 : vector<256x4xf32>
    %83 = vector.shape_cast %82 : vector<256x4xf32> to vector<16x16x4xf32>
    %84 = arith.truncf %83 : vector<16x16x4xf32> to vector<16x16x4xbf16>
    %c1_103 = arith.constant 1 : index
    %c1_104 = arith.constant 1 : index
    %c0_105 = arith.constant 0 : index
    %85 = vector.load %arg5[%c1_103, %c1_104, %c0_105] : memref<18x18x4xbf16, #tpu.memory_space<vmem>>, vector<16x16x4xbf16>
    tpu.vector_store %arg5[%c1_103, %c1_104, %c0_105], %84 {strides = array<i32>} : memref<18x18x4xbf16, #tpu.memory_space<vmem>>, vector<16x16x4xbf16>,
    %c2_106 = arith.constant 2 : index
    %c1_107 = arith.constant 1 : index
    %c0_108 = arith.constant 0 : index
    %86 = vector.load %arg5[%c2_106, %c1_107, %c0_108] : memref<18x18x4xbf16, #tpu.memory_space<vmem>>, vector<1x16x4xbf16>
    %c0_109 = arith.constant 0 : index
    %c1_110 = arith.constant 1 : index
    %c0_111 = arith.constant 0 : index
    %87 = vector.load %arg5[%c0_109, %c1_110, %c0_111] : memref<18x18x4xbf16, #tpu.memory_space<vmem>>, vector<1x16x4xbf16>
    tpu.vector_store %arg5[%c0_109, %c1_110, %c0_111], %86 {strides = array<i32>} : memref<18x18x4xbf16, #tpu.memory_space<vmem>>, vector<1x16x4xbf16>,
    %c15_112 = arith.constant 15 : index
    %c1_113 = arith.constant 1 : index
    %c0_114 = arith.constant 0 : index
    %88 = vector.load %arg5[%c15_112, %c1_113, %c0_114] : memref<18x18x4xbf16, #tpu.memory_space<vmem>>, vector<1x16x4xbf16>
    %c17_115 = arith.constant 17 : index
    %c1_116 = arith.constant 1 : index
    %c0_117 = arith.constant 0 : index
    %89 = vector.load %arg5[%c17_115, %c1_116, %c0_117] : memref<18x18x4xbf16, #tpu.memory_space<vmem>>, vector<1x16x4xbf16>
    tpu.vector_store %arg5[%c17_115, %c1_116, %c0_117], %88 {strides = array<i32>} : memref<18x18x4xbf16, #tpu.memory_space<vmem>>, vector<1x16x4xbf16>,
    %c0_118 = arith.constant 0 : index
    %c2_119 = arith.constant 2 : index
    %c0_120 = arith.constant 0 : index
    %90 = vector.load %arg5[%c0_118, %c2_119, %c0_120] : memref<18x18x4xbf16, #tpu.memory_space<vmem>>, vector<18x1x4xbf16>
    %c0_121 = arith.constant 0 : index
    %c0_122 = arith.constant 0 : index
    %c0_123 = arith.constant 0 : index
    %91 = vector.load %arg5[%c0_121, %c0_122, %c0_123] : memref<18x18x4xbf16, #tpu.memory_space<vmem>>, vector<18x1x4xbf16>
    tpu.vector_store %arg5[%c0_121, %c0_122, %c0_123], %90 {strides = array<i32>} : memref<18x18x4xbf16, #tpu.memory_space<vmem>>, vector<18x1x4xbf16>,
    %c0_124 = arith.constant 0 : index
    %c15_125 = arith.constant 15 : index
    %c0_126 = arith.constant 0 : index
    %92 = vector.load %arg5[%c0_124, %c15_125, %c0_126] : memref<18x18x4xbf16, #tpu.memory_space<vmem>>, vector<18x1x4xbf16>
    %c0_127 = arith.constant 0 : index
    %c17_128 = arith.constant 17 : index
    %c0_129 = arith.constant 0 : index
    %93 = vector.load %arg5[%c0_127, %c17_128, %c0_129] : memref<18x18x4xbf16, #tpu.memory_space<vmem>>, vector<18x1x4xbf16>
    tpu.vector_store %arg5[%c0_127, %c17_128, %c0_129], %92 {strides = array<i32>} : memref<18x18x4xbf16, #tpu.memory_space<vmem>>, vector<18x1x4xbf16>,
    %c0_130 = arith.constant 0 : index
    %c0_131 = arith.constant 0 : index
    %c0_132 = arith.constant 0 : index
    %94 = vector.load %arg5[%c0_130, %c0_131, %c0_132] : memref<18x18x4xbf16, #tpu.memory_space<vmem>>, vector<16x16x4xbf16>
    %95 = vector.shape_cast %94 : vector<16x16x4xbf16> to vector<256x4xbf16>
    %c0_133 = arith.constant 0 : index
    %c0_134 = arith.constant 0 : index
    %c0_135 = arith.constant 0 : index
    %c0_136 = arith.constant 0 : index
    %96 = vector.load %arg3[%c0_133, %c0_134, %c0_135, %c0_136] : memref<3x3x4x4xbf16, #tpu.memory_space<vmem>>, vector<1x1x4x4xbf16>
    %97 = vector.shape_cast %96 : vector<1x1x4x4xbf16> to vector<4x4xbf16>
    %cst_137 = arith.constant dense<0.000000e+00> : vector<256x4xf32>
    %98 = tpu.matmul %95, %97, %cst_137 {dimension_numbers = #tpu.dot_dimension_numbers<[1], [0], [0], [1], [0, 0, 1, 1], [], []>} : vector<256x4xbf16>, vector<4x4xbf16>, vector<256x4xf32> -> vector<256x4xf32>
    %c0_138 = arith.constant 0 : index
    %c1_139 = arith.constant 1 : index
    %c0_140 = arith.constant 0 : index
    %99 = vector.load %arg5[%c0_138, %c1_139, %c0_140] : memref<18x18x4xbf16, #tpu.memory_space<vmem>>, vector<16x16x4xbf16>
    %100 = vector.shape_cast %99 : vector<16x16x4xbf16> to vector<256x4xbf16>
    %c0_141 = arith.constant 0 : index
    %c1_142 = arith.constant 1 : index
    %c0_143 = arith.constant 0 : index
    %c0_144 = arith.constant 0 : index
    %101 = vector.load %arg3[%c0_141, %c1_142, %c0_143, %c0_144] : memref<3x3x4x4xbf16, #tpu.memory_space<vmem>>, vector<1x1x4x4xbf16>
    %102 = vector.shape_cast %101 : vector<1x1x4x4xbf16> to vector<4x4xbf16>
    %cst_145 = arith.constant dense<0.000000e+00> : vector<256x4xf32>
    %103 = tpu.matmul %100, %102, %cst_145 {dimension_numbers = #tpu.dot_dimension_numbers<[1], [0], [0], [1], [0, 0, 1, 1], [], []>} : vector<256x4xbf16>, vector<4x4xbf16>, vector<256x4xf32> -> vector<256x4xf32>
    %104 = arith.addf %98, %103 : vector<256x4xf32>
    %c0_146 = arith.constant 0 : index
    %c2_147 = arith.constant 2 : index
    %c0_148 = arith.constant 0 : index
    %105 = vector.load %arg5[%c0_146, %c2_147, %c0_148] : memref<18x18x4xbf16, #tpu.memory_space<vmem>>, vector<16x16x4xbf16>
    %106 = vector.shape_cast %105 : vector<16x16x4xbf16> to vector<256x4xbf16>
    %c0_149 = arith.constant 0 : index
    %c2_150 = arith.constant 2 : index
    %c0_151 = arith.constant 0 : index
    %c0_152 = arith.constant 0 : index
    %107 = vector.load %arg3[%c0_149, %c2_150, %c0_151, %c0_152] : memref<3x3x4x4xbf16, #tpu.memory_space<vmem>>, vector<1x1x4x4xbf16>
    %108 = vector.shape_cast %107 : vector<1x1x4x4xbf16> to vector<4x4xbf16>
    %cst_153 = arith.constant dense<0.000000e+00> : vector<256x4xf32>
    %109 = tpu.matmul %106, %108, %cst_153 {dimension_numbers = #tpu.dot_dimension_numbers<[1], [0], [0], [1], [0, 0, 1, 1], [], []>} : vector<256x4xbf16>, vector<4x4xbf16>, vector<256x4xf32> -> vector<256x4xf32>
    %110 = arith.addf %104, %109 : vector<256x4xf32>
    %c1_154 = arith.constant 1 : index
    %c0_155 = arith.constant 0 : index
    %c0_156 = arith.constant 0 : index
    %111 = vector.load %arg5[%c1_154, %c0_155, %c0_156] : memref<18x18x4xbf16, #tpu.memory_space<vmem>>, vector<16x16x4xbf16>
    %112 = vector.shape_cast %111 : vector<16x16x4xbf16> to vector<256x4xbf16>
    %c1_157 = arith.constant 1 : index
    %c0_158 = arith.constant 0 : index
    %c0_159 = arith.constant 0 : index
    %c0_160 = arith.constant 0 : index
    %113 = vector.load %arg3[%c1_157, %c0_158, %c0_159, %c0_160] : memref<3x3x4x4xbf16, #tpu.memory_space<vmem>>, vector<1x1x4x4xbf16>
    %114 = vector.shape_cast %113 : vector<1x1x4x4xbf16> to vector<4x4xbf16>
    %cst_161 = arith.constant dense<0.000000e+00> : vector<256x4xf32>
    %115 = tpu.matmul %112, %114, %cst_161 {dimension_numbers = #tpu.dot_dimension_numbers<[1], [0], [0], [1], [0, 0, 1, 1], [], []>} : vector<256x4xbf16>, vector<4x4xbf16>, vector<256x4xf32> -> vector<256x4xf32>
    %116 = arith.addf %110, %115 : vector<256x4xf32>
    %c1_162 = arith.constant 1 : index
    %c1_163 = arith.constant 1 : index
    %c0_164 = arith.constant 0 : index
    %117 = vector.load %arg5[%c1_162, %c1_163, %c0_164] : memref<18x18x4xbf16, #tpu.memory_space<vmem>>, vector<16x16x4xbf16>
    %118 = vector.shape_cast %117 : vector<16x16x4xbf16> to vector<256x4xbf16>
    %c1_165 = arith.constant 1 : index
    %c1_166 = arith.constant 1 : index
    %c0_167 = arith.constant 0 : index
    %c0_168 = arith.constant 0 : index
    %119 = vector.load %arg3[%c1_165, %c1_166, %c0_167, %c0_168] : memref<3x3x4x4xbf16, #tpu.memory_space<vmem>>, vector<1x1x4x4xbf16>
    %120 = vector.shape_cast %119 : vector<1x1x4x4xbf16> to vector<4x4xbf16>
    %cst_169 = arith.constant dense<0.000000e+00> : vector<256x4xf32>
    %121 = tpu.matmul %118, %120, %cst_169 {dimension_numbers = #tpu.dot_dimension_numbers<[1], [0], [0], [1], [0, 0, 1, 1], [], []>} : vector<256x4xbf16>, vector<4x4xbf16>, vector<256x4xf32> -> vector<256x4xf32>
    %122 = arith.addf %116, %121 : vector<256x4xf32>
    %c1_170 = arith.constant 1 : index
    %c2_171 = arith.constant 2 : index
    %c0_172 = arith.constant 0 : index
    %123 = vector.load %arg5[%c1_170, %c2_171, %c0_172] : memref<18x18x4xbf16, #tpu.memory_space<vmem>>, vector<16x16x4xbf16>
    %124 = vector.shape_cast %123 : vector<16x16x4xbf16> to vector<256x4xbf16>
    %c1_173 = arith.constant 1 : index
    %c2_174 = arith.constant 2 : index
    %c0_175 = arith.constant 0 : index
    %c0_176 = arith.constant 0 : index
    %125 = vector.load %arg3[%c1_173, %c2_174, %c0_175, %c0_176] : memref<3x3x4x4xbf16, #tpu.memory_space<vmem>>, vector<1x1x4x4xbf16>
    %126 = vector.shape_cast %125 : vector<1x1x4x4xbf16> to vector<4x4xbf16>
    %cst_177 = arith.constant dense<0.000000e+00> : vector<256x4xf32>
    %127 = tpu.matmul %124, %126, %cst_177 {dimension_numbers = #tpu.dot_dimension_numbers<[1], [0], [0], [1], [0, 0, 1, 1], [], []>} : vector<256x4xbf16>, vector<4x4xbf16>, vector<256x4xf32> -> vector<256x4xf32>
    %128 = arith.addf %122, %127 : vector<256x4xf32>
    %c2_178 = arith.constant 2 : index
    %c0_179 = arith.constant 0 : index
    %c0_180 = arith.constant 0 : index
    %129 = vector.load %arg5[%c2_178, %c0_179, %c0_180] : memref<18x18x4xbf16, #tpu.memory_space<vmem>>, vector<16x16x4xbf16>
    %130 = vector.shape_cast %129 : vector<16x16x4xbf16> to vector<256x4xbf16>
    %c2_181 = arith.constant 2 : index
    %c0_182 = arith.constant 0 : index
    %c0_183 = arith.constant 0 : index
    %c0_184 = arith.constant 0 : index
    %131 = vector.load %arg3[%c2_181, %c0_182, %c0_183, %c0_184] : memref<3x3x4x4xbf16, #tpu.memory_space<vmem>>, vector<1x1x4x4xbf16>
    %132 = vector.shape_cast %131 : vector<1x1x4x4xbf16> to vector<4x4xbf16>
    %cst_185 = arith.constant dense<0.000000e+00> : vector<256x4xf32>
    %133 = tpu.matmul %130, %132, %cst_185 {dimension_numbers = #tpu.dot_dimension_numbers<[1], [0], [0], [1], [0, 0, 1, 1], [], []>} : vector<256x4xbf16>, vector<4x4xbf16>, vector<256x4xf32> -> vector<256x4xf32>
    %134 = arith.addf %128, %133 : vector<256x4xf32>
    %c2_186 = arith.constant 2 : index
    %c1_187 = arith.constant 1 : index
    %c0_188 = arith.constant 0 : index
    %135 = vector.load %arg5[%c2_186, %c1_187, %c0_188] : memref<18x18x4xbf16, #tpu.memory_space<vmem>>, vector<16x16x4xbf16>
    %136 = vector.shape_cast %135 : vector<16x16x4xbf16> to vector<256x4xbf16>
    %c2_189 = arith.constant 2 : index
    %c1_190 = arith.constant 1 : index
    %c0_191 = arith.constant 0 : index
    %c0_192 = arith.constant 0 : index
    %137 = vector.load %arg3[%c2_189, %c1_190, %c0_191, %c0_192] : memref<3x3x4x4xbf16, #tpu.memory_space<vmem>>, vector<1x1x4x4xbf16>
    %138 = vector.shape_cast %137 : vector<1x1x4x4xbf16> to vector<4x4xbf16>
    %cst_193 = arith.constant dense<0.000000e+00> : vector<256x4xf32>
    %139 = tpu.matmul %136, %138, %cst_193 {dimension_numbers = #tpu.dot_dimension_numbers<[1], [0], [0], [1], [0, 0, 1, 1], [], []>} : vector<256x4xbf16>, vector<4x4xbf16>, vector<256x4xf32> -> vector<256x4xf32>
    %140 = arith.addf %134, %139 : vector<256x4xf32>
    %c2_194 = arith.constant 2 : index
    %c2_195 = arith.constant 2 : index
    %c0_196 = arith.constant 0 : index
    %141 = vector.load %arg5[%c2_194, %c2_195, %c0_196] : memref<18x18x4xbf16, #tpu.memory_space<vmem>>, vector<16x16x4xbf16>
    %142 = vector.shape_cast %141 : vector<16x16x4xbf16> to vector<256x4xbf16>
    %c2_197 = arith.constant 2 : index
    %c2_198 = arith.constant 2 : index
    %c0_199 = arith.constant 0 : index
    %c0_200 = arith.constant 0 : index
    %143 = vector.load %arg3[%c2_197, %c2_198, %c0_199, %c0_200] : memref<3x3x4x4xbf16, #tpu.memory_space<vmem>>, vector<1x1x4x4xbf16>
    %144 = vector.shape_cast %143 : vector<1x1x4x4xbf16> to vector<4x4xbf16>
    %cst_201 = arith.constant dense<0.000000e+00> : vector<256x4xf32>
    %145 = tpu.matmul %142, %144, %cst_201 {dimension_numbers = #tpu.dot_dimension_numbers<[1], [0], [0], [1], [0, 0, 1, 1], [], []>} : vector<256x4xbf16>, vector<4x4xbf16>, vector<256x4xf32> -> vector<256x4xf32>
    %146 = arith.addf %140, %145 : vector<256x4xf32>
    %cst_202 = arith.constant dense<0.000000e+00> : vector<4xf32>
    %147 = vector.multi_reduction <add>, %146, %cst_202 [0] : vector<256x4xf32> to vector<4xf32>
    %148 = vector.shape_cast %147 : vector<4xf32> to vector<1x4xf32>
    %cst_203 = arith.constant 3.906250e-03 : f32
    %149 = vector.broadcast %cst_203 : f32 to vector<1x4xf32>
    %150 = arith.mulf %148, %149 : vector<1x4xf32>
    %151 = vector.broadcast %150 : vector<1x4xf32> to vector<256x4xf32>
    %152 = arith.subf %146, %151 : vector<256x4xf32>
    %153 = arith.mulf %152, %152 : vector<256x4xf32>
    %cst_204 = arith.constant dense<0.000000e+00> : vector<4xf32>
    %154 = vector.multi_reduction <add>, %153, %cst_204 [0] : vector<256x4xf32> to vector<4xf32>
    %155 = vector.shape_cast %154 : vector<4xf32> to vector<1x4xf32>
    %cst_205 = arith.constant 3.906250e-03 : f32
    %156 = vector.broadcast %cst_205 : f32 to vector<1x4xf32>
    %157 = arith.mulf %155, %156 : vector<1x4xf32>
    %cst_206 = arith.constant 9.99999974E-6 : f32
    %158 = vector.broadcast %cst_206 : f32 to vector<1x4xf32>
    %159 = arith.addf %157, %158 : vector<1x4xf32>
    %160 = math.rsqrt %159 : vector<1x4xf32>
    %161 = vector.broadcast %160 : vector<1x4xf32> to vector<256x4xf32>
    %162 = arith.mulf %152, %161 : vector<256x4xf32>
    %163 = vector.shape_cast %162 : vector<256x4xf32> to vector<16x16x4xf32>
    %c0_207 = arith.constant 0 : index
    %c0_208 = arith.constant 0 : index
    %c0_209 = arith.constant 0 : index
    %c0_210 = arith.constant 0 : index
    %164 = vector.load %arg1[%c0_207, %c0_208, %c0_209, %c0_210] : memref<1x16x16x4xf32, #tpu.memory_space<vmem>>, vector<1x16x16x4xf32>
    %165 = vector.shape_cast %164 : vector<1x16x16x4xf32> to vector<16x16x4xf32>
    %166 = arith.addf %165, %163 : vector<16x16x4xf32>
    %c0_211 = arith.constant 0 : index
    %c0_212 = arith.constant 0 : index
    %c0_213 = arith.constant 0 : index
    %c0_214 = arith.constant 0 : index
    %167 = vector.load %arg4[%c0_211, %c0_212, %c0_213, %c0_214] : memref<1x16x16x4xf32, #tpu.memory_space<vmem>>, vector<1x16x16x4xf32>
    %168 = vector.shape_cast %167 : vector<1x16x16x4xf32> to vector<16x16x4xf32>
    %169 = vector.shape_cast %166 : vector<16x16x4xf32> to vector<1x16x16x4xf32>
    tpu.vector_store %arg4[%c0_211, %c0_212, %c0_213, %c0_214], %169 {strides = array<i32>} : memref<1x16x16x4xf32, #tpu.memory_space<vmem>>, vector<1x16x16x4xf32>,
    return
  }
  func.func @transform_0(%arg0: i32) -> (i32, i32, i32, i32) {
    %c0_i32 = arith.constant 0 : i32
    %c0_i32_0 = arith.constant 0 : i32
    %c0_i32_1 = arith.constant 0 : i32
    %c0_i32_2 = arith.constant 0 : i32
    return %arg0, %c0_i32, %c0_i32_0, %c0_i32_1 : i32, i32, i32, i32
  }
  func.func @transform_1(%arg0: i32) -> (i32, i32, i32, i32) {
    %c0_i32 = arith.constant 0 : i32
    %c0_i32_0 = arith.constant 0 : i32
    %c0_i32_1 = arith.constant 0 : i32
    %c0_i32_2 = arith.constant 0 : i32
    %c0_i32_3 = arith.constant 0 : i32
    return %c0_i32, %c0_i32_0, %c0_i32_1, %c0_i32_2 : i32, i32, i32, i32
  }
  func.func @transform_2(%arg0: i32) -> (i32, i32, i32, i32) {
    %c0_i32 = arith.constant 0 : i32
    %c0_i32_0 = arith.constant 0 : i32
    %c0_i32_1 = arith.constant 0 : i32
    %c0_i32_2 = arith.constant 0 : i32
    %c0_i32_3 = arith.constant 0 : i32
    return %c0_i32, %c0_i32_0, %c0_i32_1, %c0_i32_2 : i32, i32, i32, i32
  }
  func.func @transform_3(%arg0: i32) -> (i32, i32, i32, i32) {
    %c0_i32 = arith.constant 0 : i32
    %c0_i32_0 = arith.constant 0 : i32
    %c0_i32_1 = arith.constant 0 : i32
    %c0_i32_2 = arith.constant 0 : i32
    return %arg0, %c0_i32, %c0_i32_0, %c0_i32_1 : i32, i32, i32, i32
  }
}

</mosaic_0001>

<llo_original>
// kernel: tpu_custom_call.1
$region0: #{tpu_custom_call.1}
  #allocation0 [shape = 'u32[]', space=smem, size = 0x4, offset = 0x4, fixed_abs, tag = 'smem constant byte address 0x4 - core index']
  #allocation1 [shape = 'u32[144,128]{1,0:T(1,128)}', space=vmem, size = 0x12000, scoped, tag = 'internal scratch']
  #allocation2 [shape = 'bf16[18,18,4]{2,1,0:T(8,128)(2,1)}', space=vmem, size = 0x1b000, scoped, tag = 'scratch operand']
  %s0 = inlined_call_operand.vmem [shape: f32[2,16,16,4], index: 0, kind: input, shape index: {}]
  %s1 = inlined_call_operand.vmem [shape: bf16[3,3,4,4], index: 1, kind: input, shape index: {}]
  %s2 = inlined_call_operand.vmem [shape: bf16[3,3,4,4], index: 2, kind: input, shape index: {}]
  %s3 = inlined_call_operand.vmem [shape: f32[2,16,16,4], index: 3, kind: output, shape index: {}]
  %s4 = sld [smem:[#allocation0]]
  $region45: #{tpu_custom_call.1} parent=0
    _
  %s6 = ssub.s32 1, %s4
  %s7 = scalar_select 0, %s6, %s4
  loop: start=0, step=1, limit=4
  $region2: #{tpu_custom_call.1} parent=0 // loop_pre_header
    _
  $region3: #{tpu_custom_call.1} parent=0 // loop_header
    %s9 = sphi 0, %s13
    %p10 = scmp.ge.s32.totalorder %s9, 4
    %s19 = sphi 0, %s21
    %s22 = sphi 0, %s19
    %s23 = sphi 0, %s22
    %s39 = sphi 0, %s23
    %s43 = sphi 0, %s43
    %s45 = sphi 0, %s43
    %s46 = sphi 0, %s45
    %s60 = sphi 0, %s46
    %s64 = sphi 0, %s64
    %s66 = sphi 0, %s64
    %s67 = sphi 0, %s66
    %s81 = sphi 0, %s67
    %s87 = sphi 0, %s89
    %s90 = sphi 0, %s87
    %s91 = sphi 0, %s90
    %s107 = sphi 0, %s91
  $region4: #{tpu_custom_call.1} parent=0 // loop_header_branch
    %12 = sbr.rel (%p10) target = $region8
  $region5: #{tpu_custom_call.1} parent=0 // loop_body
    %s14 = ssub.s32 %s9, 1
    %s15 = ssub.s32 %s9, 2
    %s16 = sadd.s32 %s9, 1
    %s17 = ssub.s32 %s9, %s16
    %p18 = scmp.eq.s32.totalorder %s17, 0
    %s20 = sadd.s32 %s19, 1
    %s21 = scalar_select %p18, %s19, %s20
    %p24 = pneg %p18
    %p25 = scmp.eq.s32.totalorder %s9, 1
    %p26 = por %p24, %p25
    %p27 = scmp.ne.s32.totalorder %s19, %s22
    %p28 = scmp.eq.s32.totalorder %s9, 0
    %p29 = por %p27, %p28
    %p30 = scmp.ne.s32.totalorder %s19, %s22
    %p31 = scmp.eq.s32.totalorder %s14, 1
    %p32 = por %p30, %p31
    %p33 = scmp.ne.s32.totalorder %s22, %s23
    %p34 = scmp.eq.s32.totalorder %s14, 0
    %p35 = por %p33, %p34
    %p36 = scmp.ne.s32.totalorder %s22, %s23
    %p37 = scmp.eq.s32.totalorder %s15, 1
    %p38 = por %p36, %p37
    %p40 = scmp.ne.s32.totalorder %s23, %s39
    %p41 = scmp.eq.s32.totalorder %s15, 0
    %p42 = por %p40, %p41
    %s44 = sadd.s32 %s43, 1
    %p47 = scmp.eq.s32.totalorder %s9, 1
    %p48 = scmp.ne.s32.totalorder %s43, %s45
    %p49 = scmp.eq.s32.totalorder %s9, 0
    %p50 = por %p48, %p49
    %p51 = scmp.ne.s32.totalorder %s43, %s45
    %p52 = scmp.eq.s32.totalorder %s14, 1
    %p53 = por %p51, %p52
    %p54 = scmp.ne.s32.totalorder %s45, %s46
    %p55 = scmp.eq.s32.totalorder %s14, 0
    %p56 = por %p54, %p55
    %p57 = scmp.ne.s32.totalorder %s45, %s46
    %p58 = scmp.eq.s32.totalorder %s15, 1
    %p59 = por %p57, %p58
    %p61 = scmp.ne.s32.totalorder %s46, %s60
    %p62 = scmp.eq.s32.totalorder %s15, 0
    %p63 = por %p61, %p62
    %s65 = sadd.s32 %s64, 1
    %p68 = scmp.eq.s32.totalorder %s9, 1
    %p69 = scmp.ne.s32.totalorder %s64, %s66
    %p70 = scmp.eq.s32.totalorder %s9, 0
    %p71 = por %p69, %p70
    %p72 = scmp.ne.s32.totalorder %s64, %s66
    %p73 = scmp.eq.s32.totalorder %s14, 1
    %p74 = por %p72, %p73
    %p75 = scmp.ne.s32.totalorder %s66, %s67
    %p76 = scmp.eq.s32.totalorder %s14, 0
    %p77 = por %p75, %p76
    %p78 = scmp.ne.s32.totalorder %s66, %s67
    %p79 = scmp.eq.s32.totalorder %s15, 1
    %p80 = por %p78, %p79
    %p82 = scmp.ne.s32.totalorder %s67, %s81
    %p83 = scmp.eq.s32.totalorder %s15, 0
    %p84 = por %p82, %p83
    %s85 = ssub.s32 %s9, %s16
    %p86 = scmp.eq.s32.totalorder %s85, 0
    %s88 = sadd.s32 %s87, 1
    %s89 = scalar_select %p86, %s87, %s88
    %p92 = pneg %p86
    %p93 = scmp.eq.s32.totalorder %s9, 1
    %p94 = por %p92, %p93
    %p95 = scmp.ne.s32.totalorder %s87, %s90
    %p96 = scmp.eq.s32.totalorder %s9, 0
    %p97 = por %p95, %p96
    %p98 = scmp.ne.s32.totalorder %s87, %s90
    %p99 = scmp.eq.s32.totalorder %s14, 1
    %p100 = por %p98, %p99
    %p101 = scmp.ne.s32.totalorder %s90, %s91
    %p102 = scmp.eq.s32.totalorder %s14, 0
    %p103 = por %p101, %p102
    %p104 = scmp.ne.s32.totalorder %s90, %s91
    %p105 = scmp.eq.s32.totalorder %s15, 1
    %p106 = por %p104, %p105
    %p108 = scmp.ne.s32.totalorder %s91, %s107
    %p109 = scmp.eq.s32.totalorder %s15, 0
    %p110 = por %p108, %p109
    %p111 = scmp.le.s32.totalorder 1, %s9
    %p112 = scmp.lt.s32.totalorder %s9, 3
    %p113 = pnand %p111, %p112
    %p114 = pneg %p113
    // Predicated region
    $region9: #{tpu_custom_call.1} parent=5 // pred_check
      _
    $region10: #{tpu_custom_call.1} parent=5 // pred_check_branch
      %116 = sbr.rel (%p113) target = $region12
    $region11: #{tpu_custom_call.1} parent=5 // pred_region
      %s117 = ssub.s32 %s9, 1
      // Predicated region
      $region13: #{tpu_custom_call.1} parent=11 // pred_check
        %p118 = pneg %p56
      $region14: #{tpu_custom_call.1} parent=11 // pred_check_branch
        %120 = sbr.rel (%p118) target = $region16
      $region15: #{tpu_custom_call.1} parent=11 // pred_region
        _
      $region16: #{tpu_custom_call.1} parent=11 // pred_fallthru
        _
      // Predicated region
      $region17: #{tpu_custom_call.1} parent=11 // pred_check
        %p121 = pneg %p77
      $region18: #{tpu_custom_call.1} parent=11 // pred_check_branch
        %123 = sbr.rel (%p121) target = $region20
      $region19: #{tpu_custom_call.1} parent=11 // pred_region
        _
      $region20: #{tpu_custom_call.1} parent=11 // pred_fallthru
        _
    $region12: #{tpu_custom_call.1} parent=5 // pred_fallthru
      _
    %p124 = scmp.lt.s32.totalorder %s9, 2
    // Predicated region
    $region21: #{tpu_custom_call.1} parent=5 // pred_check
      %p125 = pneg %p124
    $region22: #{tpu_custom_call.1} parent=5 // pred_check_branch
      %127 = sbr.rel (%p125) target = $region24
    $region23: #{tpu_custom_call.1} parent=5 // pred_region
      // Predicated region
      $region25: #{tpu_custom_call.1} parent=23 // pred_check
        %p128 = pneg %p29
      $region26: #{tpu_custom_call.1} parent=23 // pred_check_branch
        %130 = sbr.rel (%p128) target = $region28
      $region27: #{tpu_custom_call.1} parent=23 // pred_region
        %p131 = scmp.lt.s32.totalorder %s9, 1
        %s132 = scalar_select %p131, %s9, 1
        %s133 = smul.addr %s132, 32
        %s134 = smul.addr %s133, 8
        %s135 = scalar_lea.vmem %s0, %s134
      $region28: #{tpu_custom_call.1} parent=23 // pred_fallthru
        _
    $region24: #{tpu_custom_call.1} parent=5 // pred_fallthru
      _
    %p136 = scmp.le.s32.totalorder 1, %s9
    %p137 = scmp.lt.s32.totalorder %s9, 3
    %p138 = pnand %p136, %p137
    %p139 = pneg %p138
    // Predicated region
    $region29: #{tpu_custom_call.1} parent=5 // pred_check
      _
    $region30: #{tpu_custom_call.1} parent=5 // pred_check_branch
      %141 = sbr.rel (%p138) target = $region32
    $region31: #{tpu_custom_call.1} parent=5 // pred_region
      %s142 = ssub.s32 %s9, 1
      %p143 = scmp.lt.s32.totalorder %s14, 1
      %s144 = scalar_select %p143, %s14, 1
      %s145 = smul.addr %s144, 32
      %s146 = smul.addr %s145, 8
      %s147 = scalar_lea.vmem %s0, %s146
      %p148 = pneg %p35
      %p149 = pneg %p32
      %p150 = pneg %p56
      %p151 = pneg %p53
      %p152 = pneg %p77
      %p153 = pneg %p74
      %p154 = pneg %p103
      %p155 = pneg %p100
      %p156 = scmp.lt.s32.totalorder %s14, 1
      %s157 = scalar_select %p156, %s14, 1
      %s158 = smul.addr %s157, 32
      %s159 = smul.addr %s158, 8
      %s160 = scalar_lea.vmem %s3, %s159
      %p161 = scmp.lt.s32.totalorder %s14, 1
      %s162 = scalar_select %p161, %s14, 1
      %s163 = smul.addr %s162, 32
      %s164 = smul.addr %s163, 8
      %s165 = scalar_lea.vmem %s0, %s164
      %p166 = scmp.lt.s32.totalorder %s14, 1
      %s167 = scalar_select %p166, %s14, 1
      %s168 = smul.addr %s167, 32
      %s169 = smul.addr %s168, 8
      %s170 = scalar_lea.vmem %s3, %s169
      %v172 = vld [vmem:[%s165] sm:$0xff]
      %v173 = vld [vmem:[%s165 + $0x8] sm:$0xff]
      %v174 = vld [vmem:[%s165 + $0x10] sm:$0xff]
      %v175 = vld [vmem:[%s165 + $0x18] sm:$0xff]
      %v176 = vld [vmem:[%s165 + $0x20] sm:$0xff]
      %v177 = vld [vmem:[%s165 + $0x28] sm:$0xff]
      %v178 = vld [vmem:[%s165 + $0x30] sm:$0xff]
      %v179 = vld [vmem:[%s165 + $0x38] sm:$0xff]
      %v180 = vld [vmem:[%s165 + $0x40] sm:$0xff]
      %v181 = vld [vmem:[%s165 + $0x48] sm:$0xff]
      %v182 = vld [vmem:[%s165 + $0x50] sm:$0xff]
      %v183 = vld [vmem:[%s165 + $0x58] sm:$0xff]
      %v184 = vld [vmem:[%s165 + $0x60] sm:$0xff]
      %v185 = vld [vmem:[%s165 + $0x68] sm:$0xff]
      %v186 = vld [vmem:[%s165 + $0x70] sm:$0xff]
      %v187 = vld [vmem:[%s165 + $0x78] sm:$0xff]
      %v188 = vld [vmem:[%s165 + $0x80] sm:$0xff]
      %v189 = vld [vmem:[%s165 + $0x88] sm:$0xff]
      %v190 = vld [vmem:[%s165 + $0x90] sm:$0xff]
      %v191 = vld [vmem:[%s165 + $0x98] sm:$0xff]
      %v192 = vld [vmem:[%s165 + $0xa0] sm:$0xff]
      %v193 = vld [vmem:[%s165 + $0xa8] sm:$0xff]
      %v194 = vld [vmem:[%s165 + $0xb0] sm:$0xff]
      %v195 = vld [vmem:[%s165 + $0xb8] sm:$0xff]
      %v196 = vld [vmem:[%s165 + $0xc0] sm:$0xff]
      %v197 = vld [vmem:[%s165 + $0xc8] sm:$0xff]
      %v198 = vld [vmem:[%s165 + $0xd0] sm:$0xff]
      %v199 = vld [vmem:[%s165 + $0xd8] sm:$0xff]
      %v200 = vld [vmem:[%s165 + $0xe0] sm:$0xff]
      %v201 = vld [vmem:[%s165 + $0xe8] sm:$0xff]
      %v202 = vld [vmem:[%s165 + $0xf0] sm:$0xff]
      %v203 = vld [vmem:[%s165 + $0xf8] sm:$0xff]
      %v204 = vpack.c.bf16 %v173, %v172
      %v205 = vpack.c.bf16 %v175, %v174
      %v206 = vpack.c.bf16 %v177, %v176
      %v207 = vpack.c.bf16 %v179, %v178
      %v208 = vpack.c.bf16 %v181, %v180
      %v209 = vpack.c.bf16 %v183, %v182
      %v210 = vpack.c.bf16 %v185, %v184
      %v211 = vpack.c.bf16 %v187, %v186
      %v212 = vpack.c.bf16 %v189, %v188
      %v213 = vpack.c.bf16 %v191, %v190
      %v214 = vpack.c.bf16 %v193, %v192
      %v215 = vpack.c.bf16 %v195, %v194
      %v216 = vpack.c.bf16 %v197, %v196
      %v217 = vpack.c.bf16 %v199, %v198
      %v218 = vpack.c.bf16 %v201, %v200
      %v219 = vpack.c.bf16 %v203, %v202
      %v236 = vunpack.c.l.b16 %v204
      %v237 = vunpack.c.h.b16 %v204
      %v238 = vunpack.c.l.b16 %v205
      %v239 = vunpack.c.h.b16 %v205
      %v240 = vunpack.c.l.b16 %v206
      %v241 = vunpack.c.h.b16 %v206
      %v242 = vunpack.c.l.b16 %v207
      %v243 = vunpack.c.h.b16 %v207
      %v244 = vunpack.c.l.b16 %v208
      %v245 = vunpack.c.h.b16 %v208
      %v246 = vunpack.c.l.b16 %v209
      %v247 = vunpack.c.h.b16 %v209
      %v248 = vunpack.c.l.b16 %v210
      %v249 = vunpack.c.h.b16 %v210
      %v250 = vunpack.c.l.b16 %v211
      %v251 = vunpack.c.h.b16 %v211
      %v252 = vunpack.c.l.b16 %v212
      %v253 = vunpack.c.h.b16 %v212
      %v254 = vunpack.c.l.b16 %v213
      %v255 = vunpack.c.h.b16 %v213
      %v256 = vunpack.c.l.b16 %v214
      %v257 = vunpack.c.h.b16 %v214
      %v258 = vunpack.c.l.b16 %v215
      %v259 = vunpack.c.h.b16 %v215
      %v260 = vunpack.c.l.b16 %v216
      %v261 = vunpack.c.h.b16 %v216
      %v262 = vunpack.c.l.b16 %v217
      %v263 = vunpack.c.h.b16 %v217
      %v264 = vunpack.c.l.b16 %v218
      %v265 = vunpack.c.h.b16 %v218
      %v266 = vunpack.c.l.b16 %v219
      %v267 = vunpack.c.h.b16 %v219
      %v268 = vpack.c.b16 %v236, %v236
      %v269 = vpack.c.b16 %v237, %v237
      %v270 = vpack.c.b16 %v238, %v238
      %v271 = vpack.c.b16 %v239, %v239
      %v272 = vpack.c.b16 %v240, %v240
      %v273 = vpack.c.b16 %v241, %v241
      %v274 = vpack.c.b16 %v242, %v242
      %v275 = vpack.c.b16 %v243, %v243
      %v276 = vpack.c.b16 %v244, %v244
      %v277 = vpack.c.b16 %v245, %v245
      %v278 = vpack.c.b16 %v246, %v246
      %v279 = vpack.c.b16 %v247, %v247
      %v280 = vpack.c.b16 %v248, %v248
      %v281 = vpack.c.b16 %v249, %v249
      %v282 = vpack.c.b16 %v250, %v250
      %v283 = vpack.c.b16 %v251, %v251
      %v284 = vpack.c.b16 %v252, %v252
      %v285 = vpack.c.b16 %v253, %v253
      %v286 = vpack.c.b16 %v254, %v254
      %v287 = vpack.c.b16 %v255, %v255
      %v288 = vpack.c.b16 %v256, %v256
      %v289 = vpack.c.b16 %v257, %v257
      %v290 = vpack.c.b16 %v258, %v258
      %v291 = vpack.c.b16 %v259, %v259
      %v292 = vpack.c.b16 %v260, %v260
      %v293 = vpack.c.b16 %v261, %v261
      %v294 = vpack.c.b16 %v262, %v262
      %v295 = vpack.c.b16 %v263, %v263
      %v296 = vpack.c.b16 %v264, %v264
      %v297 = vpack.c.b16 %v265, %v265
      %v298 = vpack.c.b16 %v266, %v266
      %v299 = vpack.c.b16 %v267, %v267
      %vm300 = vsmask.f32 256
      %vm301 = vsmask.f32 4368
      %vm302 = vmor %vm300, %vm301
      %v304 = vshrl.u32 %v268, 16
      %v306 = vrot.slane %v304, 7
      %v307 = vshll.u32 %v268, 16
      %v309 = vor.u32 %v306, %v307
      %v310 = vrot.slane %v306, 4
      %v312 = vshrl.u32 %v269, 16
      %v314 = vrot.slane %v312, 7
      %v315 = vshll.u32 %v269, 16
      %v317 = vor.u32 %v314, %v315
      %v318 = vsel %vm302, %v310, %v317
      %v319 = vrot.slane %v314, 4
      %v321 = vshrl.u32 %v270, 16
      %v323 = vrot.slane %v321, 7
      %v324 = vshll.u32 %v270, 16
      %v326 = vor.u32 %v323, %v324
      %v327 = vrot.slane %v323, 4
      %v329 = vshrl.u32 %v271, 16
      %v331 = vrot.slane %v329, 7
      %v332 = vshll.u32 %v271, 16
      %v334 = vor.u32 %v331, %v332
      %v335 = vsel %vm302, %v327, %v334
      %v336 = vrot.slane %v331, 4
      %v338 = vshrl.u32 %v272, 16
      %v340 = vrot.slane %v338, 7
      %v341 = vshll.u32 %v272, 16
      %v343 = vor.u32 %v340, %v341
      %v344 = vrot.slane %v340, 4
      %v346 = vshrl.u32 %v273, 16
      %v348 = vrot.slane %v346, 7
      %v349 = vshll.u32 %v273, 16
      %v351 = vor.u32 %v348, %v349
      %v352 = vsel %vm302, %v344, %v351
      %v353 = vrot.slane %v348, 4
      %v355 = vshrl.u32 %v274, 16
      %v357 = vrot.slane %v355, 7
      %v358 = vshll.u32 %v274, 16
      %v360 = vor.u32 %v357, %v358
      %v361 = vrot.slane %v357, 4
      %v363 = vshrl.u32 %v275, 16
      %v365 = vrot.slane %v363, 7
      %v366 = vshll.u32 %v275, 16
      %v368 = vor.u32 %v365, %v366
      %v369 = vsel %vm302, %v361, %v368
      %v370 = vrot.slane %v365, 4
      %v372 = vshrl.u32 %v276, 16
      %v374 = vrot.slane %v372, 7
      %v375 = vshll.u32 %v276, 16
      %v377 = vor.u32 %v374, %v375
      %v378 = vrot.slane %v374, 4
      %v380 = vshrl.u32 %v277, 16
      %v382 = vrot.slane %v380, 7
      %v383 = vshll.u32 %v277, 16
      %v385 = vor.u32 %v382, %v383
      %v386 = vsel %vm302, %v378, %v385
      %v387 = vrot.slane %v382, 4
      %v389 = vshrl.u32 %v278, 16
      %v391 = vrot.slane %v389, 7
      %v392 = vshll.u32 %v278, 16
      %v394 = vor.u32 %v391, %v392
      %v395 = vrot.slane %v391, 4
      %v397 = vshrl.u32 %v279, 16
      %v399 = vrot.slane %v397, 7
      %v400 = vshll.u32 %v279, 16
      %v402 = vor.u32 %v399, %v400
      %v403 = vsel %vm302, %v395, %v402
      %v404 = vrot.slane %v399, 4
      %v406 = vshrl.u32 %v280, 16
      %v408 = vrot.slane %v406, 7
      %v409 = vshll.u32 %v280, 16
      %v411 = vor.u32 %v408, %v409
      %v412 = vrot.slane %v408, 4
      %v414 = vshrl.u32 %v281, 16
      %v416 = vrot.slane %v414, 7
      %v417 = vshll.u32 %v281, 16
      %v419 = vor.u32 %v416, %v417
      %v420 = vsel %vm302, %v412, %v419
      %v421 = vrot.slane %v416, 4
      %v423 = vshrl.u32 %v282, 16
      %v425 = vrot.slane %v423, 7
      %v426 = vshll.u32 %v282, 16
      %v428 = vor.u32 %v425, %v426
      %v429 = vrot.slane %v425, 4
      %v431 = vshrl.u32 %v283, 16
      %v433 = vrot.slane %v431, 7
      %v434 = vshll.u32 %v283, 16
      %v436 = vor.u32 %v433, %v434
      %v437 = vsel %vm302, %v429, %v436
      %v438 = vrot.slane %v433, 4
      %v440 = vshrl.u32 %v284, 16
      %v442 = vrot.slane %v440, 7
      %v443 = vshll.u32 %v284, 16
      %v445 = vor.u32 %v442, %v443
      %v446 = vrot.slane %v442, 4
      %v448 = vshrl.u32 %v285, 16
      %v450 = vrot.slane %v448, 7
      %v451 = vshll.u32 %v285, 16
      %v453 = vor.u32 %v450, %v451
      %v454 = vsel %vm302, %v446, %v453
      %v455 = vrot.slane %v450, 4
      %v457 = vshrl.u32 %v286, 16
      %v459 = vrot.slane %v457, 7
      %v460 = vshll.u32 %v286, 16
      %v462 = vor.u32 %v459, %v460
      %v463 = vrot.slane %v459, 4
      %v465 = vshrl.u32 %v287, 16
      %v467 = vrot.slane %v465, 7
      %v468 = vshll.u32 %v287, 16
      %v470 = vor.u32 %v467, %v468
      %v471 = vsel %vm302, %v463, %v470
      %v472 = vrot.slane %v467, 4
      %v474 = vshrl.u32 %v288, 16
      %v476 = vrot.slane %v474, 7
      %v477 = vshll.u32 %v288, 16
      %v479 = vor.u32 %v476, %v477
      %v480 = vrot.slane %v476, 4
      %v482 = vshrl.u32 %v289, 16
      %v484 = vrot.slane %v482, 7
      %v485 = vshll.u32 %v289, 16
      %v487 = vor.u32 %v484, %v485
      %v488 = vsel %vm302, %v480, %v487
      %v489 = vrot.slane %v484, 4
      %v491 = vshrl.u32 %v290, 16
      %v493 = vrot.slane %v491, 7
      %v494 = vshll.u32 %v290, 16
      %v496 = vor.u32 %v493, %v494
      %v497 = vrot.slane %v493, 4
      %v499 = vshrl.u32 %v291, 16
      %v501 = vrot.slane %v499, 7
      %v502 = vshll.u32 %v291, 16
      %v504 = vor.u32 %v501, %v502
      %v505 = vsel %vm302, %v497, %v504
      %v506 = vrot.slane %v501, 4
      %v508 = vshrl.u32 %v292, 16
      %v510 = vrot.slane %v508, 7
      %v511 = vshll.u32 %v292, 16
      %v513 = vor.u32 %v510, %v511
      %v514 = vrot.slane %v510, 4
      %v516 = vshrl.u32 %v293, 16
      %v518 = vrot.slane %v516, 7
      %v519 = vshll.u32 %v293, 16
      %v521 = vor.u32 %v518, %v519
      %v522 = vsel %vm302, %v514, %v521
      %v523 = vrot.slane %v518, 4
      %v525 = vshrl.u32 %v294, 16
      %v527 = vrot.slane %v525, 7
      %v528 = vshll.u32 %v294, 16
      %v530 = vor.u32 %v527, %v528
      %v531 = vrot.slane %v527, 4
      %v533 = vshrl.u32 %v295, 16
      %v535 = vrot.slane %v533, 7
      %v536 = vshll.u32 %v295, 16
      %v538 = vor.u32 %v535, %v536
      %v539 = vsel %vm302, %v531, %v538
      %v540 = vrot.slane %v535, 4
      %v542 = vshrl.u32 %v296, 16
      %v544 = vrot.slane %v542, 7
      %v545 = vshll.u32 %v296, 16
      %v547 = vor.u32 %v544, %v545
      %v548 = vrot.slane %v544, 4
      %v550 = vshrl.u32 %v297, 16
      %v552 = vrot.slane %v550, 7
      %v553 = vshll.u32 %v297, 16
      %v555 = vor.u32 %v552, %v553
      %v556 = vsel %vm302, %v548, %v555
      %v557 = vrot.slane %v552, 4
      %v559 = vshrl.u32 %v298, 16
      %v561 = vrot.slane %v559, 7
      %v562 = vshll.u32 %v298, 16
      %v564 = vor.u32 %v561, %v562
      %v565 = vrot.slane %v561, 4
      %v567 = vshrl.u32 %v299, 16
      %v569 = vrot.slane %v567, 7
      %v570 = vshll.u32 %v299, 16
      %v572 = vor.u32 %v569, %v570
      %v573 = vsel %vm302, %v565, %v572
      %v574 = vrot.slane %v569, 4
      %s623 = scalar_lea.vmem [#allocation2], 12
      %vm624 = vcmask 27648
      %vm625 = vsmask.f32 7938
      %vm626 = vmand %vm624, %vm625
      %v627 = vld [vmem:[%s623] sm:$0xf]
      %v628 = vsel %vm626, %v309, %v627
      %629 = vst [vmem:[%s623] sm:$0xf] %v628
      %vm630 = vcmask 27648
      %631 = vst.msk [vmem:[%s623 + $0x4] sm:$0xf] %vm630, %v318
      %vm632 = vcmask 24576
      %vm633 = vmand %vm632, %vm300
      %v634 = vld [vmem:[%s623 + $0x8] sm:$0x1]
      %v635 = vsel %vm633, %v319, %v634
      %636 = vst [vmem:[%s623 + $0x8] sm:$0x1] %v635
      %v637 = vld [vmem:[%s623 + $0xc] sm:$0xf]
      %v638 = vsel %vm626, %v326, %v637
      %639 = vst [vmem:[%s623 + $0xc] sm:$0xf] %v638
      %640 = vst.msk [vmem:[%s623 + $0x10] sm:$0xf] %vm630, %v335
      %v641 = vld [vmem:[%s623 + $0x14] sm:$0x1]
      %v642 = vsel %vm633, %v336, %v641
      %643 = vst [vmem:[%s623 + $0x14] sm:$0x1] %v642
      %v644 = vld [vmem:[%s623 + $0x18] sm:$0xf]
      %v645 = vsel %vm626, %v343, %v644
      %646 = vst [vmem:[%s623 + $0x18] sm:$0xf] %v645
      %647 = vst.msk [vmem:[%s623 + $0x1c] sm:$0xf] %vm630, %v352
      %v648 = vld [vmem:[%s623 + $0x20] sm:$0x1]
      %v649 = vsel %vm633, %v353, %v648
      %650 = vst [vmem:[%s623 + $0x20] sm:$0x1] %v649
      %v651 = vld [vmem:[%s623 + $0x24] sm:$0xf]
      %v652 = vsel %vm626, %v360, %v651
      %653 = vst [vmem:[%s623 + $0x24] sm:$0xf] %v652
      %654 = vst.msk [vmem:[%s623 + $0x28] sm:$0xf] %vm630, %v369
      %v655 = vld [vmem:[%s623 + $0x2c] sm:$0x1]
      %v656 = vsel %vm633, %v370, %v655
      %657 = vst [vmem:[%s623 + $0x2c] sm:$0x1] %v656
      %v658 = vld [vmem:[%s623 + $0x30] sm:$0xf]
      %v659 = vsel %vm626, %v377, %v658
      %660 = vst [vmem:[%s623 + $0x30] sm:$0xf] %v659
      %661 = vst.msk [vmem:[%s623 + $0x34] sm:$0xf] %vm630, %v386
      %v662 = vld [vmem:[%s623 + $0x38] sm:$0x1]
      %v663 = vsel %vm633, %v387, %v662
      %664 = vst [vmem:[%s623 + $0x38] sm:$0x1] %v663
      %v665 = vld [vmem:[%s623 + $0x3c] sm:$0xf]
      %v666 = vsel %vm626, %v394, %v665
      %667 = vst [vmem:[%s623 + $0x3c] sm:$0xf] %v666
      %668 = vst.msk [vmem:[%s623 + $0x40] sm:$0xf] %vm630, %v403
      %v669 = vld [vmem:[%s623 + $0x44] sm:$0x1]
      %v670 = vsel %vm633, %v404, %v669
      %671 = vst [vmem:[%s623 + $0x44] sm:$0x1] %v670
      %v672 = vld [vmem:[%s623 + $0x48] sm:$0xf]
      %v673 = vsel %vm626, %v411, %v672
      %674 = vst [vmem:[%s623 + $0x48] sm:$0xf] %v673
      %675 = vst.msk [vmem:[%s623 + $0x4c] sm:$0xf] %vm630, %v420
      %v676 = vld [vmem:[%s623 + $0x50] sm:$0x1]
      %v677 = vsel %vm633, %v421, %v676
      %678 = vst [vmem:[%s623 + $0x50] sm:$0x1] %v677
      %v679 = vld [vmem:[%s623 + $0x54] sm:$0xf]
      %v680 = vsel %vm626, %v428, %v679
      %681 = vst [vmem:[%s623 + $0x54] sm:$0xf] %v680
      %682 = vst.msk [vmem:[%s623 + $0x58] sm:$0xf] %vm630, %v437
      %v683 = vld [vmem:[%s623 + $0x5c] sm:$0x1]
      %v684 = vsel %vm633, %v438, %v683
      %685 = vst [vmem:[%s623 + $0x5c] sm:$0x1] %v684
      %v686 = vld [vmem:[%s623 + $0x60] sm:$0xf]
      %v687 = vsel %vm626, %v445, %v686
      %688 = vst [vmem:[%s623 + $0x60] sm:$0xf] %v687
      %689 = vst.msk [vmem:[%s623 + $0x64] sm:$0xf] %vm630, %v454
      %v690 = vld [vmem:[%s623 + $0x68] sm:$0x1]
      %v691 = vsel %vm633, %v455, %v690
      %692 = vst [vmem:[%s623 + $0x68] sm:$0x1] %v691
      %v693 = vld [vmem:[%s623 + $0x6c] sm:$0xf]
      %v694 = vsel %vm626, %v462, %v693
      %695 = vst [vmem:[%s623 + $0x6c] sm:$0xf] %v694
      %696 = vst.msk [vmem:[%s623 + $0x70] sm:$0xf] %vm630, %v471
      %v697 = vld [vmem:[%s623 + $0x74] sm:$0x1]
      %v698 = vsel %vm633, %v472, %v697
      %699 = vst [vmem:[%s623 + $0x74] sm:$0x1] %v698
      %v700 = vld [vmem:[%s623 + $0x78] sm:$0xf]
      %v701 = vsel %vm626, %v479, %v700
      %702 = vst [vmem:[%s623 + $0x78] sm:$0xf] %v701
      %703 = vst.msk [vmem:[%s623 + $0x7c] sm:$0xf] %vm630, %v488
      %v704 = vld [vmem:[%s623 + $0x80] sm:$0x1]
      %v705 = vsel %vm633, %v489, %v704
      %706 = vst [vmem:[%s623 + $0x80] sm:$0x1] %v705
      %v707 = vld [vmem:[%s623 + $0x84] sm:$0xf]
      %v708 = vsel %vm626, %v496, %v707
      %709 = vst [vmem:[%s623 + $0x84] sm:$0xf] %v708
      %710 = vst.msk [vmem:[%s623 + $0x88] sm:$0xf] %vm630, %v505
      %v711 = vld [vmem:[%s623 + $0x8c] sm:$0x1]
      %v712 = vsel %vm633, %v506, %v711
      %713 = vst [vmem:[%s623 + $0x8c] sm:$0x1] %v712
      %v714 = vld [vmem:[%s623 + $0x90] sm:$0xf]
      %v715 = vsel %vm626, %v513, %v714
      %716 = vst [vmem:[%s623 + $0x90] sm:$0xf] %v715
      %717 = vst.msk [vmem:[%s623 + $0x94] sm:$0xf] %vm630, %v522
      %v718 = vld [vmem:[%s623 + $0x98] sm:$0x1]
      %v719 = vsel %vm633, %v523, %v718
      %720 = vst [vmem:[%s623 + $0x98] sm:$0x1] %v719
      %v721 = vld [vmem:[%s623 + $0x9c] sm:$0xf]
      %v722 = vsel %vm626, %v530, %v721
      %723 = vst [vmem:[%s623 + $0x9c] sm:$0xf] %v722
      %724 = vst.msk [vmem:[%s623 + $0xa0] sm:$0xf] %vm630, %v539
      %v725 = vld [vmem:[%s623 + $0xa4] sm:$0x1]
      %v726 = vsel %vm633, %v540, %v725
      %727 = vst [vmem:[%s623 + $0xa4] sm:$0x1] %v726
      %v728 = vld [vmem:[%s623 + $0xa8] sm:$0xf]
      %v729 = vsel %vm626, %v547, %v728
      %730 = vst [vmem:[%s623 + $0xa8] sm:$0xf] %v729
      %731 = vst.msk [vmem:[%s623 + $0xac] sm:$0xf] %vm630, %v556
      %v732 = vld [vmem:[%s623 + $0xb0] sm:$0x1]
      %v733 = vsel %vm633, %v557, %v732
      %734 = vst [vmem:[%s623 + $0xb0] sm:$0x1] %v733
      %v735 = vld [vmem:[%s623 + $0xb4] sm:$0xf]
      %v736 = vsel %vm626, %v564, %v735
      %737 = vst [vmem:[%s623 + $0xb4] sm:$0xf] %v736
      %738 = vst.msk [vmem:[%s623 + $0xb8] sm:$0xf] %vm630, %v573
      %v739 = vld [vmem:[%s623 + $0xbc] sm:$0x1]
      %v740 = vsel %vm633, %v574, %v739
      %741 = vst [vmem:[%s623 + $0xbc] sm:$0x1] %v740
      %s742 = scalar_lea.vmem [#allocation2], 24
      %v743 = vld [vmem:[%s742] sm:$0xf]
      %v744 = vld [vmem:[%s742 + $0x4] sm:$0xf]
      %v745 = vld [vmem:[%s742 + $0x8] sm:$0x1]
      %v746 = vld [vmem:[#allocation2] sm:$0xf]
      %v747 = vsel %vm626, %v743, %v746
      %748 = vst [vmem:[#allocation2] sm:$0xf] %v747
      %749 = vst.msk [vmem:[#allocation2 + $0x4] sm:$0xf] %vm630, %v744
      %v750 = vld [vmem:[#allocation2 + $0x8] sm:$0x1]
      %v751 = vsel %vm633, %v745, %v750
      %752 = vst [vmem:[#allocation2 + $0x8] sm:$0x1] %v751
      %s753 = scalar_lea.vmem [#allocation2], 180
      %v754 = vld [vmem:[%s753] sm:$0xf]
      %v755 = vld [vmem:[%s753 + $0x4] sm:$0xf]
      %v756 = vld [vmem:[%s753 + $0x8] sm:$0x1]
      %s757 = scalar_lea.vmem [#allocation2], 204
      %v758 = vld [vmem:[%s757] sm:$0xf]
      %v759 = vsel %vm626, %v754, %v758
      %760 = vst [vmem:[%s757] sm:$0xf] %v759
      %761 = vst.msk [vmem:[%s757 + $0x4] sm:$0xf] %vm630, %v755
      %v762 = vld [vmem:[%s757 + $0x8] sm:$0x1]
      %v763 = vsel %vm633, %v756, %v762
      %764 = vst [vmem:[%s757 + $0x8] sm:$0x1] %v763
      %v765 = vld [vmem:[#allocation2] sm:$0x2]
      %v766 = vld [vmem:[#allocation2 + $0xc] sm:$0x2]
      %v767 = vld [vmem:[#allocation2 + $0x18] sm:$0x2]
      %v768 = vld [vmem:[#allocation2 + $0x24] sm:$0x2]
      %v769 = vld [vmem:[#allocation2 + $0x30] sm:$0x2]
      %v770 = vld [vmem:[#allocation2 + $0x3c] sm:$0x2]
      %v771 = vld [vmem:[#allocation2 + $0x48] sm:$0x2]
      %v772 = vld [vmem:[#allocation2 + $0x54] sm:$0x2]
      %v773 = vld [vmem:[#allocation2 + $0x60] sm:$0x2]
      %v774 = vld [vmem:[#allocation2 + $0x6c] sm:$0x2]
      %v775 = vld [vmem:[#allocation2 + $0x78] sm:$0x2]
      %v776 = vld [vmem:[#allocation2 + $0x84] sm:$0x2]
      %v777 = vld [vmem:[#allocation2 + $0x90] sm:$0x2]
      %v778 = vld [vmem:[#allocation2 + $0x9c] sm:$0x2]
      %v779 = vld [vmem:[#allocation2 + $0xa8] sm:$0x2]
      %v780 = vld [vmem:[#allocation2 + $0xb4] sm:$0x2]
      %v781 = vld [vmem:[#allocation2 + $0xc0] sm:$0x2]
      %v782 = vld [vmem:[#allocation2 + $0xcc] sm:$0x2]
      %v801 = vrot.slane %v765, 5
      %v802 = vrot.slane %v801, 4
      %v803 = vrot.slane %v766, 5
      %v804 = vrot.slane %v803, 4
      %v805 = vrot.slane %v767, 5
      %v806 = vrot.slane %v805, 4
      %v807 = vrot.slane %v768, 5
      %v808 = vrot.slane %v807, 4
      %v809 = vrot.slane %v769, 5
      %v810 = vrot.slane %v809, 4
      %v811 = vrot.slane %v770, 5
      %v812 = vrot.slane %v811, 4
      %v813 = vrot.slane %v771, 5
      %v814 = vrot.slane %v813, 4
      %v815 = vrot.slane %v772, 5
      %v816 = vrot.slane %v815, 4
      %v817 = vrot.slane %v773, 5
      %v818 = vrot.slane %v817, 4
      %v819 = vrot.slane %v774, 5
      %v820 = vrot.slane %v819, 4
      %v821 = vrot.slane %v775, 5
      %v822 = vrot.slane %v821, 4
      %v823 = vrot.slane %v776, 5
      %v824 = vrot.slane %v823, 4
      %v825 = vrot.slane %v777, 5
      %v826 = vrot.slane %v825, 4
      %v827 = vrot.slane %v778, 5
      %v828 = vrot.slane %v827, 4
      %v829 = vrot.slane %v779, 5
      %v830 = vrot.slane %v829, 4
      %v831 = vrot.slane %v780, 5
      %v832 = vrot.slane %v831, 4
      %v833 = vrot.slane %v781, 5
      %v834 = vrot.slane %v833, 4
      %v835 = vrot.slane %v782, 5
      %v836 = vrot.slane %v835, 4
      %v855 = vld [vmem:[#allocation2] sm:$0x1]
      %v856 = vsel %vm633, %v802, %v855
      %857 = vst [vmem:[#allocation2] sm:$0x1] %v856
      %v858 = vld [vmem:[#allocation2 + $0xc] sm:$0x1]
      %v859 = vsel %vm633, %v804, %v858
      %860 = vst [vmem:[#allocation2 + $0xc] sm:$0x1] %v859
      %v861 = vld [vmem:[#allocation2 + $0x18] sm:$0x1]
      %v862 = vsel %vm633, %v806, %v861
      %863 = vst [vmem:[#allocation2 + $0x18] sm:$0x1] %v862
      %v864 = vld [vmem:[#allocation2 + $0x24] sm:$0x1]
      %v865 = vsel %vm633, %v808, %v864
      %866 = vst [vmem:[#allocation2 + $0x24] sm:$0x1] %v865
      %v867 = vld [vmem:[#allocation2 + $0x30] sm:$0x1]
      %v868 = vsel %vm633, %v810, %v867
      %869 = vst [vmem:[#allocation2 + $0x30] sm:$0x1] %v868
      %v870 = vld [vmem:[#allocation2 + $0x3c] sm:$0x1]
      %v871 = vsel %vm633, %v812, %v870
      %872 = vst [vmem:[#allocation2 + $0x3c] sm:$0x1] %v871
      %v873 = vld [vmem:[#allocation2 + $0x48] sm:$0x1]
      %v874 = vsel %vm633, %v814, %v873
      %875 = vst [vmem:[#allocation2 + $0x48] sm:$0x1] %v874
      %v876 = vld [vmem:[#allocation2 + $0x54] sm:$0x1]
      %v877 = vsel %vm633, %v816, %v876
      %878 = vst [vmem:[#allocation2 + $0x54] sm:$0x1] %v877
      %v879 = vld [vmem:[#allocation2 + $0x60] sm:$0x1]
      %v880 = vsel %vm633, %v818, %v879
      %881 = vst [vmem:[#allocation2 + $0x60] sm:$0x1] %v880
      %v882 = vld [vmem:[#allocation2 + $0x6c] sm:$0x1]
      %v883 = vsel %vm633, %v820, %v882
      %884 = vst [vmem:[#allocation2 + $0x6c] sm:$0x1] %v883
      %v885 = vld [vmem:[#allocation2 + $0x78] sm:$0x1]
      %v886 = vsel %vm633, %v822, %v885
      %887 = vst [vmem:[#allocation2 + $0x78] sm:$0x1] %v886
      %v888 = vld [vmem:[#allocation2 + $0x84] sm:$0x1]
      %v889 = vsel %vm633, %v824, %v888
      %890 = vst [vmem:[#allocation2 + $0x84] sm:$0x1] %v889
      %v891 = vld [vmem:[#allocation2 + $0x90] sm:$0x1]
      %v892 = vsel %vm633, %v826, %v891
      %893 = vst [vmem:[#allocation2 + $0x90] sm:$0x1] %v892
      %v894 = vld [vmem:[#allocation2 + $0x9c] sm:$0x1]
      %v895 = vsel %vm633, %v828, %v894
      %896 = vst [vmem:[#allocation2 + $0x9c] sm:$0x1] %v895
      %v897 = vld [vmem:[#allocation2 + $0xa8] sm:$0x1]
      %v898 = vsel %vm633, %v830, %v897
      %899 = vst [vmem:[#allocation2 + $0xa8] sm:$0x1] %v898
      %v900 = vld [vmem:[#allocation2 + $0xb4] sm:$0x1]
      %v901 = vsel %vm633, %v832, %v900
      %902 = vst [vmem:[#allocation2 + $0xb4] sm:$0x1] %v901
      %v903 = vld [vmem:[#allocation2 + $0xc0] sm:$0x1]
      %v904 = vsel %vm633, %v834, %v903
      %905 = vst [vmem:[#allocation2 + $0xc0] sm:$0x1] %v904
      %v906 = vld [vmem:[#allocation2 + $0xcc] sm:$0x1]
      %v907 = vsel %vm633, %v836, %v906
      %908 = vst [vmem:[#allocation2 + $0xcc] sm:$0x1] %v907
      %v909 = vld [vmem:[#allocation2 + $0x4] sm:$0x8]
      %v910 = vld [vmem:[#allocation2 + $0x10] sm:$0x8]
      %v911 = vld [vmem:[#allocation2 + $0x1c] sm:$0x8]
      %v912 = vld [vmem:[#allocation2 + $0x28] sm:$0x8]
      %v913 = vld [vmem:[#allocation2 + $0x34] sm:$0x8]
      %v914 = vld [vmem:[#allocation2 + $0x40] sm:$0x8]
      %v915 = vld [vmem:[#allocation2 + $0x4c] sm:$0x8]
      %v916 = vld [vmem:[#allocation2 + $0x58] sm:$0x8]
      %v917 = vld [vmem:[#allocation2 + $0x64] sm:$0x8]
      %v918 = vld [vmem:[#allocation2 + $0x70] sm:$0x8]
      %v919 = vld [vmem:[#allocation2 + $0x7c] sm:$0x8]
      %v920 = vld [vmem:[#allocation2 + $0x88] sm:$0x8]
      %v921 = vld [vmem:[#allocation2 + $0x94] sm:$0x8]
      %v922 = vld [vmem:[#allocation2 + $0xa0] sm:$0x8]
      %v923 = vld [vmem:[#allocation2 + $0xac] sm:$0x8]
      %v924 = vld [vmem:[#allocation2 + $0xb8] sm:$0x8]
      %v925 = vld [vmem:[#allocation2 + $0xc4] sm:$0x8]
      %v926 = vld [vmem:[#allocation2 + $0xd0] sm:$0x8]
      %v945 = vrot.slane %v909, 7
      %v946 = vrot.slane %v945, 4
      %v947 = vrot.slane %v910, 7
      %v948 = vrot.slane %v947, 4
      %v949 = vrot.slane %v911, 7
      %v950 = vrot.slane %v949, 4
      %v951 = vrot.slane %v912, 7
      %v952 = vrot.slane %v951, 4
      %v953 = vrot.slane %v913, 7
      %v954 = vrot.slane %v953, 4
      %v955 = vrot.slane %v914, 7
      %v956 = vrot.slane %v955, 4
      %v957 = vrot.slane %v915, 7
      %v958 = vrot.slane %v957, 4
      %v959 = vrot.slane %v916, 7
      %v960 = vrot.slane %v959, 4
      %v961 = vrot.slane %v917, 7
      %v962 = vrot.slane %v961, 4
      %v963 = vrot.slane %v918, 7
      %v964 = vrot.slane %v963, 4
      %v965 = vrot.slane %v919, 7
      %v966 = vrot.slane %v965, 4
      %v967 = vrot.slane %v920, 7
      %v968 = vrot.slane %v967, 4
      %v969 = vrot.slane %v921, 7
      %v970 = vrot.slane %v969, 4
      %v971 = vrot.slane %v922, 7
      %v972 = vrot.slane %v971, 4
      %v973 = vrot.slane %v923, 7
      %v974 = vrot.slane %v973, 4
      %v975 = vrot.slane %v924, 7
      %v976 = vrot.slane %v975, 4
      %v977 = vrot.slane %v925, 7
      %v978 = vrot.slane %v977, 4
      %v979 = vrot.slane %v926, 7
      %v980 = vrot.slane %v979, 4
      %vm999 = vmand %vm632, %vm625
      %v1000 = vld [vmem:[#allocation2 + $0x8] sm:$0x1]
      %v1001 = vsel %vm999, %v946, %v1000
      %1002 = vst [vmem:[#allocation2 + $0x8] sm:$0x1] %v1001
      %v1003 = vld [vmem:[#allocation2 + $0x14] sm:$0x1]
      %v1004 = vsel %vm999, %v948, %v1003
      %1005 = vst [vmem:[#allocation2 + $0x14] sm:$0x1] %v1004
      %v1006 = vld [vmem:[#allocation2 + $0x20] sm:$0x1]
      %v1007 = vsel %vm999, %v950, %v1006
      %1008 = vst [vmem:[#allocation2 + $0x20] sm:$0x1] %v1007
      %v1009 = vld [vmem:[#allocation2 + $0x2c] sm:$0x1]
      %v1010 = vsel %vm999, %v952, %v1009
      %1011 = vst [vmem:[#allocation2 + $0x2c] sm:$0x1] %v1010
      %v1012 = vld [vmem:[#allocation2 + $0x38] sm:$0x1]
      %v1013 = vsel %vm999, %v954, %v1012
      %1014 = vst [vmem:[#allocation2 + $0x38] sm:$0x1] %v1013
      %v1015 = vld [vmem:[#allocation2 + $0x44] sm:$0x1]
      %v1016 = vsel %vm999, %v956, %v1015
      %1017 = vst [vmem:[#allocation2 + $0x44] sm:$0x1] %v1016
      %v1018 = vld [vmem:[#allocation2 + $0x50] sm:$0x1]
      %v1019 = vsel %vm999, %v958, %v1018
      %1020 = vst [vmem:[#allocation2 + $0x50] sm:$0x1] %v1019
      %v1021 = vld [vmem:[#allocation2 + $0x5c] sm:$0x1]
      %v1022 = vsel %vm999, %v960, %v1021
      %1023 = vst [vmem:[#allocation2 + $0x5c] sm:$0x1] %v1022
      %v1024 = vld [vmem:[#allocation2 + $0x68] sm:$0x1]
      %v1025 = vsel %vm999, %v962, %v1024
      %1026 = vst [vmem:[#allocation2 + $0x68] sm:$0x1] %v1025
      %v1027 = vld [vmem:[#allocation2 + $0x74] sm:$0x1]
      %v1028 = vsel %vm999, %v964, %v1027
      %1029 = vst [vmem:[#allocation2 + $0x74] sm:$0x1] %v1028
      %v1030 = vld [vmem:[#allocation2 + $0x80] sm:$0x1]
      %v1031 = vsel %vm999, %v966, %v1030
      %1032 = vst [vmem:[#allocation2 + $0x80] sm:$0x1] %v1031
      %v1033 = vld [vmem:[#allocation2 + $0x8c] sm:$0x1]
      %v1034 = vsel %vm999, %v968, %v1033
      %1035 = vst [vmem:[#allocation2 + $0x8c] sm:$0x1] %v1034
      %v1036 = vld [vmem:[#allocation2 + $0x98] sm:$0x1]
      %v1037 = vsel %vm999, %v970, %v1036
      %1038 = vst [vmem:[#allocation2 + $0x98] sm:$0x1] %v1037
      %v1039 = vld [vmem:[#allocation2 + $0xa4] sm:$0x1]
      %v1040 = vsel %vm999, %v972, %v1039
      %1041 = vst [vmem:[#allocation2 + $0xa4] sm:$0x1] %v1040
      %v1042 = vld [vmem:[#allocation2 + $0xb0] sm:$0x1]
      %v1043 = vsel %vm999, %v974, %v1042
      %1044 = vst [vmem:[#allocation2 + $0xb0] sm:$0x1] %v1043
      %v1045 = vld [vmem:[#allocation2 + $0xbc] sm:$0x1]
      %v1046 = vsel %vm999, %v976, %v1045
      %1047 = vst [vmem:[#allocation2 + $0xbc] sm:$0x1] %v1046
      %v1048 = vld [vmem:[#allocation2 + $0xc8] sm:$0x1]
      %v1049 = vsel %vm999, %v978, %v1048
      %1050 = vst [vmem:[#allocation2 + $0xc8] sm:$0x1] %v1049
      %v1051 = vld [vmem:[#allocation2 + $0xd4] sm:$0x1]
      %v1052 = vsel %vm999, %v980, %v1051
      %1053 = vst [vmem:[#allocation2 + $0xd4] sm:$0x1] %v1052
      %v1054 = vld [vmem:[#allocation2] sm:$0xf]
      %v1055 = vld [vmem:[#allocation2 + $0x4] sm:$0xf]
      %v1056 = vld [vmem:[#allocation2 + $0xc] sm:$0xf]
      %v1057 = vld [vmem:[#allocation2 + $0x10] sm:$0xf]
      %v1058 = vld [vmem:[#allocation2 + $0x18] sm:$0xf]
      %v1059 = vld [vmem:[#allocation2 + $0x1c] sm:$0xf]
      %v1060 = vld [vmem:[#allocation2 + $0x24] sm:$0xf]
      %v1061 = vld [vmem:[#allocation2 + $0x28] sm:$0xf]
      %v1062 = vld [vmem:[#allocation2 + $0x30] sm:$0xf]
      %v1063 = vld [vmem:[#allocation2 + $0x34] sm:$0xf]
      %v1064 = vld [vmem:[#allocation2 + $0x3c] sm:$0xf]
      %v1065 = vld [vmem:[#allocation2 + $0x40] sm:$0xf]
      %v1066 = vld [vmem:[#allocation2 + $0x48] sm:$0xf]
      %v1067 = vld [vmem:[#allocation2 + $0x4c] sm:$0xf]
      %v1068 = vld [vmem:[#allocation2 + $0x54] sm:$0xf]
      %v1069 = vld [vmem:[#allocation2 + $0x58] sm:$0xf]
      %v1070 = vld [vmem:[#allocation2 + $0x60] sm:$0xf]
      %v1071 = vld [vmem:[#allocation2 + $0x64] sm:$0xf]
      %v1072 = vld [vmem:[#allocation2 + $0x6c] sm:$0xf]
      %v1073 = vld [vmem:[#allocation2 + $0x70] sm:$0xf]
      %v1074 = vld [vmem:[#allocation2 + $0x78] sm:$0xf]
      %v1075 = vld [vmem:[#allocation2 + $0x7c] sm:$0xf]
      %v1076 = vld [vmem:[#allocation2 + $0x84] sm:$0xf]
      %v1077 = vld [vmem:[#allocation2 + $0x88] sm:$0xf]
      %v1078 = vld [vmem:[#allocation2 + $0x90] sm:$0xf]
      %v1079 = vld [vmem:[#allocation2 + $0x94] sm:$0xf]
      %v1080 = vld [vmem:[#allocation2 + $0x9c] sm:$0xf]
      %v1081 = vld [vmem:[#allocation2 + $0xa0] sm:$0xf]
      %v1082 = vld [vmem:[#allocation2 + $0xa8] sm:$0xf]
      %v1083 = vld [vmem:[#allocation2 + $0xac] sm:$0xf]
      %v1084 = vld [vmem:[#allocation2 + $0xb4] sm:$0xf]
      %v1085 = vld [vmem:[#allocation2 + $0xb8] sm:$0xf]
      %v1086 = vld [vmem:[%s1] sm:$0x3]
      %v1087 = vld [vmem:[#allocation2 + $0x8] sm:$0x1]
      %v1088 = vld [vmem:[#allocation2 + $0x14] sm:$0x1]
      %v1089 = vld [vmem:[#allocation2 + $0x20] sm:$0x1]
      %v1090 = vld [vmem:[#allocation2 + $0x2c] sm:$0x1]
      %v1091 = vld [vmem:[#allocation2 + $0x38] sm:$0x1]
      %v1092 = vld [vmem:[#allocation2 + $0x44] sm:$0x1]
      %v1093 = vld [vmem:[#allocation2 + $0x50] sm:$0x1]
      %v1094 = vld [vmem:[#allocation2 + $0x5c] sm:$0x1]
      %v1095 = vld [vmem:[#allocation2 + $0x68] sm:$0x1]
      %v1096 = vld [vmem:[#allocation2 + $0x74] sm:$0x1]
      %v1097 = vld [vmem:[#allocation2 + $0x80] sm:$0x1]
      %v1098 = vld [vmem:[#allocation2 + $0x8c] sm:$0x1]
      %v1099 = vld [vmem:[#allocation2 + $0x98] sm:$0x1]
      %v1100 = vld [vmem:[#allocation2 + $0xa4] sm:$0x1]
      %v1101 = vld [vmem:[#allocation2 + $0xb0] sm:$0x1]
      %v1102 = vld [vmem:[#allocation2 + $0xbc] sm:$0x1]
      %vm1103 = vsmask.f32 3328
      %vm1104 = vsmask.f32 7440
      %vm1105 = vmor %vm1103, %vm1104
      %v1107 = vshrl.u32 %v1054, 16
      %v1109 = vrot.slane %v1107, 4
      %v1110 = vshll.u32 %v1054, 16
      %v1112 = vrot.slane %v1110, 5
      %v1113 = vor.u32 %v1109, %v1112
      %v1114 = vrot.slane %v1113, 4
      %v1116 = vshll.u32 %v1055, 16
      %v1118 = vrot.slane %v1116, 5
      %v1119 = vsel %vm1105, %v1114, %v1118
      %v1120 = vshrl.u32 %v1055, 16
      %v1122 = vrot.slane %v1120, 4
      %v1123 = vor.u32 %v1122, %v1118
      %v1124 = vrot.slane %v1123, 4
      %v1126 = vshll.u32 %v1087, 16
      %v1128 = vrot.slane %v1126, 5
      %v1129 = vsel %vm1105, %v1124, %v1128
      %v1131 = vshrl.u32 %v1056, 16
      %v1133 = vrot.slane %v1131, 4
      %v1134 = vshll.u32 %v1056, 16
      %v1136 = vrot.slane %v1134, 5
      %v1137 = vor.u32 %v1133, %v1136
      %v1138 = vrot.slane %v1137, 4
      %v1140 = vshll.u32 %v1057, 16
      %v1142 = vrot.slane %v1140, 5
      %v1143 = vsel %vm1105, %v1138, %v1142
      %v1144 = vshrl.u32 %v1057, 16
      %v1146 = vrot.slane %v1144, 4
      %v1147 = vor.u32 %v1146, %v1142
      %v1148 = vrot.slane %v1147, 4
      %v1150 = vshll.u32 %v1088, 16
      %v1152 = vrot.slane %v1150, 5
      %v1153 = vsel %vm1105, %v1148, %v1152
      %v1155 = vshrl.u32 %v1058, 16
      %v1157 = vrot.slane %v1155, 4
      %v1158 = vshll.u32 %v1058, 16
      %v1160 = vrot.slane %v1158, 5
      %v1161 = vor.u32 %v1157, %v1160
      %v1162 = vrot.slane %v1161, 4
      %v1164 = vshll.u32 %v1059, 16
      %v1166 = vrot.slane %v1164, 5
      %v1167 = vsel %vm1105, %v1162, %v1166
      %v1168 = vshrl.u32 %v1059, 16
      %v1170 = vrot.slane %v1168, 4
      %v1171 = vor.u32 %v1170, %v1166
      %v1172 = vrot.slane %v1171, 4
      %v1174 = vshll.u32 %v1089, 16
      %v1176 = vrot.slane %v1174, 5
      %v1177 = vsel %vm1105, %v1172, %v1176
      %v1179 = vshrl.u32 %v1060, 16
      %v1181 = vrot.slane %v1179, 4
      %v1182 = vshll.u32 %v1060, 16
      %v1184 = vrot.slane %v1182, 5
      %v1185 = vor.u32 %v1181, %v1184
      %v1186 = vrot.slane %v1185, 4
      %v1188 = vshll.u32 %v1061, 16
      %v1190 = vrot.slane %v1188, 5
      %v1191 = vsel %vm1105, %v1186, %v1190
      %v1192 = vshrl.u32 %v1061, 16
      %v1194 = vrot.slane %v1192, 4
      %v1195 = vor.u32 %v1194, %v1190
      %v1196 = vrot.slane %v1195, 4
      %v1198 = vshll.u32 %v1090, 16
      %v1200 = vrot.slane %v1198, 5
      %v1201 = vsel %vm1105, %v1196, %v1200
      %v1203 = vshrl.u32 %v1062, 16
      %v1205 = vrot.slane %v1203, 4
      %v1206 = vshll.u32 %v1062, 16
      %v1208 = vrot.slane %v1206, 5
      %v1209 = vor.u32 %v1205, %v1208
      %v1210 = vrot.slane %v1209, 4
      %v1212 = vshll.u32 %v1063, 16
      %v1214 = vrot.slane %v1212, 5
      %v1215 = vsel %vm1105, %v1210, %v1214
      %v1216 = vshrl.u32 %v1063, 16
      %v1218 = vrot.slane %v1216, 4
      %v1219 = vor.u32 %v1218, %v1214
      %v1220 = vrot.slane %v1219, 4
      %v1222 = vshll.u32 %v1091, 16
      %v1224 = vrot.slane %v1222, 5
      %v1225 = vsel %vm1105, %v1220, %v1224
      %v1227 = vshrl.u32 %v1064, 16
      %v1229 = vrot.slane %v1227, 4
      %v1230 = vshll.u32 %v1064, 16
      %v1232 = vrot.slane %v1230, 5
      %v1233 = vor.u32 %v1229, %v1232
      %v1234 = vrot.slane %v1233, 4
      %v1236 = vshll.u32 %v1065, 16
      %v1238 = vrot.slane %v1236, 5
      %v1239 = vsel %vm1105, %v1234, %v1238
      %v1240 = vshrl.u32 %v1065, 16
      %v1242 = vrot.slane %v1240, 4
      %v1243 = vor.u32 %v1242, %v1238
      %v1244 = vrot.slane %v1243, 4
      %v1246 = vshll.u32 %v1092, 16
      %v1248 = vrot.slane %v1246, 5
      %v1249 = vsel %vm1105, %v1244, %v1248
      %v1251 = vshrl.u32 %v1066, 16
      %v1253 = vrot.slane %v1251, 4
      %v1254 = vshll.u32 %v1066, 16
      %v1256 = vrot.slane %v1254, 5
      %v1257 = vor.u32 %v1253, %v1256
      %v1258 = vrot.slane %v1257, 4
      %v1260 = vshll.u32 %v1067, 16
      %v1262 = vrot.slane %v1260, 5
      %v1263 = vsel %vm1105, %v1258, %v1262
      %v1264 = vshrl.u32 %v1067, 16
      %v1266 = vrot.slane %v1264, 4
      %v1267 = vor.u32 %v1266, %v1262
      %v1268 = vrot.slane %v1267, 4
      %v1270 = vshll.u32 %v1093, 16
      %v1272 = vrot.slane %v1270, 5
      %v1273 = vsel %vm1105, %v1268, %v1272
      %v1275 = vshrl.u32 %v1068, 16
      %v1277 = vrot.slane %v1275, 4
      %v1278 = vshll.u32 %v1068, 16
      %v1280 = vrot.slane %v1278, 5
      %v1281 = vor.u32 %v1277, %v1280
      %v1282 = vrot.slane %v1281, 4
      %v1284 = vshll.u32 %v1069, 16
      %v1286 = vrot.slane %v1284, 5
      %v1287 = vsel %vm1105, %v1282, %v1286
      %v1288 = vshrl.u32 %v1069, 16
      %v1290 = vrot.slane %v1288, 4
      %v1291 = vor.u32 %v1290, %v1286
      %v1292 = vrot.slane %v1291, 4
      %v1294 = vshll.u32 %v1094, 16
      %v1296 = vrot.slane %v1294, 5
      %v1297 = vsel %vm1105, %v1292, %v1296
      %v1299 = vshrl.u32 %v1070, 16
      %v1301 = vrot.slane %v1299, 4
      %v1302 = vshll.u32 %v1070, 16
      %v1304 = vrot.slane %v1302, 5
      %v1305 = vor.u32 %v1301, %v1304
      %v1306 = vrot.slane %v1305, 4
      %v1308 = vshll.u32 %v1071, 16
      %v1310 = vrot.slane %v1308, 5
      %v1311 = vsel %vm1105, %v1306, %v1310
      %v1312 = vshrl.u32 %v1071, 16
      %v1314 = vrot.slane %v1312, 4
      %v1315 = vor.u32 %v1314, %v1310
      %v1316 = vrot.slane %v1315, 4
      %v1318 = vshll.u32 %v1095, 16
      %v1320 = vrot.slane %v1318, 5
      %v1321 = vsel %vm1105, %v1316, %v1320
      %v1323 = vshrl.u32 %v1072, 16
      %v1325 = vrot.slane %v1323, 4
      %v1326 = vshll.u32 %v1072, 16
      %v1328 = vrot.slane %v1326, 5
      %v1329 = vor.u32 %v1325, %v1328
      %v1330 = vrot.slane %v1329, 4
      %v1332 = vshll.u32 %v1073, 16
      %v1334 = vrot.slane %v1332, 5
      %v1335 = vsel %vm1105, %v1330, %v1334
      %v1336 = vshrl.u32 %v1073, 16
      %v1338 = vrot.slane %v1336, 4
      %v1339 = vor.u32 %v1338, %v1334
      %v1340 = vrot.slane %v1339, 4
      %v1342 = vshll.u32 %v1096, 16
      %v1344 = vrot.slane %v1342, 5
      %v1345 = vsel %vm1105, %v1340, %v1344
      %v1347 = vshrl.u32 %v1074, 16
      %v1349 = vrot.slane %v1347, 4
      %v1350 = vshll.u32 %v1074, 16
      %v1352 = vrot.slane %v1350, 5
      %v1353 = vor.u32 %v1349, %v1352
      %v1354 = vrot.slane %v1353, 4
      %v1356 = vshll.u32 %v1075, 16
      %v1358 = vrot.slane %v1356, 5
      %v1359 = vsel %vm1105, %v1354, %v1358
      %v1360 = vshrl.u32 %v1075, 16
      %v1362 = vrot.slane %v1360, 4
      %v1363 = vor.u32 %v1362, %v1358
      %v1364 = vrot.slane %v1363, 4
      %v1366 = vshll.u32 %v1097, 16
      %v1368 = vrot.slane %v1366, 5
      %v1369 = vsel %vm1105, %v1364, %v1368
      %v1371 = vshrl.u32 %v1076, 16
      %v1373 = vrot.slane %v1371, 4
      %v1374 = vshll.u32 %v1076, 16
      %v1376 = vrot.slane %v1374, 5
      %v1377 = vor.u32 %v1373, %v1376
      %v1378 = vrot.slane %v1377, 4
      %v1380 = vshll.u32 %v1077, 16
      %v1382 = vrot.slane %v1380, 5
      %v1383 = vsel %vm1105, %v1378, %v1382
      %v1384 = vshrl.u32 %v1077, 16
      %v1386 = vrot.slane %v1384, 4
      %v1387 = vor.u32 %v1386, %v1382
      %v1388 = vrot.slane %v1387, 4
      %v1390 = vshll.u32 %v1098, 16
      %v1392 = vrot.slane %v1390, 5
      %v1393 = vsel %vm1105, %v1388, %v1392
      %v1395 = vshrl.u32 %v1078, 16
      %v1397 = vrot.slane %v1395, 4
      %v1398 = vshll.u32 %v1078, 16
      %v1400 = vrot.slane %v1398, 5
      %v1401 = vor.u32 %v1397, %v1400
      %v1402 = vrot.slane %v1401, 4
      %v1404 = vshll.u32 %v1079, 16
      %v1406 = vrot.slane %v1404, 5
      %v1407 = vsel %vm1105, %v1402, %v1406
      %v1408 = vshrl.u32 %v1079, 16
      %v1410 = vrot.slane %v1408, 4
      %v1411 = vor.u32 %v1410, %v1406
      %v1412 = vrot.slane %v1411, 4
      %v1414 = vshll.u32 %v1099, 16
      %v1416 = vrot.slane %v1414, 5
      %v1417 = vsel %vm1105, %v1412, %v1416
      %v1419 = vshrl.u32 %v1080, 16
      %v1421 = vrot.slane %v1419, 4
      %v1422 = vshll.u32 %v1080, 16
      %v1424 = vrot.slane %v1422, 5
      %v1425 = vor.u32 %v1421, %v1424
      %v1426 = vrot.slane %v1425, 4
      %v1428 = vshll.u32 %v1081, 16
      %v1430 = vrot.slane %v1428, 5
      %v1431 = vsel %vm1105, %v1426, %v1430
      %v1432 = vshrl.u32 %v1081, 16
      %v1434 = vrot.slane %v1432, 4
      %v1435 = vor.u32 %v1434, %v1430
      %v1436 = vrot.slane %v1435, 4
      %v1438 = vshll.u32 %v1100, 16
      %v1440 = vrot.slane %v1438, 5
      %v1441 = vsel %vm1105, %v1436, %v1440
      %v1443 = vshrl.u32 %v1082, 16
      %v1445 = vrot.slane %v1443, 4
      %v1446 = vshll.u32 %v1082, 16
      %v1448 = vrot.slane %v1446, 5
      %v1449 = vor.u32 %v1445, %v1448
      %v1450 = vrot.slane %v1449, 4
      %v1452 = vshll.u32 %v1083, 16
      %v1454 = vrot.slane %v1452, 5
      %v1455 = vsel %vm1105, %v1450, %v1454
      %v1456 = vshrl.u32 %v1083, 16
      %v1458 = vrot.slane %v1456, 4
      %v1459 = vor.u32 %v1458, %v1454
      %v1460 = vrot.slane %v1459, 4
      %v1462 = vshll.u32 %v1101, 16
      %v1464 = vrot.slane %v1462, 5
      %v1465 = vsel %vm1105, %v1460, %v1464
      %v1467 = vshrl.u32 %v1084, 16
      %v1469 = vrot.slane %v1467, 4
      %v1470 = vshll.u32 %v1084, 16
      %v1472 = vrot.slane %v1470, 5
      %v1473 = vor.u32 %v1469, %v1472
      %v1474 = vrot.slane %v1473, 4
      %v1476 = vshll.u32 %v1085, 16
      %v1478 = vrot.slane %v1476, 5
      %v1479 = vsel %vm1105, %v1474, %v1478
      %v1480 = vshrl.u32 %v1085, 16
      %v1482 = vrot.slane %v1480, 4
      %v1483 = vor.u32 %v1482, %v1478
      %v1484 = vrot.slane %v1483, 4
      %v1486 = vshll.u32 %v1102, 16
      %v1488 = vrot.slane %v1486, 5
      %v1489 = vsel %vm1105, %v1484, %v1488
      %s1490 = scalar_lea.vmem %s1, 2
      %v1491 = vld [vmem:[%s1490] sm:$0x3]
      %v1492 = vunpack.c.l.b16 %v1119
      %v1493 = vunpack.c.l.b16 %v1129
      %v1494 = vunpack.c.l.b16 %v1143
      %v1495 = vunpack.c.l.b16 %v1153
      %v1496 = vunpack.c.l.b16 %v1167
      %v1497 = vunpack.c.l.b16 %v1177
      %v1498 = vunpack.c.l.b16 %v1191
      %v1499 = vunpack.c.l.b16 %v1201
      %v1500 = vunpack.c.l.b16 %v1215
      %v1501 = vunpack.c.l.b16 %v1225
      %v1502 = vunpack.c.l.b16 %v1239
      %v1503 = vunpack.c.l.b16 %v1249
      %v1504 = vunpack.c.l.b16 %v1263
      %v1505 = vunpack.c.l.b16 %v1273
      %v1506 = vunpack.c.l.b16 %v1287
      %v1507 = vunpack.c.l.b16 %v1297
      %v1508 = vunpack.c.l.b16 %v1311
      %v1509 = vunpack.c.l.b16 %v1321
      %v1510 = vunpack.c.l.b16 %v1335
      %v1511 = vunpack.c.l.b16 %v1345
      %v1512 = vunpack.c.l.b16 %v1359
      %v1513 = vunpack.c.l.b16 %v1369
      %v1514 = vunpack.c.l.b16 %v1383
      %v1515 = vunpack.c.l.b16 %v1393
      %v1516 = vunpack.c.l.b16 %v1407
      %v1517 = vunpack.c.l.b16 %v1417
      %v1518 = vunpack.c.l.b16 %v1431
      %v1519 = vunpack.c.l.b16 %v1441
      %v1520 = vunpack.c.l.b16 %v1455
      %v1521 = vunpack.c.l.b16 %v1465
      %v1522 = vunpack.c.l.b16 %v1479
      %v1523 = vunpack.c.l.b16 %v1489
      %v1524 = vpack.c.b16 %v1493, %v1492
      %v1525 = vpack.c.b16 %v1495, %v1494
      %v1526 = vpack.c.b16 %v1497, %v1496
      %v1527 = vpack.c.b16 %v1499, %v1498
      %v1528 = vpack.c.b16 %v1501, %v1500
      %v1529 = vpack.c.b16 %v1503, %v1502
      %v1530 = vpack.c.b16 %v1505, %v1504
      %v1531 = vpack.c.b16 %v1507, %v1506
      %v1532 = vpack.c.b16 %v1509, %v1508
      %v1533 = vpack.c.b16 %v1511, %v1510
      %v1534 = vpack.c.b16 %v1513, %v1512
      %v1535 = vpack.c.b16 %v1515, %v1514
      %v1536 = vpack.c.b16 %v1517, %v1516
      %v1537 = vpack.c.b16 %v1519, %v1518
      %v1538 = vpack.c.b16 %v1521, %v1520
      %v1539 = vpack.c.b16 %v1523, %v1522
      %vm1540 = vcmask 31744
      %v1542 = vsel %vm1540, %v1524, 0
      %v1545 = vsel %vm1540, %v1525, 0
      %v1548 = vsel %vm1540, %v1526, 0
      %v1551 = vsel %vm1540, %v1527, 0
      %v1554 = vsel %vm1540, %v1528, 0
      %v1557 = vsel %vm1540, %v1529, 0
      %v1560 = vsel %vm1540, %v1530, 0
      %v1563 = vsel %vm1540, %v1531, 0
      %v1566 = vsel %vm1540, %v1532, 0
      %v1569 = vsel %vm1540, %v1533, 0
      %v1572 = vsel %vm1540, %v1534, 0
      %v1575 = vsel %vm1540, %v1535, 0
      %v1578 = vsel %vm1540, %v1536, 0
      %v1581 = vsel %vm1540, %v1537, 0
      %v1584 = vsel %vm1540, %v1538, 0
      %v1587 = vsel %vm1540, %v1539, 0
      %vm1589 = vcmask 1041408
      %v1591 = vsel %vm1589, %v1491, 0
      %1593 = vmatprep.subr.bf16.mxu0 0
      %1594 = vmatpush1.bf16.msra.mxu0 %v1591
      %1595 = vmatprep.subr.bf16.mxu0 0
      %1596 = vmatpush1.bf16.msra.mxu0 0
      %1597 = vmatprep.subr.bf16.mxu0 0
      %1598 = vmatpush1.bf16.msra.mxu0 0
      %1599 = vmatprep.subr.bf16.mxu0 0
      %1600 = vmatpush1.bf16.msra.mxu0 0
      %1601 = vmatprep.subr.bf16.mxu0 0
      %1602 = vmatpush1.bf16.msra.mxu0 0
      %1603 = vmatprep.subr.bf16.mxu0 0
      %1604 = vmatpush1.bf16.msra.mxu0 0
      %1605 = vmatprep.subr.bf16.mxu0 0
      %1606 = vmatpush1.bf16.msra.mxu0 0
      %1607 = vmatprep.subr.bf16.mxu0 0
      %1608 = vmatpush1.bf16.msra.mxu0 0
      %1609 = vmatprep.subr.bf16.mxu0 0
      %1610 = vmatpush1.bf16.msra.mxu0 0
      %1611 = vmatprep.subr.bf16.mxu0 0
      %1612 = vmatpush1.bf16.msra.mxu0 0
      %1613 = vmatprep.subr.bf16.mxu0 0
      %1614 = vmatpush1.bf16.msra.mxu0 0
      %1615 = vmatprep.subr.bf16.mxu0 0
      %1616 = vmatpush1.bf16.msra.mxu0 0
      %1617 = vmatprep.subr.bf16.mxu0 0
      %1618 = vmatpush1.bf16.msra.mxu0 0
      %1619 = vmatprep.subr.bf16.mxu0 0
      %1620 = vmatpush1.bf16.msra.mxu0 0
      %1621 = vmatprep.subr.bf16.mxu0 0
      %1622 = vmatpush1.bf16.msra.mxu0 0
      %1623 = vmatprep.subr.bf16.mxu0 0
      %1624 = vmatpush1.bf16.msra.mxu0 0
      %1625 = vmatprep.mubr.bf16.mxu0 0
      %1626 = vmatmul.mubr.bf16.gmra.mrb[0].mxu0 %v1542
      %v1627 = vpop.f32.mrb[0].mxu0
      %v1628 = vadd.f32 0.0, %v1627
      %v1629 = vpop.f32.mrb[0].mxu0
      %v1630 = vpop.f32.mrb[0].mxu0
      %v1631 = vadd.f32 0.0, %v1630
      %v1632 = vpop.f32.mrb[0].mxu0
      %1633 = vmatprep.mubr.bf16.mxu0 0
      %1634 = vmatmul.mubr.bf16.gmra.mrb[0].mxu0 %v1545
      %v1635 = vpop.f32.mrb[0].mxu0
      %v1636 = vadd.f32 0.0, %v1635
      %v1637 = vpop.f32.mrb[0].mxu0
      %v1638 = vpop.f32.mrb[0].mxu0
      %v1639 = vadd.f32 0.0, %v1638
      %v1640 = vpop.f32.mrb[0].mxu0
      %1641 = vmatprep.mubr.bf16.mxu0 0
      %1642 = vmatmul.mubr.bf16.gmra.mrb[0].mxu0 %v1548
      %v1643 = vpop.f32.mrb[0].mxu0
      %v1644 = vadd.f32 0.0, %v1643
      %v1645 = vpop.f32.mrb[0].mxu0
      %v1646 = vpop.f32.mrb[0].mxu0
      %v1647 = vadd.f32 0.0, %v1646
      %v1648 = vpop.f32.mrb[0].mxu0
      %1649 = vmatprep.mubr.bf16.mxu0 0
      %1650 = vmatmul.mubr.bf16.gmra.mrb[0].mxu0 %v1551
      %v1651 = vpop.f32.mrb[0].mxu0
      %v1652 = vadd.f32 0.0, %v1651
      %v1653 = vpop.f32.mrb[0].mxu0
      %v1654 = vpop.f32.mrb[0].mxu0
      %v1655 = vadd.f32 0.0, %v1654
      %v1656 = vpop.f32.mrb[0].mxu0
      %1657 = vmatprep.mubr.bf16.mxu0 0
      %1658 = vmatmul.mubr.bf16.gmra.mrb[0].mxu0 %v1554
      %v1659 = vpop.f32.mrb[0].mxu0
      %v1660 = vadd.f32 0.0, %v1659
      %v1661 = vpop.f32.mrb[0].mxu0
      %v1662 = vpop.f32.mrb[0].mxu0
      %v1663 = vadd.f32 0.0, %v1662
      %v1664 = vpop.f32.mrb[0].mxu0
      %1665 = vmatprep.mubr.bf16.mxu0 0
      %1666 = vmatmul.mubr.bf16.gmra.mrb[0].mxu0 %v1557
      %v1667 = vpop.f32.mrb[0].mxu0
      %v1668 = vadd.f32 0.0, %v1667
      %v1669 = vpop.f32.mrb[0].mxu0
      %v1670 = vpop.f32.mrb[0].mxu0
      %v1671 = vadd.f32 0.0, %v1670
      %v1672 = vpop.f32.mrb[0].mxu0
      %1673 = vmatprep.mubr.bf16.mxu0 0
      %1674 = vmatmul.mubr.bf16.gmra.mrb[0].mxu0 %v1560
      %v1675 = vpop.f32.mrb[0].mxu0
      %v1676 = vadd.f32 0.0, %v1675
      %v1677 = vpop.f32.mrb[0].mxu0
      %v1678 = vpop.f32.mrb[0].mxu0
      %v1679 = vadd.f32 0.0, %v1678
      %v1680 = vpop.f32.mrb[0].mxu0
      %1681 = vmatprep.mubr.bf16.mxu0 0
      %1682 = vmatmul.mubr.bf16.gmra.mrb[0].mxu0 %v1563
      %v1683 = vpop.f32.mrb[0].mxu0
      %v1684 = vadd.f32 0.0, %v1683
      %v1685 = vpop.f32.mrb[0].mxu0
      %v1686 = vpop.f32.mrb[0].mxu0
      %v1687 = vadd.f32 0.0, %v1686
      %v1688 = vpop.f32.mrb[0].mxu0
      %1689 = vmatprep.mubr.bf16.mxu0 0
      %1690 = vmatmul.mubr.bf16.gmra.mrb[0].mxu0 %v1566
      %v1691 = vpop.f32.mrb[0].mxu0
      %v1692 = vadd.f32 0.0, %v1691
      %v1693 = vpop.f32.mrb[0].mxu0
      %v1694 = vpop.f32.mrb[0].mxu0
      %v1695 = vadd.f32 0.0, %v1694
      %v1696 = vpop.f32.mrb[0].mxu0
      %1697 = vmatprep.mubr.bf16.mxu0 0
      %1698 = vmatmul.mubr.bf16.gmra.mrb[0].mxu0 %v1569
      %v1699 = vpop.f32.mrb[0].mxu0
      %v1700 = vadd.f32 0.0, %v1699
      %v1701 = vpop.f32.mrb[0].mxu0
      %v1702 = vpop.f32.mrb[0].mxu0
      %v1703 = vadd.f32 0.0, %v1702
      %v1704 = vpop.f32.mrb[0].mxu0
      %1705 = vmatprep.mubr.bf16.mxu0 0
      %1706 = vmatmul.mubr.bf16.gmra.mrb[0].mxu0 %v1572
      %v1707 = vpop.f32.mrb[0].mxu0
      %v1708 = vadd.f32 0.0, %v1707
      %v1709 = vpop.f32.mrb[0].mxu0
      %v1710 = vpop.f32.mrb[0].mxu0
      %v1711 = vadd.f32 0.0, %v1710
      %v1712 = vpop.f32.mrb[0].mxu0
      %1713 = vmatprep.mubr.bf16.mxu0 0
      %1714 = vmatmul.mubr.bf16.gmra.mrb[0].mxu0 %v1575
      %v1715 = vpop.f32.mrb[0].mxu0
      %v1716 = vadd.f32 0.0, %v1715
      %v1717 = vpop.f32.mrb[0].mxu0
      %v1718 = vpop.f32.mrb[0].mxu0
      %v1719 = vadd.f32 0.0, %v1718
      %v1720 = vpop.f32.mrb[0].mxu0
      %1721 = vmatprep.mubr.bf16.mxu0 0
      %1722 = vmatmul.mubr.bf16.gmra.mrb[0].mxu0 %v1578
      %v1723 = vpop.f32.mrb[0].mxu0
      %v1724 = vadd.f32 0.0, %v1723
      %v1725 = vpop.f32.mrb[0].mxu0
      %v1726 = vpop.f32.mrb[0].mxu0
      %v1727 = vadd.f32 0.0, %v1726
      %v1728 = vpop.f32.mrb[0].mxu0
      %1729 = vmatprep.mubr.bf16.mxu0 0
      %1730 = vmatmul.mubr.bf16.gmra.mrb[0].mxu0 %v1581
      %v1731 = vpop.f32.mrb[0].mxu0
      %v1732 = vadd.f32 0.0, %v1731
      %v1733 = vpop.f32.mrb[0].mxu0
      %v1734 = vpop.f32.mrb[0].mxu0
      %v1735 = vadd.f32 0.0, %v1734
      %v1736 = vpop.f32.mrb[0].mxu0
      %1737 = vmatprep.mubr.bf16.mxu0 0
      %1738 = vmatmul.mubr.bf16.gmra.mrb[0].mxu0 %v1584
      %v1739 = vpop.f32.mrb[0].mxu0
      %v1740 = vadd.f32 0.0, %v1739
      %v1741 = vpop.f32.mrb[0].mxu0
      %v1742 = vpop.f32.mrb[0].mxu0
      %v1743 = vadd.f32 0.0, %v1742
      %v1744 = vpop.f32.mrb[0].mxu0
      %1745 = vmatprep.mubr.bf16.mxu0 0
      %1746 = vmatmul.mubr.bf16.gmra.mrb[0].mxu0 %v1587
      %v1747 = vpop.f32.mrb[0].mxu0
      %v1748 = vadd.f32 0.0, %v1747
      %v1749 = vpop.f32.mrb[0].mxu0
      %v1750 = vpop.f32.mrb[0].mxu0
      %v1751 = vadd.f32 0.0, %v1750
      %v1752 = vpop.f32.mrb[0].mxu0
      %1753 = vdwg.mxu0
      %v1786 = vunpack.c.l.b16 %v1054
      %v1787 = vunpack.c.l.b16 %v1055
      %v1788 = vunpack.c.l.b16 %v1056
      %v1789 = vunpack.c.l.b16 %v1057
      %v1790 = vunpack.c.l.b16 %v1058
      %v1791 = vunpack.c.l.b16 %v1059
      %v1792 = vunpack.c.l.b16 %v1060
      %v1793 = vunpack.c.l.b16 %v1061
      %v1794 = vunpack.c.l.b16 %v1062
      %v1795 = vunpack.c.l.b16 %v1063
      %v1796 = vunpack.c.l.b16 %v1064
      %v1797 = vunpack.c.l.b16 %v1065
      %v1798 = vunpack.c.l.b16 %v1066
      %v1799 = vunpack.c.l.b16 %v1067
      %v1800 = vunpack.c.l.b16 %v1068
      %v1801 = vunpack.c.l.b16 %v1069
      %v1802 = vunpack.c.l.b16 %v1070
      %v1803 = vunpack.c.l.b16 %v1071
      %v1804 = vunpack.c.l.b16 %v1072
      %v1805 = vunpack.c.l.b16 %v1073
      %v1806 = vunpack.c.l.b16 %v1074
      %v1807 = vunpack.c.l.b16 %v1075
      %v1808 = vunpack.c.l.b16 %v1076
      %v1809 = vunpack.c.l.b16 %v1077
      %v1810 = vunpack.c.l.b16 %v1078
      %v1811 = vunpack.c.l.b16 %v1079
      %v1812 = vunpack.c.l.b16 %v1080
      %v1813 = vunpack.c.l.b16 %v1081
      %v1814 = vunpack.c.l.b16 %v1082
      %v1815 = vunpack.c.l.b16 %v1083
      %v1816 = vunpack.c.l.b16 %v1084
      %v1817 = vunpack.c.l.b16 %v1085
      %v1818 = vpack.c.b16 %v1787, %v1786
      %v1819 = vpack.c.b16 %v1789, %v1788
      %v1820 = vpack.c.b16 %v1791, %v1790
      %v1821 = vpack.c.b16 %v1793, %v1792
      %v1822 = vpack.c.b16 %v1795, %v1794
      %v1823 = vpack.c.b16 %v1797, %v1796
      %v1824 = vpack.c.b16 %v1799, %v1798
      %v1825 = vpack.c.b16 %v1801, %v1800
      %v1826 = vpack.c.b16 %v1803, %v1802
      %v1827 = vpack.c.b16 %v1805, %v1804
      %v1828 = vpack.c.b16 %v1807, %v1806
      %v1829 = vpack.c.b16 %v1809, %v1808
      %v1830 = vpack.c.b16 %v1811, %v1810
      %v1831 = vpack.c.b16 %v1813, %v1812
      %v1832 = vpack.c.b16 %v1815, %v1814
      %v1833 = vpack.c.b16 %v1817, %v1816
      %v1835 = vsel %vm1540, %v1818, 0
      %v1838 = vsel %vm1540, %v1819, 0
      %v1841 = vsel %vm1540, %v1820, 0
      %v1844 = vsel %vm1540, %v1821, 0
      %v1847 = vsel %vm1540, %v1822, 0
      %v1850 = vsel %vm1540, %v1823, 0
      %v1853 = vsel %vm1540, %v1824, 0
      %v1856 = vsel %vm1540, %v1825, 0
      %v1859 = vsel %vm1540, %v1826, 0
      %v1862 = vsel %vm1540, %v1827, 0
      %v1865 = vsel %vm1540, %v1828, 0
      %v1868 = vsel %vm1540, %v1829, 0
      %v1871 = vsel %vm1540, %v1830, 0
      %v1874 = vsel %vm1540, %v1831, 0
      %v1877 = vsel %vm1540, %v1832, 0
      %v1880 = vsel %vm1540, %v1833, 0
      %v1883 = vsel %vm1589, %v1086, 0
      %1885 = vmatprep.subr.bf16.mxu0 0
      %1886 = vmatpush1.bf16.msra.mxu0 %v1883
      %1887 = vmatprep.subr.bf16.mxu0 0
      %1888 = vmatpush1.bf16.msra.mxu0 0
      %1889 = vmatprep.subr.bf16.mxu0 0
      %1890 = vmatpush1.bf16.msra.mxu0 0
      %1891 = vmatprep.subr.bf16.mxu0 0
      %1892 = vmatpush1.bf16.msra.mxu0 0
      %1893 = vmatprep.subr.bf16.mxu0 0
      %1894 = vmatpush1.bf16.msra.mxu0 0
      %1895 = vmatprep.subr.bf16.mxu0 0
      %1896 = vmatpush1.bf16.msra.mxu0 0
      %1897 = vmatprep.subr.bf16.mxu0 0
      %1898 = vmatpush1.bf16.msra.mxu0 0
      %1899 = vmatprep.subr.bf16.mxu0 0
      %1900 = vmatpush1.bf16.msra.mxu0 0
      %1901 = vmatprep.subr.bf16.mxu0 0
      %1902 = vmatpush1.bf16.msra.mxu0 0
      %1903 = vmatprep.subr.bf16.mxu0 0
      %1904 = vmatpush1.bf16.msra.mxu0 0
      %1905 = vmatprep.subr.bf16.mxu0 0
      %1906 = vmatpush1.bf16.msra.mxu0 0
      %1907 = vmatprep.subr.bf16.mxu0 0
      %1908 = vmatpush1.bf16.msra.mxu0 0
      %1909 = vmatprep.subr.bf16.mxu0 0
      %1910 = vmatpush1.bf16.msra.mxu0 0
      %1911 = vmatprep.subr.bf16.mxu0 0
      %1912 = vmatpush1.bf16.msra.mxu0 0
      %1913 = vmatprep.subr.bf16.mxu0 0
      %1914 = vmatpush1.bf16.msra.mxu0 0
      %1915 = vmatprep.subr.bf16.mxu0 0
      %1916 = vmatpush1.bf16.msra.mxu0 0
      %1917 = vmatprep.mubr.bf16.mxu0 0
      %1918 = vmatmul.mubr.bf16.gmra.mrb[0].mxu0 %v1835
      %v1919 = vpop.f32.mrb[0].mxu0
      %v1920 = vadd.f32 %v1628, %v1919
      %v1921 = vpop.f32.mrb[0].mxu0
      %v1922 = vpop.f32.mrb[0].mxu0
      %v1923 = vadd.f32 %v1631, %v1922
      %v1924 = vpop.f32.mrb[0].mxu0
      %1925 = vmatprep.mubr.bf16.mxu0 0
      %1926 = vmatmul.mubr.bf16.gmra.mrb[0].mxu0 %v1838
      %v1927 = vpop.f32.mrb[0].mxu0
      %v1928 = vadd.f32 %v1636, %v1927
      %v1929 = vpop.f32.mrb[0].mxu0
      %v1930 = vpop.f32.mrb[0].mxu0
      %v1931 = vadd.f32 %v1639, %v1930
      %v1932 = vpop.f32.mrb[0].mxu0
      %1933 = vmatprep.mubr.bf16.mxu0 0
      %1934 = vmatmul.mubr.bf16.gmra.mrb[0].mxu0 %v1841
      %v1935 = vpop.f32.mrb[0].mxu0
      %v1936 = vadd.f32 %v1644, %v1935
      %v1937 = vpop.f32.mrb[0].mxu0
      %v1938 = vpop.f32.mrb[0].mxu0
      %v1939 = vadd.f32 %v1647, %v1938
      %v1940 = vpop.f32.mrb[0].mxu0
      %1941 = vmatprep.mubr.bf16.mxu0 0
      %1942 = vmatmul.mubr.bf16.gmra.mrb[0].mxu0 %v1844
      %v1943 = vpop.f32.mrb[0].mxu0
      %v1944 = vadd.f32 %v1652, %v1943
      %v1945 = vpop.f32.mrb[0].mxu0
      %v1946 = vpop.f32.mrb[0].mxu0
      %v1947 = vadd.f32 %v1655, %v1946
      %v1948 = vpop.f32.mrb[0].mxu0
      %1949 = vmatprep.mubr.bf16.mxu0 0
      %1950 = vmatmul.mubr.bf16.gmra.mrb[0].mxu0 %v1847
      %v1951 = vpop.f32.mrb[0].mxu0
      %v1952 = vadd.f32 %v1660, %v1951
      %v1953 = vpop.f32.mrb[0].mxu0
      %v1954 = vpop.f32.mrb[0].mxu0
      %v1955 = vadd.f32 %v1663, %v1954
      %v1956 = vpop.f32.mrb[0].mxu0
      %1957 = vmatprep.mubr.bf16.mxu0 0
      %1958 = vmatmul.mubr.bf16.gmra.mrb[0].mxu0 %v1850
      %v1959 = vpop.f32.mrb[0].mxu0
      %v1960 = vadd.f32 %v1668, %v1959
      %v1961 = vpop.f32.mrb[0].mxu0
      %v1962 = vpop.f32.mrb[0].mxu0
      %v1963 = vadd.f32 %v1671, %v1962
      %v1964 = vpop.f32.mrb[0].mxu0
      %1965 = vmatprep.mubr.bf16.mxu0 0
      %1966 = vmatmul.mubr.bf16.gmra.mrb[0].mxu0 %v1853
      %v1967 = vpop.f32.mrb[0].mxu0
      %v1968 = vadd.f32 %v1676, %v1967
      %v1969 = vpop.f32.mrb[0].mxu0
      %v1970 = vpop.f32.mrb[0].mxu0
      %v1971 = vadd.f32 %v1679, %v1970
      %v1972 = vpop.f32.mrb[0].mxu0
      %1973 = vmatprep.mubr.bf16.mxu0 0
      %1974 = vmatmul.mubr.bf16.gmra.mrb[0].mxu0 %v1856
      %v1975 = vpop.f32.mrb[0].mxu0
      %v1976 = vadd.f32 %v1684, %v1975
      %v1977 = vpop.f32.mrb[0].mxu0
      %v1978 = vpop.f32.mrb[0].mxu0
      %v1979 = vadd.f32 %v1687, %v1978
      %v1980 = vpop.f32.mrb[0].mxu0
      %1981 = vmatprep.mubr.bf16.mxu0 0
      %1982 = vmatmul.mubr.bf16.gmra.mrb[0].mxu0 %v1859
      %v1983 = vpop.f32.mrb[0].mxu0
      %v1984 = vadd.f32 %v1692, %v1983
      %v1985 = vpop.f32.mrb[0].mxu0
      %v1986 = vpop.f32.mrb[0].mxu0
      %v1987 = vadd.f32 %v1695, %v1986
      %v1988 = vpop.f32.mrb[0].mxu0
      %1989 = vmatprep.mubr.bf16.mxu0 0
      %1990 = vmatmul.mubr.bf16.gmra.mrb[0].mxu0 %v1862
      %v1991 = vpop.f32.mrb[0].mxu0
      %v1992 = vadd.f32 %v1700, %v1991
      %v1993 = vpop.f32.mrb[0].mxu0
      %v1994 = vpop.f32.mrb[0].mxu0
      %v1995 = vadd.f32 %v1703, %v1994
      %v1996 = vpop.f32.mrb[0].mxu0
      %1997 = vmatprep.mubr.bf16.mxu0 0
      %1998 = vmatmul.mubr.bf16.gmra.mrb[0].mxu0 %v1865
      %v1999 = vpop.f32.mrb[0].mxu0
      %v2000 = vadd.f32 %v1708, %v1999
      %v2001 = vpop.f32.mrb[0].mxu0
      %v2002 = vpop.f32.mrb[0].mxu0
      %v2003 = vadd.f32 %v1711, %v2002
      %v2004 = vpop.f32.mrb[0].mxu0
      %2005 = vmatprep.mubr.bf16.mxu0 0
      %2006 = vmatmul.mubr.bf16.gmra.mrb[0].mxu0 %v1868
      %v2007 = vpop.f32.mrb[0].mxu0
      %v2008 = vadd.f32 %v1716, %v2007
      %v2009 = vpop.f32.mrb[0].mxu0
      %v2010 = vpop.f32.mrb[0].mxu0
      %v2011 = vadd.f32 %v1719, %v2010
      %v2012 = vpop.f32.mrb[0].mxu0
      %2013 = vmatprep.mubr.bf16.mxu0 0
      %2014 = vmatmul.mubr.bf16.gmra.mrb[0].mxu0 %v1871
      %v2015 = vpop.f32.mrb[0].mxu0
      %v2016 = vadd.f32 %v1724, %v2015
      %v2017 = vpop.f32.mrb[0].mxu0
      %v2018 = vpop.f32.mrb[0].mxu0
      %v2019 = vadd.f32 %v1727, %v2018
      %v2020 = vpop.f32.mrb[0].mxu0
      %2021 = vmatprep.mubr.bf16.mxu0 0
      %2022 = vmatmul.mubr.bf16.gmra.mrb[0].mxu0 %v1874
      %v2023 = vpop.f32.mrb[0].mxu0
      %v2024 = vadd.f32 %v1732, %v2023
      %v2025 = vpop.f32.mrb[0].mxu0
      %v2026 = vpop.f32.mrb[0].mxu0
      %v2027 = vadd.f32 %v1735, %v2026
      %v2028 = vpop.f32.mrb[0].mxu0
      %2029 = vmatprep.mubr.bf16.mxu0 0
      %2030 = vmatmul.mubr.bf16.gmra.mrb[0].mxu0 %v1877
      %v2031 = vpop.f32.mrb[0].mxu0
      %v2032 = vadd.f32 %v1740, %v2031
      %v2033 = vpop.f32.mrb[0].mxu0
      %v2034 = vpop.f32.mrb[0].mxu0
      %v2035 = vadd.f32 %v1743, %v2034
      %v2036 = vpop.f32.mrb[0].mxu0
      %2037 = vmatprep.mubr.bf16.mxu0 0
      %2038 = vmatmul.mubr.bf16.gmra.mrb[0].mxu0 %v1880
      %v2039 = vpop.f32.mrb[0].mxu0
      %v2040 = vadd.f32 %v1748, %v2039
      %v2041 = vpop.f32.mrb[0].mxu0
      %v2042 = vpop.f32.mrb[0].mxu0
      %v2043 = vadd.f32 %v1751, %v2042
      %v2044 = vpop.f32.mrb[0].mxu0
      %2045 = vdwg.mxu0
      %v2046 = vld [vmem:[#allocation2] sm:$0xe]
      %v2047 = vld [vmem:[#allocation2 + $0xc] sm:$0xe]
      %v2048 = vld [vmem:[#allocation2 + $0x18] sm:$0xe]
      %v2049 = vld [vmem:[#allocation2 + $0x24] sm:$0xe]
      %v2050 = vld [vmem:[#allocation2 + $0x30] sm:$0xe]
      %v2051 = vld [vmem:[#allocation2 + $0x3c] sm:$0xe]
      %v2052 = vld [vmem:[#allocation2 + $0x48] sm:$0xe]
      %v2053 = vld [vmem:[#allocation2 + $0x54] sm:$0xe]
      %v2054 = vld [vmem:[#allocation2 + $0x60] sm:$0xe]
      %v2055 = vld [vmem:[#allocation2 + $0x6c] sm:$0xe]
      %v2056 = vld [vmem:[#allocation2 + $0x78] sm:$0xe]
      %v2057 = vld [vmem:[#allocation2 + $0x84] sm:$0xe]
      %v2058 = vld [vmem:[#allocation2 + $0x90] sm:$0xe]
      %v2059 = vld [vmem:[#allocation2 + $0x9c] sm:$0xe]
      %v2060 = vld [vmem:[#allocation2 + $0xa8] sm:$0xe]
      %v2061 = vld [vmem:[#allocation2 + $0xb4] sm:$0xe]
      %vm2094 = vcmask 1042432
      %vm2095 = vcmask 1046532
      %vm2096 = vmor %vm2094, %vm2095
      %v2097 = vrot.slane %v2046, 5
      %v2098 = vrot.slane %v2097, 4
      %v2099 = vrot.slane %v1055, 5
      %v2100 = vsel %vm2096, %v2098, %v2099
      %v2101 = vrot.slane %v2099, 4
      %v2102 = vrot.slane %v1087, 5
      %v2103 = vsel %vm2096, %v2101, %v2102
      %v2104 = vrot.slane %v2047, 5
      %v2105 = vrot.slane %v2104, 4
      %v2106 = vrot.slane %v1057, 5
      %v2107 = vsel %vm2096, %v2105, %v2106
      %v2108 = vrot.slane %v2106, 4
      %v2109 = vrot.slane %v1088, 5
      %v2110 = vsel %vm2096, %v2108, %v2109
      %v2111 = vrot.slane %v2048, 5
      %v2112 = vrot.slane %v2111, 4
      %v2113 = vrot.slane %v1059, 5
      %v2114 = vsel %vm2096, %v2112, %v2113
      %v2115 = vrot.slane %v2113, 4
      %v2116 = vrot.slane %v1089, 5
      %v2117 = vsel %vm2096, %v2115, %v2116
      %v2118 = vrot.slane %v2049, 5
      %v2119 = vrot.slane %v2118, 4
      %v2120 = vrot.slane %v1061, 5
      %v2121 = vsel %vm2096, %v2119, %v2120
      %v2122 = vrot.slane %v2120, 4
      %v2123 = vrot.slane %v1090, 5
      %v2124 = vsel %vm2096, %v2122, %v2123
      %v2125 = vrot.slane %v2050, 5
      %v2126 = vrot.slane %v2125, 4
      %v2127 = vrot.slane %v1063, 5
      %v2128 = vsel %vm2096, %v2126, %v2127
      %v2129 = vrot.slane %v2127, 4
      %v2130 = vrot.slane %v1091, 5
      %v2131 = vsel %vm2096, %v2129, %v2130
      %v2132 = vrot.slane %v2051, 5
      %v2133 = vrot.slane %v2132, 4
      %v2134 = vrot.slane %v1065, 5
      %v2135 = vsel %vm2096, %v2133, %v2134
      %v2136 = vrot.slane %v2134, 4
      %v2137 = vrot.slane %v1092, 5
      %v2138 = vsel %vm2096, %v2136, %v2137
      %v2139 = vrot.slane %v2052, 5
      %v2140 = vrot.slane %v2139, 4
      %v2141 = vrot.slane %v1067, 5
      %v2142 = vsel %vm2096, %v2140, %v2141
      %v2143 = vrot.slane %v2141, 4
      %v2144 = vrot.slane %v1093, 5
      %v2145 = vsel %vm2096, %v2143, %v2144
      %v2146 = vrot.slane %v2053, 5
      %v2147 = vrot.slane %v2146, 4
      %v2148 = vrot.slane %v1069, 5
      %v2149 = vsel %vm2096, %v2147, %v2148
      %v2150 = vrot.slane %v2148, 4
      %v2151 = vrot.slane %v1094, 5
      %v2152 = vsel %vm2096, %v2150, %v2151
      %v2153 = vrot.slane %v2054, 5
      %v2154 = vrot.slane %v2153, 4
      %v2155 = vrot.slane %v1071, 5
      %v2156 = vsel %vm2096, %v2154, %v2155
      %v2157 = vrot.slane %v2155, 4
      %v2158 = vrot.slane %v1095, 5
      %v2159 = vsel %vm2096, %v2157, %v2158
      %v2160 = vrot.slane %v2055, 5
      %v2161 = vrot.slane %v2160, 4
      %v2162 = vrot.slane %v1073, 5
      %v2163 = vsel %vm2096, %v2161, %v2162
      %v2164 = vrot.slane %v2162, 4
      %v2165 = vrot.slane %v1096, 5
      %v2166 = vsel %vm2096, %v2164, %v2165
      %v2167 = vrot.slane %v2056, 5
      %v2168 = vrot.slane %v2167, 4
      %v2169 = vrot.slane %v1075, 5
      %v2170 = vsel %vm2096, %v2168, %v2169
      %v2171 = vrot.slane %v2169, 4
      %v2172 = vrot.slane %v1097, 5
      %v2173 = vsel %vm2096, %v2171, %v2172
      %v2174 = vrot.slane %v2057, 5
      %v2175 = vrot.slane %v2174, 4
      %v2176 = vrot.slane %v1077, 5
      %v2177 = vsel %vm2096, %v2175, %v2176
      %v2178 = vrot.slane %v2176, 4
      %v2179 = vrot.slane %v1098, 5
      %v2180 = vsel %vm2096, %v2178, %v2179
      %v2181 = vrot.slane %v2058, 5
      %v2182 = vrot.slane %v2181, 4
      %v2183 = vrot.slane %v1079, 5
      %v2184 = vsel %vm2096, %v2182, %v2183
      %v2185 = vrot.slane %v2183, 4
      %v2186 = vrot.slane %v1099, 5
      %v2187 = vsel %vm2096, %v2185, %v2186
      %v2188 = vrot.slane %v2059, 5
      %v2189 = vrot.slane %v2188, 4
      %v2190 = vrot.slane %v1081, 5
      %v2191 = vsel %vm2096, %v2189, %v2190
      %v2192 = vrot.slane %v2190, 4
      %v2193 = vrot.slane %v1100, 5
      %v2194 = vsel %vm2096, %v2192, %v2193
      %v2195 = vrot.slane %v2060, 5
      %v2196 = vrot.slane %v2195, 4
      %v2197 = vrot.slane %v1083, 5
      %v2198 = vsel %vm2096, %v2196, %v2197
      %v2199 = vrot.slane %v2197, 4
      %v2200 = vrot.slane %v1101, 5
      %v2201 = vsel %vm2096, %v2199, %v2200
      %v2202 = vrot.slane %v2061, 5
      %v2203 = vrot.slane %v2202, 4
      %v2204 = vrot.slane %v1085, 5
      %v2205 = vsel %vm2096, %v2203, %v2204
      %v2206 = vrot.slane %v2204, 4
      %v2207 = vrot.slane %v1102, 5
      %v2208 = vsel %vm2096, %v2206, %v2207
      %s2209 = scalar_lea.vmem %s1, 4
      %v2210 = vld [vmem:[%s2209] sm:$0x3]
      %v2211 = vunpack.c.l.b16 %v2100
      %v2212 = vunpack.c.l.b16 %v2103
      %v2213 = vunpack.c.l.b16 %v2107
      %v2214 = vunpack.c.l.b16 %v2110
      %v2215 = vunpack.c.l.b16 %v2114
      %v2216 = vunpack.c.l.b16 %v2117
      %v2217 = vunpack.c.l.b16 %v2121
      %v2218 = vunpack.c.l.b16 %v2124
      %v2219 = vunpack.c.l.b16 %v2128
      %v2220 = vunpack.c.l.b16 %v2131
      %v2221 = vunpack.c.l.b16 %v2135
      %v2222 = vunpack.c.l.b16 %v2138
      %v2223 = vunpack.c.l.b16 %v2142
      %v2224 = vunpack.c.l.b16 %v2145
      %v2225 = vunpack.c.l.b16 %v2149
      %v2226 = vunpack.c.l.b16 %v2152
      %v2227 = vunpack.c.l.b16 %v2156
      %v2228 = vunpack.c.l.b16 %v2159
      %v2229 = vunpack.c.l.b16 %v2163
      %v2230 = vunpack.c.l.b16 %v2166
      %v2231 = vunpack.c.l.b16 %v2170
      %v2232 = vunpack.c.l.b16 %v2173
      %v2233 = vunpack.c.l.b16 %v2177
      %v2234 = vunpack.c.l.b16 %v2180
      %v2235 = vunpack.c.l.b16 %v2184
      %v2236 = vunpack.c.l.b16 %v2187
      %v2237 = vunpack.c.l.b16 %v2191
      %v2238 = vunpack.c.l.b16 %v2194
      %v2239 = vunpack.c.l.b16 %v2198
      %v2240 = vunpack.c.l.b16 %v2201
      %v2241 = vunpack.c.l.b16 %v2205
      %v2242 = vunpack.c.l.b16 %v2208
      %v2243 = vpack.c.b16 %v2212, %v2211
      %v2244 = vpack.c.b16 %v2214, %v2213
      %v2245 = vpack.c.b16 %v2216, %v2215
      %v2246 = vpack.c.b16 %v2218, %v2217
      %v2247 = vpack.c.b16 %v2220, %v2219
      %v2248 = vpack.c.b16 %v2222, %v2221
      %v2249 = vpack.c.b16 %v2224, %v2223
      %v2250 = vpack.c.b16 %v2226, %v2225
      %v2251 = vpack.c.b16 %v2228, %v2227
      %v2252 = vpack.c.b16 %v2230, %v2229
      %v2253 = vpack.c.b16 %v2232, %v2231
      %v2254 = vpack.c.b16 %v2234, %v2233
      %v2255 = vpack.c.b16 %v2236, %v2235
      %v2256 = vpack.c.b16 %v2238, %v2237
      %v2257 = vpack.c.b16 %v2240, %v2239
      %v2258 = vpack.c.b16 %v2242, %v2241
      %v2260 = vsel %vm1540, %v2243, 0
      %v2263 = vsel %vm1540, %v2244, 0
      %v2266 = vsel %vm1540, %v2245, 0
      %v2269 = vsel %vm1540, %v2246, 0
      %v2272 = vsel %vm1540, %v2247, 0
      %v2275 = vsel %vm1540, %v2248, 0
      %v2278 = vsel %vm1540, %v2249, 0
      %v2281 = vsel %vm1540, %v2250, 0
      %v2284 = vsel %vm1540, %v2251, 0
      %v2287 = vsel %vm1540, %v2252, 0
      %v2290 = vsel %vm1540, %v2253, 0
      %v2293 = vsel %vm1540, %v2254, 0
      %v2296 = vsel %vm1540, %v2255, 0
      %v2299 = vsel %vm1540, %v2256, 0
      %v2302 = vsel %vm1540, %v2257, 0
      %v2305 = vsel %vm1540, %v2258, 0
      %v2308 = vsel %vm1589, %v2210, 0
      %2310 = vmatprep.subr.bf16.mxu0 0
      %2311 = vmatpush1.bf16.msra.mxu0 %v2308
      %2312 = vmatprep.subr.bf16.mxu0 0
      %2313 = vmatpush1.bf16.msra.mxu0 0
      %2314 = vmatprep.subr.bf16.mxu0 0
      %2315 = vmatpush1.bf16.msra.mxu0 0
      %2316 = vmatprep.subr.bf16.mxu0 0
      %2317 = vmatpush1.bf16.msra.mxu0 0
      %2318 = vmatprep.subr.bf16.mxu0 0
      %2319 = vmatpush1.bf16.msra.mxu0 0
      %2320 = vmatprep.subr.bf16.mxu0 0
      %2321 = vmatpush1.bf16.msra.mxu0 0
      %2322 = vmatprep.subr.bf16.mxu0 0
      %2323 = vmatpush1.bf16.msra.mxu0 0
      %2324 = vmatprep.subr.bf16.mxu0 0
      %2325 = vmatpush1.bf16.msra.mxu0 0
      %2326 = vmatprep.subr.bf16.mxu0 0
      %2327 = vmatpush1.bf16.msra.mxu0 0
      %2328 = vmatprep.subr.bf16.mxu0 0
      %2329 = vmatpush1.bf16.msra.mxu0 0
      %2330 = vmatprep.subr.bf16.mxu0 0
      %2331 = vmatpush1.bf16.msra.mxu0 0
      %2332 = vmatprep.subr.bf16.mxu0 0
      %2333 = vmatpush1.bf16.msra.mxu0 0
      %2334 = vmatprep.subr.bf16.mxu0 0
      %2335 = vmatpush1.bf16.msra.mxu0 0
      %2336 = vmatprep.subr.bf16.mxu0 0
      %2337 = vmatpush1.bf16.msra.mxu0 0
      %2338 = vmatprep.subr.bf16.mxu0 0
      %2339 = vmatpush1.bf16.msra.mxu0 0
      %2340 = vmatprep.subr.bf16.mxu0 0
      %2341 = vmatpush1.bf16.msra.mxu0 0
      %2342 = vmatprep.mubr.bf16.mxu0 0
      %2343 = vmatmul.mubr.bf16.gmra.mrb[0].mxu0 %v2260
      %v2344 = vpop.f32.mrb[0].mxu0
      %v2345 = vadd.f32 0.0, %v2344
      %v2346 = vpop.f32.mrb[0].mxu0
      %v2347 = vpop.f32.mrb[0].mxu0
      %v2348 = vadd.f32 0.0, %v2347
      %v2349 = vpop.f32.mrb[0].mxu0
      %2350 = vmatprep.mubr.bf16.mxu0 0
      %2351 = vmatmul.mubr.bf16.gmra.mrb[0].mxu0 %v2263
      %v2352 = vpop.f32.mrb[0].mxu0
      %v2353 = vadd.f32 0.0, %v2352
      %v2354 = vpop.f32.mrb[0].mxu0
      %v2355 = vpop.f32.mrb[0].mxu0
      %v2356 = vadd.f32 0.0, %v2355
      %v2357 = vpop.f32.mrb[0].mxu0
      %2358 = vmatprep.mubr.bf16.mxu0 0
      %2359 = vmatmul.mubr.bf16.gmra.mrb[0].mxu0 %v2266
      %v2360 = vpop.f32.mrb[0].mxu0
      %v2361 = vadd.f32 0.0, %v2360
      %v2362 = vpop.f32.mrb[0].mxu0
      %v2363 = vpop.f32.mrb[0].mxu0
      %v2364 = vadd.f32 0.0, %v2363
      %v2365 = vpop.f32.mrb[0].mxu0
      %2366 = vmatprep.mubr.bf16.mxu0 0
      %2367 = vmatmul.mubr.bf16.gmra.mrb[0].mxu0 %v2269
      %v2368 = vpop.f32.mrb[0].mxu0
      %v2369 = vadd.f32 0.0, %v2368
      %v2370 = vpop.f32.mrb[0].mxu0
      %v2371 = vpop.f32.mrb[0].mxu0
      %v2372 = vadd.f32 0.0, %v2371
      %v2373 = vpop.f32.mrb[0].mxu0
      %2374 = vmatprep.mubr.bf16.mxu0 0
      %2375 = vmatmul.mubr.bf16.gmra.mrb[0].mxu0 %v2272
      %v2376 = vpop.f32.mrb[0].mxu0
      %v2377 = vadd.f32 0.0, %v2376
      %v2378 = vpop.f32.mrb[0].mxu0
      %v2379 = vpop.f32.mrb[0].mxu0
      %v2380 = vadd.f32 0.0, %v2379
      %v2381 = vpop.f32.mrb[0].mxu0
      %2382 = vmatprep.mubr.bf16.mxu0 0
      %2383 = vmatmul.mubr.bf16.gmra.mrb[0].mxu0 %v2275
      %v2384 = vpop.f32.mrb[0].mxu0
      %v2385 = vadd.f32 0.0, %v2384
      %v2386 = vpop.f32.mrb[0].mxu0
      %v2387 = vpop.f32.mrb[0].mxu0
      %v2388 = vadd.f32 0.0, %v2387
      %v2389 = vpop.f32.mrb[0].mxu0
      %2390 = vmatprep.mubr.bf16.mxu0 0
      %2391 = vmatmul.mubr.bf16.gmra.mrb[0].mxu0 %v2278
      %v2392 = vpop.f32.mrb[0].mxu0
      %v2393 = vadd.f32 0.0, %v2392
      %v2394 = vpop.f32.mrb[0].mxu0
      %v2395 = vpop.f32.mrb[0].mxu0
      %v2396 = vadd.f32 0.0, %v2395
      %v2397 = vpop.f32.mrb[0].mxu0
      %2398 = vmatprep.mubr.bf16.mxu0 0
      %2399 = vmatmul.mubr.bf16.gmra.mrb[0].mxu0 %v2281
      %v2400 = vpop.f32.mrb[0].mxu0
      %v2401 = vadd.f32 0.0, %v2400
      %v2402 = vpop.f32.mrb[0].mxu0
      %v2403 = vpop.f32.mrb[0].mxu0
      %v2404 = vadd.f32 0.0, %v2403
      %v2405 = vpop.f32.mrb[0].mxu0
      %2406 = vmatprep.mubr.bf16.mxu0 0
      %2407 = vmatmul.mubr.bf16.gmra.mrb[0].mxu0 %v2284
      %v2408 = vpop.f32.mrb[0].mxu0
      %v2409 = vadd.f32 0.0, %v2408
      %v2410 = vpop.f32.mrb[0].mxu0
      %v2411 = vpop.f32.mrb[0].mxu0
      %v2412 = vadd.f32 0.0, %v2411
      %v2413 = vpop.f32.mrb[0].mxu0
      %2414 = vmatprep.mubr.bf16.mxu0 0
      %2415 = vmatmul.mubr.bf16.gmra.mrb[0].mxu0 %v2287
      %v2416 = vpop.f32.mrb[0].mxu0
      %v2417 = vadd.f32 0.0, %v2416
      %v2418 = vpop.f32.mrb[0].mxu0
      %v2419 = vpop.f32.mrb[0].mxu0
      %v2420 = vadd.f32 0.0, %v2419
      %v2421 = vpop.f32.mrb[0].mxu0
      %2422 = vmatprep.mubr.bf16.mxu0 0
      %2423 = vmatmul.mubr.bf16.gmra.mrb[0].mxu0 %v2290
      %v2424 = vpop.f32.mrb[0].mxu0
      %v2425 = vadd.f32 0.0, %v2424
      %v2426 = vpop.f32.mrb[0].mxu0
      %v2427 = vpop.f32.mrb[0].mxu0
      %v2428 = vadd.f32 0.0, %v2427
      %v2429 = vpop.f32.mrb[0].mxu0
      %2430 = vmatprep.mubr.bf16.mxu0 0
      %2431 = vmatmul.mubr.bf16.gmra.mrb[0].mxu0 %v2293
      %v2432 = vpop.f32.mrb[0].mxu0
      %v2433 = vadd.f32 0.0, %v2432
      %v2434 = vpop.f32.mrb[0].mxu0
      %v2435 = vpop.f32.mrb[0].mxu0
      %v2436 = vadd.f32 0.0, %v2435
      %v2437 = vpop.f32.mrb[0].mxu0
      %2438 = vmatprep.mubr.bf16.mxu0 0
      %2439 = vmatmul.mubr.bf16.gmra.mrb[0].mxu0 %v2296
      %v2440 = vpop.f32.mrb[0].mxu0
      %v2441 = vadd.f32 0.0, %v2440
      %v2442 = vpop.f32.mrb[0].mxu0
      %v2443 = vpop.f32.mrb[0].mxu0
      %v2444 = vadd.f32 0.0, %v2443
      %v2445 = vpop.f32.mrb[0].mxu0
      %2446 = vmatprep.mubr.bf16.mxu0 0
      %2447 = vmatmul.mubr.bf16.gmra.mrb[0].mxu0 %v2299
      %v2448 = vpop.f32.mrb[0].mxu0
      %v2449 = vadd.f32 0.0, %v2448
      %v2450 = vpop.f32.mrb[0].mxu0
      %v2451 = vpop.f32.mrb[0].mxu0
      %v2452 = vadd.f32 0.0, %v2451
      %v2453 = vpop.f32.mrb[0].mxu0
      %2454 = vmatprep.mubr.bf16.mxu0 0
      %2455 = vmatmul.mubr.bf16.gmra.mrb[0].mxu0 %v2302
      %v2456 = vpop.f32.mrb[0].mxu0
      %v2457 = vadd.f32 0.0, %v2456
      %v2458 = vpop.f32.mrb[0].mxu0
      %v2459 = vpop.f32.mrb[0].mxu0
      %v2460 = vadd.f32 0.0, %v2459
      %v2461 = vpop.f32.mrb[0].mxu0
      %2462 = vmatprep.mubr.bf16.mxu0 0
      %2463 = vmatmul.mubr.bf16.gmra.mrb[0].mxu0 %v2305
      %v2464 = vpop.f32.mrb[0].mxu0
      %v2465 = vadd.f32 0.0, %v2464
      %v2466 = vpop.f32.mrb[0].mxu0
      %v2467 = vpop.f32.mrb[0].mxu0
      %v2468 = vadd.f32 0.0, %v2467
      %v2469 = vpop.f32.mrb[0].mxu0
      %2470 = vdwg.mxu0
      %v2471 = vadd.f32 %v1920, %v2345
      %v2472 = vadd.f32 %v1923, %v2348
      %v2473 = vadd.f32 %v1928, %v2353
      %v2474 = vadd.f32 %v1931, %v2356
      %v2475 = vadd.f32 %v1936, %v2361
      %v2476 = vadd.f32 %v1939, %v2364
      %v2477 = vadd.f32 %v1944, %v2369
      %v2478 = vadd.f32 %v1947, %v2372
      %v2479 = vadd.f32 %v1952, %v2377
      %v2480 = vadd.f32 %v1955, %v2380
      %v2481 = vadd.f32 %v1960, %v2385
      %v2482 = vadd.f32 %v1963, %v2388
      %v2483 = vadd.f32 %v1968, %v2393
      %v2484 = vadd.f32 %v1971, %v2396
      %v2485 = vadd.f32 %v1976, %v2401
      %v2486 = vadd.f32 %v1979, %v2404
      %v2487 = vadd.f32 %v1984, %v2409
      %v2488 = vadd.f32 %v1987, %v2412
      %v2489 = vadd.f32 %v1992, %v2417
      %v2490 = vadd.f32 %v1995, %v2420
      %v2491 = vadd.f32 %v2000, %v2425
      %v2492 = vadd.f32 %v2003, %v2428
      %v2493 = vadd.f32 %v2008, %v2433
      %v2494 = vadd.f32 %v2011, %v2436
      %v2495 = vadd.f32 %v2016, %v2441
      %v2496 = vadd.f32 %v2019, %v2444
      %v2497 = vadd.f32 %v2024, %v2449
      %v2498 = vadd.f32 %v2027, %v2452
      %v2499 = vadd.f32 %v2032, %v2457
      %v2500 = vadd.f32 %v2035, %v2460
      %v2501 = vadd.f32 %v2040, %v2465
      %v2502 = vadd.f32 %v2043, %v2468
      %v2503 = vld [vmem:[%s623] sm:$0xf]
      %v2504 = vld [vmem:[%s623 + $0x4] sm:$0xf]
      %v2505 = vld [vmem:[%s623 + $0xc] sm:$0xf]
      %v2506 = vld [vmem:[%s623 + $0x10] sm:$0xf]
      %v2507 = vld [vmem:[%s623 + $0x18] sm:$0xf]
      %v2508 = vld [vmem:[%s623 + $0x1c] sm:$0xf]
      %v2509 = vld [vmem:[%s623 + $0x24] sm:$0xf]
      %v2510 = vld [vmem:[%s623 + $0x28] sm:$0xf]
      %v2511 = vld [vmem:[%s623 + $0x30] sm:$0xf]
      %v2512 = vld [vmem:[%s623 + $0x34] sm:$0xf]
      %v2513 = vld [vmem:[%s623 + $0x3c] sm:$0xf]
      %v2514 = vld [vmem:[%s623 + $0x40] sm:$0xf]
      %v2515 = vld [vmem:[%s623 + $0x48] sm:$0xf]
      %v2516 = vld [vmem:[%s623 + $0x4c] sm:$0xf]
      %v2517 = vld [vmem:[%s623 + $0x54] sm:$0xf]
      %v2518 = vld [vmem:[%s623 + $0x58] sm:$0xf]
      %v2519 = vld [vmem:[%s623 + $0x60] sm:$0xf]
      %v2520 = vld [vmem:[%s623 + $0x64] sm:$0xf]
      %v2521 = vld [vmem:[%s623 + $0x6c] sm:$0xf]
      %v2522 = vld [vmem:[%s623 + $0x70] sm:$0xf]
      %v2523 = vld [vmem:[%s623 + $0x78] sm:$0xf]
      %v2524 = vld [vmem:[%s623 + $0x7c] sm:$0xf]
      %v2525 = vld [vmem:[%s623 + $0x84] sm:$0xf]
      %v2526 = vld [vmem:[%s623 + $0x88] sm:$0xf]
      %v2527 = vld [vmem:[%s623 + $0x90] sm:$0xf]
      %v2528 = vld [vmem:[%s623 + $0x94] sm:$0xf]
      %v2529 = vld [vmem:[%s623 + $0x9c] sm:$0xf]
      %v2530 = vld [vmem:[%s623 + $0xa0] sm:$0xf]
      %v2531 = vld [vmem:[%s623 + $0xa8] sm:$0xf]
      %v2532 = vld [vmem:[%s623 + $0xac] sm:$0xf]
      %v2533 = vld [vmem:[%s623 + $0xb4] sm:$0xf]
      %v2534 = vld [vmem:[%s623 + $0xb8] sm:$0xf]
      %s2535 = scalar_lea.vmem %s1, 6
      %v2536 = vld [vmem:[%s2535] sm:$0x3]
      %v2569 = vunpack.c.l.b16 %v2503
      %v2570 = vunpack.c.l.b16 %v2504
      %v2571 = vunpack.c.l.b16 %v2505
      %v2572 = vunpack.c.l.b16 %v2506
      %v2573 = vunpack.c.l.b16 %v2507
      %v2574 = vunpack.c.l.b16 %v2508
      %v2575 = vunpack.c.l.b16 %v2509
      %v2576 = vunpack.c.l.b16 %v2510
      %v2577 = vunpack.c.l.b16 %v2511
      %v2578 = vunpack.c.l.b16 %v2512
      %v2579 = vunpack.c.l.b16 %v2513
      %v2580 = vunpack.c.l.b16 %v2514
      %v2581 = vunpack.c.l.b16 %v2515
      %v2582 = vunpack.c.l.b16 %v2516
      %v2583 = vunpack.c.l.b16 %v2517
      %v2584 = vunpack.c.l.b16 %v2518
      %v2585 = vunpack.c.l.b16 %v2519
      %v2586 = vunpack.c.l.b16 %v2520
      %v2587 = vunpack.c.l.b16 %v2521
      %v2588 = vunpack.c.l.b16 %v2522
      %v2589 = vunpack.c.l.b16 %v2523
      %v2590 = vunpack.c.l.b16 %v2524
      %v2591 = vunpack.c.l.b16 %v2525
      %v2592 = vunpack.c.l.b16 %v2526
      %v2593 = vunpack.c.l.b16 %v2527
      %v2594 = vunpack.c.l.b16 %v2528
      %v2595 = vunpack.c.l.b16 %v2529
      %v2596 = vunpack.c.l.b16 %v2530
      %v2597 = vunpack.c.l.b16 %v2531
      %v2598 = vunpack.c.l.b16 %v2532
      %v2599 = vunpack.c.l.b16 %v2533
      %v2600 = vunpack.c.l.b16 %v2534
      %v2601 = vpack.c.b16 %v2570, %v2569
      %v2602 = vpack.c.b16 %v2572, %v2571
      %v2603 = vpack.c.b16 %v2574, %v2573
      %v2604 = vpack.c.b16 %v2576, %v2575
      %v2605 = vpack.c.b16 %v2578, %v2577
      %v2606 = vpack.c.b16 %v2580, %v2579
      %v2607 = vpack.c.b16 %v2582, %v2581
      %v2608 = vpack.c.b16 %v2584, %v2583
      %v2609 = vpack.c.b16 %v2586, %v2585
      %v2610 = vpack.c.b16 %v2588, %v2587
      %v2611 = vpack.c.b16 %v2590, %v2589
      %v2612 = vpack.c.b16 %v2592, %v2591
      %v2613 = vpack.c.b16 %v2594, %v2593
      %v2614 = vpack.c.b16 %v2596, %v2595
      %v2615 = vpack.c.b16 %v2598, %v2597
      %v2616 = vpack.c.b16 %v2600, %v2599
      %v2618 = vsel %vm1540, %v2601, 0
      %v2621 = vsel %vm1540, %v2602, 0
      %v2624 = vsel %vm1540, %v2603, 0
      %v2627 = vsel %vm1540, %v2604, 0
      %v2630 = vsel %vm1540, %v2605, 0
      %v2633 = vsel %vm1540, %v2606, 0
      %v2636 = vsel %vm1540, %v2607, 0
      %v2639 = vsel %vm1540, %v2608, 0
      %v2642 = vsel %vm1540, %v2609, 0
      %v2645 = vsel %vm1540, %v2610, 0
      %v2648 = vsel %vm1540, %v2611, 0
      %v2651 = vsel %vm1540, %v2612, 0
      %v2654 = vsel %vm1540, %v2613, 0
      %v2657 = vsel %vm1540, %v2614, 0
      %v2660 = vsel %vm1540, %v2615, 0
      %v2663 = vsel %vm1540, %v2616, 0
      %v2666 = vsel %vm1589, %v2536, 0
      %2668 = vmatprep.subr.bf16.mxu0 0
      %2669 = vmatpush1.bf16.msra.mxu0 %v2666
      %2670 = vmatprep.subr.bf16.mxu0 0
      %2671 = vmatpush1.bf16.msra.mxu0 0
      %2672 = vmatprep.subr.bf16.mxu0 0
      %2673 = vmatpush1.bf16.msra.mxu0 0
      %2674 = vmatprep.subr.bf16.mxu0 0
      %2675 = vmatpush1.bf16.msra.mxu0 0
      %2676 = vmatprep.subr.bf16.mxu0 0
      %2677 = vmatpush1.bf16.msra.mxu0 0
      %2678 = vmatprep.subr.bf16.mxu0 0
      %2679 = vmatpush1.bf16.msra.mxu0 0
      %2680 = vmatprep.subr.bf16.mxu0 0
      %2681 = vmatpush1.bf16.msra.mxu0 0
      %2682 = vmatprep.subr.bf16.mxu0 0
      %2683 = vmatpush1.bf16.msra.mxu0 0
      %2684 = vmatprep.subr.bf16.mxu0 0
      %2685 = vmatpush1.bf16.msra.mxu0 0
      %2686 = vmatprep.subr.bf16.mxu0 0
      %2687 = vmatpush1.bf16.msra.mxu0 0
      %2688 = vmatprep.subr.bf16.mxu0 0
      %2689 = vmatpush1.bf16.msra.mxu0 0
      %2690 = vmatprep.subr.bf16.mxu0 0
      %2691 = vmatpush1.bf16.msra.mxu0 0
      %2692 = vmatprep.subr.bf16.mxu0 0
      %2693 = vmatpush1.bf16.msra.mxu0 0
      %2694 = vmatprep.subr.bf16.mxu0 0
      %2695 = vmatpush1.bf16.msra.mxu0 0
      %2696 = vmatprep.subr.bf16.mxu0 0
      %2697 = vmatpush1.bf16.msra.mxu0 0
      %2698 = vmatprep.subr.bf16.mxu0 0
      %2699 = vmatpush1.bf16.msra.mxu0 0
      %2700 = vmatprep.mubr.bf16.mxu0 0
      %2701 = vmatmul.mubr.bf16.gmra.mrb[0].mxu0 %v2618
      %v2702 = vpop.f32.mrb[0].mxu0
      %v2703 = vadd.f32 0.0, %v2702
      %v2704 = vpop.f32.mrb[0].mxu0
      %v2705 = vpop.f32.mrb[0].mxu0
      %v2706 = vadd.f32 0.0, %v2705
      %v2707 = vpop.f32.mrb[0].mxu0
      %2708 = vmatprep.mubr.bf16.mxu0 0
      %2709 = vmatmul.mubr.bf16.gmra.mrb[0].mxu0 %v2621
      %v2710 = vpop.f32.mrb[0].mxu0
      %v2711 = vadd.f32 0.0, %v2710
      %v2712 = vpop.f32.mrb[0].mxu0
      %v2713 = vpop.f32.mrb[0].mxu0
      %v2714 = vadd.f32 0.0, %v2713
      %v2715 = vpop.f32.mrb[0].mxu0
      %2716 = vmatprep.mubr.bf16.mxu0 0
      %2717 = vmatmul.mubr.bf16.gmra.mrb[0].mxu0 %v2624
      %v2718 = vpop.f32.mrb[0].mxu0
      %v2719 = vadd.f32 0.0, %v2718
      %v2720 = vpop.f32.mrb[0].mxu0
      %v2721 = vpop.f32.mrb[0].mxu0
      %v2722 = vadd.f32 0.0, %v2721
      %v2723 = vpop.f32.mrb[0].mxu0
      %2724 = vmatprep.mubr.bf16.mxu0 0
      %2725 = vmatmul.mubr.bf16.gmra.mrb[0].mxu0 %v2627
      %v2726 = vpop.f32.mrb[0].mxu0
      %v2727 = vadd.f32 0.0, %v2726
      %v2728 = vpop.f32.mrb[0].mxu0
      %v2729 = vpop.f32.mrb[0].mxu0
      %v2730 = vadd.f32 0.0, %v2729
      %v2731 = vpop.f32.mrb[0].mxu0
      %2732 = vmatprep.mubr.bf16.mxu0 0
      %2733 = vmatmul.mubr.bf16.gmra.mrb[0].mxu0 %v2630
      %v2734 = vpop.f32.mrb[0].mxu0
      %v2735 = vadd.f32 0.0, %v2734
      %v2736 = vpop.f32.mrb[0].mxu0
      %v2737 = vpop.f32.mrb[0].mxu0
      %v2738 = vadd.f32 0.0, %v2737
      %v2739 = vpop.f32.mrb[0].mxu0
      %2740 = vmatprep.mubr.bf16.mxu0 0
      %2741 = vmatmul.mubr.bf16.gmra.mrb[0].mxu0 %v2633
      %v2742 = vpop.f32.mrb[0].mxu0
      %v2743 = vadd.f32 0.0, %v2742
      %v2744 = vpop.f32.mrb[0].mxu0
      %v2745 = vpop.f32.mrb[0].mxu0
      %v2746 = vadd.f32 0.0, %v2745
      %v2747 = vpop.f32.mrb[0].mxu0
      %2748 = vmatprep.mubr.bf16.mxu0 0
      %2749 = vmatmul.mubr.bf16.gmra.mrb[0].mxu0 %v2636
      %v2750 = vpop.f32.mrb[0].mxu0
      %v2751 = vadd.f32 0.0, %v2750
      %v2752 = vpop.f32.mrb[0].mxu0
      %v2753 = vpop.f32.mrb[0].mxu0
      %v2754 = vadd.f32 0.0, %v2753
      %v2755 = vpop.f32.mrb[0].mxu0
      %2756 = vmatprep.mubr.bf16.mxu0 0
      %2757 = vmatmul.mubr.bf16.gmra.mrb[0].mxu0 %v2639
      %v2758 = vpop.f32.mrb[0].mxu0
      %v2759 = vadd.f32 0.0, %v2758
      %v2760 = vpop.f32.mrb[0].mxu0
      %v2761 = vpop.f32.mrb[0].mxu0
      %v2762 = vadd.f32 0.0, %v2761
      %v2763 = vpop.f32.mrb[0].mxu0
      %2764 = vmatprep.mubr.bf16.mxu0 0
      %2765 = vmatmul.mubr.bf16.gmra.mrb[0].mxu0 %v2642
      %v2766 = vpop.f32.mrb[0].mxu0
      %v2767 = vadd.f32 0.0, %v2766
      %v2768 = vpop.f32.mrb[0].mxu0
      %v2769 = vpop.f32.mrb[0].mxu0
      %v2770 = vadd.f32 0.0, %v2769
      %v2771 = vpop.f32.mrb[0].mxu0
      %2772 = vmatprep.mubr.bf16.mxu0 0
      %2773 = vmatmul.mubr.bf16.gmra.mrb[0].mxu0 %v2645
      %v2774 = vpop.f32.mrb[0].mxu0
      %v2775 = vadd.f32 0.0, %v2774
      %v2776 = vpop.f32.mrb[0].mxu0
      %v2777 = vpop.f32.mrb[0].mxu0
      %v2778 = vadd.f32 0.0, %v2777
      %v2779 = vpop.f32.mrb[0].mxu0
      %2780 = vmatprep.mubr.bf16.mxu0 0
      %2781 = vmatmul.mubr.bf16.gmra.mrb[0].mxu0 %v2648
      %v2782 = vpop.f32.mrb[0].mxu0
      %v2783 = vadd.f32 0.0, %v2782
      %v2784 = vpop.f32.mrb[0].mxu0
      %v2785 = vpop.f32.mrb[0].mxu0
      %v2786 = vadd.f32 0.0, %v2785
      %v2787 = vpop.f32.mrb[0].mxu0
      %2788 = vmatprep.mubr.bf16.mxu0 0
      %2789 = vmatmul.mubr.bf16.gmra.mrb[0].mxu0 %v2651
      %v2790 = vpop.f32.mrb[0].mxu0
      %v2791 = vadd.f32 0.0, %v2790
      %v2792 = vpop.f32.mrb[0].mxu0
      %v2793 = vpop.f32.mrb[0].mxu0
      %v2794 = vadd.f32 0.0, %v2793
      %v2795 = vpop.f32.mrb[0].mxu0
      %2796 = vmatprep.mubr.bf16.mxu0 0
      %2797 = vmatmul.mubr.bf16.gmra.mrb[0].mxu0 %v2654
      %v2798 = vpop.f32.mrb[0].mxu0
      %v2799 = vadd.f32 0.0, %v2798
      %v2800 = vpop.f32.mrb[0].mxu0
      %v2801 = vpop.f32.mrb[0].mxu0
      %v2802 = vadd.f32 0.0, %v2801
      %v2803 = vpop.f32.mrb[0].mxu0
      %2804 = vmatprep.mubr.bf16.mxu0 0
      %2805 = vmatmul.mubr.bf16.gmra.mrb[0].mxu0 %v2657
      %v2806 = vpop.f32.mrb[0].mxu0
      %v2807 = vadd.f32 0.0, %v2806
      %v2808 = vpop.f32.mrb[0].mxu0
      %v2809 = vpop.f32.mrb[0].mxu0
      %v2810 = vadd.f32 0.0, %v2809
      %v2811 = vpop.f32.mrb[0].mxu0
      %2812 = vmatprep.mubr.bf16.mxu0 0
      %2813 = vmatmul.mubr.bf16.gmra.mrb[0].mxu0 %v2660
      %v2814 = vpop.f32.mrb[0].mxu0
      %v2815 = vadd.f32 0.0, %v2814
      %v2816 = vpop.f32.mrb[0].mxu0
      %v2817 = vpop.f32.mrb[0].mxu0
      %v2818 = vadd.f32 0.0, %v2817
      %v2819 = vpop.f32.mrb[0].mxu0
      %2820 = vmatprep.mubr.bf16.mxu0 0
      %2821 = vmatmul.mubr.bf16.gmra.mrb[0].mxu0 %v2663
      %v2822 = vpop.f32.mrb[0].mxu0
      %v2823 = vadd.f32 0.0, %v2822
      %v2824 = vpop.f32.mrb[0].mxu0
      %v2825 = vpop.f32.mrb[0].mxu0
      %v2826 = vadd.f32 0.0, %v2825
      %v2827 = vpop.f32.mrb[0].mxu0
      %2828 = vdwg.mxu0
      %v2829 = vadd.f32 %v2471, %v2703
      %v2830 = vadd.f32 %v2472, %v2706
      %v2831 = vadd.f32 %v2473, %v2711
      %v2832 = vadd.f32 %v2474, %v2714
      %v2833 = vadd.f32 %v2475, %v2719
      %v2834 = vadd.f32 %v2476, %v2722
      %v2835 = vadd.f32 %v2477, %v2727
      %v2836 = vadd.f32 %v2478, %v2730
      %v2837 = vadd.f32 %v2479, %v2735
      %v2838 = vadd.f32 %v2480, %v2738
      %v2839 = vadd.f32 %v2481, %v2743
      %v2840 = vadd.f32 %v2482, %v2746
      %v2841 = vadd.f32 %v2483, %v2751
      %v2842 = vadd.f32 %v2484, %v2754
      %v2843 = vadd.f32 %v2485, %v2759
      %v2844 = vadd.f32 %v2486, %v2762
      %v2845 = vadd.f32 %v2487, %v2767
      %v2846 = vadd.f32 %v2488, %v2770
      %v2847 = vadd.f32 %v2489, %v2775
      %v2848 = vadd.f32 %v2490, %v2778
      %v2849 = vadd.f32 %v2491, %v2783
      %v2850 = vadd.f32 %v2492, %v2786
      %v2851 = vadd.f32 %v2493, %v2791
      %v2852 = vadd.f32 %v2494, %v2794
      %v2853 = vadd.f32 %v2495, %v2799
      %v2854 = vadd.f32 %v2496, %v2802
      %v2855 = vadd.f32 %v2497, %v2807
      %v2856 = vadd.f32 %v2498, %v2810
      %v2857 = vadd.f32 %v2499, %v2815
      %v2858 = vadd.f32 %v2500, %v2818
      %v2859 = vadd.f32 %v2501, %v2823
      %v2860 = vadd.f32 %v2502, %v2826
      %v2861 = vld [vmem:[%s623] sm:$0xf]
      %v2862 = vld [vmem:[%s623 + $0x4] sm:$0xf]
      %v2863 = vld [vmem:[%s623 + $0x8] sm:$0x1]
      %v2864 = vld [vmem:[%s623 + $0xc] sm:$0xf]
      %v2865 = vld [vmem:[%s623 + $0x10] sm:$0xf]
      %v2866 = vld [vmem:[%s623 + $0x14] sm:$0x1]
      %v2867 = vld [vmem:[%s623 + $0x18] sm:$0xf]
      %v2868 = vld [vmem:[%s623 + $0x1c] sm:$0xf]
      %v2869 = vld [vmem:[%s623 + $0x20] sm:$0x1]
      %v2870 = vld [vmem:[%s623 + $0x24] sm:$0xf]
      %v2871 = vld [vmem:[%s623 + $0x28] sm:$0xf]
      %v2872 = vld [vmem:[%s623 + $0x2c] sm:$0x1]
      %v2873 = vld [vmem:[%s623 + $0x30] sm:$0xf]
      %v2874 = vld [vmem:[%s623 + $0x34] sm:$0xf]
      %v2875 = vld [vmem:[%s623 + $0x38] sm:$0x1]
      %v2876 = vld [vmem:[%s623 + $0x3c] sm:$0xf]
      %v2877 = vld [vmem:[%s623 + $0x40] sm:$0xf]
      %v2878 = vld [vmem:[%s623 + $0x44] sm:$0x1]
      %v2879 = vld [vmem:[%s623 + $0x48] sm:$0xf]
      %v2880 = vld [vmem:[%s623 + $0x4c] sm:$0xf]
      %v2881 = vld [vmem:[%s623 + $0x50] sm:$0x1]
      %v2882 = vld [vmem:[%s623 + $0x54] sm:$0xf]
      %v2883 = vld [vmem:[%s623 + $0x58] sm:$0xf]
      %v2884 = vld [vmem:[%s623 + $0x5c] sm:$0x1]
      %v2885 = vld [vmem:[%s623 + $0x60] sm:$0xf]
      %v2886 = vld [vmem:[%s623 + $0x64] sm:$0xf]
      %v2887 = vld [vmem:[%s623 + $0x68] sm:$0x1]
      %v2888 = vld [vmem:[%s623 + $0x6c] sm:$0xf]
      %v2889 = vld [vmem:[%s623 + $0x70] sm:$0xf]
      %v2890 = vld [vmem:[%s623 + $0x74] sm:$0x1]
      %v2891 = vld [vmem:[%s623 + $0x78] sm:$0xf]
      %v2892 = vld [vmem:[%s623 + $0x7c] sm:$0xf]
      %v2893 = vld [vmem:[%s623 + $0x80] sm:$0x1]
      %v2894 = vld [vmem:[%s623 + $0x84] sm:$0xf]
      %v2895 = vld [vmem:[%s623 + $0x88] sm:$0xf]
      %v2896 = vld [vmem:[%s623 + $0x8c] sm:$0x1]
      %v2897 = vld [vmem:[%s623 + $0x90] sm:$0xf]
      %v2898 = vld [vmem:[%s623 + $0x94] sm:$0xf]
      %v2899 = vld [vmem:[%s623 + $0x98] sm:$0x1]
      %v2900 = vld [vmem:[%s623 + $0x9c] sm:$0xf]
      %v2901 = vld [vmem:[%s623 + $0xa0] sm:$0xf]
      %v2902 = vld [vmem:[%s623 + $0xa4] sm:$0x1]
      %v2903 = vld [vmem:[%s623 + $0xa8] sm:$0xf]
      %v2904 = vld [vmem:[%s623 + $0xac] sm:$0xf]
      %v2905 = vld [vmem:[%s623 + $0xb0] sm:$0x1]
      %v2906 = vld [vmem:[%s623 + $0xb4] sm:$0xf]
      %v2907 = vld [vmem:[%s623 + $0xb8] sm:$0xf]
      %v2908 = vld [vmem:[%s623 + $0xbc] sm:$0x1]
      %v2910 = vshrl.u32 %v2861, 16
      %v2912 = vrot.slane %v2910, 4
      %v2913 = vshll.u32 %v2861, 16
      %v2915 = vrot.slane %v2913, 5
      %v2916 = vor.u32 %v2912, %v2915
      %v2917 = vrot.slane %v2916, 4
      %v2919 = vshll.u32 %v2862, 16
      %v2921 = vrot.slane %v2919, 5
      %v2922 = vsel %vm1105, %v2917, %v2921
      %v2923 = vshrl.u32 %v2862, 16
      %v2925 = vrot.slane %v2923, 4
      %v2926 = vor.u32 %v2925, %v2921
      %v2927 = vrot.slane %v2926, 4
      %v2929 = vshll.u32 %v2863, 16
      %v2931 = vrot.slane %v2929, 5
      %v2932 = vsel %vm1105, %v2927, %v2931
      %v2934 = vshrl.u32 %v2864, 16
      %v2936 = vrot.slane %v2934, 4
      %v2937 = vshll.u32 %v2864, 16
      %v2939 = vrot.slane %v2937, 5
      %v2940 = vor.u32 %v2936, %v2939
      %v2941 = vrot.slane %v2940, 4
      %v2943 = vshll.u32 %v2865, 16
      %v2945 = vrot.slane %v2943, 5
      %v2946 = vsel %vm1105, %v2941, %v2945
      %v2947 = vshrl.u32 %v2865, 16
      %v2949 = vrot.slane %v2947, 4
      %v2950 = vor.u32 %v2949, %v2945
      %v2951 = vrot.slane %v2950, 4
      %v2953 = vshll.u32 %v2866, 16
      %v2955 = vrot.slane %v2953, 5
      %v2956 = vsel %vm1105, %v2951, %v2955
      %v2958 = vshrl.u32 %v2867, 16
      %v2960 = vrot.slane %v2958, 4
      %v2961 = vshll.u32 %v2867, 16
      %v2963 = vrot.slane %v2961, 5
      %v2964 = vor.u32 %v2960, %v2963
      %v2965 = vrot.slane %v2964, 4
      %v2967 = vshll.u32 %v2868, 16
      %v2969 = vrot.slane %v2967, 5
      %v2970 = vsel %vm1105, %v2965, %v2969
      %v2971 = vshrl.u32 %v2868, 16
      %v2973 = vrot.slane %v2971, 4
      %v2974 = vor.u32 %v2973, %v2969
      %v2975 = vrot.slane %v2974, 4
      %v2977 = vshll.u32 %v2869, 16
      %v2979 = vrot.slane %v2977, 5
      %v2980 = vsel %vm1105, %v2975, %v2979
      %v2982 = vshrl.u32 %v2870, 16
      %v2984 = vrot.slane %v2982, 4
      %v2985 = vshll.u32 %v2870, 16
      %v2987 = vrot.slane %v2985, 5
      %v2988 = vor.u32 %v2984, %v2987
      %v2989 = vrot.slane %v2988, 4
      %v2991 = vshll.u32 %v2871, 16
      %v2993 = vrot.slane %v2991, 5
      %v2994 = vsel %vm1105, %v2989, %v2993
      %v2995 = vshrl.u32 %v2871, 16
      %v2997 = vrot.slane %v2995, 4
      %v2998 = vor.u32 %v2997, %v2993
      %v2999 = vrot.slane %v2998, 4
      %v3001 = vshll.u32 %v2872, 16
      %v3003 = vrot.slane %v3001, 5
      %v3004 = vsel %vm1105, %v2999, %v3003
      %v3006 = vshrl.u32 %v2873, 16
      %v3008 = vrot.slane %v3006, 4
      %v3009 = vshll.u32 %v2873, 16
      %v3011 = vrot.slane %v3009, 5
      %v3012 = vor.u32 %v3008, %v3011
      %v3013 = vrot.slane %v3012, 4
      %v3015 = vshll.u32 %v2874, 16
      %v3017 = vrot.slane %v3015, 5
      %v3018 = vsel %vm1105, %v3013, %v3017
      %v3019 = vshrl.u32 %v2874, 16
      %v3021 = vrot.slane %v3019, 4
      %v3022 = vor.u32 %v3021, %v3017
      %v3023 = vrot.slane %v3022, 4
      %v3025 = vshll.u32 %v2875, 16
      %v3027 = vrot.slane %v3025, 5
      %v3028 = vsel %vm1105, %v3023, %v3027
      %v3030 = vshrl.u32 %v2876, 16
      %v3032 = vrot.slane %v3030, 4
      %v3033 = vshll.u32 %v2876, 16
      %v3035 = vrot.slane %v3033, 5
      %v3036 = vor.u32 %v3032, %v3035
      %v3037 = vrot.slane %v3036, 4
      %v3039 = vshll.u32 %v2877, 16
      %v3041 = vrot.slane %v3039, 5
      %v3042 = vsel %vm1105, %v3037, %v3041
      %v3043 = vshrl.u32 %v2877, 16
      %v3045 = vrot.slane %v3043, 4
      %v3046 = vor.u32 %v3045, %v3041
      %v3047 = vrot.slane %v3046, 4
      %v3049 = vshll.u32 %v2878, 16
      %v3051 = vrot.slane %v3049, 5
      %v3052 = vsel %vm1105, %v3047, %v3051
      %v3054 = vshrl.u32 %v2879, 16
      %v3056 = vrot.slane %v3054, 4
      %v3057 = vshll.u32 %v2879, 16
      %v3059 = vrot.slane %v3057, 5
      %v3060 = vor.u32 %v3056, %v3059
      %v3061 = vrot.slane %v3060, 4
      %v3063 = vshll.u32 %v2880, 16
      %v3065 = vrot.slane %v3063, 5
      %v3066 = vsel %vm1105, %v3061, %v3065
      %v3067 = vshrl.u32 %v2880, 16
      %v3069 = vrot.slane %v3067, 4
      %v3070 = vor.u32 %v3069, %v3065
      %v3071 = vrot.slane %v3070, 4
      %v3073 = vshll.u32 %v2881, 16
      %v3075 = vrot.slane %v3073, 5
      %v3076 = vsel %vm1105, %v3071, %v3075
      %v3078 = vshrl.u32 %v2882, 16
      %v3080 = vrot.slane %v3078, 4
      %v3081 = vshll.u32 %v2882, 16
      %v3083 = vrot.slane %v3081, 5
      %v3084 = vor.u32 %v3080, %v3083
      %v3085 = vrot.slane %v3084, 4
      %v3087 = vshll.u32 %v2883, 16
      %v3089 = vrot.slane %v3087, 5
      %v3090 = vsel %vm1105, %v3085, %v3089
      %v3091 = vshrl.u32 %v2883, 16
      %v3093 = vrot.slane %v3091, 4
      %v3094 = vor.u32 %v3093, %v3089
      %v3095 = vrot.slane %v3094, 4
      %v3097 = vshll.u32 %v2884, 16
      %v3099 = vrot.slane %v3097, 5
      %v3100 = vsel %vm1105, %v3095, %v3099
      %v3102 = vshrl.u32 %v2885, 16
      %v3104 = vrot.slane %v3102, 4
      %v3105 = vshll.u32 %v2885, 16
      %v3107 = vrot.slane %v3105, 5
      %v3108 = vor.u32 %v3104, %v3107
      %v3109 = vrot.slane %v3108, 4
      %v3111 = vshll.u32 %v2886, 16
      %v3113 = vrot.slane %v3111, 5
      %v3114 = vsel %vm1105, %v3109, %v3113
      %v3115 = vshrl.u32 %v2886, 16
      %v3117 = vrot.slane %v3115, 4
      %v3118 = vor.u32 %v3117, %v3113
      %v3119 = vrot.slane %v3118, 4
      %v3121 = vshll.u32 %v2887, 16
      %v3123 = vrot.slane %v3121, 5
      %v3124 = vsel %vm1105, %v3119, %v3123
      %v3126 = vshrl.u32 %v2888, 16
      %v3128 = vrot.slane %v3126, 4
      %v3129 = vshll.u32 %v2888, 16
      %v3131 = vrot.slane %v3129, 5
      %v3132 = vor.u32 %v3128, %v3131
      %v3133 = vrot.slane %v3132, 4
      %v3135 = vshll.u32 %v2889, 16
      %v3137 = vrot.slane %v3135, 5
      %v3138 = vsel %vm1105, %v3133, %v3137
      %v3139 = vshrl.u32 %v2889, 16
      %v3141 = vrot.slane %v3139, 4
      %v3142 = vor.u32 %v3141, %v3137
      %v3143 = vrot.slane %v3142, 4
      %v3145 = vshll.u32 %v2890, 16
      %v3147 = vrot.slane %v3145, 5
      %v3148 = vsel %vm1105, %v3143, %v3147
      %v3150 = vshrl.u32 %v2891, 16
      %v3152 = vrot.slane %v3150, 4
      %v3153 = vshll.u32 %v2891, 16
      %v3155 = vrot.slane %v3153, 5
      %v3156 = vor.u32 %v3152, %v3155
      %v3157 = vrot.slane %v3156, 4
      %v3159 = vshll.u32 %v2892, 16
      %v3161 = vrot.slane %v3159, 5
      %v3162 = vsel %vm1105, %v3157, %v3161
      %v3163 = vshrl.u32 %v2892, 16
      %v3165 = vrot.slane %v3163, 4
      %v3166 = vor.u32 %v3165, %v3161
      %v3167 = vrot.slane %v3166, 4
      %v3169 = vshll.u32 %v2893, 16
      %v3171 = vrot.slane %v3169, 5
      %v3172 = vsel %vm1105, %v3167, %v3171
      %v3174 = vshrl.u32 %v2894, 16
      %v3176 = vrot.slane %v3174, 4
      %v3177 = vshll.u32 %v2894, 16
      %v3179 = vrot.slane %v3177, 5
      %v3180 = vor.u32 %v3176, %v3179
      %v3181 = vrot.slane %v3180, 4
      %v3183 = vshll.u32 %v2895, 16
      %v3185 = vrot.slane %v3183, 5
      %v3186 = vsel %vm1105, %v3181, %v3185
      %v3187 = vshrl.u32 %v2895, 16
      %v3189 = vrot.slane %v3187, 4
      %v3190 = vor.u32 %v3189, %v3185
      %v3191 = vrot.slane %v3190, 4
      %v3193 = vshll.u32 %v2896, 16
      %v3195 = vrot.slane %v3193, 5
      %v3196 = vsel %vm1105, %v3191, %v3195
      %v3198 = vshrl.u32 %v2897, 16
      %v3200 = vrot.slane %v3198, 4
      %v3201 = vshll.u32 %v2897, 16
      %v3203 = vrot.slane %v3201, 5
      %v3204 = vor.u32 %v3200, %v3203
      %v3205 = vrot.slane %v3204, 4
      %v3207 = vshll.u32 %v2898, 16
      %v3209 = vrot.slane %v3207, 5
      %v3210 = vsel %vm1105, %v3205, %v3209
      %v3211 = vshrl.u32 %v2898, 16
      %v3213 = vrot.slane %v3211, 4
      %v3214 = vor.u32 %v3213, %v3209
      %v3215 = vrot.slane %v3214, 4
      %v3217 = vshll.u32 %v2899, 16
      %v3219 = vrot.slane %v3217, 5
      %v3220 = vsel %vm1105, %v3215, %v3219
      %v3222 = vshrl.u32 %v2900, 16
      %v3224 = vrot.slane %v3222, 4
      %v3225 = vshll.u32 %v2900, 16
      %v3227 = vrot.slane %v3225, 5
      %v3228 = vor.u32 %v3224, %v3227
      %v3229 = vrot.slane %v3228, 4
      %v3231 = vshll.u32 %v2901, 16
      %v3233 = vrot.slane %v3231, 5
      %v3234 = vsel %vm1105, %v3229, %v3233
      %v3235 = vshrl.u32 %v2901, 16
      %v3237 = vrot.slane %v3235, 4
      %v3238 = vor.u32 %v3237, %v3233
      %v3239 = vrot.slane %v3238, 4
      %v3241 = vshll.u32 %v2902, 16
      %v3243 = vrot.slane %v3241, 5
      %v3244 = vsel %vm1105, %v3239, %v3243
      %v3246 = vshrl.u32 %v2903, 16
      %v3248 = vrot.slane %v3246, 4
      %v3249 = vshll.u32 %v2903, 16
      %v3251 = vrot.slane %v3249, 5
      %v3252 = vor.u32 %v3248, %v3251
      %v3253 = vrot.slane %v3252, 4
      %v3255 = vshll.u32 %v2904, 16
      %v3257 = vrot.slane %v3255, 5
      %v3258 = vsel %vm1105, %v3253, %v3257
      %v3259 = vshrl.u32 %v2904, 16
      %v3261 = vrot.slane %v3259, 4
      %v3262 = vor.u32 %v3261, %v3257
      %v3263 = vrot.slane %v3262, 4
      %v3265 = vshll.u32 %v2905, 16
      %v3267 = vrot.slane %v3265, 5
      %v3268 = vsel %vm1105, %v3263, %v3267
      %v3270 = vshrl.u32 %v2906, 16
      %v3272 = vrot.slane %v3270, 4
      %v3273 = vshll.u32 %v2906, 16
      %v3275 = vrot.slane %v3273, 5
      %v3276 = vor.u32 %v3272, %v3275
      %v3277 = vrot.slane %v3276, 4
      %v3279 = vshll.u32 %v2907, 16
      %v3281 = vrot.slane %v3279, 5
      %v3282 = vsel %vm1105, %v3277, %v3281
      %v3283 = vshrl.u32 %v2907, 16
      %v3285 = vrot.slane %v3283, 4
      %v3286 = vor.u32 %v3285, %v3281
      %v3287 = vrot.slane %v3286, 4
      %v3289 = vshll.u32 %v2908, 16
      %v3291 = vrot.slane %v3289, 5
      %v3292 = vsel %vm1105, %v3287, %v3291
      %s3293 = scalar_lea.vmem %s1, 8
      %v3294 = vld [vmem:[%s3293] sm:$0x3]
      %v3295 = vunpack.c.l.b16 %v2922
      %v3296 = vunpack.c.l.b16 %v2932
      %v3297 = vunpack.c.l.b16 %v2946
      %v3298 = vunpack.c.l.b16 %v2956
      %v3299 = vunpack.c.l.b16 %v2970
      %v3300 = vunpack.c.l.b16 %v2980
      %v3301 = vunpack.c.l.b16 %v2994
      %v3302 = vunpack.c.l.b16 %v3004
      %v3303 = vunpack.c.l.b16 %v3018
      %v3304 = vunpack.c.l.b16 %v3028
      %v3305 = vunpack.c.l.b16 %v3042
      %v3306 = vunpack.c.l.b16 %v3052
      %v3307 = vunpack.c.l.b16 %v3066
      %v3308 = vunpack.c.l.b16 %v3076
      %v3309 = vunpack.c.l.b16 %v3090
      %v3310 = vunpack.c.l.b16 %v3100
      %v3311 = vunpack.c.l.b16 %v3114
      %v3312 = vunpack.c.l.b16 %v3124
      %v3313 = vunpack.c.l.b16 %v3138
      %v3314 = vunpack.c.l.b16 %v3148
      %v3315 = vunpack.c.l.b16 %v3162
      %v3316 = vunpack.c.l.b16 %v3172
      %v3317 = vunpack.c.l.b16 %v3186
      %v3318 = vunpack.c.l.b16 %v3196
      %v3319 = vunpack.c.l.b16 %v3210
      %v3320 = vunpack.c.l.b16 %v3220
      %v3321 = vunpack.c.l.b16 %v3234
      %v3322 = vunpack.c.l.b16 %v3244
      %v3323 = vunpack.c.l.b16 %v3258
      %v3324 = vunpack.c.l.b16 %v3268
      %v3325 = vunpack.c.l.b16 %v3282
      %v3326 = vunpack.c.l.b16 %v3292
      %v3327 = vpack.c.b16 %v3296, %v3295
      %v3328 = vpack.c.b16 %v3298, %v3297
      %v3329 = vpack.c.b16 %v3300, %v3299
      %v3330 = vpack.c.b16 %v3302, %v3301
      %v3331 = vpack.c.b16 %v3304, %v3303
      %v3332 = vpack.c.b16 %v3306, %v3305
      %v3333 = vpack.c.b16 %v3308, %v3307
      %v3334 = vpack.c.b16 %v3310, %v3309
      %v3335 = vpack.c.b16 %v3312, %v3311
      %v3336 = vpack.c.b16 %v3314, %v3313
      %v3337 = vpack.c.b16 %v3316, %v3315
      %v3338 = vpack.c.b16 %v3318, %v3317
      %v3339 = vpack.c.b16 %v3320, %v3319
      %v3340 = vpack.c.b16 %v3322, %v3321
      %v3341 = vpack.c.b16 %v3324, %v3323
      %v3342 = vpack.c.b16 %v3326, %v3325
      %v3344 = vsel %vm1540, %v3327, 0
      %v3347 = vsel %vm1540, %v3328, 0
      %v3350 = vsel %vm1540, %v3329, 0
      %v3353 = vsel %vm1540, %v3330, 0
      %v3356 = vsel %vm1540, %v3331, 0
      %v3359 = vsel %vm1540, %v3332, 0
      %v3362 = vsel %vm1540, %v3333, 0
      %v3365 = vsel %vm1540, %v3334, 0
      %v3368 = vsel %vm1540, %v3335, 0
      %v3371 = vsel %vm1540, %v3336, 0
      %v3374 = vsel %vm1540, %v3337, 0
      %v3377 = vsel %vm1540, %v3338, 0
      %v3380 = vsel %vm1540, %v3339, 0
      %v3383 = vsel %vm1540, %v3340, 0
      %v3386 = vsel %vm1540, %v3341, 0
      %v3389 = vsel %vm1540, %v3342, 0
      %v3392 = vsel %vm1589, %v3294, 0
      %3394 = vmatprep.subr.bf16.mxu0 0
      %3395 = vmatpush1.bf16.msra.mxu0 %v3392
      %3396 = vmatprep.subr.bf16.mxu0 0
      %3397 = vmatpush1.bf16.msra.mxu0 0
      %3398 = vmatprep.subr.bf16.mxu0 0
      %3399 = vmatpush1.bf16.msra.mxu0 0
      %3400 = vmatprep.subr.bf16.mxu0 0
      %3401 = vmatpush1.bf16.msra.mxu0 0
      %3402 = vmatprep.subr.bf16.mxu0 0
      %3403 = vmatpush1.bf16.msra.mxu0 0
      %3404 = vmatprep.subr.bf16.mxu0 0
      %3405 = vmatpush1.bf16.msra.mxu0 0
      %3406 = vmatprep.subr.bf16.mxu0 0
      %3407 = vmatpush1.bf16.msra.mxu0 0
      %3408 = vmatprep.subr.bf16.mxu0 0
      %3409 = vmatpush1.bf16.msra.mxu0 0
      %3410 = vmatprep.subr.bf16.mxu0 0
      %3411 = vmatpush1.bf16.msra.mxu0 0
      %3412 = vmatprep.subr.bf16.mxu0 0
      %3413 = vmatpush1.bf16.msra.mxu0 0
      %3414 = vmatprep.subr.bf16.mxu0 0
      %3415 = vmatpush1.bf16.msra.mxu0 0
      %3416 = vmatprep.subr.bf16.mxu0 0
      %3417 = vmatpush1.bf16.msra.mxu0 0
      %3418 = vmatprep.subr.bf16.mxu0 0
      %3419 = vmatpush1.bf16.msra.mxu0 0
      %3420 = vmatprep.subr.bf16.mxu0 0
      %3421 = vmatpush1.bf16.msra.mxu0 0
      %3422 = vmatprep.subr.bf16.mxu0 0
      %3423 = vmatpush1.bf16.msra.mxu0 0
      %3424 = vmatprep.subr.bf16.mxu0 0
      %3425 = vmatpush1.bf16.msra.mxu0 0
      %3426 = vmatprep.mubr.bf16.mxu0 0
      %3427 = vmatmul.mubr.bf16.gmra.mrb[0].mxu0 %v3344
      %v3428 = vpop.f32.mrb[0].mxu0
      %v3429 = vadd.f32 0.0, %v3428
      %v3430 = vpop.f32.mrb[0].mxu0
      %v3431 = vpop.f32.mrb[0].mxu0
      %v3432 = vadd.f32 0.0, %v3431
      %v3433 = vpop.f32.mrb[0].mxu0
      %3434 = vmatprep.mubr.bf16.mxu0 0
      %3435 = vmatmul.mubr.bf16.gmra.mrb[0].mxu0 %v3347
      %v3436 = vpop.f32.mrb[0].mxu0
      %v3437 = vadd.f32 0.0, %v3436
      %v3438 = vpop.f32.mrb[0].mxu0
      %v3439 = vpop.f32.mrb[0].mxu0
      %v3440 = vadd.f32 0.0, %v3439
      %v3441 = vpop.f32.mrb[0].mxu0
      %3442 = vmatprep.mubr.bf16.mxu0 0
      %3443 = vmatmul.mubr.bf16.gmra.mrb[0].mxu0 %v3350
      %v3444 = vpop.f32.mrb[0].mxu0
      %v3445 = vadd.f32 0.0, %v3444
      %v3446 = vpop.f32.mrb[0].mxu0
      %v3447 = vpop.f32.mrb[0].mxu0
      %v3448 = vadd.f32 0.0, %v3447
      %v3449 = vpop.f32.mrb[0].mxu0
      %3450 = vmatprep.mubr.bf16.mxu0 0
      %3451 = vmatmul.mubr.bf16.gmra.mrb[0].mxu0 %v3353
      %v3452 = vpop.f32.mrb[0].mxu0
      %v3453 = vadd.f32 0.0, %v3452
      %v3454 = vpop.f32.mrb[0].mxu0
      %v3455 = vpop.f32.mrb[0].mxu0
      %v3456 = vadd.f32 0.0, %v3455
      %v3457 = vpop.f32.mrb[0].mxu0
      %3458 = vmatprep.mubr.bf16.mxu0 0
      %3459 = vmatmul.mubr.bf16.gmra.mrb[0].mxu0 %v3356
      %v3460 = vpop.f32.mrb[0].mxu0
      %v3461 = vadd.f32 0.0, %v3460
      %v3462 = vpop.f32.mrb[0].mxu0
      %v3463 = vpop.f32.mrb[0].mxu0
      %v3464 = vadd.f32 0.0, %v3463
      %v3465 = vpop.f32.mrb[0].mxu0
      %3466 = vmatprep.mubr.bf16.mxu0 0
      %3467 = vmatmul.mubr.bf16.gmra.mrb[0].mxu0 %v3359
      %v3468 = vpop.f32.mrb[0].mxu0
      %v3469 = vadd.f32 0.0, %v3468
      %v3470 = vpop.f32.mrb[0].mxu0
      %v3471 = vpop.f32.mrb[0].mxu0
      %v3472 = vadd.f32 0.0, %v3471
      %v3473 = vpop.f32.mrb[0].mxu0
      %3474 = vmatprep.mubr.bf16.mxu0 0
      %3475 = vmatmul.mubr.bf16.gmra.mrb[0].mxu0 %v3362
      %v3476 = vpop.f32.mrb[0].mxu0
      %v3477 = vadd.f32 0.0, %v3476
      %v3478 = vpop.f32.mrb[0].mxu0
      %v3479 = vpop.f32.mrb[0].mxu0
      %v3480 = vadd.f32 0.0, %v3479
      %v3481 = vpop.f32.mrb[0].mxu0
      %3482 = vmatprep.mubr.bf16.mxu0 0
      %3483 = vmatmul.mubr.bf16.gmra.mrb[0].mxu0 %v3365
      %v3484 = vpop.f32.mrb[0].mxu0
      %v3485 = vadd.f32 0.0, %v3484
      %v3486 = vpop.f32.mrb[0].mxu0
      %v3487 = vpop.f32.mrb[0].mxu0
      %v3488 = vadd.f32 0.0, %v3487
      %v3489 = vpop.f32.mrb[0].mxu0
      %3490 = vmatprep.mubr.bf16.mxu0 0
      %3491 = vmatmul.mubr.bf16.gmra.mrb[0].mxu0 %v3368
      %v3492 = vpop.f32.mrb[0].mxu0
      %v3493 = vadd.f32 0.0, %v3492
      %v3494 = vpop.f32.mrb[0].mxu0
      %v3495 = vpop.f32.mrb[0].mxu0
      %v3496 = vadd.f32 0.0, %v3495
      %v3497 = vpop.f32.mrb[0].mxu0
      %3498 = vmatprep.mubr.bf16.mxu0 0
      %3499 = vmatmul.mubr.bf16.gmra.mrb[0].mxu0 %v3371
      %v3500 = vpop.f32.mrb[0].mxu0
      %v3501 = vadd.f32 0.0, %v3500
      %v3502 = vpop.f32.mrb[0].mxu0
      %v3503 = vpop.f32.mrb[0].mxu0
      %v3504 = vadd.f32 0.0, %v3503
      %v3505 = vpop.f32.mrb[0].mxu0
      %3506 = vmatprep.mubr.bf16.mxu0 0
      %3507 = vmatmul.mubr.bf16.gmra.mrb[0].mxu0 %v3374
      %v3508 = vpop.f32.mrb[0].mxu0
      %v3509 = vadd.f32 0.0, %v3508
      %v3510 = vpop.f32.mrb[0].mxu0
      %v3511 = vpop.f32.mrb[0].mxu0
      %v3512 = vadd.f32 0.0, %v3511
      %v3513 = vpop.f32.mrb[0].mxu0
      %3514 = vmatprep.mubr.bf16.mxu0 0
      %3515 = vmatmul.mubr.bf16.gmra.mrb[0].mxu0 %v3377
      %v3516 = vpop.f32.mrb[0].mxu0
      %v3517 = vadd.f32 0.0, %v3516
      %v3518 = vpop.f32.mrb[0].mxu0
      %v3519 = vpop.f32.mrb[0].mxu0
      %v3520 = vadd.f32 0.0, %v3519
      %v3521 = vpop.f32.mrb[0].mxu0
      %3522 = vmatprep.mubr.bf16.mxu0 0
      %3523 = vmatmul.mubr.bf16.gmra.mrb[0].mxu0 %v3380
      %v3524 = vpop.f32.mrb[0].mxu0
      %v3525 = vadd.f32 0.0, %v3524
      %v3526 = vpop.f32.mrb[0].mxu0
      %v3527 = vpop.f32.mrb[0].mxu0
      %v3528 = vadd.f32 0.0, %v3527
      %v3529 = vpop.f32.mrb[0].mxu0
      %3530 = vmatprep.mubr.bf16.mxu0 0
      %3531 = vmatmul.mubr.bf16.gmra.mrb[0].mxu0 %v3383
      %v3532 = vpop.f32.mrb[0].mxu0
      %v3533 = vadd.f32 0.0, %v3532
      %v3534 = vpop.f32.mrb[0].mxu0
      %v3535 = vpop.f32.mrb[0].mxu0
      %v3536 = vadd.f32 0.0, %v3535
      %v3537 = vpop.f32.mrb[0].mxu0
      %3538 = vmatprep.mubr.bf16.mxu0 0
      %3539 = vmatmul.mubr.bf16.gmra.mrb[0].mxu0 %v3386
      %v3540 = vpop.f32.mrb[0].mxu0
      %v3541 = vadd.f32 0.0, %v3540
      %v3542 = vpop.f32.mrb[0].mxu0
      %v3543 = vpop.f32.mrb[0].mxu0
      %v3544 = vadd.f32 0.0, %v3543
      %v3545 = vpop.f32.mrb[0].mxu0
      %3546 = vmatprep.mubr.bf16.mxu0 0
      %3547 = vmatmul.mubr.bf16.gmra.mrb[0].mxu0 %v3389
      %v3548 = vpop.f32.mrb[0].mxu0
      %v3549 = vadd.f32 0.0, %v3548
      %v3550 = vpop.f32.mrb[0].mxu0
      %v3551 = vpop.f32.mrb[0].mxu0
      %v3552 = vadd.f32 0.0, %v3551
      %v3553 = vpop.f32.mrb[0].mxu0
      %3554 = vdwg.mxu0
      %v3555 = vadd.f32 %v2829, %v3429
      %v3556 = vadd.f32 %v2830, %v3432
      %v3557 = vadd.f32 %v2831, %v3437
      %v3558 = vadd.f32 %v2832, %v3440
      %v3559 = vadd.f32 %v2833, %v3445
      %v3560 = vadd.f32 %v2834, %v3448
      %v3561 = vadd.f32 %v2835, %v3453
      %v3562 = vadd.f32 %v2836, %v3456
      %v3563 = vadd.f32 %v2837, %v3461
      %v3564 = vadd.f32 %v2838, %v3464
      %v3565 = vadd.f32 %v2839, %v3469
      %v3566 = vadd.f32 %v2840, %v3472
      %v3567 = vadd.f32 %v2841, %v3477
      %v3568 = vadd.f32 %v2842, %v3480
      %v3569 = vadd.f32 %v2843, %v3485
      %v3570 = vadd.f32 %v2844, %v3488
      %v3571 = vadd.f32 %v2845, %v3493
      %v3572 = vadd.f32 %v2846, %v3496
      %v3573 = vadd.f32 %v2847, %v3501
      %v3574 = vadd.f32 %v2848, %v3504
      %v3575 = vadd.f32 %v2849, %v3509
      %v3576 = vadd.f32 %v2850, %v3512
      %v3577 = vadd.f32 %v2851, %v3517
      %v3578 = vadd.f32 %v2852, %v3520
      %v3579 = vadd.f32 %v2853, %v3525
      %v3580 = vadd.f32 %v2854, %v3528
      %v3581 = vadd.f32 %v2855, %v3533
      %v3582 = vadd.f32 %v2856, %v3536
      %v3583 = vadd.f32 %v2857, %v3541
      %v3584 = vadd.f32 %v2858, %v3544
      %v3585 = vadd.f32 %v2859, %v3549
      %v3586 = vadd.f32 %v2860, %v3552
      %v3587 = vld [vmem:[%s623] sm:$0xe]
      %v3588 = vld [vmem:[%s623 + $0xc] sm:$0xe]
      %v3589 = vld [vmem:[%s623 + $0x18] sm:$0xe]
      %v3590 = vld [vmem:[%s623 + $0x24] sm:$0xe]
      %v3591 = vld [vmem:[%s623 + $0x30] sm:$0xe]
      %v3592 = vld [vmem:[%s623 + $0x3c] sm:$0xe]
      %v3593 = vld [vmem:[%s623 + $0x48] sm:$0xe]
      %v3594 = vld [vmem:[%s623 + $0x54] sm:$0xe]
      %v3595 = vld [vmem:[%s623 + $0x60] sm:$0xe]
      %v3596 = vld [vmem:[%s623 + $0x6c] sm:$0xe]
      %v3597 = vld [vmem:[%s623 + $0x78] sm:$0xe]
      %v3598 = vld [vmem:[%s623 + $0x84] sm:$0xe]
      %v3599 = vld [vmem:[%s623 + $0x90] sm:$0xe]
      %v3600 = vld [vmem:[%s623 + $0x9c] sm:$0xe]
      %v3601 = vld [vmem:[%s623 + $0xa8] sm:$0xe]
      %v3602 = vld [vmem:[%s623 + $0xb4] sm:$0xe]
      %v3651 = vrot.slane %v3587, 5
      %v3652 = vrot.slane %v3651, 4
      %v3653 = vrot.slane %v2862, 5
      %v3654 = vsel %vm2096, %v3652, %v3653
      %v3655 = vrot.slane %v3653, 4
      %v3656 = vrot.slane %v2863, 5
      %v3657 = vsel %vm2096, %v3655, %v3656
      %v3658 = vrot.slane %v3588, 5
      %v3659 = vrot.slane %v3658, 4
      %v3660 = vrot.slane %v2865, 5
      %v3661 = vsel %vm2096, %v3659, %v3660
      %v3662 = vrot.slane %v3660, 4
      %v3663 = vrot.slane %v2866, 5
      %v3664 = vsel %vm2096, %v3662, %v3663
      %v3665 = vrot.slane %v3589, 5
      %v3666 = vrot.slane %v3665, 4
      %v3667 = vrot.slane %v2868, 5
      %v3668 = vsel %vm2096, %v3666, %v3667
      %v3669 = vrot.slane %v3667, 4
      %v3670 = vrot.slane %v2869, 5
      %v3671 = vsel %vm2096, %v3669, %v3670
      %v3672 = vrot.slane %v3590, 5
      %v3673 = vrot.slane %v3672, 4
      %v3674 = vrot.slane %v2871, 5
      %v3675 = vsel %vm2096, %v3673, %v3674
      %v3676 = vrot.slane %v3674, 4
      %v3677 = vrot.slane %v2872, 5
      %v3678 = vsel %vm2096, %v3676, %v3677
      %v3679 = vrot.slane %v3591, 5
      %v3680 = vrot.slane %v3679, 4
      %v3681 = vrot.slane %v2874, 5
      %v3682 = vsel %vm2096, %v3680, %v3681
      %v3683 = vrot.slane %v3681, 4
      %v3684 = vrot.slane %v2875, 5
      %v3685 = vsel %vm2096, %v3683, %v3684
      %v3686 = vrot.slane %v3592, 5
      %v3687 = vrot.slane %v3686, 4
      %v3688 = vrot.slane %v2877, 5
      %v3689 = vsel %vm2096, %v3687, %v3688
      %v3690 = vrot.slane %v3688, 4
      %v3691 = vrot.slane %v2878, 5
      %v3692 = vsel %vm2096, %v3690, %v3691
      %v3693 = vrot.slane %v3593, 5
      %v3694 = vrot.slane %v3693, 4
      %v3695 = vrot.slane %v2880, 5
      %v3696 = vsel %vm2096, %v3694, %v3695
      %v3697 = vrot.slane %v3695, 4
      %v3698 = vrot.slane %v2881, 5
      %v3699 = vsel %vm2096, %v3697, %v3698
      %v3700 = vrot.slane %v3594, 5
      %v3701 = vrot.slane %v3700, 4
      %v3702 = vrot.slane %v2883, 5
      %v3703 = vsel %vm2096, %v3701, %v3702
      %v3704 = vrot.slane %v3702, 4
      %v3705 = vrot.slane %v2884, 5
      %v3706 = vsel %vm2096, %v3704, %v3705
      %v3707 = vrot.slane %v3595, 5
      %v3708 = vrot.slane %v3707, 4
      %v3709 = vrot.slane %v2886, 5
      %v3710 = vsel %vm2096, %v3708, %v3709
      %v3711 = vrot.slane %v3709, 4
      %v3712 = vrot.slane %v2887, 5
      %v3713 = vsel %vm2096, %v3711, %v3712
      %v3714 = vrot.slane %v3596, 5
      %v3715 = vrot.slane %v3714, 4
      %v3716 = vrot.slane %v2889, 5
      %v3717 = vsel %vm2096, %v3715, %v3716
      %v3718 = vrot.slane %v3716, 4
      %v3719 = vrot.slane %v2890, 5
      %v3720 = vsel %vm2096, %v3718, %v3719
      %v3721 = vrot.slane %v3597, 5
      %v3722 = vrot.slane %v3721, 4
      %v3723 = vrot.slane %v2892, 5
      %v3724 = vsel %vm2096, %v3722, %v3723
      %v3725 = vrot.slane %v3723, 4
      %v3726 = vrot.slane %v2893, 5
      %v3727 = vsel %vm2096, %v3725, %v3726
      %v3728 = vrot.slane %v3598, 5
      %v3729 = vrot.slane %v3728, 4
      %v3730 = vrot.slane %v2895, 5
      %v3731 = vsel %vm2096, %v3729, %v3730
      %v3732 = vrot.slane %v3730, 4
      %v3733 = vrot.slane %v2896, 5
      %v3734 = vsel %vm2096, %v3732, %v3733
      %v3735 = vrot.slane %v3599, 5
      %v3736 = vrot.slane %v3735, 4
      %v3737 = vrot.slane %v2898, 5
      %v3738 = vsel %vm2096, %v3736, %v3737
      %v3739 = vrot.slane %v3737, 4
      %v3740 = vrot.slane %v2899, 5
      %v3741 = vsel %vm2096, %v3739, %v3740
      %v3742 = vrot.slane %v3600, 5
      %v3743 = vrot.slane %v3742, 4
      %v3744 = vrot.slane %v2901, 5
      %v3745 = vsel %vm2096, %v3743, %v3744
      %v3746 = vrot.slane %v3744, 4
      %v3747 = vrot.slane %v2902, 5
      %v3748 = vsel %vm2096, %v3746, %v3747
      %v3749 = vrot.slane %v3601, 5
      %v3750 = vrot.slane %v3749, 4
      %v3751 = vrot.slane %v2904, 5
      %v3752 = vsel %vm2096, %v3750, %v3751
      %v3753 = vrot.slane %v3751, 4
      %v3754 = vrot.slane %v2905, 5
      %v3755 = vsel %vm2096, %v3753, %v3754
      %v3756 = vrot.slane %v3602, 5
      %v3757 = vrot.slane %v3756, 4
      %v3758 = vrot.slane %v2907, 5
      %v3759 = vsel %vm2096, %v3757, %v3758
      %v3760 = vrot.slane %v3758, 4
      %v3761 = vrot.slane %v2908, 5
      %v3762 = vsel %vm2096, %v3760, %v3761
      %s3763 = scalar_lea.vmem %s1, 10
      %v3764 = vld [vmem:[%s3763] sm:$0x3]
      %v3765 = vunpack.c.l.b16 %v3654
      %v3766 = vunpack.c.l.b16 %v3657
      %v3767 = vunpack.c.l.b16 %v3661
      %v3768 = vunpack.c.l.b16 %v3664
      %v3769 = vunpack.c.l.b16 %v3668
      %v3770 = vunpack.c.l.b16 %v3671
      %v3771 = vunpack.c.l.b16 %v3675
      %v3772 = vunpack.c.l.b16 %v3678
      %v3773 = vunpack.c.l.b16 %v3682
      %v3774 = vunpack.c.l.b16 %v3685
      %v3775 = vunpack.c.l.b16 %v3689
      %v3776 = vunpack.c.l.b16 %v3692
      %v3777 = vunpack.c.l.b16 %v3696
      %v3778 = vunpack.c.l.b16 %v3699
      %v3779 = vunpack.c.l.b16 %v3703
      %v3780 = vunpack.c.l.b16 %v3706
      %v3781 = vunpack.c.l.b16 %v3710
      %v3782 = vunpack.c.l.b16 %v3713
      %v3783 = vunpack.c.l.b16 %v3717
      %v3784 = vunpack.c.l.b16 %v3720
      %v3785 = vunpack.c.l.b16 %v3724
      %v3786 = vunpack.c.l.b16 %v3727
      %v3787 = vunpack.c.l.b16 %v3731
      %v3788 = vunpack.c.l.b16 %v3734
      %v3789 = vunpack.c.l.b16 %v3738
      %v3790 = vunpack.c.l.b16 %v3741
      %v3791 = vunpack.c.l.b16 %v3745
      %v3792 = vunpack.c.l.b16 %v3748
      %v3793 = vunpack.c.l.b16 %v3752
      %v3794 = vunpack.c.l.b16 %v3755
      %v3795 = vunpack.c.l.b16 %v3759
      %v3796 = vunpack.c.l.b16 %v3762
      %v3797 = vpack.c.b16 %v3766, %v3765
      %v3798 = vpack.c.b16 %v3768, %v3767
      %v3799 = vpack.c.b16 %v3770, %v3769
      %v3800 = vpack.c.b16 %v3772, %v3771
      %v3801 = vpack.c.b16 %v3774, %v3773
      %v3802 = vpack.c.b16 %v3776, %v3775
      %v3803 = vpack.c.b16 %v3778, %v3777
      %v3804 = vpack.c.b16 %v3780, %v3779
      %v3805 = vpack.c.b16 %v3782, %v3781
      %v3806 = vpack.c.b16 %v3784, %v3783
      %v3807 = vpack.c.b16 %v3786, %v3785
      %v3808 = vpack.c.b16 %v3788, %v3787
      %v3809 = vpack.c.b16 %v3790, %v3789
      %v3810 = vpack.c.b16 %v3792, %v3791
      %v3811 = vpack.c.b16 %v3794, %v3793
      %v3812 = vpack.c.b16 %v3796, %v3795
      %v3814 = vsel %vm1540, %v3797, 0
      %v3817 = vsel %vm1540, %v3798, 0
      %v3820 = vsel %vm1540, %v3799, 0
      %v3823 = vsel %vm1540, %v3800, 0
      %v3826 = vsel %vm1540, %v3801, 0
      %v3829 = vsel %vm1540, %v3802, 0
      %v3832 = vsel %vm1540, %v3803, 0
      %v3835 = vsel %vm1540, %v3804, 0
      %v3838 = vsel %vm1540, %v3805, 0
      %v3841 = vsel %vm1540, %v3806, 0
      %v3844 = vsel %vm1540, %v3807, 0
      %v3847 = vsel %vm1540, %v3808, 0
      %v3850 = vsel %vm1540, %v3809, 0
      %v3853 = vsel %vm1540, %v3810, 0
      %v3856 = vsel %vm1540, %v3811, 0
      %v3859 = vsel %vm1540, %v3812, 0
      %v3862 = vsel %vm1589, %v3764, 0
      %3864 = vmatprep.subr.bf16.mxu0 0
      %3865 = vmatpush1.bf16.msra.mxu0 %v3862
      %3866 = vmatprep.subr.bf16.mxu0 0
      %3867 = vmatpush1.bf16.msra.mxu0 0
      %3868 = vmatprep.subr.bf16.mxu0 0
      %3869 = vmatpush1.bf16.msra.mxu0 0
      %3870 = vmatprep.subr.bf16.mxu0 0
      %3871 = vmatpush1.bf16.msra.mxu0 0
      %3872 = vmatprep.subr.bf16.mxu0 0
      %3873 = vmatpush1.bf16.msra.mxu0 0
      %3874 = vmatprep.subr.bf16.mxu0 0
      %3875 = vmatpush1.bf16.msra.mxu0 0
      %3876 = vmatprep.subr.bf16.mxu0 0
      %3877 = vmatpush1.bf16.msra.mxu0 0
      %3878 = vmatprep.subr.bf16.mxu0 0
      %3879 = vmatpush1.bf16.msra.mxu0 0
      %3880 = vmatprep.subr.bf16.mxu0 0
      %3881 = vmatpush1.bf16.msra.mxu0 0
      %3882 = vmatprep.subr.bf16.mxu0 0
      %3883 = vmatpush1.bf16.msra.mxu0 0
      %3884 = vmatprep.subr.bf16.mxu0 0
      %3885 = vmatpush1.bf16.msra.mxu0 0
      %3886 = vmatprep.subr.bf16.mxu0 0
      %3887 = vmatpush1.bf16.msra.mxu0 0
      %3888 = vmatprep.subr.bf16.mxu0 0
      %3889 = vmatpush1.bf16.msra.mxu0 0
      %3890 = vmatprep.subr.bf16.mxu0 0
      %3891 = vmatpush1.bf16.msra.mxu0 0
      %3892 = vmatprep.subr.bf16.mxu0 0
      %3893 = vmatpush1.bf16.msra.mxu0 0
      %3894 = vmatprep.subr.bf16.mxu0 0
      %3895 = vmatpush1.bf16.msra.mxu0 0
      %3896 = vmatprep.mubr.bf16.mxu0 0
      %3897 = vmatmul.mubr.bf16.gmra.mrb[0].mxu0 %v3814
      %v3898 = vpop.f32.mrb[0].mxu0
      %v3899 = vadd.f32 0.0, %v3898
      %v3900 = vpop.f32.mrb[0].mxu0
      %v3901 = vpop.f32.mrb[0].mxu0
      %v3902 = vadd.f32 0.0, %v3901
      %v3903 = vpop.f32.mrb[0].mxu0
      %3904 = vmatprep.mubr.bf16.mxu0 0
      %3905 = vmatmul.mubr.bf16.gmra.mrb[0].mxu0 %v3817
      %v3906 = vpop.f32.mrb[0].mxu0
      %v3907 = vadd.f32 0.0, %v3906
      %v3908 = vpop.f32.mrb[0].mxu0
      %v3909 = vpop.f32.mrb[0].mxu0
      %v3910 = vadd.f32 0.0, %v3909
      %v3911 = vpop.f32.mrb[0].mxu0
      %3912 = vmatprep.mubr.bf16.mxu0 0
      %3913 = vmatmul.mubr.bf16.gmra.mrb[0].mxu0 %v3820
      %v3914 = vpop.f32.mrb[0].mxu0
      %v3915 = vadd.f32 0.0, %v3914
      %v3916 = vpop.f32.mrb[0].mxu0
      %v3917 = vpop.f32.mrb[0].mxu0
      %v3918 = vadd.f32 0.0, %v3917
      %v3919 = vpop.f32.mrb[0].mxu0
      %3920 = vmatprep.mubr.bf16.mxu0 0
      %3921 = vmatmul.mubr.bf16.gmra.mrb[0].mxu0 %v3823
      %v3922 = vpop.f32.mrb[0].mxu0
      %v3923 = vadd.f32 0.0, %v3922
      %v3924 = vpop.f32.mrb[0].mxu0
      %v3925 = vpop.f32.mrb[0].mxu0
      %v3926 = vadd.f32 0.0, %v3925
      %v3927 = vpop.f32.mrb[0].mxu0
      %3928 = vmatprep.mubr.bf16.mxu0 0
      %3929 = vmatmul.mubr.bf16.gmra.mrb[0].mxu0 %v3826
      %v3930 = vpop.f32.mrb[0].mxu0
      %v3931 = vadd.f32 0.0, %v3930
      %v3932 = vpop.f32.mrb[0].mxu0
      %v3933 = vpop.f32.mrb[0].mxu0
      %v3934 = vadd.f32 0.0, %v3933
      %v3935 = vpop.f32.mrb[0].mxu0
      %3936 = vmatprep.mubr.bf16.mxu0 0
      %3937 = vmatmul.mubr.bf16.gmra.mrb[0].mxu0 %v3829
      %v3938 = vpop.f32.mrb[0].mxu0
      %v3939 = vadd.f32 0.0, %v3938
      %v3940 = vpop.f32.mrb[0].mxu0
      %v3941 = vpop.f32.mrb[0].mxu0
      %v3942 = vadd.f32 0.0, %v3941
      %v3943 = vpop.f32.mrb[0].mxu0
      %3944 = vmatprep.mubr.bf16.mxu0 0
      %3945 = vmatmul.mubr.bf16.gmra.mrb[0].mxu0 %v3832
      %v3946 = vpop.f32.mrb[0].mxu0
      %v3947 = vadd.f32 0.0, %v3946
      %v3948 = vpop.f32.mrb[0].mxu0
      %v3949 = vpop.f32.mrb[0].mxu0
      %v3950 = vadd.f32 0.0, %v3949
      %v3951 = vpop.f32.mrb[0].mxu0
      %3952 = vmatprep.mubr.bf16.mxu0 0
      %3953 = vmatmul.mubr.bf16.gmra.mrb[0].mxu0 %v3835
      %v3954 = vpop.f32.mrb[0].mxu0
      %v3955 = vadd.f32 0.0, %v3954
      %v3956 = vpop.f32.mrb[0].mxu0
      %v3957 = vpop.f32.mrb[0].mxu0
      %v3958 = vadd.f32 0.0, %v3957
      %v3959 = vpop.f32.mrb[0].mxu0
      %3960 = vmatprep.mubr.bf16.mxu0 0
      %3961 = vmatmul.mubr.bf16.gmra.mrb[0].mxu0 %v3838
      %v3962 = vpop.f32.mrb[0].mxu0
      %v3963 = vadd.f32 0.0, %v3962
      %v3964 = vpop.f32.mrb[0].mxu0
      %v3965 = vpop.f32.mrb[0].mxu0
      %v3966 = vadd.f32 0.0, %v3965
      %v3967 = vpop.f32.mrb[0].mxu0
      %3968 = vmatprep.mubr.bf16.mxu0 0
      %3969 = vmatmul.mubr.bf16.gmra.mrb[0].mxu0 %v3841
      %v3970 = vpop.f32.mrb[0].mxu0
      %v3971 = vadd.f32 0.0, %v3970
      %v3972 = vpop.f32.mrb[0].mxu0
      %v3973 = vpop.f32.mrb[0].mxu0
      %v3974 = vadd.f32 0.0, %v3973
      %v3975 = vpop.f32.mrb[0].mxu0
      %3976 = vmatprep.mubr.bf16.mxu0 0
      %3977 = vmatmul.mubr.bf16.gmra.mrb[0].mxu0 %v3844
      %v3978 = vpop.f32.mrb[0].mxu0
      %v3979 = vadd.f32 0.0, %v3978
      %v3980 = vpop.f32.mrb[0].mxu0
      %v3981 = vpop.f32.mrb[0].mxu0
      %v3982 = vadd.f32 0.0, %v3981
      %v3983 = vpop.f32.mrb[0].mxu0
      %3984 = vmatprep.mubr.bf16.mxu0 0
      %3985 = vmatmul.mubr.bf16.gmra.mrb[0].mxu0 %v3847
      %v3986 = vpop.f32.mrb[0].mxu0
      %v3987 = vadd.f32 0.0, %v3986
      %v3988 = vpop.f32.mrb[0].mxu0
      %v3989 = vpop.f32.mrb[0].mxu0
      %v3990 = vadd.f32 0.0, %v3989
      %v3991 = vpop.f32.mrb[0].mxu0
      %3992 = vmatprep.mubr.bf16.mxu0 0
      %3993 = vmatmul.mubr.bf16.gmra.mrb[0].mxu0 %v3850
      %v3994 = vpop.f32.mrb[0].mxu0
      %v3995 = vadd.f32 0.0, %v3994
      %v3996 = vpop.f32.mrb[0].mxu0
      %v3997 = vpop.f32.mrb[0].mxu0
      %v3998 = vadd.f32 0.0, %v3997
      %v3999 = vpop.f32.mrb[0].mxu0
      %4000 = vmatprep.mubr.bf16.mxu0 0
      %4001 = vmatmul.mubr.bf16.gmra.mrb[0].mxu0 %v3853
      %v4002 = vpop.f32.mrb[0].mxu0
      %v4003 = vadd.f32 0.0, %v4002
      %v4004 = vpop.f32.mrb[0].mxu0
      %v4005 = vpop.f32.mrb[0].mxu0
      %v4006 = vadd.f32 0.0, %v4005
      %v4007 = vpop.f32.mrb[0].mxu0
      %4008 = vmatprep.mubr.bf16.mxu0 0
      %4009 = vmatmul.mubr.bf16.gmra.mrb[0].mxu0 %v3856
      %v4010 = vpop.f32.mrb[0].mxu0
      %v4011 = vadd.f32 0.0, %v4010
      %v4012 = vpop.f32.mrb[0].mxu0
      %v4013 = vpop.f32.mrb[0].mxu0
      %v4014 = vadd.f32 0.0, %v4013
      %v4015 = vpop.f32.mrb[0].mxu0
      %4016 = vmatprep.mubr.bf16.mxu0 0
      %4017 = vmatmul.mubr.bf16.gmra.mrb[0].mxu0 %v3859
      %v4018 = vpop.f32.mrb[0].mxu0
      %v4019 = vadd.f32 0.0, %v4018
      %v4020 = vpop.f32.mrb[0].mxu0
      %v4021 = vpop.f32.mrb[0].mxu0
      %v4022 = vadd.f32 0.0, %v4021
      %v4023 = vpop.f32.mrb[0].mxu0
      %4024 = vdwg.mxu0
      %v4025 = vadd.f32 %v3555, %v3899
      %v4026 = vadd.f32 %v3556, %v3902
      %v4027 = vadd.f32 %v3557, %v3907
      %v4028 = vadd.f32 %v3558, %v3910
      %v4029 = vadd.f32 %v3559, %v3915
      %v4030 = vadd.f32 %v3560, %v3918
      %v4031 = vadd.f32 %v3561, %v3923
      %v4032 = vadd.f32 %v3562, %v3926
      %v4033 = vadd.f32 %v3563, %v3931
      %v4034 = vadd.f32 %v3564, %v3934
      %v4035 = vadd.f32 %v3565, %v3939
      %v4036 = vadd.f32 %v3566, %v3942
      %v4037 = vadd.f32 %v3567, %v3947
      %v4038 = vadd.f32 %v3568, %v3950
      %v4039 = vadd.f32 %v3569, %v3955
      %v4040 = vadd.f32 %v3570, %v3958
      %v4041 = vadd.f32 %v3571, %v3963
      %v4042 = vadd.f32 %v3572, %v3966
      %v4043 = vadd.f32 %v3573, %v3971
      %v4044 = vadd.f32 %v3574, %v3974
      %v4045 = vadd.f32 %v3575, %v3979
      %v4046 = vadd.f32 %v3576, %v3982
      %v4047 = vadd.f32 %v3577, %v3987
      %v4048 = vadd.f32 %v3578, %v3990
      %v4049 = vadd.f32 %v3579, %v3995
      %v4050 = vadd.f32 %v3580, %v3998
      %v4051 = vadd.f32 %v3581, %v4003
      %v4052 = vadd.f32 %v3582, %v4006
      %v4053 = vadd.f32 %v3583, %v4011
      %v4054 = vadd.f32 %v3584, %v4014
      %v4055 = vadd.f32 %v3585, %v4019
      %v4056 = vadd.f32 %v3586, %v4022
      %v4057 = vld [vmem:[%s742] sm:$0xf]
      %v4058 = vld [vmem:[%s742 + $0x4] sm:$0xf]
      %v4059 = vld [vmem:[%s742 + $0xc] sm:$0xf]
      %v4060 = vld [vmem:[%s742 + $0x10] sm:$0xf]
      %v4061 = vld [vmem:[%s742 + $0x18] sm:$0xf]
      %v4062 = vld [vmem:[%s742 + $0x1c] sm:$0xf]
      %v4063 = vld [vmem:[%s742 + $0x24] sm:$0xf]
      %v4064 = vld [vmem:[%s742 + $0x28] sm:$0xf]
      %v4065 = vld [vmem:[%s742 + $0x30] sm:$0xf]
      %v4066 = vld [vmem:[%s742 + $0x34] sm:$0xf]
      %v4067 = vld [vmem:[%s742 + $0x3c] sm:$0xf]
      %v4068 = vld [vmem:[%s742 + $0x40] sm:$0xf]
      %v4069 = vld [vmem:[%s742 + $0x48] sm:$0xf]
      %v4070 = vld [vmem:[%s742 + $0x4c] sm:$0xf]
      %v4071 = vld [vmem:[%s742 + $0x54] sm:$0xf]
      %v4072 = vld [vmem:[%s742 + $0x58] sm:$0xf]
      %v4073 = vld [vmem:[%s742 + $0x60] sm:$0xf]
      %v4074 = vld [vmem:[%s742 + $0x64] sm:$0xf]
      %v4075 = vld [vmem:[%s742 + $0x6c] sm:$0xf]
      %v4076 = vld [vmem:[%s742 + $0x70] sm:$0xf]
      %v4077 = vld [vmem:[%s742 + $0x78] sm:$0xf]
      %v4078 = vld [vmem:[%s742 + $0x7c] sm:$0xf]
      %v4079 = vld [vmem:[%s742 + $0x84] sm:$0xf]
      %v4080 = vld [vmem:[%s742 + $0x88] sm:$0xf]
      %v4081 = vld [vmem:[%s742 + $0x90] sm:$0xf]
      %v4082 = vld [vmem:[%s742 + $0x94] sm:$0xf]
      %v4083 = vld [vmem:[%s742 + $0x9c] sm:$0xf]
      %v4084 = vld [vmem:[%s742 + $0xa0] sm:$0xf]
      %v4085 = vld [vmem:[%s742 + $0xa8] sm:$0xf]
      %v4086 = vld [vmem:[%s742 + $0xac] sm:$0xf]
      %v4087 = vld [vmem:[%s742 + $0xb4] sm:$0xf]
      %v4088 = vld [vmem:[%s742 + $0xb8] sm:$0xf]
      %s4089 = scalar_lea.vmem %s1, 12
      %v4090 = vld [vmem:[%s4089] sm:$0x3]
      %v4123 = vunpack.c.l.b16 %v4057
      %v4124 = vunpack.c.l.b16 %v4058
      %v4125 = vunpack.c.l.b16 %v4059
      %v4126 = vunpack.c.l.b16 %v4060
      %v4127 = vunpack.c.l.b16 %v4061
      %v4128 = vunpack.c.l.b16 %v4062
      %v4129 = vunpack.c.l.b16 %v4063
      %v4130 = vunpack.c.l.b16 %v4064
      %v4131 = vunpack.c.l.b16 %v4065
      %v4132 = vunpack.c.l.b16 %v4066
      %v4133 = vunpack.c.l.b16 %v4067
      %v4134 = vunpack.c.l.b16 %v4068
      %v4135 = vunpack.c.l.b16 %v4069
      %v4136 = vunpack.c.l.b16 %v4070
      %v4137 = vunpack.c.l.b16 %v4071
      %v4138 = vunpack.c.l.b16 %v4072
      %v4139 = vunpack.c.l.b16 %v4073
      %v4140 = vunpack.c.l.b16 %v4074
      %v4141 = vunpack.c.l.b16 %v4075
      %v4142 = vunpack.c.l.b16 %v4076
      %v4143 = vunpack.c.l.b16 %v4077
      %v4144 = vunpack.c.l.b16 %v4078
      %v4145 = vunpack.c.l.b16 %v4079
      %v4146 = vunpack.c.l.b16 %v4080
      %v4147 = vunpack.c.l.b16 %v4081
      %v4148 = vunpack.c.l.b16 %v4082
      %v4149 = vunpack.c.l.b16 %v4083
      %v4150 = vunpack.c.l.b16 %v4084
      %v4151 = vunpack.c.l.b16 %v4085
      %v4152 = vunpack.c.l.b16 %v4086
      %v4153 = vunpack.c.l.b16 %v4087
      %v4154 = vunpack.c.l.b16 %v4088
      %v4155 = vpack.c.b16 %v4124, %v4123
      %v4156 = vpack.c.b16 %v4126, %v4125
      %v4157 = vpack.c.b16 %v4128, %v4127
      %v4158 = vpack.c.b16 %v4130, %v4129
      %v4159 = vpack.c.b16 %v4132, %v4131
      %v4160 = vpack.c.b16 %v4134, %v4133
      %v4161 = vpack.c.b16 %v4136, %v4135
      %v4162 = vpack.c.b16 %v4138, %v4137
      %v4163 = vpack.c.b16 %v4140, %v4139
      %v4164 = vpack.c.b16 %v4142, %v4141
      %v4165 = vpack.c.b16 %v4144, %v4143
      %v4166 = vpack.c.b16 %v4146, %v4145
      %v4167 = vpack.c.b16 %v4148, %v4147
      %v4168 = vpack.c.b16 %v4150, %v4149
      %v4169 = vpack.c.b16 %v4152, %v4151
      %v4170 = vpack.c.b16 %v4154, %v4153
      %v4172 = vsel %vm1540, %v4155, 0
      %v4175 = vsel %vm1540, %v4156, 0
      %v4178 = vsel %vm1540, %v4157, 0
      %v4181 = vsel %vm1540, %v4158, 0
      %v4184 = vsel %vm1540, %v4159, 0
      %v4187 = vsel %vm1540, %v4160, 0
      %v4190 = vsel %vm1540, %v4161, 0
      %v4193 = vsel %vm1540, %v4162, 0
      %v4196 = vsel %vm1540, %v4163, 0
      %v4199 = vsel %vm1540, %v4164, 0
      %v4202 = vsel %vm1540, %v4165, 0
      %v4205 = vsel %vm1540, %v4166, 0
      %v4208 = vsel %vm1540, %v4167, 0
      %v4211 = vsel %vm1540, %v4168, 0
      %v4214 = vsel %vm1540, %v4169, 0
      %v4217 = vsel %vm1540, %v4170, 0
      %v4220 = vsel %vm1589, %v4090, 0
      %4222 = vmatprep.subr.bf16.mxu0 0
      %4223 = vmatpush1.bf16.msra.mxu0 %v4220
      %4224 = vmatprep.subr.bf16.mxu0 0
      %4225 = vmatpush1.bf16.msra.mxu0 0
      %4226 = vmatprep.subr.bf16.mxu0 0
      %4227 = vmatpush1.bf16.msra.mxu0 0
      %4228 = vmatprep.subr.bf16.mxu0 0
      %4229 = vmatpush1.bf16.msra.mxu0 0
      %4230 = vmatprep.subr.bf16.mxu0 0
      %4231 = vmatpush1.bf16.msra.mxu0 0
      %4232 = vmatprep.subr.bf16.mxu0 0
      %4233 = vmatpush1.bf16.msra.mxu0 0
      %4234 = vmatprep.subr.bf16.mxu0 0
      %4235 = vmatpush1.bf16.msra.mxu0 0
      %4236 = vmatprep.subr.bf16.mxu0 0
      %4237 = vmatpush1.bf16.msra.mxu0 0
      %4238 = vmatprep.subr.bf16.mxu0 0
      %4239 = vmatpush1.bf16.msra.mxu0 0
      %4240 = vmatprep.subr.bf16.mxu0 0
      %4241 = vmatpush1.bf16.msra.mxu0 0
      %4242 = vmatprep.subr.bf16.mxu0 0
      %4243 = vmatpush1.bf16.msra.mxu0 0
      %4244 = vmatprep.subr.bf16.mxu0 0
      %4245 = vmatpush1.bf16.msra.mxu0 0
      %4246 = vmatprep.subr.bf16.mxu0 0
      %4247 = vmatpush1.bf16.msra.mxu0 0
      %4248 = vmatprep.subr.bf16.mxu0 0
      %4249 = vmatpush1.bf16.msra.mxu0 0
      %4250 = vmatprep.subr.bf16.mxu0 0
      %4251 = vmatpush1.bf16.msra.mxu0 0
      %4252 = vmatprep.subr.bf16.mxu0 0
      %4253 = vmatpush1.bf16.msra.mxu0 0
      %4254 = vmatprep.mubr.bf16.mxu0 0
      %4255 = vmatmul.mubr.bf16.gmra.mrb[0].mxu0 %v4172
      %v4256 = vpop.f32.mrb[0].mxu0
      %v4257 = vadd.f32 0.0, %v4256
      %v4258 = vpop.f32.mrb[0].mxu0
      %v4259 = vpop.f32.mrb[0].mxu0
      %v4260 = vadd.f32 0.0, %v4259
      %v4261 = vpop.f32.mrb[0].mxu0
      %4262 = vmatprep.mubr.bf16.mxu0 0
      %4263 = vmatmul.mubr.bf16.gmra.mrb[0].mxu0 %v4175
      %v4264 = vpop.f32.mrb[0].mxu0
      %v4265 = vadd.f32 0.0, %v4264
      %v4266 = vpop.f32.mrb[0].mxu0
      %v4267 = vpop.f32.mrb[0].mxu0
      %v4268 = vadd.f32 0.0, %v4267
      %v4269 = vpop.f32.mrb[0].mxu0
      %4270 = vmatprep.mubr.bf16.mxu0 0
      %4271 = vmatmul.mubr.bf16.gmra.mrb[0].mxu0 %v4178
      %v4272 = vpop.f32.mrb[0].mxu0
      %v4273 = vadd.f32 0.0, %v4272
      %v4274 = vpop.f32.mrb[0].mxu0
      %v4275 = vpop.f32.mrb[0].mxu0
      %v4276 = vadd.f32 0.0, %v4275
      %v4277 = vpop.f32.mrb[0].mxu0
      %4278 = vmatprep.mubr.bf16.mxu0 0
      %4279 = vmatmul.mubr.bf16.gmra.mrb[0].mxu0 %v4181
      %v4280 = vpop.f32.mrb[0].mxu0
      %v4281 = vadd.f32 0.0, %v4280
      %v4282 = vpop.f32.mrb[0].mxu0
      %v4283 = vpop.f32.mrb[0].mxu0
      %v4284 = vadd.f32 0.0, %v4283
      %v4285 = vpop.f32.mrb[0].mxu0
      %4286 = vmatprep.mubr.bf16.mxu0 0
      %4287 = vmatmul.mubr.bf16.gmra.mrb[0].mxu0 %v4184
      %v4288 = vpop.f32.mrb[0].mxu0
      %v4289 = vadd.f32 0.0, %v4288
      %v4290 = vpop.f32.mrb[0].mxu0
      %v4291 = vpop.f32.mrb[0].mxu0
      %v4292 = vadd.f32 0.0, %v4291
      %v4293 = vpop.f32.mrb[0].mxu0
      %4294 = vmatprep.mubr.bf16.mxu0 0
      %4295 = vmatmul.mubr.bf16.gmra.mrb[0].mxu0 %v4187
      %v4296 = vpop.f32.mrb[0].mxu0
      %v4297 = vadd.f32 0.0, %v4296
      %v4298 = vpop.f32.mrb[0].mxu0
      %v4299 = vpop.f32.mrb[0].mxu0
      %v4300 = vadd.f32 0.0, %v4299
      %v4301 = vpop.f32.mrb[0].mxu0
      %4302 = vmatprep.mubr.bf16.mxu0 0
      %4303 = vmatmul.mubr.bf16.gmra.mrb[0].mxu0 %v4190
      %v4304 = vpop.f32.mrb[0].mxu0
      %v4305 = vadd.f32 0.0, %v4304
      %v4306 = vpop.f32.mrb[0].mxu0
      %v4307 = vpop.f32.mrb[0].mxu0
      %v4308 = vadd.f32 0.0, %v4307
      %v4309 = vpop.f32.mrb[0].mxu0
      %4310 = vmatprep.mubr.bf16.mxu0 0
      %4311 = vmatmul.mubr.bf16.gmra.mrb[0].mxu0 %v4193
      %v4312 = vpop.f32.mrb[0].mxu0
      %v4313 = vadd.f32 0.0, %v4312
      %v4314 = vpop.f32.mrb[0].mxu0
      %v4315 = vpop.f32.mrb[0].mxu0
      %v4316 = vadd.f32 0.0, %v4315
      %v4317 = vpop.f32.mrb[0].mxu0
      %4318 = vmatprep.mubr.bf16.mxu0 0
      %4319 = vmatmul.mubr.bf16.gmra.mrb[0].mxu0 %v4196
      %v4320 = vpop.f32.mrb[0].mxu0
      %v4321 = vadd.f32 0.0, %v4320
      %v4322 = vpop.f32.mrb[0].mxu0
      %v4323 = vpop.f32.mrb[0].mxu0
      %v4324 = vadd.f32 0.0, %v4323
      %v4325 = vpop.f32.mrb[0].mxu0
      %4326 = vmatprep.mubr.bf16.mxu0 0
      %4327 = vmatmul.mubr.bf16.gmra.mrb[0].mxu0 %v4199
      %v4328 = vpop.f32.mrb[0].mxu0
      %v4329 = vadd.f32 0.0, %v4328
      %v4330 = vpop.f32.mrb[0].mxu0
      %v4331 = vpop.f32.mrb[0].mxu0
      %v4332 = vadd.f32 0.0, %v4331
      %v4333 = vpop.f32.mrb[0].mxu0
      %4334 = vmatprep.mubr.bf16.mxu0 0
      %4335 = vmatmul.mubr.bf16.gmra.mrb[0].mxu0 %v4202
      %v4336 = vpop.f32.mrb[0].mxu0
      %v4337 = vadd.f32 0.0, %v4336
      %v4338 = vpop.f32.mrb[0].mxu0
      %v4339 = vpop.f32.mrb[0].mxu0
      %v4340 = vadd.f32 0.0, %v4339
      %v4341 = vpop.f32.mrb[0].mxu0
      %4342 = vmatprep.mubr.bf16.mxu0 0
      %4343 = vmatmul.mubr.bf16.gmra.mrb[0].mxu0 %v4205
      %v4344 = vpop.f32.mrb[0].mxu0
      %v4345 = vadd.f32 0.0, %v4344
      %v4346 = vpop.f32.mrb[0].mxu0
      %v4347 = vpop.f32.mrb[0].mxu0
      %v4348 = vadd.f32 0.0, %v4347
      %v4349 = vpop.f32.mrb[0].mxu0
      %4350 = vmatprep.mubr.bf16.mxu0 0
      %4351 = vmatmul.mubr.bf16.gmra.mrb[0].mxu0 %v4208
      %v4352 = vpop.f32.mrb[0].mxu0
      %v4353 = vadd.f32 0.0, %v4352
      %v4354 = vpop.f32.mrb[0].mxu0
      %v4355 = vpop.f32.mrb[0].mxu0
      %v4356 = vadd.f32 0.0, %v4355
      %v4357 = vpop.f32.mrb[0].mxu0
      %4358 = vmatprep.mubr.bf16.mxu0 0
      %4359 = vmatmul.mubr.bf16.gmra.mrb[0].mxu0 %v4211
      %v4360 = vpop.f32.mrb[0].mxu0
      %v4361 = vadd.f32 0.0, %v4360
      %v4362 = vpop.f32.mrb[0].mxu0
      %v4363 = vpop.f32.mrb[0].mxu0
      %v4364 = vadd.f32 0.0, %v4363
      %v4365 = vpop.f32.mrb[0].mxu0
      %4366 = vmatprep.mubr.bf16.mxu0 0
      %4367 = vmatmul.mubr.bf16.gmra.mrb[0].mxu0 %v4214
      %v4368 = vpop.f32.mrb[0].mxu0
      %v4369 = vadd.f32 0.0, %v4368
      %v4370 = vpop.f32.mrb[0].mxu0
      %v4371 = vpop.f32.mrb[0].mxu0
      %v4372 = vadd.f32 0.0, %v4371
      %v4373 = vpop.f32.mrb[0].mxu0
      %4374 = vmatprep.mubr.bf16.mxu0 0
      %4375 = vmatmul.mubr.bf16.gmra.mrb[0].mxu0 %v4217
      %v4376 = vpop.f32.mrb[0].mxu0
      %v4377 = vadd.f32 0.0, %v4376
      %v4378 = vpop.f32.mrb[0].mxu0
      %v4379 = vpop.f32.mrb[0].mxu0
      %v4380 = vadd.f32 0.0, %v4379
      %v4381 = vpop.f32.mrb[0].mxu0
      %4382 = vdwg.mxu0
      %v4383 = vadd.f32 %v4025, %v4257
      %v4384 = vadd.f32 %v4026, %v4260
      %v4385 = vadd.f32 %v4027, %v4265
      %v4386 = vadd.f32 %v4028, %v4268
      %v4387 = vadd.f32 %v4029, %v4273
      %v4388 = vadd.f32 %v4030, %v4276
      %v4389 = vadd.f32 %v4031, %v4281
      %v4390 = vadd.f32 %v4032, %v4284
      %v4391 = vadd.f32 %v4033, %v4289
      %v4392 = vadd.f32 %v4034, %v4292
      %v4393 = vadd.f32 %v4035, %v4297
      %v4394 = vadd.f32 %v4036, %v4300
      %v4395 = vadd.f32 %v4037, %v4305
      %v4396 = vadd.f32 %v4038, %v4308
      %v4397 = vadd.f32 %v4039, %v4313
      %v4398 = vadd.f32 %v4040, %v4316
      %v4399 = vadd.f32 %v4041, %v4321
      %v4400 = vadd.f32 %v4042, %v4324
      %v4401 = vadd.f32 %v4043, %v4329
      %v4402 = vadd.f32 %v4044, %v4332
      %v4403 = vadd.f32 %v4045, %v4337
      %v4404 = vadd.f32 %v4046, %v4340
      %v4405 = vadd.f32 %v4047, %v4345
      %v4406 = vadd.f32 %v4048, %v4348
      %v4407 = vadd.f32 %v4049, %v4353
      %v4408 = vadd.f32 %v4050, %v4356
      %v4409 = vadd.f32 %v4051, %v4361
      %v4410 = vadd.f32 %v4052, %v4364
      %v4411 = vadd.f32 %v4053, %v4369
      %v4412 = vadd.f32 %v4054, %v4372
      %v4413 = vadd.f32 %v4055, %v4377
      %v4414 = vadd.f32 %v4056, %v4380
      %v4415 = vld [vmem:[%s742] sm:$0xf]
      %v4416 = vld [vmem:[%s742 + $0x4] sm:$0xf]
      %v4417 = vld [vmem:[%s742 + $0x8] sm:$0x1]
      %v4418 = vld [vmem:[%s742 + $0xc] sm:$0xf]
      %v4419 = vld [vmem:[%s742 + $0x10] sm:$0xf]
      %v4420 = vld [vmem:[%s742 + $0x14] sm:$0x1]
      %v4421 = vld [vmem:[%s742 + $0x18] sm:$0xf]
      %v4422 = vld [vmem:[%s742 + $0x1c] sm:$0xf]
      %v4423 = vld [vmem:[%s742 + $0x20] sm:$0x1]
      %v4424 = vld [vmem:[%s742 + $0x24] sm:$0xf]
      %v4425 = vld [vmem:[%s742 + $0x28] sm:$0xf]
      %v4426 = vld [vmem:[%s742 + $0x2c] sm:$0x1]
      %v4427 = vld [vmem:[%s742 + $0x30] sm:$0xf]
      %v4428 = vld [vmem:[%s742 + $0x34] sm:$0xf]
      %v4429 = vld [vmem:[%s742 + $0x38] sm:$0x1]
      %v4430 = vld [vmem:[%s742 + $0x3c] sm:$0xf]
      %v4431 = vld [vmem:[%s742 + $0x40] sm:$0xf]
      %v4432 = vld [vmem:[%s742 + $0x44] sm:$0x1]
      %v4433 = vld [vmem:[%s742 + $0x48] sm:$0xf]
      %v4434 = vld [vmem:[%s742 + $0x4c] sm:$0xf]
      %v4435 = vld [vmem:[%s742 + $0x50] sm:$0x1]
      %v4436 = vld [vmem:[%s742 + $0x54] sm:$0xf]
      %v4437 = vld [vmem:[%s742 + $0x58] sm:$0xf]
      %v4438 = vld [vmem:[%s742 + $0x5c] sm:$0x1]
      %v4439 = vld [vmem:[%s742 + $0x60] sm:$0xf]
      %v4440 = vld [vmem:[%s742 + $0x64] sm:$0xf]
      %v4441 = vld [vmem:[%s742 + $0x68] sm:$0x1]
      %v4442 = vld [vmem:[%s742 + $0x6c] sm:$0xf]
      %v4443 = vld [vmem:[%s742 + $0x70] sm:$0xf]
      %v4444 = vld [vmem:[%s742 + $0x74] sm:$0x1]
      %v4445 = vld [vmem:[%s742 + $0x78] sm:$0xf]
      %v4446 = vld [vmem:[%s742 + $0x7c] sm:$0xf]
      %v4447 = vld [vmem:[%s742 + $0x80] sm:$0x1]
      %v4448 = vld [vmem:[%s742 + $0x84] sm:$0xf]
      %v4449 = vld [vmem:[%s742 + $0x88] sm:$0xf]
      %v4450 = vld [vmem:[%s742 + $0x8c] sm:$0x1]
      %v4451 = vld [vmem:[%s742 + $0x90] sm:$0xf]
      %v4452 = vld [vmem:[%s742 + $0x94] sm:$0xf]
      %v4453 = vld [vmem:[%s742 + $0x98] sm:$0x1]
      %v4454 = vld [vmem:[%s742 + $0x9c] sm:$0xf]
      %v4455 = vld [vmem:[%s742 + $0xa0] sm:$0xf]
      %v4456 = vld [vmem:[%s742 + $0xa4] sm:$0x1]
      %v4457 = vld [vmem:[%s742 + $0xa8] sm:$0xf]
      %v4458 = vld [vmem:[%s742 + $0xac] sm:$0xf]
      %v4459 = vld [vmem:[%s742 + $0xb0] sm:$0x1]
      %v4460 = vld [vmem:[%s742 + $0xb4] sm:$0xf]
      %v4461 = vld [vmem:[%s742 + $0xb8] sm:$0xf]
      %v4462 = vld [vmem:[%s742 + $0xbc] sm:$0x1]
      %v4464 = vshrl.u32 %v4415, 16
      %v4466 = vrot.slane %v4464, 4
      %v4467 = vshll.u32 %v4415, 16
      %v4469 = vrot.slane %v4467, 5
      %v4470 = vor.u32 %v4466, %v4469
      %v4471 = vrot.slane %v4470, 4
      %v4473 = vshll.u32 %v4416, 16
      %v4475 = vrot.slane %v4473, 5
      %v4476 = vsel %vm1105, %v4471, %v4475
      %v4477 = vshrl.u32 %v4416, 16
      %v4479 = vrot.slane %v4477, 4
      %v4480 = vor.u32 %v4479, %v4475
      %v4481 = vrot.slane %v4480, 4
      %v4483 = vshll.u32 %v4417, 16
      %v4485 = vrot.slane %v4483, 5
      %v4486 = vsel %vm1105, %v4481, %v4485
      %v4488 = vshrl.u32 %v4418, 16
      %v4490 = vrot.slane %v4488, 4
      %v4491 = vshll.u32 %v4418, 16
      %v4493 = vrot.slane %v4491, 5
      %v4494 = vor.u32 %v4490, %v4493
      %v4495 = vrot.slane %v4494, 4
      %v4497 = vshll.u32 %v4419, 16
      %v4499 = vrot.slane %v4497, 5
      %v4500 = vsel %vm1105, %v4495, %v4499
      %v4501 = vshrl.u32 %v4419, 16
      %v4503 = vrot.slane %v4501, 4
      %v4504 = vor.u32 %v4503, %v4499
      %v4505 = vrot.slane %v4504, 4
      %v4507 = vshll.u32 %v4420, 16
      %v4509 = vrot.slane %v4507, 5
      %v4510 = vsel %vm1105, %v4505, %v4509
      %v4512 = vshrl.u32 %v4421, 16
      %v4514 = vrot.slane %v4512, 4
      %v4515 = vshll.u32 %v4421, 16
      %v4517 = vrot.slane %v4515, 5
      %v4518 = vor.u32 %v4514, %v4517
      %v4519 = vrot.slane %v4518, 4
      %v4521 = vshll.u32 %v4422, 16
      %v4523 = vrot.slane %v4521, 5
      %v4524 = vsel %vm1105, %v4519, %v4523
      %v4525 = vshrl.u32 %v4422, 16
      %v4527 = vrot.slane %v4525, 4
      %v4528 = vor.u32 %v4527, %v4523
      %v4529 = vrot.slane %v4528, 4
      %v4531 = vshll.u32 %v4423, 16
      %v4533 = vrot.slane %v4531, 5
      %v4534 = vsel %vm1105, %v4529, %v4533
      %v4536 = vshrl.u32 %v4424, 16
      %v4538 = vrot.slane %v4536, 4
      %v4539 = vshll.u32 %v4424, 16
      %v4541 = vrot.slane %v4539, 5
      %v4542 = vor.u32 %v4538, %v4541
      %v4543 = vrot.slane %v4542, 4
      %v4545 = vshll.u32 %v4425, 16
      %v4547 = vrot.slane %v4545, 5
      %v4548 = vsel %vm1105, %v4543, %v4547
      %v4549 = vshrl.u32 %v4425, 16
      %v4551 = vrot.slane %v4549, 4
      %v4552 = vor.u32 %v4551, %v4547
      %v4553 = vrot.slane %v4552, 4
      %v4555 = vshll.u32 %v4426, 16
      %v4557 = vrot.slane %v4555, 5
      %v4558 = vsel %vm1105, %v4553, %v4557
      %v4560 = vshrl.u32 %v4427, 16
      %v4562 = vrot.slane %v4560, 4
      %v4563 = vshll.u32 %v4427, 16
      %v4565 = vrot.slane %v4563, 5
      %v4566 = vor.u32 %v4562, %v4565
      %v4567 = vrot.slane %v4566, 4
      %v4569 = vshll.u32 %v4428, 16
      %v4571 = vrot.slane %v4569, 5
      %v4572 = vsel %vm1105, %v4567, %v4571
      %v4573 = vshrl.u32 %v4428, 16
      %v4575 = vrot.slane %v4573, 4
      %v4576 = vor.u32 %v4575, %v4571
      %v4577 = vrot.slane %v4576, 4
      %v4579 = vshll.u32 %v4429, 16
      %v4581 = vrot.slane %v4579, 5
      %v4582 = vsel %vm1105, %v4577, %v4581
      %v4584 = vshrl.u32 %v4430, 16
      %v4586 = vrot.slane %v4584, 4
      %v4587 = vshll.u32 %v4430, 16
      %v4589 = vrot.slane %v4587, 5
      %v4590 = vor.u32 %v4586, %v4589
      %v4591 = vrot.slane %v4590, 4
      %v4593 = vshll.u32 %v4431, 16
      %v4595 = vrot.slane %v4593, 5
      %v4596 = vsel %vm1105, %v4591, %v4595
      %v4597 = vshrl.u32 %v4431, 16
      %v4599 = vrot.slane %v4597, 4
      %v4600 = vor.u32 %v4599, %v4595
      %v4601 = vrot.slane %v4600, 4
      %v4603 = vshll.u32 %v4432, 16
      %v4605 = vrot.slane %v4603, 5
      %v4606 = vsel %vm1105, %v4601, %v4605
      %v4608 = vshrl.u32 %v4433, 16
      %v4610 = vrot.slane %v4608, 4
      %v4611 = vshll.u32 %v4433, 16
      %v4613 = vrot.slane %v4611, 5
      %v4614 = vor.u32 %v4610, %v4613
      %v4615 = vrot.slane %v4614, 4
      %v4617 = vshll.u32 %v4434, 16
      %v4619 = vrot.slane %v4617, 5
      %v4620 = vsel %vm1105, %v4615, %v4619
      %v4621 = vshrl.u32 %v4434, 16
      %v4623 = vrot.slane %v4621, 4
      %v4624 = vor.u32 %v4623, %v4619
      %v4625 = vrot.slane %v4624, 4
      %v4627 = vshll.u32 %v4435, 16
      %v4629 = vrot.slane %v4627, 5
      %v4630 = vsel %vm1105, %v4625, %v4629
      %v4632 = vshrl.u32 %v4436, 16
      %v4634 = vrot.slane %v4632, 4
      %v4635 = vshll.u32 %v4436, 16
      %v4637 = vrot.slane %v4635, 5
      %v4638 = vor.u32 %v4634, %v4637
      %v4639 = vrot.slane %v4638, 4
      %v4641 = vshll.u32 %v4437, 16
      %v4643 = vrot.slane %v4641, 5
      %v4644 = vsel %vm1105, %v4639, %v4643
      %v4645 = vshrl.u32 %v4437, 16
      %v4647 = vrot.slane %v4645, 4
      %v4648 = vor.u32 %v4647, %v4643
      %v4649 = vrot.slane %v4648, 4
      %v4651 = vshll.u32 %v4438, 16
      %v4653 = vrot.slane %v4651, 5
      %v4654 = vsel %vm1105, %v4649, %v4653
      %v4656 = vshrl.u32 %v4439, 16
      %v4658 = vrot.slane %v4656, 4
      %v4659 = vshll.u32 %v4439, 16
      %v4661 = vrot.slane %v4659, 5
      %v4662 = vor.u32 %v4658, %v4661
      %v4663 = vrot.slane %v4662, 4
      %v4665 = vshll.u32 %v4440, 16
      %v4667 = vrot.slane %v4665, 5
      %v4668 = vsel %vm1105, %v4663, %v4667
      %v4669 = vshrl.u32 %v4440, 16
      %v4671 = vrot.slane %v4669, 4
      %v4672 = vor.u32 %v4671, %v4667
      %v4673 = vrot.slane %v4672, 4
      %v4675 = vshll.u32 %v4441, 16
      %v4677 = vrot.slane %v4675, 5
      %v4678 = vsel %vm1105, %v4673, %v4677
      %v4680 = vshrl.u32 %v4442, 16
      %v4682 = vrot.slane %v4680, 4
      %v4683 = vshll.u32 %v4442, 16
      %v4685 = vrot.slane %v4683, 5
      %v4686 = vor.u32 %v4682, %v4685
      %v4687 = vrot.slane %v4686, 4
      %v4689 = vshll.u32 %v4443, 16
      %v4691 = vrot.slane %v4689, 5
      %v4692 = vsel %vm1105, %v4687, %v4691
      %v4693 = vshrl.u32 %v4443, 16
      %v4695 = vrot.slane %v4693, 4
      %v4696 = vor.u32 %v4695, %v4691
      %v4697 = vrot.slane %v4696, 4
      %v4699 = vshll.u32 %v4444, 16
      %v4701 = vrot.slane %v4699, 5
      %v4702 = vsel %vm1105, %v4697, %v4701
      %v4704 = vshrl.u32 %v4445, 16
      %v4706 = vrot.slane %v4704, 4
      %v4707 = vshll.u32 %v4445, 16
      %v4709 = vrot.slane %v4707, 5
      %v4710 = vor.u32 %v4706, %v4709
      %v4711 = vrot.slane %v4710, 4
      %v4713 = vshll.u32 %v4446, 16
      %v4715 = vrot.slane %v4713, 5
      %v4716 = vsel %vm1105, %v4711, %v4715
      %v4717 = vshrl.u32 %v4446, 16
      %v4719 = vrot.slane %v4717, 4
      %v4720 = vor.u32 %v4719, %v4715
      %v4721 = vrot.slane %v4720, 4
      %v4723 = vshll.u32 %v4447, 16
      %v4725 = vrot.slane %v4723, 5
      %v4726 = vsel %vm1105, %v4721, %v4725
      %v4728 = vshrl.u32 %v4448, 16
      %v4730 = vrot.slane %v4728, 4
      %v4731 = vshll.u32 %v4448, 16
      %v4733 = vrot.slane %v4731, 5
      %v4734 = vor.u32 %v4730, %v4733
      %v4735 = vrot.slane %v4734, 4
      %v4737 = vshll.u32 %v4449, 16
      %v4739 = vrot.slane %v4737, 5
      %v4740 = vsel %vm1105, %v4735, %v4739
      %v4741 = vshrl.u32 %v4449, 16
      %v4743 = vrot.slane %v4741, 4
      %v4744 = vor.u32 %v4743, %v4739
      %v4745 = vrot.slane %v4744, 4
      %v4747 = vshll.u32 %v4450, 16
      %v4749 = vrot.slane %v4747, 5
      %v4750 = vsel %vm1105, %v4745, %v4749
      %v4752 = vshrl.u32 %v4451, 16
      %v4754 = vrot.slane %v4752, 4
      %v4755 = vshll.u32 %v4451, 16
      %v4757 = vrot.slane %v4755, 5
      %v4758 = vor.u32 %v4754, %v4757
      %v4759 = vrot.slane %v4758, 4
      %v4761 = vshll.u32 %v4452, 16
      %v4763 = vrot.slane %v4761, 5
      %v4764 = vsel %vm1105, %v4759, %v4763
      %v4765 = vshrl.u32 %v4452, 16
      %v4767 = vrot.slane %v4765, 4
      %v4768 = vor.u32 %v4767, %v4763
      %v4769 = vrot.slane %v4768, 4
      %v4771 = vshll.u32 %v4453, 16
      %v4773 = vrot.slane %v4771, 5
      %v4774 = vsel %vm1105, %v4769, %v4773
      %v4776 = vshrl.u32 %v4454, 16
      %v4778 = vrot.slane %v4776, 4
      %v4779 = vshll.u32 %v4454, 16
      %v4781 = vrot.slane %v4779, 5
      %v4782 = vor.u32 %v4778, %v4781
      %v4783 = vrot.slane %v4782, 4
      %v4785 = vshll.u32 %v4455, 16
      %v4787 = vrot.slane %v4785, 5
      %v4788 = vsel %vm1105, %v4783, %v4787
      %v4789 = vshrl.u32 %v4455, 16
      %v4791 = vrot.slane %v4789, 4
      %v4792 = vor.u32 %v4791, %v4787
      %v4793 = vrot.slane %v4792, 4
      %v4795 = vshll.u32 %v4456, 16
      %v4797 = vrot.slane %v4795, 5
      %v4798 = vsel %vm1105, %v4793, %v4797
      %v4800 = vshrl.u32 %v4457, 16
      %v4802 = vrot.slane %v4800, 4
      %v4803 = vshll.u32 %v4457, 16
      %v4805 = vrot.slane %v4803, 5
      %v4806 = vor.u32 %v4802, %v4805
      %v4807 = vrot.slane %v4806, 4
      %v4809 = vshll.u32 %v4458, 16
      %v4811 = vrot.slane %v4809, 5
      %v4812 = vsel %vm1105, %v4807, %v4811
      %v4813 = vshrl.u32 %v4458, 16
      %v4815 = vrot.slane %v4813, 4
      %v4816 = vor.u32 %v4815, %v4811
      %v4817 = vrot.slane %v4816, 4
      %v4819 = vshll.u32 %v4459, 16
      %v4821 = vrot.slane %v4819, 5
      %v4822 = vsel %vm1105, %v4817, %v4821
      %v4824 = vshrl.u32 %v4460, 16
      %v4826 = vrot.slane %v4824, 4
      %v4827 = vshll.u32 %v4460, 16
      %v4829 = vrot.slane %v4827, 5
      %v4830 = vor.u32 %v4826, %v4829
      %v4831 = vrot.slane %v4830, 4
      %v4833 = vshll.u32 %v4461, 16
      %v4835 = vrot.slane %v4833, 5
      %v4836 = vsel %vm1105, %v4831, %v4835
      %v4837 = vshrl.u32 %v4461, 16
      %v4839 = vrot.slane %v4837, 4
      %v4840 = vor.u32 %v4839, %v4835
      %v4841 = vrot.slane %v4840, 4
      %v4843 = vshll.u32 %v4462, 16
      %v4845 = vrot.slane %v4843, 5
      %v4846 = vsel %vm1105, %v4841, %v4845
      %s4847 = scalar_lea.vmem %s1, 14
      %v4848 = vld [vmem:[%s4847] sm:$0x3]
      %v4849 = vunpack.c.l.b16 %v4476
      %v4850 = vunpack.c.l.b16 %v4486
      %v4851 = vunpack.c.l.b16 %v4500
      %v4852 = vunpack.c.l.b16 %v4510
      %v4853 = vunpack.c.l.b16 %v4524
      %v4854 = vunpack.c.l.b16 %v4534
      %v4855 = vunpack.c.l.b16 %v4548
      %v4856 = vunpack.c.l.b16 %v4558
      %v4857 = vunpack.c.l.b16 %v4572
      %v4858 = vunpack.c.l.b16 %v4582
      %v4859 = vunpack.c.l.b16 %v4596
      %v4860 = vunpack.c.l.b16 %v4606
      %v4861 = vunpack.c.l.b16 %v4620
      %v4862 = vunpack.c.l.b16 %v4630
      %v4863 = vunpack.c.l.b16 %v4644
      %v4864 = vunpack.c.l.b16 %v4654
      %v4865 = vunpack.c.l.b16 %v4668
      %v4866 = vunpack.c.l.b16 %v4678
      %v4867 = vunpack.c.l.b16 %v4692
      %v4868 = vunpack.c.l.b16 %v4702
      %v4869 = vunpack.c.l.b16 %v4716
      %v4870 = vunpack.c.l.b16 %v4726
      %v4871 = vunpack.c.l.b16 %v4740
      %v4872 = vunpack.c.l.b16 %v4750
      %v4873 = vunpack.c.l.b16 %v4764
      %v4874 = vunpack.c.l.b16 %v4774
      %v4875 = vunpack.c.l.b16 %v4788
      %v4876 = vunpack.c.l.b16 %v4798
      %v4877 = vunpack.c.l.b16 %v4812
      %v4878 = vunpack.c.l.b16 %v4822
      %v4879 = vunpack.c.l.b16 %v4836
      %v4880 = vunpack.c.l.b16 %v4846
      %v4881 = vpack.c.b16 %v4850, %v4849
      %v4882 = vpack.c.b16 %v4852, %v4851
      %v4883 = vpack.c.b16 %v4854, %v4853
      %v4884 = vpack.c.b16 %v4856, %v4855
      %v4885 = vpack.c.b16 %v4858, %v4857
      %v4886 = vpack.c.b16 %v4860, %v4859
      %v4887 = vpack.c.b16 %v4862, %v4861
      %v4888 = vpack.c.b16 %v4864, %v4863
      %v4889 = vpack.c.b16 %v4866, %v4865
      %v4890 = vpack.c.b16 %v4868, %v4867
      %v4891 = vpack.c.b16 %v4870, %v4869
      %v4892 = vpack.c.b16 %v4872, %v4871
      %v4893 = vpack.c.b16 %v4874, %v4873
      %v4894 = vpack.c.b16 %v4876, %v4875
      %v4895 = vpack.c.b16 %v4878, %v4877
      %v4896 = vpack.c.b16 %v4880, %v4879
      %v4898 = vsel %vm1540, %v4881, 0
      %v4901 = vsel %vm1540, %v4882, 0
      %v4904 = vsel %vm1540, %v4883, 0
      %v4907 = vsel %vm1540, %v4884, 0
      %v4910 = vsel %vm1540, %v4885, 0
      %v4913 = vsel %vm1540, %v4886, 0
      %v4916 = vsel %vm1540, %v4887, 0
      %v4919 = vsel %vm1540, %v4888, 0
      %v4922 = vsel %vm1540, %v4889, 0
      %v4925 = vsel %vm1540, %v4890, 0
      %v4928 = vsel %vm1540, %v4891, 0
      %v4931 = vsel %vm1540, %v4892, 0
      %v4934 = vsel %vm1540, %v4893, 0
      %v4937 = vsel %vm1540, %v4894, 0
      %v4940 = vsel %vm1540, %v4895, 0
      %v4943 = vsel %vm1540, %v4896, 0
      %v4946 = vsel %vm1589, %v4848, 0
      %4948 = vmatprep.subr.bf16.mxu0 0
      %4949 = vmatpush1.bf16.msra.mxu0 %v4946
      %4950 = vmatprep.subr.bf16.mxu0 0
      %4951 = vmatpush1.bf16.msra.mxu0 0
      %4952 = vmatprep.subr.bf16.mxu0 0
      %4953 = vmatpush1.bf16.msra.mxu0 0
      %4954 = vmatprep.subr.bf16.mxu0 0
      %4955 = vmatpush1.bf16.msra.mxu0 0
      %4956 = vmatprep.subr.bf16.mxu0 0
      %4957 = vmatpush1.bf16.msra.mxu0 0
      %4958 = vmatprep.subr.bf16.mxu0 0
      %4959 = vmatpush1.bf16.msra.mxu0 0
      %4960 = vmatprep.subr.bf16.mxu0 0
      %4961 = vmatpush1.bf16.msra.mxu0 0
      %4962 = vmatprep.subr.bf16.mxu0 0
      %4963 = vmatpush1.bf16.msra.mxu0 0
      %4964 = vmatprep.subr.bf16.mxu0 0
      %4965 = vmatpush1.bf16.msra.mxu0 0
      %4966 = vmatprep.subr.bf16.mxu0 0
      %4967 = vmatpush1.bf16.msra.mxu0 0
      %4968 = vmatprep.subr.bf16.mxu0 0
      %4969 = vmatpush1.bf16.msra.mxu0 0
      %4970 = vmatprep.subr.bf16.mxu0 0
      %4971 = vmatpush1.bf16.msra.mxu0 0
      %4972 = vmatprep.subr.bf16.mxu0 0
      %4973 = vmatpush1.bf16.msra.mxu0 0
      %4974 = vmatprep.subr.bf16.mxu0 0
      %4975 = vmatpush1.bf16.msra.mxu0 0
      %4976 = vmatprep.subr.bf16.mxu0 0
      %4977 = vmatpush1.bf16.msra.mxu0 0
      %4978 = vmatprep.subr.bf16.mxu0 0
      %4979 = vmatpush1.bf16.msra.mxu0 0
      %4980 = vmatprep.mubr.bf16.mxu0 0
      %4981 = vmatmul.mubr.bf16.gmra.mrb[0].mxu0 %v4898
      %v4982 = vpop.f32.mrb[0].mxu0
      %v4983 = vadd.f32 0.0, %v4982
      %v4984 = vpop.f32.mrb[0].mxu0
      %v4985 = vpop.f32.mrb[0].mxu0
      %v4986 = vadd.f32 0.0, %v4985
      %v4987 = vpop.f32.mrb[0].mxu0
      %4988 = vmatprep.mubr.bf16.mxu0 0
      %4989 = vmatmul.mubr.bf16.gmra.mrb[0].mxu0 %v4901
      %v4990 = vpop.f32.mrb[0].mxu0
      %v4991 = vadd.f32 0.0, %v4990
      %v4992 = vpop.f32.mrb[0].mxu0
      %v4993 = vpop.f32.mrb[0].mxu0
      %v4994 = vadd.f32 0.0, %v4993
      %v4995 = vpop.f32.mrb[0].mxu0
      %4996 = vmatprep.mubr.bf16.mxu0 0
      %4997 = vmatmul.mubr.bf16.gmra.mrb[0].mxu0 %v4904
      %v4998 = vpop.f32.mrb[0].mxu0
      %v4999 = vadd.f32 0.0, %v4998
      %v5000 = vpop.f32.mrb[0].mxu0
      %v5001 = vpop.f32.mrb[0].mxu0
      %v5002 = vadd.f32 0.0, %v5001
      %v5003 = vpop.f32.mrb[0].mxu0
      %5004 = vmatprep.mubr.bf16.mxu0 0
      %5005 = vmatmul.mubr.bf16.gmra.mrb[0].mxu0 %v4907
      %v5006 = vpop.f32.mrb[0].mxu0
      %v5007 = vadd.f32 0.0, %v5006
      %v5008 = vpop.f32.mrb[0].mxu0
      %v5009 = vpop.f32.mrb[0].mxu0
      %v5010 = vadd.f32 0.0, %v5009
      %v5011 = vpop.f32.mrb[0].mxu0
      %5012 = vmatprep.mubr.bf16.mxu0 0
      %5013 = vmatmul.mubr.bf16.gmra.mrb[0].mxu0 %v4910
      %v5014 = vpop.f32.mrb[0].mxu0
      %v5015 = vadd.f32 0.0, %v5014
      %v5016 = vpop.f32.mrb[0].mxu0
      %v5017 = vpop.f32.mrb[0].mxu0
      %v5018 = vadd.f32 0.0, %v5017
      %v5019 = vpop.f32.mrb[0].mxu0
      %5020 = vmatprep.mubr.bf16.mxu0 0
      %5021 = vmatmul.mubr.bf16.gmra.mrb[0].mxu0 %v4913
      %v5022 = vpop.f32.mrb[0].mxu0
      %v5023 = vadd.f32 0.0, %v5022
      %v5024 = vpop.f32.mrb[0].mxu0
      %v5025 = vpop.f32.mrb[0].mxu0
      %v5026 = vadd.f32 0.0, %v5025
      %v5027 = vpop.f32.mrb[0].mxu0
      %5028 = vmatprep.mubr.bf16.mxu0 0
      %5029 = vmatmul.mubr.bf16.gmra.mrb[0].mxu0 %v4916
      %v5030 = vpop.f32.mrb[0].mxu0
      %v5031 = vadd.f32 0.0, %v5030
      %v5032 = vpop.f32.mrb[0].mxu0
      %v5033 = vpop.f32.mrb[0].mxu0
      %v5034 = vadd.f32 0.0, %v5033
      %v5035 = vpop.f32.mrb[0].mxu0
      %5036 = vmatprep.mubr.bf16.mxu0 0
      %5037 = vmatmul.mubr.bf16.gmra.mrb[0].mxu0 %v4919
      %v5038 = vpop.f32.mrb[0].mxu0
      %v5039 = vadd.f32 0.0, %v5038
      %v5040 = vpop.f32.mrb[0].mxu0
      %v5041 = vpop.f32.mrb[0].mxu0
      %v5042 = vadd.f32 0.0, %v5041
      %v5043 = vpop.f32.mrb[0].mxu0
      %5044 = vmatprep.mubr.bf16.mxu0 0
      %5045 = vmatmul.mubr.bf16.gmra.mrb[0].mxu0 %v4922
      %v5046 = vpop.f32.mrb[0].mxu0
      %v5047 = vadd.f32 0.0, %v5046
      %v5048 = vpop.f32.mrb[0].mxu0
      %v5049 = vpop.f32.mrb[0].mxu0
      %v5050 = vadd.f32 0.0, %v5049
      %v5051 = vpop.f32.mrb[0].mxu0
      %5052 = vmatprep.mubr.bf16.mxu0 0
      %5053 = vmatmul.mubr.bf16.gmra.mrb[0].mxu0 %v4925
      %v5054 = vpop.f32.mrb[0].mxu0
      %v5055 = vadd.f32 0.0, %v5054
      %v5056 = vpop.f32.mrb[0].mxu0
      %v5057 = vpop.f32.mrb[0].mxu0
      %v5058 = vadd.f32 0.0, %v5057
      %v5059 = vpop.f32.mrb[0].mxu0
      %5060 = vmatprep.mubr.bf16.mxu0 0
      %5061 = vmatmul.mubr.bf16.gmra.mrb[0].mxu0 %v4928
      %v5062 = vpop.f32.mrb[0].mxu0
      %v5063 = vadd.f32 0.0, %v5062
      %v5064 = vpop.f32.mrb[0].mxu0
      %v5065 = vpop.f32.mrb[0].mxu0
      %v5066 = vadd.f32 0.0, %v5065
      %v5067 = vpop.f32.mrb[0].mxu0
      %5068 = vmatprep.mubr.bf16.mxu0 0
      %5069 = vmatmul.mubr.bf16.gmra.mrb[0].mxu0 %v4931
      %v5070 = vpop.f32.mrb[0].mxu0
      %v5071 = vadd.f32 0.0, %v5070
      %v5072 = vpop.f32.mrb[0].mxu0
      %v5073 = vpop.f32.mrb[0].mxu0
      %v5074 = vadd.f32 0.0, %v5073
      %v5075 = vpop.f32.mrb[0].mxu0
      %5076 = vmatprep.mubr.bf16.mxu0 0
      %5077 = vmatmul.mubr.bf16.gmra.mrb[0].mxu0 %v4934
      %v5078 = vpop.f32.mrb[0].mxu0
      %v5079 = vadd.f32 0.0, %v5078
      %v5080 = vpop.f32.mrb[0].mxu0
      %v5081 = vpop.f32.mrb[0].mxu0
      %v5082 = vadd.f32 0.0, %v5081
      %v5083 = vpop.f32.mrb[0].mxu0
      %5084 = vmatprep.mubr.bf16.mxu0 0
      %5085 = vmatmul.mubr.bf16.gmra.mrb[0].mxu0 %v4937
      %v5086 = vpop.f32.mrb[0].mxu0
      %v5087 = vadd.f32 0.0, %v5086
      %v5088 = vpop.f32.mrb[0].mxu0
      %v5089 = vpop.f32.mrb[0].mxu0
      %v5090 = vadd.f32 0.0, %v5089
      %v5091 = vpop.f32.mrb[0].mxu0
      %5092 = vmatprep.mubr.bf16.mxu0 0
      %5093 = vmatmul.mubr.bf16.gmra.mrb[0].mxu0 %v4940
      %v5094 = vpop.f32.mrb[0].mxu0
      %v5095 = vadd.f32 0.0, %v5094
      %v5096 = vpop.f32.mrb[0].mxu0
      %v5097 = vpop.f32.mrb[0].mxu0
      %v5098 = vadd.f32 0.0, %v5097
      %v5099 = vpop.f32.mrb[0].mxu0
      %5100 = vmatprep.mubr.bf16.mxu0 0
      %5101 = vmatmul.mubr.bf16.gmra.mrb[0].mxu0 %v4943
      %v5102 = vpop.f32.mrb[0].mxu0
      %v5103 = vadd.f32 0.0, %v5102
      %v5104 = vpop.f32.mrb[0].mxu0
      %v5105 = vpop.f32.mrb[0].mxu0
      %v5106 = vadd.f32 0.0, %v5105
      %v5107 = vpop.f32.mrb[0].mxu0
      %5108 = vdwg.mxu0
      %v5109 = vadd.f32 %v4383, %v4983
      %v5110 = vadd.f32 %v4384, %v4986
      %v5111 = vadd.f32 %v4385, %v4991
      %v5112 = vadd.f32 %v4386, %v4994
      %v5113 = vadd.f32 %v4387, %v4999
      %v5114 = vadd.f32 %v4388, %v5002
      %v5115 = vadd.f32 %v4389, %v5007
      %v5116 = vadd.f32 %v4390, %v5010
      %v5117 = vadd.f32 %v4391, %v5015
      %v5118 = vadd.f32 %v4392, %v5018
      %v5119 = vadd.f32 %v4393, %v5023
      %v5120 = vadd.f32 %v4394, %v5026
      %v5121 = vadd.f32 %v4395, %v5031
      %v5122 = vadd.f32 %v4396, %v5034
      %v5123 = vadd.f32 %v4397, %v5039
      %v5124 = vadd.f32 %v4398, %v5042
      %v5125 = vadd.f32 %v4399, %v5047
      %v5126 = vadd.f32 %v4400, %v5050
      %v5127 = vadd.f32 %v4401, %v5055
      %v5128 = vadd.f32 %v4402, %v5058
      %v5129 = vadd.f32 %v4403, %v5063
      %v5130 = vadd.f32 %v4404, %v5066
      %v5131 = vadd.f32 %v4405, %v5071
      %v5132 = vadd.f32 %v4406, %v5074
      %v5133 = vadd.f32 %v4407, %v5079
      %v5134 = vadd.f32 %v4408, %v5082
      %v5135 = vadd.f32 %v4409, %v5087
      %v5136 = vadd.f32 %v4410, %v5090
      %v5137 = vadd.f32 %v4411, %v5095
      %v5138 = vadd.f32 %v4412, %v5098
      %v5139 = vadd.f32 %v4413, %v5103
      %v5140 = vadd.f32 %v4414, %v5106
      %v5141 = vld [vmem:[%s742] sm:$0xe]
      %v5142 = vld [vmem:[%s742 + $0xc] sm:$0xe]
      %v5143 = vld [vmem:[%s742 + $0x18] sm:$0xe]
      %v5144 = vld [vmem:[%s742 + $0x24] sm:$0xe]
      %v5145 = vld [vmem:[%s742 + $0x30] sm:$0xe]
      %v5146 = vld [vmem:[%s742 + $0x3c] sm:$0xe]
      %v5147 = vld [vmem:[%s742 + $0x48] sm:$0xe]
      %v5148 = vld [vmem:[%s742 + $0x54] sm:$0xe]
      %v5149 = vld [vmem:[%s742 + $0x60] sm:$0xe]
      %v5150 = vld [vmem:[%s742 + $0x6c] sm:$0xe]
      %v5151 = vld [vmem:[%s742 + $0x78] sm:$0xe]
      %v5152 = vld [vmem:[%s742 + $0x84] sm:$0xe]
      %v5153 = vld [vmem:[%s742 + $0x90] sm:$0xe]
      %v5154 = vld [vmem:[%s742 + $0x9c] sm:$0xe]
      %v5155 = vld [vmem:[%s742 + $0xa8] sm:$0xe]
      %v5156 = vld [vmem:[%s742 + $0xb4] sm:$0xe]
      %v5205 = vrot.slane %v5141, 5
      %v5206 = vrot.slane %v5205, 4
      %v5207 = vrot.slane %v4416, 5
      %v5208 = vsel %vm2096, %v5206, %v5207
      %v5209 = vrot.slane %v5207, 4
      %v5210 = vrot.slane %v4417, 5
      %v5211 = vsel %vm2096, %v5209, %v5210
      %v5212 = vrot.slane %v5142, 5
      %v5213 = vrot.slane %v5212, 4
      %v5214 = vrot.slane %v4419, 5
      %v5215 = vsel %vm2096, %v5213, %v5214
      %v5216 = vrot.slane %v5214, 4
      %v5217 = vrot.slane %v4420, 5
      %v5218 = vsel %vm2096, %v5216, %v5217
      %v5219 = vrot.slane %v5143, 5
      %v5220 = vrot.slane %v5219, 4
      %v5221 = vrot.slane %v4422, 5
      %v5222 = vsel %vm2096, %v5220, %v5221
      %v5223 = vrot.slane %v5221, 4
      %v5224 = vrot.slane %v4423, 5
      %v5225 = vsel %vm2096, %v5223, %v5224
      %v5226 = vrot.slane %v5144, 5
      %v5227 = vrot.slane %v5226, 4
      %v5228 = vrot.slane %v4425, 5
      %v5229 = vsel %vm2096, %v5227, %v5228
      %v5230 = vrot.slane %v5228, 4
      %v5231 = vrot.slane %v4426, 5
      %v5232 = vsel %vm2096, %v5230, %v5231
      %v5233 = vrot.slane %v5145, 5
      %v5234 = vrot.slane %v5233, 4
      %v5235 = vrot.slane %v4428, 5
      %v5236 = vsel %vm2096, %v5234, %v5235
      %v5237 = vrot.slane %v5235, 4
      %v5238 = vrot.slane %v4429, 5
      %v5239 = vsel %vm2096, %v5237, %v5238
      %v5240 = vrot.slane %v5146, 5
      %v5241 = vrot.slane %v5240, 4
      %v5242 = vrot.slane %v4431, 5
      %v5243 = vsel %vm2096, %v5241, %v5242
      %v5244 = vrot.slane %v5242, 4
      %v5245 = vrot.slane %v4432, 5
      %v5246 = vsel %vm2096, %v5244, %v5245
      %v5247 = vrot.slane %v5147, 5
      %v5248 = vrot.slane %v5247, 4
      %v5249 = vrot.slane %v4434, 5
      %v5250 = vsel %vm2096, %v5248, %v5249
      %v5251 = vrot.slane %v5249, 4
      %v5252 = vrot.slane %v4435, 5
      %v5253 = vsel %vm2096, %v5251, %v5252
      %v5254 = vrot.slane %v5148, 5
      %v5255 = vrot.slane %v5254, 4
      %v5256 = vrot.slane %v4437, 5
      %v5257 = vsel %vm2096, %v5255, %v5256
      %v5258 = vrot.slane %v5256, 4
      %v5259 = vrot.slane %v4438, 5
      %v5260 = vsel %vm2096, %v5258, %v5259
      %v5261 = vrot.slane %v5149, 5
      %v5262 = vrot.slane %v5261, 4
      %v5263 = vrot.slane %v4440, 5
      %v5264 = vsel %vm2096, %v5262, %v5263
      %v5265 = vrot.slane %v5263, 4
      %v5266 = vrot.slane %v4441, 5
      %v5267 = vsel %vm2096, %v5265, %v5266
      %v5268 = vrot.slane %v5150, 5
      %v5269 = vrot.slane %v5268, 4
      %v5270 = vrot.slane %v4443, 5
      %v5271 = vsel %vm2096, %v5269, %v5270
      %v5272 = vrot.slane %v5270, 4
      %v5273 = vrot.slane %v4444, 5
      %v5274 = vsel %vm2096, %v5272, %v5273
      %v5275 = vrot.slane %v5151, 5
      %v5276 = vrot.slane %v5275, 4
      %v5277 = vrot.slane %v4446, 5
      %v5278 = vsel %vm2096, %v5276, %v5277
      %v5279 = vrot.slane %v5277, 4
      %v5280 = vrot.slane %v4447, 5
      %v5281 = vsel %vm2096, %v5279, %v5280
      %v5282 = vrot.slane %v5152, 5
      %v5283 = vrot.slane %v5282, 4
      %v5284 = vrot.slane %v4449, 5
      %v5285 = vsel %vm2096, %v5283, %v5284
      %v5286 = vrot.slane %v5284, 4
      %v5287 = vrot.slane %v4450, 5
      %v5288 = vsel %vm2096, %v5286, %v5287
      %v5289 = vrot.slane %v5153, 5
      %v5290 = vrot.slane %v5289, 4
      %v5291 = vrot.slane %v4452, 5
      %v5292 = vsel %vm2096, %v5290, %v5291
      %v5293 = vrot.slane %v5291, 4
      %v5294 = vrot.slane %v4453, 5
      %v5295 = vsel %vm2096, %v5293, %v5294
      %v5296 = vrot.slane %v5154, 5
      %v5297 = vrot.slane %v5296, 4
      %v5298 = vrot.slane %v4455, 5
      %v5299 = vsel %vm2096, %v5297, %v5298
      %v5300 = vrot.slane %v5298, 4
      %v5301 = vrot.slane %v4456, 5
      %v5302 = vsel %vm2096, %v5300, %v5301
      %v5303 = vrot.slane %v5155, 5
      %v5304 = vrot.slane %v5303, 4
      %v5305 = vrot.slane %v4458, 5
      %v5306 = vsel %vm2096, %v5304, %v5305
      %v5307 = vrot.slane %v5305, 4
      %v5308 = vrot.slane %v4459, 5
      %v5309 = vsel %vm2096, %v5307, %v5308
      %v5310 = vrot.slane %v5156, 5
      %v5311 = vrot.slane %v5310, 4
      %v5312 = vrot.slane %v4461, 5
      %v5313 = vsel %vm2096, %v5311, %v5312
      %v5314 = vrot.slane %v5312, 4
      %v5315 = vrot.slane %v4462, 5
      %v5316 = vsel %vm2096, %v5314, %v5315
      %s5317 = scalar_lea.vmem %s1, 16
      %v5318 = vld [vmem:[%s5317] sm:$0x3]
      %v5319 = vunpack.c.l.b16 %v5208
      %v5320 = vunpack.c.l.b16 %v5211
      %v5321 = vunpack.c.l.b16 %v5215
      %v5322 = vunpack.c.l.b16 %v5218
      %v5323 = vunpack.c.l.b16 %v5222
      %v5324 = vunpack.c.l.b16 %v5225
      %v5325 = vunpack.c.l.b16 %v5229
      %v5326 = vunpack.c.l.b16 %v5232
      %v5327 = vunpack.c.l.b16 %v5236
      %v5328 = vunpack.c.l.b16 %v5239
      %v5329 = vunpack.c.l.b16 %v5243
      %v5330 = vunpack.c.l.b16 %v5246
      %v5331 = vunpack.c.l.b16 %v5250
      %v5332 = vunpack.c.l.b16 %v5253
      %v5333 = vunpack.c.l.b16 %v5257
      %v5334 = vunpack.c.l.b16 %v5260
      %v5335 = vunpack.c.l.b16 %v5264
      %v5336 = vunpack.c.l.b16 %v5267
      %v5337 = vunpack.c.l.b16 %v5271
      %v5338 = vunpack.c.l.b16 %v5274
      %v5339 = vunpack.c.l.b16 %v5278
      %v5340 = vunpack.c.l.b16 %v5281
      %v5341 = vunpack.c.l.b16 %v5285
      %v5342 = vunpack.c.l.b16 %v5288
      %v5343 = vunpack.c.l.b16 %v5292
      %v5344 = vunpack.c.l.b16 %v5295
      %v5345 = vunpack.c.l.b16 %v5299
      %v5346 = vunpack.c.l.b16 %v5302
      %v5347 = vunpack.c.l.b16 %v5306
      %v5348 = vunpack.c.l.b16 %v5309
      %v5349 = vunpack.c.l.b16 %v5313
      %v5350 = vunpack.c.l.b16 %v5316
      %v5351 = vpack.c.b16 %v5320, %v5319
      %v5352 = vpack.c.b16 %v5322, %v5321
      %v5353 = vpack.c.b16 %v5324, %v5323
      %v5354 = vpack.c.b16 %v5326, %v5325
      %v5355 = vpack.c.b16 %v5328, %v5327
      %v5356 = vpack.c.b16 %v5330, %v5329
      %v5357 = vpack.c.b16 %v5332, %v5331
      %v5358 = vpack.c.b16 %v5334, %v5333
      %v5359 = vpack.c.b16 %v5336, %v5335
      %v5360 = vpack.c.b16 %v5338, %v5337
      %v5361 = vpack.c.b16 %v5340, %v5339
      %v5362 = vpack.c.b16 %v5342, %v5341
      %v5363 = vpack.c.b16 %v5344, %v5343
      %v5364 = vpack.c.b16 %v5346, %v5345
      %v5365 = vpack.c.b16 %v5348, %v5347
      %v5366 = vpack.c.b16 %v5350, %v5349
      %v5368 = vsel %vm1540, %v5351, 0
      %v5371 = vsel %vm1540, %v5352, 0
      %v5374 = vsel %vm1540, %v5353, 0
      %v5377 = vsel %vm1540, %v5354, 0
      %v5380 = vsel %vm1540, %v5355, 0
      %v5383 = vsel %vm1540, %v5356, 0
      %v5386 = vsel %vm1540, %v5357, 0
      %v5389 = vsel %vm1540, %v5358, 0
      %v5392 = vsel %vm1540, %v5359, 0
      %v5395 = vsel %vm1540, %v5360, 0
      %v5398 = vsel %vm1540, %v5361, 0
      %v5401 = vsel %vm1540, %v5362, 0
      %v5404 = vsel %vm1540, %v5363, 0
      %v5407 = vsel %vm1540, %v5364, 0
      %v5410 = vsel %vm1540, %v5365, 0
      %v5413 = vsel %vm1540, %v5366, 0
      %v5416 = vsel %vm1589, %v5318, 0
      %5418 = vmatprep.subr.bf16.mxu0 0
      %5419 = vmatpush1.bf16.msra.mxu0 %v5416
      %5420 = vmatprep.subr.bf16.mxu0 0
      %5421 = vmatpush1.bf16.msra.mxu0 0
      %5422 = vmatprep.subr.bf16.mxu0 0
      %5423 = vmatpush1.bf16.msra.mxu0 0
      %5424 = vmatprep.subr.bf16.mxu0 0
      %5425 = vmatpush1.bf16.msra.mxu0 0
      %5426 = vmatprep.subr.bf16.mxu0 0
      %5427 = vmatpush1.bf16.msra.mxu0 0
      %5428 = vmatprep.subr.bf16.mxu0 0
      %5429 = vmatpush1.bf16.msra.mxu0 0
      %5430 = vmatprep.subr.bf16.mxu0 0
      %5431 = vmatpush1.bf16.msra.mxu0 0
      %5432 = vmatprep.subr.bf16.mxu0 0
      %5433 = vmatpush1.bf16.msra.mxu0 0
      %5434 = vmatprep.subr.bf16.mxu0 0
      %5435 = vmatpush1.bf16.msra.mxu0 0
      %5436 = vmatprep.subr.bf16.mxu0 0
      %5437 = vmatpush1.bf16.msra.mxu0 0
      %5438 = vmatprep.subr.bf16.mxu0 0
      %5439 = vmatpush1.bf16.msra.mxu0 0
      %5440 = vmatprep.subr.bf16.mxu0 0
      %5441 = vmatpush1.bf16.msra.mxu0 0
      %5442 = vmatprep.subr.bf16.mxu0 0
      %5443 = vmatpush1.bf16.msra.mxu0 0
      %5444 = vmatprep.subr.bf16.mxu0 0
      %5445 = vmatpush1.bf16.msra.mxu0 0
      %5446 = vmatprep.subr.bf16.mxu0 0
      %5447 = vmatpush1.bf16.msra.mxu0 0
      %5448 = vmatprep.subr.bf16.mxu0 0
      %5449 = vmatpush1.bf16.msra.mxu0 0
      %5450 = vmatprep.mubr.bf16.mxu0 0
      %5451 = vmatmul.mubr.bf16.gmra.mrb[0].mxu0 %v5368
      %v5452 = vpop.f32.mrb[0].mxu0
      %v5453 = vadd.f32 0.0, %v5452
      %v5454 = vpop.f32.mrb[0].mxu0
      %v5455 = vpop.f32.mrb[0].mxu0
      %v5456 = vadd.f32 0.0, %v5455
      %v5457 = vpop.f32.mrb[0].mxu0
      %5458 = vmatprep.mubr.bf16.mxu0 0
      %5459 = vmatmul.mubr.bf16.gmra.mrb[0].mxu0 %v5371
      %v5460 = vpop.f32.mrb[0].mxu0
      %v5461 = vadd.f32 0.0, %v5460
      %v5462 = vpop.f32.mrb[0].mxu0
      %v5463 = vpop.f32.mrb[0].mxu0
      %v5464 = vadd.f32 0.0, %v5463
      %v5465 = vpop.f32.mrb[0].mxu0
      %5466 = vmatprep.mubr.bf16.mxu0 0
      %5467 = vmatmul.mubr.bf16.gmra.mrb[0].mxu0 %v5374
      %v5468 = vpop.f32.mrb[0].mxu0
      %v5469 = vadd.f32 0.0, %v5468
      %v5470 = vpop.f32.mrb[0].mxu0
      %v5471 = vpop.f32.mrb[0].mxu0
      %v5472 = vadd.f32 0.0, %v5471
      %v5473 = vpop.f32.mrb[0].mxu0
      %5474 = vmatprep.mubr.bf16.mxu0 0
      %5475 = vmatmul.mubr.bf16.gmra.mrb[0].mxu0 %v5377
      %v5476 = vpop.f32.mrb[0].mxu0
      %v5477 = vadd.f32 0.0, %v5476
      %v5478 = vpop.f32.mrb[0].mxu0
      %v5479 = vpop.f32.mrb[0].mxu0
      %v5480 = vadd.f32 0.0, %v5479
      %v5481 = vpop.f32.mrb[0].mxu0
      %5482 = vmatprep.mubr.bf16.mxu0 0
      %5483 = vmatmul.mubr.bf16.gmra.mrb[0].mxu0 %v5380
      %v5484 = vpop.f32.mrb[0].mxu0
      %v5485 = vadd.f32 0.0, %v5484
      %v5486 = vpop.f32.mrb[0].mxu0
      %v5487 = vpop.f32.mrb[0].mxu0
      %v5488 = vadd.f32 0.0, %v5487
      %v5489 = vpop.f32.mrb[0].mxu0
      %5490 = vmatprep.mubr.bf16.mxu0 0
      %5491 = vmatmul.mubr.bf16.gmra.mrb[0].mxu0 %v5383
      %v5492 = vpop.f32.mrb[0].mxu0
      %v5493 = vadd.f32 0.0, %v5492
      %v5494 = vpop.f32.mrb[0].mxu0
      %v5495 = vpop.f32.mrb[0].mxu0
      %v5496 = vadd.f32 0.0, %v5495
      %v5497 = vpop.f32.mrb[0].mxu0
      %5498 = vmatprep.mubr.bf16.mxu0 0
      %5499 = vmatmul.mubr.bf16.gmra.mrb[0].mxu0 %v5386
      %v5500 = vpop.f32.mrb[0].mxu0
      %v5501 = vadd.f32 0.0, %v5500
      %v5502 = vpop.f32.mrb[0].mxu0
      %v5503 = vpop.f32.mrb[0].mxu0
      %v5504 = vadd.f32 0.0, %v5503
      %v5505 = vpop.f32.mrb[0].mxu0
      %5506 = vmatprep.mubr.bf16.mxu0 0
      %5507 = vmatmul.mubr.bf16.gmra.mrb[0].mxu0 %v5389
      %v5508 = vpop.f32.mrb[0].mxu0
      %v5509 = vadd.f32 0.0, %v5508
      %v5510 = vpop.f32.mrb[0].mxu0
      %v5511 = vpop.f32.mrb[0].mxu0
      %v5512 = vadd.f32 0.0, %v5511
      %v5513 = vpop.f32.mrb[0].mxu0
      %5514 = vmatprep.mubr.bf16.mxu0 0
      %5515 = vmatmul.mubr.bf16.gmra.mrb[0].mxu0 %v5392
      %v5516 = vpop.f32.mrb[0].mxu0
      %v5517 = vadd.f32 0.0, %v5516
      %v5518 = vpop.f32.mrb[0].mxu0
      %v5519 = vpop.f32.mrb[0].mxu0
      %v5520 = vadd.f32 0.0, %v5519
      %v5521 = vpop.f32.mrb[0].mxu0
      %5522 = vmatprep.mubr.bf16.mxu0 0
      %5523 = vmatmul.mubr.bf16.gmra.mrb[0].mxu0 %v5395
      %v5524 = vpop.f32.mrb[0].mxu0
      %v5525 = vadd.f32 0.0, %v5524
      %v5526 = vpop.f32.mrb[0].mxu0
      %v5527 = vpop.f32.mrb[0].mxu0
      %v5528 = vadd.f32 0.0, %v5527
      %v5529 = vpop.f32.mrb[0].mxu0
      %5530 = vmatprep.mubr.bf16.mxu0 0
      %5531 = vmatmul.mubr.bf16.gmra.mrb[0].mxu0 %v5398
      %v5532 = vpop.f32.mrb[0].mxu0
      %v5533 = vadd.f32 0.0, %v5532
      %v5534 = vpop.f32.mrb[0].mxu0
      %v5535 = vpop.f32.mrb[0].mxu0
      %v5536 = vadd.f32 0.0, %v5535
      %v5537 = vpop.f32.mrb[0].mxu0
      %5538 = vmatprep.mubr.bf16.mxu0 0
      %5539 = vmatmul.mubr.bf16.gmra.mrb[0].mxu0 %v5401
      %v5540 = vpop.f32.mrb[0].mxu0
      %v5541 = vadd.f32 0.0, %v5540
      %v5542 = vpop.f32.mrb[0].mxu0
      %v5543 = vpop.f32.mrb[0].mxu0
      %v5544 = vadd.f32 0.0, %v5543
      %v5545 = vpop.f32.mrb[0].mxu0
      %5546 = vmatprep.mubr.bf16.mxu0 0
      %5547 = vmatmul.mubr.bf16.gmra.mrb[0].mxu0 %v5404
      %v5548 = vpop.f32.mrb[0].mxu0
      %v5549 = vadd.f32 0.0, %v5548
      %v5550 = vpop.f32.mrb[0].mxu0
      %v5551 = vpop.f32.mrb[0].mxu0
      %v5552 = vadd.f32 0.0, %v5551
      %v5553 = vpop.f32.mrb[0].mxu0
      %5554 = vmatprep.mubr.bf16.mxu0 0
      %5555 = vmatmul.mubr.bf16.gmra.mrb[0].mxu0 %v5407
      %v5556 = vpop.f32.mrb[0].mxu0
      %v5557 = vadd.f32 0.0, %v5556
      %v5558 = vpop.f32.mrb[0].mxu0
      %v5559 = vpop.f32.mrb[0].mxu0
      %v5560 = vadd.f32 0.0, %v5559
      %v5561 = vpop.f32.mrb[0].mxu0
      %5562 = vmatprep.mubr.bf16.mxu0 0
      %5563 = vmatmul.mubr.bf16.gmra.mrb[0].mxu0 %v5410
      %v5564 = vpop.f32.mrb[0].mxu0
      %v5565 = vadd.f32 0.0, %v5564
      %v5566 = vpop.f32.mrb[0].mxu0
      %v5567 = vpop.f32.mrb[0].mxu0
      %v5568 = vadd.f32 0.0, %v5567
      %v5569 = vpop.f32.mrb[0].mxu0
      %5570 = vmatprep.mubr.bf16.mxu0 0
      %5571 = vmatmul.mubr.bf16.gmra.mrb[0].mxu0 %v5413
      %v5572 = vpop.f32.mrb[0].mxu0
      %v5573 = vadd.f32 0.0, %v5572
      %v5574 = vpop.f32.mrb[0].mxu0
      %v5575 = vpop.f32.mrb[0].mxu0
      %v5576 = vadd.f32 0.0, %v5575
      %v5577 = vpop.f32.mrb[0].mxu0
      %5578 = vdwg.mxu0
      %v5579 = vadd.f32 %v5109, %v5453
      %v5580 = vadd.f32 %v5110, %v5456
      %v5581 = vadd.f32 %v5111, %v5461
      %v5582 = vadd.f32 %v5112, %v5464
      %v5583 = vadd.f32 %v5113, %v5469
      %v5584 = vadd.f32 %v5114, %v5472
      %v5585 = vadd.f32 %v5115, %v5477
      %v5586 = vadd.f32 %v5116, %v5480
      %v5587 = vadd.f32 %v5117, %v5485
      %v5588 = vadd.f32 %v5118, %v5488
      %v5589 = vadd.f32 %v5119, %v5493
      %v5590 = vadd.f32 %v5120, %v5496
      %v5591 = vadd.f32 %v5121, %v5501
      %v5592 = vadd.f32 %v5122, %v5504
      %v5593 = vadd.f32 %v5123, %v5509
      %v5594 = vadd.f32 %v5124, %v5512
      %v5595 = vadd.f32 %v5125, %v5517
      %v5596 = vadd.f32 %v5126, %v5520
      %v5597 = vadd.f32 %v5127, %v5525
      %v5598 = vadd.f32 %v5128, %v5528
      %v5599 = vadd.f32 %v5129, %v5533
      %v5600 = vadd.f32 %v5130, %v5536
      %v5601 = vadd.f32 %v5131, %v5541
      %v5602 = vadd.f32 %v5132, %v5544
      %v5603 = vadd.f32 %v5133, %v5549
      %v5604 = vadd.f32 %v5134, %v5552
      %v5605 = vadd.f32 %v5135, %v5557
      %v5606 = vadd.f32 %v5136, %v5560
      %v5607 = vadd.f32 %v5137, %v5565
      %v5608 = vadd.f32 %v5138, %v5568
      %v5609 = vadd.f32 %v5139, %v5573
      %v5610 = vadd.f32 %v5140, %v5576
      %v5611 = vsel %vm1540, %v5579, 0.0
      %v5612 = vsel %vm1540, %v5580, 0.0
      %v5613 = vadd.f32 %v5611, %v5612
      %v5614 = vsel %vm1540, %v5581, 0.0
      %v5615 = vadd.f32 %v5613, %v5614
      %v5616 = vsel %vm1540, %v5582, 0.0
      %v5617 = vadd.f32 %v5615, %v5616
      %v5618 = vsel %vm1540, %v5583, 0.0
      %v5619 = vadd.f32 %v5617, %v5618
      %v5620 = vsel %vm1540, %v5584, 0.0
      %v5621 = vadd.f32 %v5619, %v5620
      %v5622 = vsel %vm1540, %v5585, 0.0
      %v5623 = vadd.f32 %v5621, %v5622
      %v5624 = vsel %vm1540, %v5586, 0.0
      %v5625 = vadd.f32 %v5623, %v5624
      %v5626 = vsel %vm1540, %v5587, 0.0
      %v5627 = vadd.f32 %v5625, %v5626
      %v5628 = vsel %vm1540, %v5588, 0.0
      %v5629 = vadd.f32 %v5627, %v5628
      %v5630 = vsel %vm1540, %v5589, 0.0
      %v5631 = vadd.f32 %v5629, %v5630
      %v5632 = vsel %vm1540, %v5590, 0.0
      %v5633 = vadd.f32 %v5631, %v5632
      %v5634 = vsel %vm1540, %v5591, 0.0
      %v5635 = vadd.f32 %v5633, %v5634
      %v5636 = vsel %vm1540, %v5592, 0.0
      %v5637 = vadd.f32 %v5635, %v5636
      %v5638 = vsel %vm1540, %v5593, 0.0
      %v5639 = vadd.f32 %v5637, %v5638
      %v5640 = vsel %vm1540, %v5594, 0.0
      %v5641 = vadd.f32 %v5639, %v5640
      %v5642 = vsel %vm1540, %v5595, 0.0
      %v5643 = vadd.f32 %v5641, %v5642
      %v5644 = vsel %vm1540, %v5596, 0.0
      %v5645 = vadd.f32 %v5643, %v5644
      %v5646 = vsel %vm1540, %v5597, 0.0
      %v5647 = vadd.f32 %v5645, %v5646
      %v5648 = vsel %vm1540, %v5598, 0.0
      %v5649 = vadd.f32 %v5647, %v5648
      %v5650 = vsel %vm1540, %v5599, 0.0
      %v5651 = vadd.f32 %v5649, %v5650
      %v5652 = vsel %vm1540, %v5600, 0.0
      %v5653 = vadd.f32 %v5651, %v5652
      %v5654 = vsel %vm1540, %v5601, 0.0
      %v5655 = vadd.f32 %v5653, %v5654
      %v5656 = vsel %vm1540, %v5602, 0.0
      %v5657 = vadd.f32 %v5655, %v5656
      %v5658 = vsel %vm1540, %v5603, 0.0
      %v5659 = vadd.f32 %v5657, %v5658
      %v5660 = vsel %vm1540, %v5604, 0.0
      %v5661 = vadd.f32 %v5659, %v5660
      %v5662 = vsel %vm1540, %v5605, 0.0
      %v5663 = vadd.f32 %v5661, %v5662
      %v5664 = vsel %vm1540, %v5606, 0.0
      %v5665 = vadd.f32 %v5663, %v5664
      %v5666 = vsel %vm1540, %v5607, 0.0
      %v5667 = vadd.f32 %v5665, %v5666
      %v5668 = vsel %vm1540, %v5608, 0.0
      %v5669 = vadd.f32 %v5667, %v5668
      %v5670 = vsel %vm1540, %v5609, 0.0
      %v5671 = vadd.f32 %v5669, %v5670
      %v5672 = vsel %vm1540, %v5610, 0.0
      %v5673 = vadd.f32 %v5671, %v5672
      %v5674 = vrot.slane %v5673, 4
      %v5675 = vadd.f32 %v5673, %v5674
      %v5676 = vrot.slane %v5675, 2
      %v5677 = vadd.f32 %v5675, %v5676
      %v5678 = vrot.slane %v5677, 1
      %v5679 = vadd.f32 %v5677, %v5678
      %v5680 = vmul.f32 %v5679, 0.00390625
      %v5681 = vsub.f32 %v5579, %v5680
      %v5682 = vsub.f32 %v5580, %v5680
      %v5683 = vsub.f32 %v5581, %v5680
      %v5684 = vsub.f32 %v5582, %v5680
      %v5685 = vsub.f32 %v5583, %v5680
      %v5686 = vsub.f32 %v5584, %v5680
      %v5687 = vsub.f32 %v5585, %v5680
      %v5688 = vsub.f32 %v5586, %v5680
      %v5689 = vsub.f32 %v5587, %v5680
      %v5690 = vsub.f32 %v5588, %v5680
      %v5691 = vsub.f32 %v5589, %v5680
      %v5692 = vsub.f32 %v5590, %v5680
      %v5693 = vsub.f32 %v5591, %v5680
      %v5694 = vsub.f32 %v5592, %v5680
      %v5695 = vsub.f32 %v5593, %v5680
      %v5696 = vsub.f32 %v5594, %v5680
      %v5697 = vsub.f32 %v5595, %v5680
      %v5698 = vsub.f32 %v5596, %v5680
      %v5699 = vsub.f32 %v5597, %v5680
      %v5700 = vsub.f32 %v5598, %v5680
      %v5701 = vsub.f32 %v5599, %v5680
      %v5702 = vsub.f32 %v5600, %v5680
      %v5703 = vsub.f32 %v5601, %v5680
      %v5704 = vsub.f32 %v5602, %v5680
      %v5705 = vsub.f32 %v5603, %v5680
      %v5706 = vsub.f32 %v5604, %v5680
      %v5707 = vsub.f32 %v5605, %v5680
      %v5708 = vsub.f32 %v5606, %v5680
      %v5709 = vsub.f32 %v5607, %v5680
      %v5710 = vsub.f32 %v5608, %v5680
      %v5711 = vsub.f32 %v5609, %v5680
      %v5712 = vsub.f32 %v5610, %v5680
      %v5713 = vmul.f32 %v5681, %v5681
      %v5714 = vmul.f32 %v5682, %v5682
      %v5715 = vmul.f32 %v5683, %v5683
      %v5716 = vmul.f32 %v5684, %v5684
      %v5717 = vmul.f32 %v5685, %v5685
      %v5718 = vmul.f32 %v5686, %v5686
      %v5719 = vmul.f32 %v5687, %v5687
      %v5720 = vmul.f32 %v5688, %v5688
      %v5721 = vmul.f32 %v5689, %v5689
      %v5722 = vmul.f32 %v5690, %v5690
      %v5723 = vmul.f32 %v5691, %v5691
      %v5724 = vmul.f32 %v5692, %v5692
      %v5725 = vmul.f32 %v5693, %v5693
      %v5726 = vmul.f32 %v5694, %v5694
      %v5727 = vmul.f32 %v5695, %v5695
      %v5728 = vmul.f32 %v5696, %v5696
      %v5729 = vmul.f32 %v5697, %v5697
      %v5730 = vmul.f32 %v5698, %v5698
      %v5731 = vmul.f32 %v5699, %v5699
      %v5732 = vmul.f32 %v5700, %v5700
      %v5733 = vmul.f32 %v5701, %v5701
      %v5734 = vmul.f32 %v5702, %v5702
      %v5735 = vmul.f32 %v5703, %v5703
      %v5736 = vmul.f32 %v5704, %v5704
      %v5737 = vmul.f32 %v5705, %v5705
      %v5738 = vmul.f32 %v5706, %v5706
      %v5739 = vmul.f32 %v5707, %v5707
      %v5740 = vmul.f32 %v5708, %v5708
      %v5741 = vmul.f32 %v5709, %v5709
      %v5742 = vmul.f32 %v5710, %v5710
      %v5743 = vmul.f32 %v5711, %v5711
      %v5744 = vmul.f32 %v5712, %v5712
      %v5745 = vsel %vm1540, %v5713, 0.0
      %v5746 = vsel %vm1540, %v5714, 0.0
      %v5747 = vadd.f32 %v5745, %v5746
      %v5748 = vsel %vm1540, %v5715, 0.0
      %v5749 = vadd.f32 %v5747, %v5748
      %v5750 = vsel %vm1540, %v5716, 0.0
      %v5751 = vadd.f32 %v5749, %v5750
      %v5752 = vsel %vm1540, %v5717, 0.0
      %v5753 = vadd.f32 %v5751, %v5752
      %v5754 = vsel %vm1540, %v5718, 0.0
      %v5755 = vadd.f32 %v5753, %v5754
      %v5756 = vsel %vm1540, %v5719, 0.0
      %v5757 = vadd.f32 %v5755, %v5756
      %v5758 = vsel %vm1540, %v5720, 0.0
      %v5759 = vadd.f32 %v5757, %v5758
      %v5760 = vsel %vm1540, %v5721, 0.0
      %v5761 = vadd.f32 %v5759, %v5760
      %v5762 = vsel %vm1540, %v5722, 0.0
      %v5763 = vadd.f32 %v5761, %v5762
      %v5764 = vsel %vm1540, %v5723, 0.0
      %v5765 = vadd.f32 %v5763, %v5764
      %v5766 = vsel %vm1540, %v5724, 0.0
      %v5767 = vadd.f32 %v5765, %v5766
      %v5768 = vsel %vm1540, %v5725, 0.0
      %v5769 = vadd.f32 %v5767, %v5768
      %v5770 = vsel %vm1540, %v5726, 0.0
      %v5771 = vadd.f32 %v5769, %v5770
      %v5772 = vsel %vm1540, %v5727, 0.0
      %v5773 = vadd.f32 %v5771, %v5772
      %v5774 = vsel %vm1540, %v5728, 0.0
      %v5775 = vadd.f32 %v5773, %v5774
      %v5776 = vsel %vm1540, %v5729, 0.0
      %v5777 = vadd.f32 %v5775, %v5776
      %v5778 = vsel %vm1540, %v5730, 0.0
      %v5779 = vadd.f32 %v5777, %v5778
      %v5780 = vsel %vm1540, %v5731, 0.0
      %v5781 = vadd.f32 %v5779, %v5780
      %v5782 = vsel %vm1540, %v5732, 0.0
      %v5783 = vadd.f32 %v5781, %v5782
      %v5784 = vsel %vm1540, %v5733, 0.0
      %v5785 = vadd.f32 %v5783, %v5784
      %v5786 = vsel %vm1540, %v5734, 0.0
      %v5787 = vadd.f32 %v5785, %v5786
      %v5788 = vsel %vm1540, %v5735, 0.0
      %v5789 = vadd.f32 %v5787, %v5788
      %v5790 = vsel %vm1540, %v5736, 0.0
      %v5791 = vadd.f32 %v5789, %v5790
      %v5792 = vsel %vm1540, %v5737, 0.0
      %v5793 = vadd.f32 %v5791, %v5792
      %v5794 = vsel %vm1540, %v5738, 0.0
      %v5795 = vadd.f32 %v5793, %v5794
      %v5796 = vsel %vm1540, %v5739, 0.0
      %v5797 = vadd.f32 %v5795, %v5796
      %v5798 = vsel %vm1540, %v5740, 0.0
      %v5799 = vadd.f32 %v5797, %v5798
      %v5800 = vsel %vm1540, %v5741, 0.0
      %v5801 = vadd.f32 %v5799, %v5800
      %v5802 = vsel %vm1540, %v5742, 0.0
      %v5803 = vadd.f32 %v5801, %v5802
      %v5804 = vsel %vm1540, %v5743, 0.0
      %v5805 = vadd.f32 %v5803, %v5804
      %v5806 = vsel %vm1540, %v5744, 0.0
      %v5807 = vadd.f32 %v5805, %v5806
      %v5808 = vrot.slane %v5807, 4
      %v5809 = vadd.f32 %v5807, %v5808
      %v5810 = vrot.slane %v5809, 2
      %v5811 = vadd.f32 %v5809, %v5810
      %v5812 = vrot.slane %v5811, 1
      %v5813 = vadd.f32 %v5811, %v5812
      %v5814 = vmul.f32 %v5813, 0.00390625
      %v5815 = vadd.f32 %v5814, 1e-05
      %v5816 = vrsqrt.pop %v5815
      %v5817 = vmul.f32 %v5681, %v5816
      %v5818 = vmul.f32 %v5682, %v5816
      %v5819 = vmul.f32 %v5683, %v5816
      %v5820 = vmul.f32 %v5684, %v5816
      %v5821 = vmul.f32 %v5685, %v5816
      %v5822 = vmul.f32 %v5686, %v5816
      %v5823 = vmul.f32 %v5687, %v5816
      %v5824 = vmul.f32 %v5688, %v5816
      %v5825 = vmul.f32 %v5689, %v5816
      %v5826 = vmul.f32 %v5690, %v5816
      %v5827 = vmul.f32 %v5691, %v5816
      %v5828 = vmul.f32 %v5692, %v5816
      %v5829 = vmul.f32 %v5693, %v5816
      %v5830 = vmul.f32 %v5694, %v5816
      %v5831 = vmul.f32 %v5695, %v5816
      %v5832 = vmul.f32 %v5696, %v5816
      %v5833 = vmul.f32 %v5697, %v5816
      %v5834 = vmul.f32 %v5698, %v5816
      %v5835 = vmul.f32 %v5699, %v5816
      %v5836 = vmul.f32 %v5700, %v5816
      %v5837 = vmul.f32 %v5701, %v5816
      %v5838 = vmul.f32 %v5702, %v5816
      %v5839 = vmul.f32 %v5703, %v5816
      %v5840 = vmul.f32 %v5704, %v5816
      %v5841 = vmul.f32 %v5705, %v5816
      %v5842 = vmul.f32 %v5706, %v5816
      %v5843 = vmul.f32 %v5707, %v5816
      %v5844 = vmul.f32 %v5708, %v5816
      %v5845 = vmul.f32 %v5709, %v5816
      %v5846 = vmul.f32 %v5710, %v5816
      %v5847 = vmul.f32 %v5711, %v5816
      %v5848 = vmul.f32 %v5712, %v5816
      %v5849 = vmax.f32 %v5817, 0.0
      %v5850 = vmax.f32 %v5818, 0.0
      %v5851 = vmax.f32 %v5819, 0.0
      %v5852 = vmax.f32 %v5820, 0.0
      %v5853 = vmax.f32 %v5821, 0.0
      %v5854 = vmax.f32 %v5822, 0.0
      %v5855 = vmax.f32 %v5823, 0.0
      %v5856 = vmax.f32 %v5824, 0.0
      %v5857 = vmax.f32 %v5825, 0.0
      %v5858 = vmax.f32 %v5826, 0.0
      %v5859 = vmax.f32 %v5827, 0.0
      %v5860 = vmax.f32 %v5828, 0.0
      %v5861 = vmax.f32 %v5829, 0.0
      %v5862 = vmax.f32 %v5830, 0.0
      %v5863 = vmax.f32 %v5831, 0.0
      %v5864 = vmax.f32 %v5832, 0.0
      %v5865 = vmax.f32 %v5833, 0.0
      %v5866 = vmax.f32 %v5834, 0.0
      %v5867 = vmax.f32 %v5835, 0.0
      %v5868 = vmax.f32 %v5836, 0.0
      %v5869 = vmax.f32 %v5837, 0.0
      %v5870 = vmax.f32 %v5838, 0.0
      %v5871 = vmax.f32 %v5839, 0.0
      %v5872 = vmax.f32 %v5840, 0.0
      %v5873 = vmax.f32 %v5841, 0.0
      %v5874 = vmax.f32 %v5842, 0.0
      %v5875 = vmax.f32 %v5843, 0.0
      %v5876 = vmax.f32 %v5844, 0.0
      %v5877 = vmax.f32 %v5845, 0.0
      %v5878 = vmax.f32 %v5846, 0.0
      %v5879 = vmax.f32 %v5847, 0.0
      %v5880 = vmax.f32 %v5848, 0.0
      %v5881 = vpack.c.bf16 %v5850, %v5849
      %v5882 = vpack.c.bf16 %v5852, %v5851
      %v5883 = vpack.c.bf16 %v5854, %v5853
      %v5884 = vpack.c.bf16 %v5856, %v5855
      %v5885 = vpack.c.bf16 %v5858, %v5857
      %v5886 = vpack.c.bf16 %v5860, %v5859
      %v5887 = vpack.c.bf16 %v5862, %v5861
      %v5888 = vpack.c.bf16 %v5864, %v5863
      %v5889 = vpack.c.bf16 %v5866, %v5865
      %v5890 = vpack.c.bf16 %v5868, %v5867
      %v5891 = vpack.c.bf16 %v5870, %v5869
      %v5892 = vpack.c.bf16 %v5872, %v5871
      %v5893 = vpack.c.bf16 %v5874, %v5873
      %v5894 = vpack.c.bf16 %v5876, %v5875
      %v5895 = vpack.c.bf16 %v5878, %v5877
      %v5896 = vpack.c.bf16 %v5880, %v5879
      %v5913 = vunpack.c.l.b16 %v5881
      %v5914 = vunpack.c.h.b16 %v5881
      %v5915 = vunpack.c.l.b16 %v5882
      %v5916 = vunpack.c.h.b16 %v5882
      %v5917 = vunpack.c.l.b16 %v5883
      %v5918 = vunpack.c.h.b16 %v5883
      %v5919 = vunpack.c.l.b16 %v5884
      %v5920 = vunpack.c.h.b16 %v5884
      %v5921 = vunpack.c.l.b16 %v5885
      %v5922 = vunpack.c.h.b16 %v5885
      %v5923 = vunpack.c.l.b16 %v5886
      %v5924 = vunpack.c.h.b16 %v5886
      %v5925 = vunpack.c.l.b16 %v5887
      %v5926 = vunpack.c.h.b16 %v5887
      %v5927 = vunpack.c.l.b16 %v5888
      %v5928 = vunpack.c.h.b16 %v5888
      %v5929 = vunpack.c.l.b16 %v5889
      %v5930 = vunpack.c.h.b16 %v5889
      %v5931 = vunpack.c.l.b16 %v5890
      %v5932 = vunpack.c.h.b16 %v5890
      %v5933 = vunpack.c.l.b16 %v5891
      %v5934 = vunpack.c.h.b16 %v5891
      %v5935 = vunpack.c.l.b16 %v5892
      %v5936 = vunpack.c.h.b16 %v5892
      %v5937 = vunpack.c.l.b16 %v5893
      %v5938 = vunpack.c.h.b16 %v5893
      %v5939 = vunpack.c.l.b16 %v5894
      %v5940 = vunpack.c.h.b16 %v5894
      %v5941 = vunpack.c.l.b16 %v5895
      %v5942 = vunpack.c.h.b16 %v5895
      %v5943 = vunpack.c.l.b16 %v5896
      %v5944 = vunpack.c.h.b16 %v5896
      %v5945 = vpack.c.b16 %v5913, %v5913
      %v5946 = vpack.c.b16 %v5914, %v5914
      %v5947 = vpack.c.b16 %v5915, %v5915
      %v5948 = vpack.c.b16 %v5916, %v5916
      %v5949 = vpack.c.b16 %v5917, %v5917
      %v5950 = vpack.c.b16 %v5918, %v5918
      %v5951 = vpack.c.b16 %v5919, %v5919
      %v5952 = vpack.c.b16 %v5920, %v5920
      %v5953 = vpack.c.b16 %v5921, %v5921
      %v5954 = vpack.c.b16 %v5922, %v5922
      %v5955 = vpack.c.b16 %v5923, %v5923
      %v5956 = vpack.c.b16 %v5924, %v5924
      %v5957 = vpack.c.b16 %v5925, %v5925
      %v5958 = vpack.c.b16 %v5926, %v5926
      %v5959 = vpack.c.b16 %v5927, %v5927
      %v5960 = vpack.c.b16 %v5928, %v5928
      %v5961 = vpack.c.b16 %v5929, %v5929
      %v5962 = vpack.c.b16 %v5930, %v5930
      %v5963 = vpack.c.b16 %v5931, %v5931
      %v5964 = vpack.c.b16 %v5932, %v5932
      %v5965 = vpack.c.b16 %v5933, %v5933
      %v5966 = vpack.c.b16 %v5934, %v5934
      %v5967 = vpack.c.b16 %v5935, %v5935
      %v5968 = vpack.c.b16 %v5936, %v5936
      %v5969 = vpack.c.b16 %v5937, %v5937
      %v5970 = vpack.c.b16 %v5938, %v5938
      %v5971 = vpack.c.b16 %v5939, %v5939
      %v5972 = vpack.c.b16 %v5940, %v5940
      %v5973 = vpack.c.b16 %v5941, %v5941
      %v5974 = vpack.c.b16 %v5942, %v5942
      %v5975 = vpack.c.b16 %v5943, %v5943
      %v5976 = vpack.c.b16 %v5944, %v5944
      %v5978 = vshrl.u32 %v5945, 16
      %v5980 = vrot.slane %v5978, 7
      %v5981 = vshll.u32 %v5945, 16
      %v5983 = vor.u32 %v5980, %v5981
      %v5984 = vrot.slane %v5980, 4
      %v5986 = vshrl.u32 %v5946, 16
      %v5988 = vrot.slane %v5986, 7
      %v5989 = vshll.u32 %v5946, 16
      %v5991 = vor.u32 %v5988, %v5989
      %v5992 = vsel %vm302, %v5984, %v5991
      %v5993 = vrot.slane %v5988, 4
      %v5995 = vshrl.u32 %v5947, 16
      %v5997 = vrot.slane %v5995, 7
      %v5998 = vshll.u32 %v5947, 16
      %v6000 = vor.u32 %v5997, %v5998
      %v6001 = vrot.slane %v5997, 4
      %v6003 = vshrl.u32 %v5948, 16
      %v6005 = vrot.slane %v6003, 7
      %v6006 = vshll.u32 %v5948, 16
      %v6008 = vor.u32 %v6005, %v6006
      %v6009 = vsel %vm302, %v6001, %v6008
      %v6010 = vrot.slane %v6005, 4
      %v6012 = vshrl.u32 %v5949, 16
      %v6014 = vrot.slane %v6012, 7
      %v6015 = vshll.u32 %v5949, 16
      %v6017 = vor.u32 %v6014, %v6015
      %v6018 = vrot.slane %v6014, 4
      %v6020 = vshrl.u32 %v5950, 16
      %v6022 = vrot.slane %v6020, 7
      %v6023 = vshll.u32 %v5950, 16
      %v6025 = vor.u32 %v6022, %v6023
      %v6026 = vsel %vm302, %v6018, %v6025
      %v6027 = vrot.slane %v6022, 4
      %v6029 = vshrl.u32 %v5951, 16
      %v6031 = vrot.slane %v6029, 7
      %v6032 = vshll.u32 %v5951, 16
      %v6034 = vor.u32 %v6031, %v6032
      %v6035 = vrot.slane %v6031, 4
      %v6037 = vshrl.u32 %v5952, 16
      %v6039 = vrot.slane %v6037, 7
      %v6040 = vshll.u32 %v5952, 16
      %v6042 = vor.u32 %v6039, %v6040
      %v6043 = vsel %vm302, %v6035, %v6042
      %v6044 = vrot.slane %v6039, 4
      %v6046 = vshrl.u32 %v5953, 16
      %v6048 = vrot.slane %v6046, 7
      %v6049 = vshll.u32 %v5953, 16
      %v6051 = vor.u32 %v6048, %v6049
      %v6052 = vrot.slane %v6048, 4
      %v6054 = vshrl.u32 %v5954, 16
      %v6056 = vrot.slane %v6054, 7
      %v6057 = vshll.u32 %v5954, 16
      %v6059 = vor.u32 %v6056, %v6057
      %v6060 = vsel %vm302, %v6052, %v6059
      %v6061 = vrot.slane %v6056, 4
      %v6063 = vshrl.u32 %v5955, 16
      %v6065 = vrot.slane %v6063, 7
      %v6066 = vshll.u32 %v5955, 16
      %v6068 = vor.u32 %v6065, %v6066
      %v6069 = vrot.slane %v6065, 4
      %v6071 = vshrl.u32 %v5956, 16
      %v6073 = vrot.slane %v6071, 7
      %v6074 = vshll.u32 %v5956, 16
      %v6076 = vor.u32 %v6073, %v6074
      %v6077 = vsel %vm302, %v6069, %v6076
      %v6078 = vrot.slane %v6073, 4
      %v6080 = vshrl.u32 %v5957, 16
      %v6082 = vrot.slane %v6080, 7
      %v6083 = vshll.u32 %v5957, 16
      %v6085 = vor.u32 %v6082, %v6083
      %v6086 = vrot.slane %v6082, 4
      %v6088 = vshrl.u32 %v5958, 16
      %v6090 = vrot.slane %v6088, 7
      %v6091 = vshll.u32 %v5958, 16
      %v6093 = vor.u32 %v6090, %v6091
      %v6094 = vsel %vm302, %v6086, %v6093
      %v6095 = vrot.slane %v6090, 4
      %v6097 = vshrl.u32 %v5959, 16
      %v6099 = vrot.slane %v6097, 7
      %v6100 = vshll.u32 %v5959, 16
      %v6102 = vor.u32 %v6099, %v6100
      %v6103 = vrot.slane %v6099, 4
      %v6105 = vshrl.u32 %v5960, 16
      %v6107 = vrot.slane %v6105, 7
      %v6108 = vshll.u32 %v5960, 16
      %v6110 = vor.u32 %v6107, %v6108
      %v6111 = vsel %vm302, %v6103, %v6110
      %v6112 = vrot.slane %v6107, 4
      %v6114 = vshrl.u32 %v5961, 16
      %v6116 = vrot.slane %v6114, 7
      %v6117 = vshll.u32 %v5961, 16
      %v6119 = vor.u32 %v6116, %v6117
      %v6120 = vrot.slane %v6116, 4
      %v6122 = vshrl.u32 %v5962, 16
      %v6124 = vrot.slane %v6122, 7
      %v6125 = vshll.u32 %v5962, 16
      %v6127 = vor.u32 %v6124, %v6125
      %v6128 = vsel %vm302, %v6120, %v6127
      %v6129 = vrot.slane %v6124, 4
      %v6131 = vshrl.u32 %v5963, 16
      %v6133 = vrot.slane %v6131, 7
      %v6134 = vshll.u32 %v5963, 16
      %v6136 = vor.u32 %v6133, %v6134
      %v6137 = vrot.slane %v6133, 4
      %v6139 = vshrl.u32 %v5964, 16
      %v6141 = vrot.slane %v6139, 7
      %v6142 = vshll.u32 %v5964, 16
      %v6144 = vor.u32 %v6141, %v6142
      %v6145 = vsel %vm302, %v6137, %v6144
      %v6146 = vrot.slane %v6141, 4
      %v6148 = vshrl.u32 %v5965, 16
      %v6150 = vrot.slane %v6148, 7
      %v6151 = vshll.u32 %v5965, 16
      %v6153 = vor.u32 %v6150, %v6151
      %v6154 = vrot.slane %v6150, 4
      %v6156 = vshrl.u32 %v5966, 16
      %v6158 = vrot.slane %v6156, 7
      %v6159 = vshll.u32 %v5966, 16
      %v6161 = vor.u32 %v6158, %v6159
      %v6162 = vsel %vm302, %v6154, %v6161
      %v6163 = vrot.slane %v6158, 4
      %v6165 = vshrl.u32 %v5967, 16
      %v6167 = vrot.slane %v6165, 7
      %v6168 = vshll.u32 %v5967, 16
      %v6170 = vor.u32 %v6167, %v6168
      %v6171 = vrot.slane %v6167, 4
      %v6173 = vshrl.u32 %v5968, 16
      %v6175 = vrot.slane %v6173, 7
      %v6176 = vshll.u32 %v5968, 16
      %v6178 = vor.u32 %v6175, %v6176
      %v6179 = vsel %vm302, %v6171, %v6178
      %v6180 = vrot.slane %v6175, 4
      %v6182 = vshrl.u32 %v5969, 16
      %v6184 = vrot.slane %v6182, 7
      %v6185 = vshll.u32 %v5969, 16
      %v6187 = vor.u32 %v6184, %v6185
      %v6188 = vrot.slane %v6184, 4
      %v6190 = vshrl.u32 %v5970, 16
      %v6192 = vrot.slane %v6190, 7
      %v6193 = vshll.u32 %v5970, 16
      %v6195 = vor.u32 %v6192, %v6193
      %v6196 = vsel %vm302, %v6188, %v6195
      %v6197 = vrot.slane %v6192, 4
      %v6199 = vshrl.u32 %v5971, 16
      %v6201 = vrot.slane %v6199, 7
      %v6202 = vshll.u32 %v5971, 16
      %v6204 = vor.u32 %v6201, %v6202
      %v6205 = vrot.slane %v6201, 4
      %v6207 = vshrl.u32 %v5972, 16
      %v6209 = vrot.slane %v6207, 7
      %v6210 = vshll.u32 %v5972, 16
      %v6212 = vor.u32 %v6209, %v6210
      %v6213 = vsel %vm302, %v6205, %v6212
      %v6214 = vrot.slane %v6209, 4
      %v6216 = vshrl.u32 %v5973, 16
      %v6218 = vrot.slane %v6216, 7
      %v6219 = vshll.u32 %v5973, 16
      %v6221 = vor.u32 %v6218, %v6219
      %v6222 = vrot.slane %v6218, 4
      %v6224 = vshrl.u32 %v5974, 16
      %v6226 = vrot.slane %v6224, 7
      %v6227 = vshll.u32 %v5974, 16
      %v6229 = vor.u32 %v6226, %v6227
      %v6230 = vsel %vm302, %v6222, %v6229
      %v6231 = vrot.slane %v6226, 4
      %v6233 = vshrl.u32 %v5975, 16
      %v6235 = vrot.slane %v6233, 7
      %v6236 = vshll.u32 %v5975, 16
      %v6238 = vor.u32 %v6235, %v6236
      %v6239 = vrot.slane %v6235, 4
      %v6241 = vshrl.u32 %v5976, 16
      %v6243 = vrot.slane %v6241, 7
      %v6244 = vshll.u32 %v5976, 16
      %v6246 = vor.u32 %v6243, %v6244
      %v6247 = vsel %vm302, %v6239, %v6246
      %v6248 = vrot.slane %v6243, 4
      %v6297 = vsel %vm626, %v5983, %v2861
      %6298 = vst [vmem:[%s623] sm:$0xf] %v6297
      %6299 = vst.msk [vmem:[%s623 + $0x4] sm:$0xf] %vm630, %v5992
      %v6300 = vld [vmem:[%s623 + $0x8] sm:$0x1]
      %v6301 = vsel %vm633, %v5993, %v6300
      %6302 = vst [vmem:[%s623 + $0x8] sm:$0x1] %v6301
      %v6303 = vld [vmem:[%s623 + $0xc] sm:$0xf]
      %v6304 = vsel %vm626, %v6000, %v6303
      %6305 = vst [vmem:[%s623 + $0xc] sm:$0xf] %v6304
      %6306 = vst.msk [vmem:[%s623 + $0x10] sm:$0xf] %vm630, %v6009
      %v6307 = vld [vmem:[%s623 + $0x14] sm:$0x1]
      %v6308 = vsel %vm633, %v6010, %v6307
      %6309 = vst [vmem:[%s623 + $0x14] sm:$0x1] %v6308
      %v6310 = vld [vmem:[%s623 + $0x18] sm:$0xf]
      %v6311 = vsel %vm626, %v6017, %v6310
      %6312 = vst [vmem:[%s623 + $0x18] sm:$0xf] %v6311
      %6313 = vst.msk [vmem:[%s623 + $0x1c] sm:$0xf] %vm630, %v6026
      %v6314 = vld [vmem:[%s623 + $0x20] sm:$0x1]
      %v6315 = vsel %vm633, %v6027, %v6314
      %6316 = vst [vmem:[%s623 + $0x20] sm:$0x1] %v6315
      %v6317 = vld [vmem:[%s623 + $0x24] sm:$0xf]
      %v6318 = vsel %vm626, %v6034, %v6317
      %6319 = vst [vmem:[%s623 + $0x24] sm:$0xf] %v6318
      %6320 = vst.msk [vmem:[%s623 + $0x28] sm:$0xf] %vm630, %v6043
      %v6321 = vld [vmem:[%s623 + $0x2c] sm:$0x1]
      %v6322 = vsel %vm633, %v6044, %v6321
      %6323 = vst [vmem:[%s623 + $0x2c] sm:$0x1] %v6322
      %v6324 = vld [vmem:[%s623 + $0x30] sm:$0xf]
      %v6325 = vsel %vm626, %v6051, %v6324
      %6326 = vst [vmem:[%s623 + $0x30] sm:$0xf] %v6325
      %6327 = vst.msk [vmem:[%s623 + $0x34] sm:$0xf] %vm630, %v6060
      %v6328 = vld [vmem:[%s623 + $0x38] sm:$0x1]
      %v6329 = vsel %vm633, %v6061, %v6328
      %6330 = vst [vmem:[%s623 + $0x38] sm:$0x1] %v6329
      %v6331 = vld [vmem:[%s623 + $0x3c] sm:$0xf]
      %v6332 = vsel %vm626, %v6068, %v6331
      %6333 = vst [vmem:[%s623 + $0x3c] sm:$0xf] %v6332
      %6334 = vst.msk [vmem:[%s623 + $0x40] sm:$0xf] %vm630, %v6077
      %v6335 = vld [vmem:[%s623 + $0x44] sm:$0x1]
      %v6336 = vsel %vm633, %v6078, %v6335
      %6337 = vst [vmem:[%s623 + $0x44] sm:$0x1] %v6336
      %v6338 = vld [vmem:[%s623 + $0x48] sm:$0xf]
      %v6339 = vsel %vm626, %v6085, %v6338
      %6340 = vst [vmem:[%s623 + $0x48] sm:$0xf] %v6339
      %6341 = vst.msk [vmem:[%s623 + $0x4c] sm:$0xf] %vm630, %v6094
      %v6342 = vld [vmem:[%s623 + $0x50] sm:$0x1]
      %v6343 = vsel %vm633, %v6095, %v6342
      %6344 = vst [vmem:[%s623 + $0x50] sm:$0x1] %v6343
      %v6345 = vld [vmem:[%s623 + $0x54] sm:$0xf]
      %v6346 = vsel %vm626, %v6102, %v6345
      %6347 = vst [vmem:[%s623 + $0x54] sm:$0xf] %v6346
      %6348 = vst.msk [vmem:[%s623 + $0x58] sm:$0xf] %vm630, %v6111
      %v6349 = vld [vmem:[%s623 + $0x5c] sm:$0x1]
      %v6350 = vsel %vm633, %v6112, %v6349
      %6351 = vst [vmem:[%s623 + $0x5c] sm:$0x1] %v6350
      %v6352 = vld [vmem:[%s623 + $0x60] sm:$0xf]
      %v6353 = vsel %vm626, %v6119, %v6352
      %6354 = vst [vmem:[%s623 + $0x60] sm:$0xf] %v6353
      %6355 = vst.msk [vmem:[%s623 + $0x64] sm:$0xf] %vm630, %v6128
      %v6356 = vld [vmem:[%s623 + $0x68] sm:$0x1]
      %v6357 = vsel %vm633, %v6129, %v6356
      %6358 = vst [vmem:[%s623 + $0x68] sm:$0x1] %v6357
      %v6359 = vld [vmem:[%s623 + $0x6c] sm:$0xf]
      %v6360 = vsel %vm626, %v6136, %v6359
      %6361 = vst [vmem:[%s623 + $0x6c] sm:$0xf] %v6360
      %6362 = vst.msk [vmem:[%s623 + $0x70] sm:$0xf] %vm630, %v6145
      %v6363 = vld [vmem:[%s623 + $0x74] sm:$0x1]
      %v6364 = vsel %vm633, %v6146, %v6363
      %6365 = vst [vmem:[%s623 + $0x74] sm:$0x1] %v6364
      %v6366 = vld [vmem:[%s623 + $0x78] sm:$0xf]
      %v6367 = vsel %vm626, %v6153, %v6366
      %6368 = vst [vmem:[%s623 + $0x78] sm:$0xf] %v6367
      %6369 = vst.msk [vmem:[%s623 + $0x7c] sm:$0xf] %vm630, %v6162
      %v6370 = vld [vmem:[%s623 + $0x80] sm:$0x1]
      %v6371 = vsel %vm633, %v6163, %v6370
      %6372 = vst [vmem:[%s623 + $0x80] sm:$0x1] %v6371
      %v6373 = vld [vmem:[%s623 + $0x84] sm:$0xf]
      %v6374 = vsel %vm626, %v6170, %v6373
      %6375 = vst [vmem:[%s623 + $0x84] sm:$0xf] %v6374
      %6376 = vst.msk [vmem:[%s623 + $0x88] sm:$0xf] %vm630, %v6179
      %v6377 = vld [vmem:[%s623 + $0x8c] sm:$0x1]
      %v6378 = vsel %vm633, %v6180, %v6377
      %6379 = vst [vmem:[%s623 + $0x8c] sm:$0x1] %v6378
      %v6380 = vld [vmem:[%s623 + $0x90] sm:$0xf]
      %v6381 = vsel %vm626, %v6187, %v6380
      %6382 = vst [vmem:[%s623 + $0x90] sm:$0xf] %v6381
      %6383 = vst.msk [vmem:[%s623 + $0x94] sm:$0xf] %vm630, %v6196
      %v6384 = vld [vmem:[%s623 + $0x98] sm:$0x1]
      %v6385 = vsel %vm633, %v6197, %v6384
      %6386 = vst [vmem:[%s623 + $0x98] sm:$0x1] %v6385
      %v6387 = vld [vmem:[%s623 + $0x9c] sm:$0xf]
      %v6388 = vsel %vm626, %v6204, %v6387
      %6389 = vst [vmem:[%s623 + $0x9c] sm:$0xf] %v6388
      %6390 = vst.msk [vmem:[%s623 + $0xa0] sm:$0xf] %vm630, %v6213
      %v6391 = vld [vmem:[%s623 + $0xa4] sm:$0x1]
      %v6392 = vsel %vm633, %v6214, %v6391
      %6393 = vst [vmem:[%s623 + $0xa4] sm:$0x1] %v6392
      %v6394 = vld [vmem:[%s623 + $0xa8] sm:$0xf]
      %v6395 = vsel %vm626, %v6221, %v6394
      %6396 = vst [vmem:[%s623 + $0xa8] sm:$0xf] %v6395
      %6397 = vst.msk [vmem:[%s623 + $0xac] sm:$0xf] %vm630, %v6230
      %v6398 = vld [vmem:[%s623 + $0xb0] sm:$0x1]
      %v6399 = vsel %vm633, %v6231, %v6398
      %6400 = vst [vmem:[%s623 + $0xb0] sm:$0x1] %v6399
      %v6401 = vld [vmem:[%s623 + $0xb4] sm:$0xf]
      %v6402 = vsel %vm626, %v6238, %v6401
      %6403 = vst [vmem:[%s623 + $0xb4] sm:$0xf] %v6402
      %6404 = vst.msk [vmem:[%s623 + $0xb8] sm:$0xf] %vm630, %v6247
      %v6405 = vld [vmem:[%s623 + $0xbc] sm:$0x1]
      %v6406 = vsel %vm633, %v6248, %v6405
      %6407 = vst [vmem:[%s623 + $0xbc] sm:$0x1] %v6406
      %v6408 = vld [vmem:[%s742] sm:$0xf]
      %v6409 = vld [vmem:[%s742 + $0x4] sm:$0xf]
      %v6410 = vld [vmem:[%s742 + $0x8] sm:$0x1]
      %v6411 = vld [vmem:[#allocation2] sm:$0xf]
      %v6412 = vsel %vm626, %v6408, %v6411
      %6413 = vst [vmem:[#allocation2] sm:$0xf] %v6412
      %6414 = vst.msk [vmem:[#allocation2 + $0x4] sm:$0xf] %vm630, %v6409
      %v6415 = vld [vmem:[#allocation2 + $0x8] sm:$0x1]
      %v6416 = vsel %vm633, %v6410, %v6415
      %6417 = vst [vmem:[#allocation2 + $0x8] sm:$0x1] %v6416
      %v6418 = vld [vmem:[%s753] sm:$0xf]
      %v6419 = vld [vmem:[%s753 + $0x4] sm:$0xf]
      %v6420 = vld [vmem:[%s753 + $0x8] sm:$0x1]
      %v6421 = vld [vmem:[%s757] sm:$0xf]
      %v6422 = vsel %vm626, %v6418, %v6421
      %6423 = vst [vmem:[%s757] sm:$0xf] %v6422
      %6424 = vst.msk [vmem:[%s757 + $0x4] sm:$0xf] %vm630, %v6419
      %v6425 = vld [vmem:[%s757 + $0x8] sm:$0x1]
      %v6426 = vsel %vm633, %v6420, %v6425
      %6427 = vst [vmem:[%s757 + $0x8] sm:$0x1] %v6426
      %v6428 = vld [vmem:[#allocation2] sm:$0x2]
      %v6429 = vld [vmem:[#allocation2 + $0xc] sm:$0x2]
      %v6430 = vld [vmem:[#allocation2 + $0x18] sm:$0x2]
      %v6431 = vld [vmem:[#allocation2 + $0x24] sm:$0x2]
      %v6432 = vld [vmem:[#allocation2 + $0x30] sm:$0x2]
      %v6433 = vld [vmem:[#allocation2 + $0x3c] sm:$0x2]
      %v6434 = vld [vmem:[#allocation2 + $0x48] sm:$0x2]
      %v6435 = vld [vmem:[#allocation2 + $0x54] sm:$0x2]
      %v6436 = vld [vmem:[#allocation2 + $0x60] sm:$0x2]
      %v6437 = vld [vmem:[#allocation2 + $0x6c] sm:$0x2]
      %v6438 = vld [vmem:[#allocation2 + $0x78] sm:$0x2]
      %v6439 = vld [vmem:[#allocation2 + $0x84] sm:$0x2]
      %v6440 = vld [vmem:[#allocation2 + $0x90] sm:$0x2]
      %v6441 = vld [vmem:[#allocation2 + $0x9c] sm:$0x2]
      %v6442 = vld [vmem:[#allocation2 + $0xa8] sm:$0x2]
      %v6443 = vld [vmem:[#allocation2 + $0xb4] sm:$0x2]
      %v6444 = vld [vmem:[#allocation2 + $0xc0] sm:$0x2]
      %v6445 = vld [vmem:[#allocation2 + $0xcc] sm:$0x2]
      %v6464 = vrot.slane %v6428, 5
      %v6465 = vrot.slane %v6464, 4
      %v6466 = vrot.slane %v6429, 5
      %v6467 = vrot.slane %v6466, 4
      %v6468 = vrot.slane %v6430, 5
      %v6469 = vrot.slane %v6468, 4
      %v6470 = vrot.slane %v6431, 5
      %v6471 = vrot.slane %v6470, 4
      %v6472 = vrot.slane %v6432, 5
      %v6473 = vrot.slane %v6472, 4
      %v6474 = vrot.slane %v6433, 5
      %v6475 = vrot.slane %v6474, 4
      %v6476 = vrot.slane %v6434, 5
      %v6477 = vrot.slane %v6476, 4
      %v6478 = vrot.slane %v6435, 5
      %v6479 = vrot.slane %v6478, 4
      %v6480 = vrot.slane %v6436, 5
      %v6481 = vrot.slane %v6480, 4
      %v6482 = vrot.slane %v6437, 5
      %v6483 = vrot.slane %v6482, 4
      %v6484 = vrot.slane %v6438, 5
      %v6485 = vrot.slane %v6484, 4
      %v6486 = vrot.slane %v6439, 5
      %v6487 = vrot.slane %v6486, 4
      %v6488 = vrot.slane %v6440, 5
      %v6489 = vrot.slane %v6488, 4
      %v6490 = vrot.slane %v6441, 5
      %v6491 = vrot.slane %v6490, 4
      %v6492 = vrot.slane %v6442, 5
      %v6493 = vrot.slane %v6492, 4
      %v6494 = vrot.slane %v6443, 5
      %v6495 = vrot.slane %v6494, 4
      %v6496 = vrot.slane %v6444, 5
      %v6497 = vrot.slane %v6496, 4
      %v6498 = vrot.slane %v6445, 5
      %v6499 = vrot.slane %v6498, 4
      %v6518 = vld [vmem:[#allocation2] sm:$0x1]
      %v6519 = vsel %vm633, %v6465, %v6518
      %6520 = vst [vmem:[#allocation2] sm:$0x1] %v6519
      %v6521 = vld [vmem:[#allocation2 + $0xc] sm:$0x1]
      %v6522 = vsel %vm633, %v6467, %v6521
      %6523 = vst [vmem:[#allocation2 + $0xc] sm:$0x1] %v6522
      %v6524 = vld [vmem:[#allocation2 + $0x18] sm:$0x1]
      %v6525 = vsel %vm633, %v6469, %v6524
      %6526 = vst [vmem:[#allocation2 + $0x18] sm:$0x1] %v6525
      %v6527 = vld [vmem:[#allocation2 + $0x24] sm:$0x1]
      %v6528 = vsel %vm633, %v6471, %v6527
      %6529 = vst [vmem:[#allocation2 + $0x24] sm:$0x1] %v6528
      %v6530 = vld [vmem:[#allocation2 + $0x30] sm:$0x1]
      %v6531 = vsel %vm633, %v6473, %v6530
      %6532 = vst [vmem:[#allocation2 + $0x30] sm:$0x1] %v6531
      %v6533 = vld [vmem:[#allocation2 + $0x3c] sm:$0x1]
      %v6534 = vsel %vm633, %v6475, %v6533
      %6535 = vst [vmem:[#allocation2 + $0x3c] sm:$0x1] %v6534
      %v6536 = vld [vmem:[#allocation2 + $0x48] sm:$0x1]
      %v6537 = vsel %vm633, %v6477, %v6536
      %6538 = vst [vmem:[#allocation2 + $0x48] sm:$0x1] %v6537
      %v6539 = vld [vmem:[#allocation2 + $0x54] sm:$0x1]
      %v6540 = vsel %vm633, %v6479, %v6539
      %6541 = vst [vmem:[#allocation2 + $0x54] sm:$0x1] %v6540
      %v6542 = vld [vmem:[#allocation2 + $0x60] sm:$0x1]
      %v6543 = vsel %vm633, %v6481, %v6542
      %6544 = vst [vmem:[#allocation2 + $0x60] sm:$0x1] %v6543
      %v6545 = vld [vmem:[#allocation2 + $0x6c] sm:$0x1]
      %v6546 = vsel %vm633, %v6483, %v6545
      %6547 = vst [vmem:[#allocation2 + $0x6c] sm:$0x1] %v6546
      %v6548 = vld [vmem:[#allocation2 + $0x78] sm:$0x1]
      %v6549 = vsel %vm633, %v6485, %v6548
      %6550 = vst [vmem:[#allocation2 + $0x78] sm:$0x1] %v6549
      %v6551 = vld [vmem:[#allocation2 + $0x84] sm:$0x1]
      %v6552 = vsel %vm633, %v6487, %v6551
      %6553 = vst [vmem:[#allocation2 + $0x84] sm:$0x1] %v6552
      %v6554 = vld [vmem:[#allocation2 + $0x90] sm:$0x1]
      %v6555 = vsel %vm633, %v6489, %v6554
      %6556 = vst [vmem:[#allocation2 + $0x90] sm:$0x1] %v6555
      %v6557 = vld [vmem:[#allocation2 + $0x9c] sm:$0x1]
      %v6558 = vsel %vm633, %v6491, %v6557
      %6559 = vst [vmem:[#allocation2 + $0x9c] sm:$0x1] %v6558
      %v6560 = vld [vmem:[#allocation2 + $0xa8] sm:$0x1]
      %v6561 = vsel %vm633, %v6493, %v6560
      %6562 = vst [vmem:[#allocation2 + $0xa8] sm:$0x1] %v6561
      %v6563 = vld [vmem:[#allocation2 + $0xb4] sm:$0x1]
      %v6564 = vsel %vm633, %v6495, %v6563
      %6565 = vst [vmem:[#allocation2 + $0xb4] sm:$0x1] %v6564
      %v6566 = vld [vmem:[#allocation2 + $0xc0] sm:$0x1]
      %v6567 = vsel %vm633, %v6497, %v6566
      %6568 = vst [vmem:[#allocation2 + $0xc0] sm:$0x1] %v6567
      %v6569 = vld [vmem:[#allocation2 + $0xcc] sm:$0x1]
      %v6570 = vsel %vm633, %v6499, %v6569
      %6571 = vst [vmem:[#allocation2 + $0xcc] sm:$0x1] %v6570
      %v6572 = vld [vmem:[#allocation2 + $0x4] sm:$0x8]
      %v6573 = vld [vmem:[#allocation2 + $0x10] sm:$0x8]
      %v6574 = vld [vmem:[#allocation2 + $0x1c] sm:$0x8]
      %v6575 = vld [vmem:[#allocation2 + $0x28] sm:$0x8]
      %v6576 = vld [vmem:[#allocation2 + $0x34] sm:$0x8]
      %v6577 = vld [vmem:[#allocation2 + $0x40] sm:$0x8]
      %v6578 = vld [vmem:[#allocation2 + $0x4c] sm:$0x8]
      %v6579 = vld [vmem:[#allocation2 + $0x58] sm:$0x8]
      %v6580 = vld [vmem:[#allocation2 + $0x64] sm:$0x8]
      %v6581 = vld [vmem:[#allocation2 + $0x70] sm:$0x8]
      %v6582 = vld [vmem:[#allocation2 + $0x7c] sm:$0x8]
      %v6583 = vld [vmem:[#allocation2 + $0x88] sm:$0x8]
      %v6584 = vld [vmem:[#allocation2 + $0x94] sm:$0x8]
      %v6585 = vld [vmem:[#allocation2 + $0xa0] sm:$0x8]
      %v6586 = vld [vmem:[#allocation2 + $0xac] sm:$0x8]
      %v6587 = vld [vmem:[#allocation2 + $0xb8] sm:$0x8]
      %v6588 = vld [vmem:[#allocation2 + $0xc4] sm:$0x8]
      %v6589 = vld [vmem:[#allocation2 + $0xd0] sm:$0x8]
      %v6608 = vrot.slane %v6572, 7
      %v6609 = vrot.slane %v6608, 4
      %v6610 = vrot.slane %v6573, 7
      %v6611 = vrot.slane %v6610, 4
      %v6612 = vrot.slane %v6574, 7
      %v6613 = vrot.slane %v6612, 4
      %v6614 = vrot.slane %v6575, 7
      %v6615 = vrot.slane %v6614, 4
      %v6616 = vrot.slane %v6576, 7
      %v6617 = vrot.slane %v6616, 4
      %v6618 = vrot.slane %v6577, 7
      %v6619 = vrot.slane %v6618, 4
      %v6620 = vrot.slane %v6578, 7
      %v6621 = vrot.slane %v6620, 4
      %v6622 = vrot.slane %v6579, 7
      %v6623 = vrot.slane %v6622, 4
      %v6624 = vrot.slane %v6580, 7
      %v6625 = vrot.slane %v6624, 4
      %v6626 = vrot.slane %v6581, 7
      %v6627 = vrot.slane %v6626, 4
      %v6628 = vrot.slane %v6582, 7
      %v6629 = vrot.slane %v6628, 4
      %v6630 = vrot.slane %v6583, 7
      %v6631 = vrot.slane %v6630, 4
      %v6632 = vrot.slane %v6584, 7
      %v6633 = vrot.slane %v6632, 4
      %v6634 = vrot.slane %v6585, 7
      %v6635 = vrot.slane %v6634, 4
      %v6636 = vrot.slane %v6586, 7
      %v6637 = vrot.slane %v6636, 4
      %v6638 = vrot.slane %v6587, 7
      %v6639 = vrot.slane %v6638, 4
      %v6640 = vrot.slane %v6588, 7
      %v6641 = vrot.slane %v6640, 4
      %v6642 = vrot.slane %v6589, 7
      %v6643 = vrot.slane %v6642, 4
      %v6662 = vld [vmem:[#allocation2 + $0x8] sm:$0x1]
      %v6663 = vsel %vm999, %v6609, %v6662
      %6664 = vst [vmem:[#allocation2 + $0x8] sm:$0x1] %v6663
      %v6665 = vld [vmem:[#allocation2 + $0x14] sm:$0x1]
      %v6666 = vsel %vm999, %v6611, %v6665
      %6667 = vst [vmem:[#allocation2 + $0x14] sm:$0x1] %v6666
      %v6668 = vld [vmem:[#allocation2 + $0x20] sm:$0x1]
      %v6669 = vsel %vm999, %v6613, %v6668
      %6670 = vst [vmem:[#allocation2 + $0x20] sm:$0x1] %v6669
      %v6671 = vld [vmem:[#allocation2 + $0x2c] sm:$0x1]
      %v6672 = vsel %vm999, %v6615, %v6671
      %6673 = vst [vmem:[#allocation2 + $0x2c] sm:$0x1] %v6672
      %v6674 = vld [vmem:[#allocation2 + $0x38] sm:$0x1]
      %v6675 = vsel %vm999, %v6617, %v6674
      %6676 = vst [vmem:[#allocation2 + $0x38] sm:$0x1] %v6675
      %v6677 = vld [vmem:[#allocation2 + $0x44] sm:$0x1]
      %v6678 = vsel %vm999, %v6619, %v6677
      %6679 = vst [vmem:[#allocation2 + $0x44] sm:$0x1] %v6678
      %v6680 = vld [vmem:[#allocation2 + $0x50] sm:$0x1]
      %v6681 = vsel %vm999, %v6621, %v6680
      %6682 = vst [vmem:[#allocation2 + $0x50] sm:$0x1] %v6681
      %v6683 = vld [vmem:[#allocation2 + $0x5c] sm:$0x1]
      %v6684 = vsel %vm999, %v6623, %v6683
      %6685 = vst [vmem:[#allocation2 + $0x5c] sm:$0x1] %v6684
      %v6686 = vld [vmem:[#allocation2 + $0x68] sm:$0x1]
      %v6687 = vsel %vm999, %v6625, %v6686
      %6688 = vst [vmem:[#allocation2 + $0x68] sm:$0x1] %v6687
      %v6689 = vld [vmem:[#allocation2 + $0x74] sm:$0x1]
      %v6690 = vsel %vm999, %v6627, %v6689
      %6691 = vst [vmem:[#allocation2 + $0x74] sm:$0x1] %v6690
      %v6692 = vld [vmem:[#allocation2 + $0x80] sm:$0x1]
      %v6693 = vsel %vm999, %v6629, %v6692
      %6694 = vst [vmem:[#allocation2 + $0x80] sm:$0x1] %v6693
      %v6695 = vld [vmem:[#allocation2 + $0x8c] sm:$0x1]
      %v6696 = vsel %vm999, %v6631, %v6695
      %6697 = vst [vmem:[#allocation2 + $0x8c] sm:$0x1] %v6696
      %v6698 = vld [vmem:[#allocation2 + $0x98] sm:$0x1]
      %v6699 = vsel %vm999, %v6633, %v6698
      %6700 = vst [vmem:[#allocation2 + $0x98] sm:$0x1] %v6699
      %v6701 = vld [vmem:[#allocation2 + $0xa4] sm:$0x1]
      %v6702 = vsel %vm999, %v6635, %v6701
      %6703 = vst [vmem:[#allocation2 + $0xa4] sm:$0x1] %v6702
      %v6704 = vld [vmem:[#allocation2 + $0xb0] sm:$0x1]
      %v6705 = vsel %vm999, %v6637, %v6704
      %6706 = vst [vmem:[#allocation2 + $0xb0] sm:$0x1] %v6705
      %v6707 = vld [vmem:[#allocation2 + $0xbc] sm:$0x1]
      %v6708 = vsel %vm999, %v6639, %v6707
      %6709 = vst [vmem:[#allocation2 + $0xbc] sm:$0x1] %v6708
      %v6710 = vld [vmem:[#allocation2 + $0xc8] sm:$0x1]
      %v6711 = vsel %vm999, %v6641, %v6710
      %6712 = vst [vmem:[#allocation2 + $0xc8] sm:$0x1] %v6711
      %v6713 = vld [vmem:[#allocation2 + $0xd4] sm:$0x1]
      %v6714 = vsel %vm999, %v6643, %v6713
      %6715 = vst [vmem:[#allocation2 + $0xd4] sm:$0x1] %v6714
      %v6716 = vld [vmem:[#allocation2] sm:$0xf]
      %v6717 = vld [vmem:[#allocation2 + $0x4] sm:$0xf]
      %v6718 = vld [vmem:[#allocation2 + $0xc] sm:$0xf]
      %v6719 = vld [vmem:[#allocation2 + $0x10] sm:$0xf]
      %v6720 = vld [vmem:[#allocation2 + $0x18] sm:$0xf]
      %v6721 = vld [vmem:[#allocation2 + $0x1c] sm:$0xf]
      %v6722 = vld [vmem:[#allocation2 + $0x24] sm:$0xf]
      %v6723 = vld [vmem:[#allocation2 + $0x28] sm:$0xf]
      %v6724 = vld [vmem:[#allocation2 + $0x30] sm:$0xf]
      %v6725 = vld [vmem:[#allocation2 + $0x34] sm:$0xf]
      %v6726 = vld [vmem:[#allocation2 + $0x3c] sm:$0xf]
      %v6727 = vld [vmem:[#allocation2 + $0x40] sm:$0xf]
      %v6728 = vld [vmem:[#allocation2 + $0x48] sm:$0xf]
      %v6729 = vld [vmem:[#allocation2 + $0x4c] sm:$0xf]
      %v6730 = vld [vmem:[#allocation2 + $0x54] sm:$0xf]
      %v6731 = vld [vmem:[#allocation2 + $0x58] sm:$0xf]
      %v6732 = vld [vmem:[#allocation2 + $0x60] sm:$0xf]
      %v6733 = vld [vmem:[#allocation2 + $0x64] sm:$0xf]
      %v6734 = vld [vmem:[#allocation2 + $0x6c] sm:$0xf]
      %v6735 = vld [vmem:[#allocation2 + $0x70] sm:$0xf]
      %v6736 = vld [vmem:[#allocation2 + $0x78] sm:$0xf]
      %v6737 = vld [vmem:[#allocation2 + $0x7c] sm:$0xf]
      %v6738 = vld [vmem:[#allocation2 + $0x84] sm:$0xf]
      %v6739 = vld [vmem:[#allocation2 + $0x88] sm:$0xf]
      %v6740 = vld [vmem:[#allocation2 + $0x90] sm:$0xf]
      %v6741 = vld [vmem:[#allocation2 + $0x94] sm:$0xf]
      %v6742 = vld [vmem:[#allocation2 + $0x9c] sm:$0xf]
      %v6743 = vld [vmem:[#allocation2 + $0xa0] sm:$0xf]
      %v6744 = vld [vmem:[#allocation2 + $0xa8] sm:$0xf]
      %v6745 = vld [vmem:[#allocation2 + $0xac] sm:$0xf]
      %v6746 = vld [vmem:[#allocation2 + $0xb4] sm:$0xf]
      %v6747 = vld [vmem:[#allocation2 + $0xb8] sm:$0xf]
      %v6748 = vld [vmem:[%s2] sm:$0x3]
      %v6749 = vld [vmem:[#allocation2 + $0x8] sm:$0x1]
      %v6750 = vld [vmem:[#allocation2 + $0x14] sm:$0x1]
      %v6751 = vld [vmem:[#allocation2 + $0x20] sm:$0x1]
      %v6752 = vld [vmem:[#allocation2 + $0x2c] sm:$0x1]
      %v6753 = vld [vmem:[#allocation2 + $0x38] sm:$0x1]
      %v6754 = vld [vmem:[#allocation2 + $0x44] sm:$0x1]
      %v6755 = vld [vmem:[#allocation2 + $0x50] sm:$0x1]
      %v6756 = vld [vmem:[#allocation2 + $0x5c] sm:$0x1]
      %v6757 = vld [vmem:[#allocation2 + $0x68] sm:$0x1]
      %v6758 = vld [vmem:[#allocation2 + $0x74] sm:$0x1]
      %v6759 = vld [vmem:[#allocation2 + $0x80] sm:$0x1]
      %v6760 = vld [vmem:[#allocation2 + $0x8c] sm:$0x1]
      %v6761 = vld [vmem:[#allocation2 + $0x98] sm:$0x1]
      %v6762 = vld [vmem:[#allocation2 + $0xa4] sm:$0x1]
      %v6763 = vld [vmem:[#allocation2 + $0xb0] sm:$0x1]
      %v6764 = vld [vmem:[#allocation2 + $0xbc] sm:$0x1]
      %v6766 = vshrl.u32 %v6716, 16
      %v6768 = vrot.slane %v6766, 4
      %v6769 = vshll.u32 %v6716, 16
      %v6771 = vrot.slane %v6769, 5
      %v6772 = vor.u32 %v6768, %v6771
      %v6773 = vrot.slane %v6772, 4
      %v6775 = vshll.u32 %v6717, 16
      %v6777 = vrot.slane %v6775, 5
      %v6778 = vsel %vm1105, %v6773, %v6777
      %v6779 = vshrl.u32 %v6717, 16
      %v6781 = vrot.slane %v6779, 4
      %v6782 = vor.u32 %v6781, %v6777
      %v6783 = vrot.slane %v6782, 4
      %v6785 = vshll.u32 %v6749, 16
      %v6787 = vrot.slane %v6785, 5
      %v6788 = vsel %vm1105, %v6783, %v6787
      %v6790 = vshrl.u32 %v6718, 16
      %v6792 = vrot.slane %v6790, 4
      %v6793 = vshll.u32 %v6718, 16
      %v6795 = vrot.slane %v6793, 5
      %v6796 = vor.u32 %v6792, %v6795
      %v6797 = vrot.slane %v6796, 4
      %v6799 = vshll.u32 %v6719, 16
      %v6801 = vrot.slane %v6799, 5
      %v6802 = vsel %vm1105, %v6797, %v6801
      %v6803 = vshrl.u32 %v6719, 16
      %v6805 = vrot.slane %v6803, 4
      %v6806 = vor.u32 %v6805, %v6801
      %v6807 = vrot.slane %v6806, 4
      %v6809 = vshll.u32 %v6750, 16
      %v6811 = vrot.slane %v6809, 5
      %v6812 = vsel %vm1105, %v6807, %v6811
      %v6814 = vshrl.u32 %v6720, 16
      %v6816 = vrot.slane %v6814, 4
      %v6817 = vshll.u32 %v6720, 16
      %v6819 = vrot.slane %v6817, 5
      %v6820 = vor.u32 %v6816, %v6819
      %v6821 = vrot.slane %v6820, 4
      %v6823 = vshll.u32 %v6721, 16
      %v6825 = vrot.slane %v6823, 5
      %v6826 = vsel %vm1105, %v6821, %v6825
      %v6827 = vshrl.u32 %v6721, 16
      %v6829 = vrot.slane %v6827, 4
      %v6830 = vor.u32 %v6829, %v6825
      %v6831 = vrot.slane %v6830, 4
      %v6833 = vshll.u32 %v6751, 16
      %v6835 = vrot.slane %v6833, 5
      %v6836 = vsel %vm1105, %v6831, %v6835
      %v6838 = vshrl.u32 %v6722, 16
      %v6840 = vrot.slane %v6838, 4
      %v6841 = vshll.u32 %v6722, 16
      %v6843 = vrot.slane %v6841, 5
      %v6844 = vor.u32 %v6840, %v6843
      %v6845 = vrot.slane %v6844, 4
      %v6847 = vshll.u32 %v6723, 16
      %v6849 = vrot.slane %v6847, 5
      %v6850 = vsel %vm1105, %v6845, %v6849
      %v6851 = vshrl.u32 %v6723, 16
      %v6853 = vrot.slane %v6851, 4
      %v6854 = vor.u32 %v6853, %v6849
      %v6855 = vrot.slane %v6854, 4
      %v6857 = vshll.u32 %v6752, 16
      %v6859 = vrot.slane %v6857, 5
      %v6860 = vsel %vm1105, %v6855, %v6859
      %v6862 = vshrl.u32 %v6724, 16
      %v6864 = vrot.slane %v6862, 4
      %v6865 = vshll.u32 %v6724, 16
      %v6867 = vrot.slane %v6865, 5
      %v6868 = vor.u32 %v6864, %v6867
      %v6869 = vrot.slane %v6868, 4
      %v6871 = vshll.u32 %v6725, 16
      %v6873 = vrot.slane %v6871, 5
      %v6874 = vsel %vm1105, %v6869, %v6873
      %v6875 = vshrl.u32 %v6725, 16
      %v6877 = vrot.slane %v6875, 4
      %v6878 = vor.u32 %v6877, %v6873
      %v6879 = vrot.slane %v6878, 4
      %v6881 = vshll.u32 %v6753, 16
      %v6883 = vrot.slane %v6881, 5
      %v6884 = vsel %vm1105, %v6879, %v6883
      %v6886 = vshrl.u32 %v6726, 16
      %v6888 = vrot.slane %v6886, 4
      %v6889 = vshll.u32 %v6726, 16
      %v6891 = vrot.slane %v6889, 5
      %v6892 = vor.u32 %v6888, %v6891
      %v6893 = vrot.slane %v6892, 4
      %v6895 = vshll.u32 %v6727, 16
      %v6897 = vrot.slane %v6895, 5
      %v6898 = vsel %vm1105, %v6893, %v6897
      %v6899 = vshrl.u32 %v6727, 16
      %v6901 = vrot.slane %v6899, 4
      %v6902 = vor.u32 %v6901, %v6897
      %v6903 = vrot.slane %v6902, 4
      %v6905 = vshll.u32 %v6754, 16
      %v6907 = vrot.slane %v6905, 5
      %v6908 = vsel %vm1105, %v6903, %v6907
      %v6910 = vshrl.u32 %v6728, 16
      %v6912 = vrot.slane %v6910, 4
      %v6913 = vshll.u32 %v6728, 16
      %v6915 = vrot.slane %v6913, 5
      %v6916 = vor.u32 %v6912, %v6915
      %v6917 = vrot.slane %v6916, 4
      %v6919 = vshll.u32 %v6729, 16
      %v6921 = vrot.slane %v6919, 5
      %v6922 = vsel %vm1105, %v6917, %v6921
      %v6923 = vshrl.u32 %v6729, 16
      %v6925 = vrot.slane %v6923, 4
      %v6926 = vor.u32 %v6925, %v6921
      %v6927 = vrot.slane %v6926, 4
      %v6929 = vshll.u32 %v6755, 16
      %v6931 = vrot.slane %v6929, 5
      %v6932 = vsel %vm1105, %v6927, %v6931
      %v6934 = vshrl.u32 %v6730, 16
      %v6936 = vrot.slane %v6934, 4
      %v6937 = vshll.u32 %v6730, 16
      %v6939 = vrot.slane %v6937, 5
      %v6940 = vor.u32 %v6936, %v6939
      %v6941 = vrot.slane %v6940, 4
      %v6943 = vshll.u32 %v6731, 16
      %v6945 = vrot.slane %v6943, 5
      %v6946 = vsel %vm1105, %v6941, %v6945
      %v6947 = vshrl.u32 %v6731, 16
      %v6949 = vrot.slane %v6947, 4
      %v6950 = vor.u32 %v6949, %v6945
      %v6951 = vrot.slane %v6950, 4
      %v6953 = vshll.u32 %v6756, 16
      %v6955 = vrot.slane %v6953, 5
      %v6956 = vsel %vm1105, %v6951, %v6955
      %v6958 = vshrl.u32 %v6732, 16
      %v6960 = vrot.slane %v6958, 4
      %v6961 = vshll.u32 %v6732, 16
      %v6963 = vrot.slane %v6961, 5
      %v6964 = vor.u32 %v6960, %v6963
      %v6965 = vrot.slane %v6964, 4
      %v6967 = vshll.u32 %v6733, 16
      %v6969 = vrot.slane %v6967, 5
      %v6970 = vsel %vm1105, %v6965, %v6969
      %v6971 = vshrl.u32 %v6733, 16
      %v6973 = vrot.slane %v6971, 4
      %v6974 = vor.u32 %v6973, %v6969
      %v6975 = vrot.slane %v6974, 4
      %v6977 = vshll.u32 %v6757, 16
      %v6979 = vrot.slane %v6977, 5
      %v6980 = vsel %vm1105, %v6975, %v6979
      %v6982 = vshrl.u32 %v6734, 16
      %v6984 = vrot.slane %v6982, 4
      %v6985 = vshll.u32 %v6734, 16
      %v6987 = vrot.slane %v6985, 5
      %v6988 = vor.u32 %v6984, %v6987
      %v6989 = vrot.slane %v6988, 4
      %v6991 = vshll.u32 %v6735, 16
      %v6993 = vrot.slane %v6991, 5
      %v6994 = vsel %vm1105, %v6989, %v6993
      %v6995 = vshrl.u32 %v6735, 16
      %v6997 = vrot.slane %v6995, 4
      %v6998 = vor.u32 %v6997, %v6993
      %v6999 = vrot.slane %v6998, 4
      %v7001 = vshll.u32 %v6758, 16
      %v7003 = vrot.slane %v7001, 5
      %v7004 = vsel %vm1105, %v6999, %v7003
      %v7006 = vshrl.u32 %v6736, 16
      %v7008 = vrot.slane %v7006, 4
      %v7009 = vshll.u32 %v6736, 16
      %v7011 = vrot.slane %v7009, 5
      %v7012 = vor.u32 %v7008, %v7011
      %v7013 = vrot.slane %v7012, 4
      %v7015 = vshll.u32 %v6737, 16
      %v7017 = vrot.slane %v7015, 5
      %v7018 = vsel %vm1105, %v7013, %v7017
      %v7019 = vshrl.u32 %v6737, 16
      %v7021 = vrot.slane %v7019, 4
      %v7022 = vor.u32 %v7021, %v7017
      %v7023 = vrot.slane %v7022, 4
      %v7025 = vshll.u32 %v6759, 16
      %v7027 = vrot.slane %v7025, 5
      %v7028 = vsel %vm1105, %v7023, %v7027
      %v7030 = vshrl.u32 %v6738, 16
      %v7032 = vrot.slane %v7030, 4
      %v7033 = vshll.u32 %v6738, 16
      %v7035 = vrot.slane %v7033, 5
      %v7036 = vor.u32 %v7032, %v7035
      %v7037 = vrot.slane %v7036, 4
      %v7039 = vshll.u32 %v6739, 16
      %v7041 = vrot.slane %v7039, 5
      %v7042 = vsel %vm1105, %v7037, %v7041
      %v7043 = vshrl.u32 %v6739, 16
      %v7045 = vrot.slane %v7043, 4
      %v7046 = vor.u32 %v7045, %v7041
      %v7047 = vrot.slane %v7046, 4
      %v7049 = vshll.u32 %v6760, 16
      %v7051 = vrot.slane %v7049, 5
      %v7052 = vsel %vm1105, %v7047, %v7051
      %v7054 = vshrl.u32 %v6740, 16
      %v7056 = vrot.slane %v7054, 4
      %v7057 = vshll.u32 %v6740, 16
      %v7059 = vrot.slane %v7057, 5
      %v7060 = vor.u32 %v7056, %v7059
      %v7061 = vrot.slane %v7060, 4
      %v7063 = vshll.u32 %v6741, 16
      %v7065 = vrot.slane %v7063, 5
      %v7066 = vsel %vm1105, %v7061, %v7065
      %v7067 = vshrl.u32 %v6741, 16
      %v7069 = vrot.slane %v7067, 4
      %v7070 = vor.u32 %v7069, %v7065
      %v7071 = vrot.slane %v7070, 4
      %v7073 = vshll.u32 %v6761, 16
      %v7075 = vrot.slane %v7073, 5
      %v7076 = vsel %vm1105, %v7071, %v7075
      %v7078 = vshrl.u32 %v6742, 16
      %v7080 = vrot.slane %v7078, 4
      %v7081 = vshll.u32 %v6742, 16
      %v7083 = vrot.slane %v7081, 5
      %v7084 = vor.u32 %v7080, %v7083
      %v7085 = vrot.slane %v7084, 4
      %v7087 = vshll.u32 %v6743, 16
      %v7089 = vrot.slane %v7087, 5
      %v7090 = vsel %vm1105, %v7085, %v7089
      %v7091 = vshrl.u32 %v6743, 16
      %v7093 = vrot.slane %v7091, 4
      %v7094 = vor.u32 %v7093, %v7089
      %v7095 = vrot.slane %v7094, 4
      %v7097 = vshll.u32 %v6762, 16
      %v7099 = vrot.slane %v7097, 5
      %v7100 = vsel %vm1105, %v7095, %v7099
      %v7102 = vshrl.u32 %v6744, 16
      %v7104 = vrot.slane %v7102, 4
      %v7105 = vshll.u32 %v6744, 16
      %v7107 = vrot.slane %v7105, 5
      %v7108 = vor.u32 %v7104, %v7107
      %v7109 = vrot.slane %v7108, 4
      %v7111 = vshll.u32 %v6745, 16
      %v7113 = vrot.slane %v7111, 5
      %v7114 = vsel %vm1105, %v7109, %v7113
      %v7115 = vshrl.u32 %v6745, 16
      %v7117 = vrot.slane %v7115, 4
      %v7118 = vor.u32 %v7117, %v7113
      %v7119 = vrot.slane %v7118, 4
      %v7121 = vshll.u32 %v6763, 16
      %v7123 = vrot.slane %v7121, 5
      %v7124 = vsel %vm1105, %v7119, %v7123
      %v7126 = vshrl.u32 %v6746, 16
      %v7128 = vrot.slane %v7126, 4
      %v7129 = vshll.u32 %v6746, 16
      %v7131 = vrot.slane %v7129, 5
      %v7132 = vor.u32 %v7128, %v7131
      %v7133 = vrot.slane %v7132, 4
      %v7135 = vshll.u32 %v6747, 16
      %v7137 = vrot.slane %v7135, 5
      %v7138 = vsel %vm1105, %v7133, %v7137
      %v7139 = vshrl.u32 %v6747, 16
      %v7141 = vrot.slane %v7139, 4
      %v7142 = vor.u32 %v7141, %v7137
      %v7143 = vrot.slane %v7142, 4
      %v7145 = vshll.u32 %v6764, 16
      %v7147 = vrot.slane %v7145, 5
      %v7148 = vsel %vm1105, %v7143, %v7147
      %s7149 = scalar_lea.vmem %s2, 2
      %v7150 = vld [vmem:[%s7149] sm:$0x3]
      %v7151 = vunpack.c.l.b16 %v6778
      %v7152 = vunpack.c.l.b16 %v6788
      %v7153 = vunpack.c.l.b16 %v6802
      %v7154 = vunpack.c.l.b16 %v6812
      %v7155 = vunpack.c.l.b16 %v6826
      %v7156 = vunpack.c.l.b16 %v6836
      %v7157 = vunpack.c.l.b16 %v6850
      %v7158 = vunpack.c.l.b16 %v6860
      %v7159 = vunpack.c.l.b16 %v6874
      %v7160 = vunpack.c.l.b16 %v6884
      %v7161 = vunpack.c.l.b16 %v6898
      %v7162 = vunpack.c.l.b16 %v6908
      %v7163 = vunpack.c.l.b16 %v6922
      %v7164 = vunpack.c.l.b16 %v6932
      %v7165 = vunpack.c.l.b16 %v6946
      %v7166 = vunpack.c.l.b16 %v6956
      %v7167 = vunpack.c.l.b16 %v6970
      %v7168 = vunpack.c.l.b16 %v6980
      %v7169 = vunpack.c.l.b16 %v6994
      %v7170 = vunpack.c.l.b16 %v7004
      %v7171 = vunpack.c.l.b16 %v7018
      %v7172 = vunpack.c.l.b16 %v7028
      %v7173 = vunpack.c.l.b16 %v7042
      %v7174 = vunpack.c.l.b16 %v7052
      %v7175 = vunpack.c.l.b16 %v7066
      %v7176 = vunpack.c.l.b16 %v7076
      %v7177 = vunpack.c.l.b16 %v7090
      %v7178 = vunpack.c.l.b16 %v7100
      %v7179 = vunpack.c.l.b16 %v7114
      %v7180 = vunpack.c.l.b16 %v7124
      %v7181 = vunpack.c.l.b16 %v7138
      %v7182 = vunpack.c.l.b16 %v7148
      %v7183 = vpack.c.b16 %v7152, %v7151
      %v7184 = vpack.c.b16 %v7154, %v7153
      %v7185 = vpack.c.b16 %v7156, %v7155
      %v7186 = vpack.c.b16 %v7158, %v7157
      %v7187 = vpack.c.b16 %v7160, %v7159
      %v7188 = vpack.c.b16 %v7162, %v7161
      %v7189 = vpack.c.b16 %v7164, %v7163
      %v7190 = vpack.c.b16 %v7166, %v7165
      %v7191 = vpack.c.b16 %v7168, %v7167
      %v7192 = vpack.c.b16 %v7170, %v7169
      %v7193 = vpack.c.b16 %v7172, %v7171
      %v7194 = vpack.c.b16 %v7174, %v7173
      %v7195 = vpack.c.b16 %v7176, %v7175
      %v7196 = vpack.c.b16 %v7178, %v7177
      %v7197 = vpack.c.b16 %v7180, %v7179
      %v7198 = vpack.c.b16 %v7182, %v7181
      %v7200 = vsel %vm1540, %v7183, 0
      %v7203 = vsel %vm1540, %v7184, 0
      %v7206 = vsel %vm1540, %v7185, 0
      %v7209 = vsel %vm1540, %v7186, 0
      %v7212 = vsel %vm1540, %v7187, 0
      %v7215 = vsel %vm1540, %v7188, 0
      %v7218 = vsel %vm1540, %v7189, 0
      %v7221 = vsel %vm1540, %v7190, 0
      %v7224 = vsel %vm1540, %v7191, 0
      %v7227 = vsel %vm1540, %v7192, 0
      %v7230 = vsel %vm1540, %v7193, 0
      %v7233 = vsel %vm1540, %v7194, 0
      %v7236 = vsel %vm1540, %v7195, 0
      %v7239 = vsel %vm1540, %v7196, 0
      %v7242 = vsel %vm1540, %v7197, 0
      %v7245 = vsel %vm1540, %v7198, 0
      %v7248 = vsel %vm1589, %v7150, 0
      %7250 = vmatprep.subr.bf16.mxu0 0
      %7251 = vmatpush1.bf16.msra.mxu0 %v7248
      %7252 = vmatprep.subr.bf16.mxu0 0
      %7253 = vmatpush1.bf16.msra.mxu0 0
      %7254 = vmatprep.subr.bf16.mxu0 0
      %7255 = vmatpush1.bf16.msra.mxu0 0
      %7256 = vmatprep.subr.bf16.mxu0 0
      %7257 = vmatpush1.bf16.msra.mxu0 0
      %7258 = vmatprep.subr.bf16.mxu0 0
      %7259 = vmatpush1.bf16.msra.mxu0 0
      %7260 = vmatprep.subr.bf16.mxu0 0
      %7261 = vmatpush1.bf16.msra.mxu0 0
      %7262 = vmatprep.subr.bf16.mxu0 0
      %7263 = vmatpush1.bf16.msra.mxu0 0
      %7264 = vmatprep.subr.bf16.mxu0 0
      %7265 = vmatpush1.bf16.msra.mxu0 0
      %7266 = vmatprep.subr.bf16.mxu0 0
      %7267 = vmatpush1.bf16.msra.mxu0 0
      %7268 = vmatprep.subr.bf16.mxu0 0
      %7269 = vmatpush1.bf16.msra.mxu0 0
      %7270 = vmatprep.subr.bf16.mxu0 0
      %7271 = vmatpush1.bf16.msra.mxu0 0
      %7272 = vmatprep.subr.bf16.mxu0 0
      %7273 = vmatpush1.bf16.msra.mxu0 0
      %7274 = vmatprep.subr.bf16.mxu0 0
      %7275 = vmatpush1.bf16.msra.mxu0 0
      %7276 = vmatprep.subr.bf16.mxu0 0
      %7277 = vmatpush1.bf16.msra.mxu0 0
      %7278 = vmatprep.subr.bf16.mxu0 0
      %7279 = vmatpush1.bf16.msra.mxu0 0
      %7280 = vmatprep.subr.bf16.mxu0 0
      %7281 = vmatpush1.bf16.msra.mxu0 0
      %7282 = vmatprep.mubr.bf16.mxu0 0
      %7283 = vmatmul.mubr.bf16.gmra.mrb[0].mxu0 %v7200
      %v7284 = vpop.f32.mrb[0].mxu0
      %v7285 = vadd.f32 0.0, %v7284
      %v7286 = vpop.f32.mrb[0].mxu0
      %v7287 = vpop.f32.mrb[0].mxu0
      %v7288 = vadd.f32 0.0, %v7287
      %v7289 = vpop.f32.mrb[0].mxu0
      %7290 = vmatprep.mubr.bf16.mxu0 0
      %7291 = vmatmul.mubr.bf16.gmra.mrb[0].mxu0 %v7203
      %v7292 = vpop.f32.mrb[0].mxu0
      %v7293 = vadd.f32 0.0, %v7292
      %v7294 = vpop.f32.mrb[0].mxu0
      %v7295 = vpop.f32.mrb[0].mxu0
      %v7296 = vadd.f32 0.0, %v7295
      %v7297 = vpop.f32.mrb[0].mxu0
      %7298 = vmatprep.mubr.bf16.mxu0 0
      %7299 = vmatmul.mubr.bf16.gmra.mrb[0].mxu0 %v7206
      %v7300 = vpop.f32.mrb[0].mxu0
      %v7301 = vadd.f32 0.0, %v7300
      %v7302 = vpop.f32.mrb[0].mxu0
      %v7303 = vpop.f32.mrb[0].mxu0
      %v7304 = vadd.f32 0.0, %v7303
      %v7305 = vpop.f32.mrb[0].mxu0
      %7306 = vmatprep.mubr.bf16.mxu0 0
      %7307 = vmatmul.mubr.bf16.gmra.mrb[0].mxu0 %v7209
      %v7308 = vpop.f32.mrb[0].mxu0
      %v7309 = vadd.f32 0.0, %v7308
      %v7310 = vpop.f32.mrb[0].mxu0
      %v7311 = vpop.f32.mrb[0].mxu0
      %v7312 = vadd.f32 0.0, %v7311
      %v7313 = vpop.f32.mrb[0].mxu0
      %7314 = vmatprep.mubr.bf16.mxu0 0
      %7315 = vmatmul.mubr.bf16.gmra.mrb[0].mxu0 %v7212
      %v7316 = vpop.f32.mrb[0].mxu0
      %v7317 = vadd.f32 0.0, %v7316
      %v7318 = vpop.f32.mrb[0].mxu0
      %v7319 = vpop.f32.mrb[0].mxu0
      %v7320 = vadd.f32 0.0, %v7319
      %v7321 = vpop.f32.mrb[0].mxu0
      %7322 = vmatprep.mubr.bf16.mxu0 0
      %7323 = vmatmul.mubr.bf16.gmra.mrb[0].mxu0 %v7215
      %v7324 = vpop.f32.mrb[0].mxu0
      %v7325 = vadd.f32 0.0, %v7324
      %v7326 = vpop.f32.mrb[0].mxu0
      %v7327 = vpop.f32.mrb[0].mxu0
      %v7328 = vadd.f32 0.0, %v7327
      %v7329 = vpop.f32.mrb[0].mxu0
      %7330 = vmatprep.mubr.bf16.mxu0 0
      %7331 = vmatmul.mubr.bf16.gmra.mrb[0].mxu0 %v7218
      %v7332 = vpop.f32.mrb[0].mxu0
      %v7333 = vadd.f32 0.0, %v7332
      %v7334 = vpop.f32.mrb[0].mxu0
      %v7335 = vpop.f32.mrb[0].mxu0
      %v7336 = vadd.f32 0.0, %v7335
      %v7337 = vpop.f32.mrb[0].mxu0
      %7338 = vmatprep.mubr.bf16.mxu0 0
      %7339 = vmatmul.mubr.bf16.gmra.mrb[0].mxu0 %v7221
      %v7340 = vpop.f32.mrb[0].mxu0
      %v7341 = vadd.f32 0.0, %v7340
      %v7342 = vpop.f32.mrb[0].mxu0
      %v7343 = vpop.f32.mrb[0].mxu0
      %v7344 = vadd.f32 0.0, %v7343
      %v7345 = vpop.f32.mrb[0].mxu0
      %7346 = vmatprep.mubr.bf16.mxu0 0
      %7347 = vmatmul.mubr.bf16.gmra.mrb[0].mxu0 %v7224
      %v7348 = vpop.f32.mrb[0].mxu0
      %v7349 = vadd.f32 0.0, %v7348
      %v7350 = vpop.f32.mrb[0].mxu0
      %v7351 = vpop.f32.mrb[0].mxu0
      %v7352 = vadd.f32 0.0, %v7351
      %v7353 = vpop.f32.mrb[0].mxu0
      %7354 = vmatprep.mubr.bf16.mxu0 0
      %7355 = vmatmul.mubr.bf16.gmra.mrb[0].mxu0 %v7227
      %v7356 = vpop.f32.mrb[0].mxu0
      %v7357 = vadd.f32 0.0, %v7356
      %v7358 = vpop.f32.mrb[0].mxu0
      %v7359 = vpop.f32.mrb[0].mxu0
      %v7360 = vadd.f32 0.0, %v7359
      %v7361 = vpop.f32.mrb[0].mxu0
      %7362 = vmatprep.mubr.bf16.mxu0 0
      %7363 = vmatmul.mubr.bf16.gmra.mrb[0].mxu0 %v7230
      %v7364 = vpop.f32.mrb[0].mxu0
      %v7365 = vadd.f32 0.0, %v7364
      %v7366 = vpop.f32.mrb[0].mxu0
      %v7367 = vpop.f32.mrb[0].mxu0
      %v7368 = vadd.f32 0.0, %v7367
      %v7369 = vpop.f32.mrb[0].mxu0
      %7370 = vmatprep.mubr.bf16.mxu0 0
      %7371 = vmatmul.mubr.bf16.gmra.mrb[0].mxu0 %v7233
      %v7372 = vpop.f32.mrb[0].mxu0
      %v7373 = vadd.f32 0.0, %v7372
      %v7374 = vpop.f32.mrb[0].mxu0
      %v7375 = vpop.f32.mrb[0].mxu0
      %v7376 = vadd.f32 0.0, %v7375
      %v7377 = vpop.f32.mrb[0].mxu0
      %7378 = vmatprep.mubr.bf16.mxu0 0
      %7379 = vmatmul.mubr.bf16.gmra.mrb[0].mxu0 %v7236
      %v7380 = vpop.f32.mrb[0].mxu0
      %v7381 = vadd.f32 0.0, %v7380
      %v7382 = vpop.f32.mrb[0].mxu0
      %v7383 = vpop.f32.mrb[0].mxu0
      %v7384 = vadd.f32 0.0, %v7383
      %v7385 = vpop.f32.mrb[0].mxu0
      %7386 = vmatprep.mubr.bf16.mxu0 0
      %7387 = vmatmul.mubr.bf16.gmra.mrb[0].mxu0 %v7239
      %v7388 = vpop.f32.mrb[0].mxu0
      %v7389 = vadd.f32 0.0, %v7388
      %v7390 = vpop.f32.mrb[0].mxu0
      %v7391 = vpop.f32.mrb[0].mxu0
      %v7392 = vadd.f32 0.0, %v7391
      %v7393 = vpop.f32.mrb[0].mxu0
      %7394 = vmatprep.mubr.bf16.mxu0 0
      %7395 = vmatmul.mubr.bf16.gmra.mrb[0].mxu0 %v7242
      %v7396 = vpop.f32.mrb[0].mxu0
      %v7397 = vadd.f32 0.0, %v7396
      %v7398 = vpop.f32.mrb[0].mxu0
      %v7399 = vpop.f32.mrb[0].mxu0
      %v7400 = vadd.f32 0.0, %v7399
      %v7401 = vpop.f32.mrb[0].mxu0
      %7402 = vmatprep.mubr.bf16.mxu0 0
      %7403 = vmatmul.mubr.bf16.gmra.mrb[0].mxu0 %v7245
      %v7404 = vpop.f32.mrb[0].mxu0
      %v7405 = vadd.f32 0.0, %v7404
      %v7406 = vpop.f32.mrb[0].mxu0
      %v7407 = vpop.f32.mrb[0].mxu0
      %v7408 = vadd.f32 0.0, %v7407
      %v7409 = vpop.f32.mrb[0].mxu0
      %7410 = vdwg.mxu0
      %v7443 = vunpack.c.l.b16 %v6716
      %v7444 = vunpack.c.l.b16 %v6717
      %v7445 = vunpack.c.l.b16 %v6718
      %v7446 = vunpack.c.l.b16 %v6719
      %v7447 = vunpack.c.l.b16 %v6720
      %v7448 = vunpack.c.l.b16 %v6721
      %v7449 = vunpack.c.l.b16 %v6722
      %v7450 = vunpack.c.l.b16 %v6723
      %v7451 = vunpack.c.l.b16 %v6724
      %v7452 = vunpack.c.l.b16 %v6725
      %v7453 = vunpack.c.l.b16 %v6726
      %v7454 = vunpack.c.l.b16 %v6727
      %v7455 = vunpack.c.l.b16 %v6728
      %v7456 = vunpack.c.l.b16 %v6729
      %v7457 = vunpack.c.l.b16 %v6730
      %v7458 = vunpack.c.l.b16 %v6731
      %v7459 = vunpack.c.l.b16 %v6732
      %v7460 = vunpack.c.l.b16 %v6733
      %v7461 = vunpack.c.l.b16 %v6734
      %v7462 = vunpack.c.l.b16 %v6735
      %v7463 = vunpack.c.l.b16 %v6736
      %v7464 = vunpack.c.l.b16 %v6737
      %v7465 = vunpack.c.l.b16 %v6738
      %v7466 = vunpack.c.l.b16 %v6739
      %v7467 = vunpack.c.l.b16 %v6740
      %v7468 = vunpack.c.l.b16 %v6741
      %v7469 = vunpack.c.l.b16 %v6742
      %v7470 = vunpack.c.l.b16 %v6743
      %v7471 = vunpack.c.l.b16 %v6744
      %v7472 = vunpack.c.l.b16 %v6745
      %v7473 = vunpack.c.l.b16 %v6746
      %v7474 = vunpack.c.l.b16 %v6747
      %v7475 = vpack.c.b16 %v7444, %v7443
      %v7476 = vpack.c.b16 %v7446, %v7445
      %v7477 = vpack.c.b16 %v7448, %v7447
      %v7478 = vpack.c.b16 %v7450, %v7449
      %v7479 = vpack.c.b16 %v7452, %v7451
      %v7480 = vpack.c.b16 %v7454, %v7453
      %v7481 = vpack.c.b16 %v7456, %v7455
      %v7482 = vpack.c.b16 %v7458, %v7457
      %v7483 = vpack.c.b16 %v7460, %v7459
      %v7484 = vpack.c.b16 %v7462, %v7461
      %v7485 = vpack.c.b16 %v7464, %v7463
      %v7486 = vpack.c.b16 %v7466, %v7465
      %v7487 = vpack.c.b16 %v7468, %v7467
      %v7488 = vpack.c.b16 %v7470, %v7469
      %v7489 = vpack.c.b16 %v7472, %v7471
      %v7490 = vpack.c.b16 %v7474, %v7473
      %v7492 = vsel %vm1540, %v7475, 0
      %v7495 = vsel %vm1540, %v7476, 0
      %v7498 = vsel %vm1540, %v7477, 0
      %v7501 = vsel %vm1540, %v7478, 0
      %v7504 = vsel %vm1540, %v7479, 0
      %v7507 = vsel %vm1540, %v7480, 0
      %v7510 = vsel %vm1540, %v7481, 0
      %v7513 = vsel %vm1540, %v7482, 0
      %v7516 = vsel %vm1540, %v7483, 0
      %v7519 = vsel %vm1540, %v7484, 0
      %v7522 = vsel %vm1540, %v7485, 0
      %v7525 = vsel %vm1540, %v7486, 0
      %v7528 = vsel %vm1540, %v7487, 0
      %v7531 = vsel %vm1540, %v7488, 0
      %v7534 = vsel %vm1540, %v7489, 0
      %v7537 = vsel %vm1540, %v7490, 0
      %v7540 = vsel %vm1589, %v6748, 0
      %7542 = vmatprep.subr.bf16.mxu0 0
      %7543 = vmatpush1.bf16.msra.mxu0 %v7540
      %7544 = vmatprep.subr.bf16.mxu0 0
      %7545 = vmatpush1.bf16.msra.mxu0 0
      %7546 = vmatprep.subr.bf16.mxu0 0
      %7547 = vmatpush1.bf16.msra.mxu0 0
      %7548 = vmatprep.subr.bf16.mxu0 0
      %7549 = vmatpush1.bf16.msra.mxu0 0
      %7550 = vmatprep.subr.bf16.mxu0 0
      %7551 = vmatpush1.bf16.msra.mxu0 0
      %7552 = vmatprep.subr.bf16.mxu0 0
      %7553 = vmatpush1.bf16.msra.mxu0 0
      %7554 = vmatprep.subr.bf16.mxu0 0
      %7555 = vmatpush1.bf16.msra.mxu0 0
      %7556 = vmatprep.subr.bf16.mxu0 0
      %7557 = vmatpush1.bf16.msra.mxu0 0
      %7558 = vmatprep.subr.bf16.mxu0 0
      %7559 = vmatpush1.bf16.msra.mxu0 0
      %7560 = vmatprep.subr.bf16.mxu0 0
      %7561 = vmatpush1.bf16.msra.mxu0 0
      %7562 = vmatprep.subr.bf16.mxu0 0
      %7563 = vmatpush1.bf16.msra.mxu0 0
      %7564 = vmatprep.subr.bf16.mxu0 0
      %7565 = vmatpush1.bf16.msra.mxu0 0
      %7566 = vmatprep.subr.bf16.mxu0 0
      %7567 = vmatpush1.bf16.msra.mxu0 0
      %7568 = vmatprep.subr.bf16.mxu0 0
      %7569 = vmatpush1.bf16.msra.mxu0 0
      %7570 = vmatprep.subr.bf16.mxu0 0
      %7571 = vmatpush1.bf16.msra.mxu0 0
      %7572 = vmatprep.subr.bf16.mxu0 0
      %7573 = vmatpush1.bf16.msra.mxu0 0
      %7574 = vmatprep.mubr.bf16.mxu0 0
      %7575 = vmatmul.mubr.bf16.gmra.mrb[0].mxu0 %v7492
      %v7576 = vpop.f32.mrb[0].mxu0
      %v7577 = vadd.f32 %v7285, %v7576
      %v7578 = vpop.f32.mrb[0].mxu0
      %v7579 = vpop.f32.mrb[0].mxu0
      %v7580 = vadd.f32 %v7288, %v7579
      %v7581 = vpop.f32.mrb[0].mxu0
      %7582 = vmatprep.mubr.bf16.mxu0 0
      %7583 = vmatmul.mubr.bf16.gmra.mrb[0].mxu0 %v7495
      %v7584 = vpop.f32.mrb[0].mxu0
      %v7585 = vadd.f32 %v7293, %v7584
      %v7586 = vpop.f32.mrb[0].mxu0
      %v7587 = vpop.f32.mrb[0].mxu0
      %v7588 = vadd.f32 %v7296, %v7587
      %v7589 = vpop.f32.mrb[0].mxu0
      %7590 = vmatprep.mubr.bf16.mxu0 0
      %7591 = vmatmul.mubr.bf16.gmra.mrb[0].mxu0 %v7498
      %v7592 = vpop.f32.mrb[0].mxu0
      %v7593 = vadd.f32 %v7301, %v7592
      %v7594 = vpop.f32.mrb[0].mxu0
      %v7595 = vpop.f32.mrb[0].mxu0
      %v7596 = vadd.f32 %v7304, %v7595
      %v7597 = vpop.f32.mrb[0].mxu0
      %7598 = vmatprep.mubr.bf16.mxu0 0
      %7599 = vmatmul.mubr.bf16.gmra.mrb[0].mxu0 %v7501
      %v7600 = vpop.f32.mrb[0].mxu0
      %v7601 = vadd.f32 %v7309, %v7600
      %v7602 = vpop.f32.mrb[0].mxu0
      %v7603 = vpop.f32.mrb[0].mxu0
      %v7604 = vadd.f32 %v7312, %v7603
      %v7605 = vpop.f32.mrb[0].mxu0
      %7606 = vmatprep.mubr.bf16.mxu0 0
      %7607 = vmatmul.mubr.bf16.gmra.mrb[0].mxu0 %v7504
      %v7608 = vpop.f32.mrb[0].mxu0
      %v7609 = vadd.f32 %v7317, %v7608
      %v7610 = vpop.f32.mrb[0].mxu0
      %v7611 = vpop.f32.mrb[0].mxu0
      %v7612 = vadd.f32 %v7320, %v7611
      %v7613 = vpop.f32.mrb[0].mxu0
      %7614 = vmatprep.mubr.bf16.mxu0 0
      %7615 = vmatmul.mubr.bf16.gmra.mrb[0].mxu0 %v7507
      %v7616 = vpop.f32.mrb[0].mxu0
      %v7617 = vadd.f32 %v7325, %v7616
      %v7618 = vpop.f32.mrb[0].mxu0
      %v7619 = vpop.f32.mrb[0].mxu0
      %v7620 = vadd.f32 %v7328, %v7619
      %v7621 = vpop.f32.mrb[0].mxu0
      %7622 = vmatprep.mubr.bf16.mxu0 0
      %7623 = vmatmul.mubr.bf16.gmra.mrb[0].mxu0 %v7510
      %v7624 = vpop.f32.mrb[0].mxu0
      %v7625 = vadd.f32 %v7333, %v7624
      %v7626 = vpop.f32.mrb[0].mxu0
      %v7627 = vpop.f32.mrb[0].mxu0
      %v7628 = vadd.f32 %v7336, %v7627
      %v7629 = vpop.f32.mrb[0].mxu0
      %7630 = vmatprep.mubr.bf16.mxu0 0
      %7631 = vmatmul.mubr.bf16.gmra.mrb[0].mxu0 %v7513
      %v7632 = vpop.f32.mrb[0].mxu0
      %v7633 = vadd.f32 %v7341, %v7632
      %v7634 = vpop.f32.mrb[0].mxu0
      %v7635 = vpop.f32.mrb[0].mxu0
      %v7636 = vadd.f32 %v7344, %v7635
      %v7637 = vpop.f32.mrb[0].mxu0
      %7638 = vmatprep.mubr.bf16.mxu0 0
      %7639 = vmatmul.mubr.bf16.gmra.mrb[0].mxu0 %v7516
      %v7640 = vpop.f32.mrb[0].mxu0
      %v7641 = vadd.f32 %v7349, %v7640
      %v7642 = vpop.f32.mrb[0].mxu0
      %v7643 = vpop.f32.mrb[0].mxu0
      %v7644 = vadd.f32 %v7352, %v7643
      %v7645 = vpop.f32.mrb[0].mxu0
      %7646 = vmatprep.mubr.bf16.mxu0 0
      %7647 = vmatmul.mubr.bf16.gmra.mrb[0].mxu0 %v7519
      %v7648 = vpop.f32.mrb[0].mxu0
      %v7649 = vadd.f32 %v7357, %v7648
      %v7650 = vpop.f32.mrb[0].mxu0
      %v7651 = vpop.f32.mrb[0].mxu0
      %v7652 = vadd.f32 %v7360, %v7651
      %v7653 = vpop.f32.mrb[0].mxu0
      %7654 = vmatprep.mubr.bf16.mxu0 0
      %7655 = vmatmul.mubr.bf16.gmra.mrb[0].mxu0 %v7522
      %v7656 = vpop.f32.mrb[0].mxu0
      %v7657 = vadd.f32 %v7365, %v7656
      %v7658 = vpop.f32.mrb[0].mxu0
      %v7659 = vpop.f32.mrb[0].mxu0
      %v7660 = vadd.f32 %v7368, %v7659
      %v7661 = vpop.f32.mrb[0].mxu0
      %7662 = vmatprep.mubr.bf16.mxu0 0
      %7663 = vmatmul.mubr.bf16.gmra.mrb[0].mxu0 %v7525
      %v7664 = vpop.f32.mrb[0].mxu0
      %v7665 = vadd.f32 %v7373, %v7664
      %v7666 = vpop.f32.mrb[0].mxu0
      %v7667 = vpop.f32.mrb[0].mxu0
      %v7668 = vadd.f32 %v7376, %v7667
      %v7669 = vpop.f32.mrb[0].mxu0
      %7670 = vmatprep.mubr.bf16.mxu0 0
      %7671 = vmatmul.mubr.bf16.gmra.mrb[0].mxu0 %v7528
      %v7672 = vpop.f32.mrb[0].mxu0
      %v7673 = vadd.f32 %v7381, %v7672
      %v7674 = vpop.f32.mrb[0].mxu0
      %v7675 = vpop.f32.mrb[0].mxu0
      %v7676 = vadd.f32 %v7384, %v7675
      %v7677 = vpop.f32.mrb[0].mxu0
      %7678 = vmatprep.mubr.bf16.mxu0 0
      %7679 = vmatmul.mubr.bf16.gmra.mrb[0].mxu0 %v7531
      %v7680 = vpop.f32.mrb[0].mxu0
      %v7681 = vadd.f32 %v7389, %v7680
      %v7682 = vpop.f32.mrb[0].mxu0
      %v7683 = vpop.f32.mrb[0].mxu0
      %v7684 = vadd.f32 %v7392, %v7683
      %v7685 = vpop.f32.mrb[0].mxu0
      %7686 = vmatprep.mubr.bf16.mxu0 0
      %7687 = vmatmul.mubr.bf16.gmra.mrb[0].mxu0 %v7534
      %v7688 = vpop.f32.mrb[0].mxu0
      %v7689 = vadd.f32 %v7397, %v7688
      %v7690 = vpop.f32.mrb[0].mxu0
      %v7691 = vpop.f32.mrb[0].mxu0
      %v7692 = vadd.f32 %v7400, %v7691
      %v7693 = vpop.f32.mrb[0].mxu0
      %7694 = vmatprep.mubr.bf16.mxu0 0
      %7695 = vmatmul.mubr.bf16.gmra.mrb[0].mxu0 %v7537
      %v7696 = vpop.f32.mrb[0].mxu0
      %v7697 = vadd.f32 %v7405, %v7696
      %v7698 = vpop.f32.mrb[0].mxu0
      %v7699 = vpop.f32.mrb[0].mxu0
      %v7700 = vadd.f32 %v7408, %v7699
      %v7701 = vpop.f32.mrb[0].mxu0
      %7702 = vdwg.mxu0
      %v7703 = vld [vmem:[#allocation2] sm:$0xe]
      %v7704 = vld [vmem:[#allocation2 + $0xc] sm:$0xe]
      %v7705 = vld [vmem:[#allocation2 + $0x18] sm:$0xe]
      %v7706 = vld [vmem:[#allocation2 + $0x24] sm:$0xe]
      %v7707 = vld [vmem:[#allocation2 + $0x30] sm:$0xe]
      %v7708 = vld [vmem:[#allocation2 + $0x3c] sm:$0xe]
      %v7709 = vld [vmem:[#allocation2 + $0x48] sm:$0xe]
      %v7710 = vld [vmem:[#allocation2 + $0x54] sm:$0xe]
      %v7711 = vld [vmem:[#allocation2 + $0x60] sm:$0xe]
      %v7712 = vld [vmem:[#allocation2 + $0x6c] sm:$0xe]
      %v7713 = vld [vmem:[#allocation2 + $0x78] sm:$0xe]
      %v7714 = vld [vmem:[#allocation2 + $0x84] sm:$0xe]
      %v7715 = vld [vmem:[#allocation2 + $0x90] sm:$0xe]
      %v7716 = vld [vmem:[#allocation2 + $0x9c] sm:$0xe]
      %v7717 = vld [vmem:[#allocation2 + $0xa8] sm:$0xe]
      %v7718 = vld [vmem:[#allocation2 + $0xb4] sm:$0xe]
      %v7751 = vrot.slane %v7703, 5
      %v7752 = vrot.slane %v7751, 4
      %v7753 = vrot.slane %v6717, 5
      %v7754 = vsel %vm2096, %v7752, %v7753
      %v7755 = vrot.slane %v7753, 4
      %v7756 = vrot.slane %v6749, 5
      %v7757 = vsel %vm2096, %v7755, %v7756
      %v7758 = vrot.slane %v7704, 5
      %v7759 = vrot.slane %v7758, 4
      %v7760 = vrot.slane %v6719, 5
      %v7761 = vsel %vm2096, %v7759, %v7760
      %v7762 = vrot.slane %v7760, 4
      %v7763 = vrot.slane %v6750, 5
      %v7764 = vsel %vm2096, %v7762, %v7763
      %v7765 = vrot.slane %v7705, 5
      %v7766 = vrot.slane %v7765, 4
      %v7767 = vrot.slane %v6721, 5
      %v7768 = vsel %vm2096, %v7766, %v7767
      %v7769 = vrot.slane %v7767, 4
      %v7770 = vrot.slane %v6751, 5
      %v7771 = vsel %vm2096, %v7769, %v7770
      %v7772 = vrot.slane %v7706, 5
      %v7773 = vrot.slane %v7772, 4
      %v7774 = vrot.slane %v6723, 5
      %v7775 = vsel %vm2096, %v7773, %v7774
      %v7776 = vrot.slane %v7774, 4
      %v7777 = vrot.slane %v6752, 5
      %v7778 = vsel %vm2096, %v7776, %v7777
      %v7779 = vrot.slane %v7707, 5
      %v7780 = vrot.slane %v7779, 4
      %v7781 = vrot.slane %v6725, 5
      %v7782 = vsel %vm2096, %v7780, %v7781
      %v7783 = vrot.slane %v7781, 4
      %v7784 = vrot.slane %v6753, 5
      %v7785 = vsel %vm2096, %v7783, %v7784
      %v7786 = vrot.slane %v7708, 5
      %v7787 = vrot.slane %v7786, 4
      %v7788 = vrot.slane %v6727, 5
      %v7789 = vsel %vm2096, %v7787, %v7788
      %v7790 = vrot.slane %v7788, 4
      %v7791 = vrot.slane %v6754, 5
      %v7792 = vsel %vm2096, %v7790, %v7791
      %v7793 = vrot.slane %v7709, 5
      %v7794 = vrot.slane %v7793, 4
      %v7795 = vrot.slane %v6729, 5
      %v7796 = vsel %vm2096, %v7794, %v7795
      %v7797 = vrot.slane %v7795, 4
      %v7798 = vrot.slane %v6755, 5
      %v7799 = vsel %vm2096, %v7797, %v7798
      %v7800 = vrot.slane %v7710, 5
      %v7801 = vrot.slane %v7800, 4
      %v7802 = vrot.slane %v6731, 5
      %v7803 = vsel %vm2096, %v7801, %v7802
      %v7804 = vrot.slane %v7802, 4
      %v7805 = vrot.slane %v6756, 5
      %v7806 = vsel %vm2096, %v7804, %v7805
      %v7807 = vrot.slane %v7711, 5
      %v7808 = vrot.slane %v7807, 4
      %v7809 = vrot.slane %v6733, 5
      %v7810 = vsel %vm2096, %v7808, %v7809
      %v7811 = vrot.slane %v7809, 4
      %v7812 = vrot.slane %v6757, 5
      %v7813 = vsel %vm2096, %v7811, %v7812
      %v7814 = vrot.slane %v7712, 5
      %v7815 = vrot.slane %v7814, 4
      %v7816 = vrot.slane %v6735, 5
      %v7817 = vsel %vm2096, %v7815, %v7816
      %v7818 = vrot.slane %v7816, 4
      %v7819 = vrot.slane %v6758, 5
      %v7820 = vsel %vm2096, %v7818, %v7819
      %v7821 = vrot.slane %v7713, 5
      %v7822 = vrot.slane %v7821, 4
      %v7823 = vrot.slane %v6737, 5
      %v7824 = vsel %vm2096, %v7822, %v7823
      %v7825 = vrot.slane %v7823, 4
      %v7826 = vrot.slane %v6759, 5
      %v7827 = vsel %vm2096, %v7825, %v7826
      %v7828 = vrot.slane %v7714, 5
      %v7829 = vrot.slane %v7828, 4
      %v7830 = vrot.slane %v6739, 5
      %v7831 = vsel %vm2096, %v7829, %v7830
      %v7832 = vrot.slane %v7830, 4
      %v7833 = vrot.slane %v6760, 5
      %v7834 = vsel %vm2096, %v7832, %v7833
      %v7835 = vrot.slane %v7715, 5
      %v7836 = vrot.slane %v7835, 4
      %v7837 = vrot.slane %v6741, 5
      %v7838 = vsel %vm2096, %v7836, %v7837
      %v7839 = vrot.slane %v7837, 4
      %v7840 = vrot.slane %v6761, 5
      %v7841 = vsel %vm2096, %v7839, %v7840
      %v7842 = vrot.slane %v7716, 5
      %v7843 = vrot.slane %v7842, 4
      %v7844 = vrot.slane %v6743, 5
      %v7845 = vsel %vm2096, %v7843, %v7844
      %v7846 = vrot.slane %v7844, 4
      %v7847 = vrot.slane %v6762, 5
      %v7848 = vsel %vm2096, %v7846, %v7847
      %v7849 = vrot.slane %v7717, 5
      %v7850 = vrot.slane %v7849, 4
      %v7851 = vrot.slane %v6745, 5
      %v7852 = vsel %vm2096, %v7850, %v7851
      %v7853 = vrot.slane %v7851, 4
      %v7854 = vrot.slane %v6763, 5
      %v7855 = vsel %vm2096, %v7853, %v7854
      %v7856 = vrot.slane %v7718, 5
      %v7857 = vrot.slane %v7856, 4
      %v7858 = vrot.slane %v6747, 5
      %v7859 = vsel %vm2096, %v7857, %v7858
      %v7860 = vrot.slane %v7858, 4
      %v7861 = vrot.slane %v6764, 5
      %v7862 = vsel %vm2096, %v7860, %v7861
      %s7863 = scalar_lea.vmem %s2, 4
      %v7864 = vld [vmem:[%s7863] sm:$0x3]
      %v7865 = vunpack.c.l.b16 %v7754
      %v7866 = vunpack.c.l.b16 %v7757
      %v7867 = vunpack.c.l.b16 %v7761
      %v7868 = vunpack.c.l.b16 %v7764
      %v7869 = vunpack.c.l.b16 %v7768
      %v7870 = vunpack.c.l.b16 %v7771
      %v7871 = vunpack.c.l.b16 %v7775
      %v7872 = vunpack.c.l.b16 %v7778
      %v7873 = vunpack.c.l.b16 %v7782
      %v7874 = vunpack.c.l.b16 %v7785
      %v7875 = vunpack.c.l.b16 %v7789
      %v7876 = vunpack.c.l.b16 %v7792
      %v7877 = vunpack.c.l.b16 %v7796
      %v7878 = vunpack.c.l.b16 %v7799
      %v7879 = vunpack.c.l.b16 %v7803
      %v7880 = vunpack.c.l.b16 %v7806
      %v7881 = vunpack.c.l.b16 %v7810
      %v7882 = vunpack.c.l.b16 %v7813
      %v7883 = vunpack.c.l.b16 %v7817
      %v7884 = vunpack.c.l.b16 %v7820
      %v7885 = vunpack.c.l.b16 %v7824
      %v7886 = vunpack.c.l.b16 %v7827
      %v7887 = vunpack.c.l.b16 %v7831
      %v7888 = vunpack.c.l.b16 %v7834
      %v7889 = vunpack.c.l.b16 %v7838
      %v7890 = vunpack.c.l.b16 %v7841
      %v7891 = vunpack.c.l.b16 %v7845
      %v7892 = vunpack.c.l.b16 %v7848
      %v7893 = vunpack.c.l.b16 %v7852
      %v7894 = vunpack.c.l.b16 %v7855
      %v7895 = vunpack.c.l.b16 %v7859
      %v7896 = vunpack.c.l.b16 %v7862
      %v7897 = vpack.c.b16 %v7866, %v7865
      %v7898 = vpack.c.b16 %v7868, %v7867
      %v7899 = vpack.c.b16 %v7870, %v7869
      %v7900 = vpack.c.b16 %v7872, %v7871
      %v7901 = vpack.c.b16 %v7874, %v7873
      %v7902 = vpack.c.b16 %v7876, %v7875
      %v7903 = vpack.c.b16 %v7878, %v7877
      %v7904 = vpack.c.b16 %v7880, %v7879
      %v7905 = vpack.c.b16 %v7882, %v7881
      %v7906 = vpack.c.b16 %v7884, %v7883
      %v7907 = vpack.c.b16 %v7886, %v7885
      %v7908 = vpack.c.b16 %v7888, %v7887
      %v7909 = vpack.c.b16 %v7890, %v7889
      %v7910 = vpack.c.b16 %v7892, %v7891
      %v7911 = vpack.c.b16 %v7894, %v7893
      %v7912 = vpack.c.b16 %v7896, %v7895
      %v7914 = vsel %vm1540, %v7897, 0
      %v7917 = vsel %vm1540, %v7898, 0
      %v7920 = vsel %vm1540, %v7899, 0
      %v7923 = vsel %vm1540, %v7900, 0
      %v7926 = vsel %vm1540, %v7901, 0
      %v7929 = vsel %vm1540, %v7902, 0
      %v7932 = vsel %vm1540, %v7903, 0
      %v7935 = vsel %vm1540, %v7904, 0
      %v7938 = vsel %vm1540, %v7905, 0
      %v7941 = vsel %vm1540, %v7906, 0
      %v7944 = vsel %vm1540, %v7907, 0
      %v7947 = vsel %vm1540, %v7908, 0
      %v7950 = vsel %vm1540, %v7909, 0
      %v7953 = vsel %vm1540, %v7910, 0
      %v7956 = vsel %vm1540, %v7911, 0
      %v7959 = vsel %vm1540, %v7912, 0
      %v7962 = vsel %vm1589, %v7864, 0
      %7964 = vmatprep.subr.bf16.mxu0 0
      %7965 = vmatpush1.bf16.msra.mxu0 %v7962
      %7966 = vmatprep.subr.bf16.mxu0 0
      %7967 = vmatpush1.bf16.msra.mxu0 0
      %7968 = vmatprep.subr.bf16.mxu0 0
      %7969 = vmatpush1.bf16.msra.mxu0 0
      %7970 = vmatprep.subr.bf16.mxu0 0
      %7971 = vmatpush1.bf16.msra.mxu0 0
      %7972 = vmatprep.subr.bf16.mxu0 0
      %7973 = vmatpush1.bf16.msra.mxu0 0
      %7974 = vmatprep.subr.bf16.mxu0 0
      %7975 = vmatpush1.bf16.msra.mxu0 0
      %7976 = vmatprep.subr.bf16.mxu0 0
      %7977 = vmatpush1.bf16.msra.mxu0 0
      %7978 = vmatprep.subr.bf16.mxu0 0
      %7979 = vmatpush1.bf16.msra.mxu0 0
      %7980 = vmatprep.subr.bf16.mxu0 0
      %7981 = vmatpush1.bf16.msra.mxu0 0
      %7982 = vmatprep.subr.bf16.mxu0 0
      %7983 = vmatpush1.bf16.msra.mxu0 0
      %7984 = vmatprep.subr.bf16.mxu0 0
      %7985 = vmatpush1.bf16.msra.mxu0 0
      %7986 = vmatprep.subr.bf16.mxu0 0
      %7987 = vmatpush1.bf16.msra.mxu0 0
      %7988 = vmatprep.subr.bf16.mxu0 0
      %7989 = vmatpush1.bf16.msra.mxu0 0
      %7990 = vmatprep.subr.bf16.mxu0 0
      %7991 = vmatpush1.bf16.msra.mxu0 0
      %7992 = vmatprep.subr.bf16.mxu0 0
      %7993 = vmatpush1.bf16.msra.mxu0 0
      %7994 = vmatprep.subr.bf16.mxu0 0
      %7995 = vmatpush1.bf16.msra.mxu0 0
      %7996 = vmatprep.mubr.bf16.mxu0 0
      %7997 = vmatmul.mubr.bf16.gmra.mrb[0].mxu0 %v7914
      %v7998 = vpop.f32.mrb[0].mxu0
      %v7999 = vadd.f32 0.0, %v7998
      %v8000 = vpop.f32.mrb[0].mxu0
      %v8001 = vpop.f32.mrb[0].mxu0
      %v8002 = vadd.f32 0.0, %v8001
      %v8003 = vpop.f32.mrb[0].mxu0
      %8004 = vmatprep.mubr.bf16.mxu0 0
      %8005 = vmatmul.mubr.bf16.gmra.mrb[0].mxu0 %v7917
      %v8006 = vpop.f32.mrb[0].mxu0
      %v8007 = vadd.f32 0.0, %v8006
      %v8008 = vpop.f32.mrb[0].mxu0
      %v8009 = vpop.f32.mrb[0].mxu0
      %v8010 = vadd.f32 0.0, %v8009
      %v8011 = vpop.f32.mrb[0].mxu0
      %8012 = vmatprep.mubr.bf16.mxu0 0
      %8013 = vmatmul.mubr.bf16.gmra.mrb[0].mxu0 %v7920
      %v8014 = vpop.f32.mrb[0].mxu0
      %v8015 = vadd.f32 0.0, %v8014
      %v8016 = vpop.f32.mrb[0].mxu0
      %v8017 = vpop.f32.mrb[0].mxu0
      %v8018 = vadd.f32 0.0, %v8017
      %v8019 = vpop.f32.mrb[0].mxu0
      %8020 = vmatprep.mubr.bf16.mxu0 0
      %8021 = vmatmul.mubr.bf16.gmra.mrb[0].mxu0 %v7923
      %v8022 = vpop.f32.mrb[0].mxu0
      %v8023 = vadd.f32 0.0, %v8022
      %v8024 = vpop.f32.mrb[0].mxu0
      %v8025 = vpop.f32.mrb[0].mxu0
      %v8026 = vadd.f32 0.0, %v8025
      %v8027 = vpop.f32.mrb[0].mxu0
      %8028 = vmatprep.mubr.bf16.mxu0 0
      %8029 = vmatmul.mubr.bf16.gmra.mrb[0].mxu0 %v7926
      %v8030 = vpop.f32.mrb[0].mxu0
      %v8031 = vadd.f32 0.0, %v8030
      %v8032 = vpop.f32.mrb[0].mxu0
      %v8033 = vpop.f32.mrb[0].mxu0
      %v8034 = vadd.f32 0.0, %v8033
      %v8035 = vpop.f32.mrb[0].mxu0
      %8036 = vmatprep.mubr.bf16.mxu0 0
      %8037 = vmatmul.mubr.bf16.gmra.mrb[0].mxu0 %v7929
      %v8038 = vpop.f32.mrb[0].mxu0
      %v8039 = vadd.f32 0.0, %v8038
      %v8040 = vpop.f32.mrb[0].mxu0
      %v8041 = vpop.f32.mrb[0].mxu0
      %v8042 = vadd.f32 0.0, %v8041
      %v8043 = vpop.f32.mrb[0].mxu0
      %8044 = vmatprep.mubr.bf16.mxu0 0
      %8045 = vmatmul.mubr.bf16.gmra.mrb[0].mxu0 %v7932
      %v8046 = vpop.f32.mrb[0].mxu0
      %v8047 = vadd.f32 0.0, %v8046
      %v8048 = vpop.f32.mrb[0].mxu0
      %v8049 = vpop.f32.mrb[0].mxu0
      %v8050 = vadd.f32 0.0, %v8049
      %v8051 = vpop.f32.mrb[0].mxu0
      %8052 = vmatprep.mubr.bf16.mxu0 0
      %8053 = vmatmul.mubr.bf16.gmra.mrb[0].mxu0 %v7935
      %v8054 = vpop.f32.mrb[0].mxu0
      %v8055 = vadd.f32 0.0, %v8054
      %v8056 = vpop.f32.mrb[0].mxu0
      %v8057 = vpop.f32.mrb[0].mxu0
      %v8058 = vadd.f32 0.0, %v8057
      %v8059 = vpop.f32.mrb[0].mxu0
      %8060 = vmatprep.mubr.bf16.mxu0 0
      %8061 = vmatmul.mubr.bf16.gmra.mrb[0].mxu0 %v7938
      %v8062 = vpop.f32.mrb[0].mxu0
      %v8063 = vadd.f32 0.0, %v8062
      %v8064 = vpop.f32.mrb[0].mxu0
      %v8065 = vpop.f32.mrb[0].mxu0
      %v8066 = vadd.f32 0.0, %v8065
      %v8067 = vpop.f32.mrb[0].mxu0
      %8068 = vmatprep.mubr.bf16.mxu0 0
      %8069 = vmatmul.mubr.bf16.gmra.mrb[0].mxu0 %v7941
      %v8070 = vpop.f32.mrb[0].mxu0
      %v8071 = vadd.f32 0.0, %v8070
      %v8072 = vpop.f32.mrb[0].mxu0
      %v8073 = vpop.f32.mrb[0].mxu0
      %v8074 = vadd.f32 0.0, %v8073
      %v8075 = vpop.f32.mrb[0].mxu0
      %8076 = vmatprep.mubr.bf16.mxu0 0
      %8077 = vmatmul.mubr.bf16.gmra.mrb[0].mxu0 %v7944
      %v8078 = vpop.f32.mrb[0].mxu0
      %v8079 = vadd.f32 0.0, %v8078
      %v8080 = vpop.f32.mrb[0].mxu0
      %v8081 = vpop.f32.mrb[0].mxu0
      %v8082 = vadd.f32 0.0, %v8081
      %v8083 = vpop.f32.mrb[0].mxu0
      %8084 = vmatprep.mubr.bf16.mxu0 0
      %8085 = vmatmul.mubr.bf16.gmra.mrb[0].mxu0 %v7947
      %v8086 = vpop.f32.mrb[0].mxu0
      %v8087 = vadd.f32 0.0, %v8086
      %v8088 = vpop.f32.mrb[0].mxu0
      %v8089 = vpop.f32.mrb[0].mxu0
      %v8090 = vadd.f32 0.0, %v8089
      %v8091 = vpop.f32.mrb[0].mxu0
      %8092 = vmatprep.mubr.bf16.mxu0 0
      %8093 = vmatmul.mubr.bf16.gmra.mrb[0].mxu0 %v7950
      %v8094 = vpop.f32.mrb[0].mxu0
      %v8095 = vadd.f32 0.0, %v8094
      %v8096 = vpop.f32.mrb[0].mxu0
      %v8097 = vpop.f32.mrb[0].mxu0
      %v8098 = vadd.f32 0.0, %v8097
      %v8099 = vpop.f32.mrb[0].mxu0
      %8100 = vmatprep.mubr.bf16.mxu0 0
      %8101 = vmatmul.mubr.bf16.gmra.mrb[0].mxu0 %v7953
      %v8102 = vpop.f32.mrb[0].mxu0
      %v8103 = vadd.f32 0.0, %v8102
      %v8104 = vpop.f32.mrb[0].mxu0
      %v8105 = vpop.f32.mrb[0].mxu0
      %v8106 = vadd.f32 0.0, %v8105
      %v8107 = vpop.f32.mrb[0].mxu0
      %8108 = vmatprep.mubr.bf16.mxu0 0
      %8109 = vmatmul.mubr.bf16.gmra.mrb[0].mxu0 %v7956
      %v8110 = vpop.f32.mrb[0].mxu0
      %v8111 = vadd.f32 0.0, %v8110
      %v8112 = vpop.f32.mrb[0].mxu0
      %v8113 = vpop.f32.mrb[0].mxu0
      %v8114 = vadd.f32 0.0, %v8113
      %v8115 = vpop.f32.mrb[0].mxu0
      %8116 = vmatprep.mubr.bf16.mxu0 0
      %8117 = vmatmul.mubr.bf16.gmra.mrb[0].mxu0 %v7959
      %v8118 = vpop.f32.mrb[0].mxu0
      %v8119 = vadd.f32 0.0, %v8118
      %v8120 = vpop.f32.mrb[0].mxu0
      %v8121 = vpop.f32.mrb[0].mxu0
      %v8122 = vadd.f32 0.0, %v8121
      %v8123 = vpop.f32.mrb[0].mxu0
      %8124 = vdwg.mxu0
      %v8125 = vadd.f32 %v7577, %v7999
      %v8126 = vadd.f32 %v7580, %v8002
      %v8127 = vadd.f32 %v7585, %v8007
      %v8128 = vadd.f32 %v7588, %v8010
      %v8129 = vadd.f32 %v7593, %v8015
      %v8130 = vadd.f32 %v7596, %v8018
      %v8131 = vadd.f32 %v7601, %v8023
      %v8132 = vadd.f32 %v7604, %v8026
      %v8133 = vadd.f32 %v7609, %v8031
      %v8134 = vadd.f32 %v7612, %v8034
      %v8135 = vadd.f32 %v7617, %v8039
      %v8136 = vadd.f32 %v7620, %v8042
      %v8137 = vadd.f32 %v7625, %v8047
      %v8138 = vadd.f32 %v7628, %v8050
      %v8139 = vadd.f32 %v7633, %v8055
      %v8140 = vadd.f32 %v7636, %v8058
      %v8141 = vadd.f32 %v7641, %v8063
      %v8142 = vadd.f32 %v7644, %v8066
      %v8143 = vadd.f32 %v7649, %v8071
      %v8144 = vadd.f32 %v7652, %v8074
      %v8145 = vadd.f32 %v7657, %v8079
      %v8146 = vadd.f32 %v7660, %v8082
      %v8147 = vadd.f32 %v7665, %v8087
      %v8148 = vadd.f32 %v7668, %v8090
      %v8149 = vadd.f32 %v7673, %v8095
      %v8150 = vadd.f32 %v7676, %v8098
      %v8151 = vadd.f32 %v7681, %v8103
      %v8152 = vadd.f32 %v7684, %v8106
      %v8153 = vadd.f32 %v7689, %v8111
      %v8154 = vadd.f32 %v7692, %v8114
      %v8155 = vadd.f32 %v7697, %v8119
      %v8156 = vadd.f32 %v7700, %v8122
      %v8157 = vld [vmem:[%s623] sm:$0xf]
      %v8158 = vld [vmem:[%s623 + $0x4] sm:$0xf]
      %v8159 = vld [vmem:[%s623 + $0xc] sm:$0xf]
      %v8160 = vld [vmem:[%s623 + $0x10] sm:$0xf]
      %v8161 = vld [vmem:[%s623 + $0x18] sm:$0xf]
      %v8162 = vld [vmem:[%s623 + $0x1c] sm:$0xf]
      %v8163 = vld [vmem:[%s623 + $0x24] sm:$0xf]
      %v8164 = vld [vmem:[%s623 + $0x28] sm:$0xf]
      %v8165 = vld [vmem:[%s623 + $0x30] sm:$0xf]
      %v8166 = vld [vmem:[%s623 + $0x34] sm:$0xf]
      %v8167 = vld [vmem:[%s623 + $0x3c] sm:$0xf]
      %v8168 = vld [vmem:[%s623 + $0x40] sm:$0xf]
      %v8169 = vld [vmem:[%s623 + $0x48] sm:$0xf]
      %v8170 = vld [vmem:[%s623 + $0x4c] sm:$0xf]
      %v8171 = vld [vmem:[%s623 + $0x54] sm:$0xf]
      %v8172 = vld [vmem:[%s623 + $0x58] sm:$0xf]
      %v8173 = vld [vmem:[%s623 + $0x60] sm:$0xf]
      %v8174 = vld [vmem:[%s623 + $0x64] sm:$0xf]
      %v8175 = vld [vmem:[%s623 + $0x6c] sm:$0xf]
      %v8176 = vld [vmem:[%s623 + $0x70] sm:$0xf]
      %v8177 = vld [vmem:[%s623 + $0x78] sm:$0xf]
      %v8178 = vld [vmem:[%s623 + $0x7c] sm:$0xf]
      %v8179 = vld [vmem:[%s623 + $0x84] sm:$0xf]
      %v8180 = vld [vmem:[%s623 + $0x88] sm:$0xf]
      %v8181 = vld [vmem:[%s623 + $0x90] sm:$0xf]
      %v8182 = vld [vmem:[%s623 + $0x94] sm:$0xf]
      %v8183 = vld [vmem:[%s623 + $0x9c] sm:$0xf]
      %v8184 = vld [vmem:[%s623 + $0xa0] sm:$0xf]
      %v8185 = vld [vmem:[%s623 + $0xa8] sm:$0xf]
      %v8186 = vld [vmem:[%s623 + $0xac] sm:$0xf]
      %v8187 = vld [vmem:[%s623 + $0xb4] sm:$0xf]
      %v8188 = vld [vmem:[%s623 + $0xb8] sm:$0xf]
      %s8189 = scalar_lea.vmem %s2, 6
      %v8190 = vld [vmem:[%s8189] sm:$0x3]
      %v8223 = vunpack.c.l.b16 %v8157
      %v8224 = vunpack.c.l.b16 %v8158
      %v8225 = vunpack.c.l.b16 %v8159
      %v8226 = vunpack.c.l.b16 %v8160
      %v8227 = vunpack.c.l.b16 %v8161
      %v8228 = vunpack.c.l.b16 %v8162
      %v8229 = vunpack.c.l.b16 %v8163
      %v8230 = vunpack.c.l.b16 %v8164
      %v8231 = vunpack.c.l.b16 %v8165
      %v8232 = vunpack.c.l.b16 %v8166
      %v8233 = vunpack.c.l.b16 %v8167
      %v8234 = vunpack.c.l.b16 %v8168
      %v8235 = vunpack.c.l.b16 %v8169
      %v8236 = vunpack.c.l.b16 %v8170
      %v8237 = vunpack.c.l.b16 %v8171
      %v8238 = vunpack.c.l.b16 %v8172
      %v8239 = vunpack.c.l.b16 %v8173
      %v8240 = vunpack.c.l.b16 %v8174
      %v8241 = vunpack.c.l.b16 %v8175
      %v8242 = vunpack.c.l.b16 %v8176
      %v8243 = vunpack.c.l.b16 %v8177
      %v8244 = vunpack.c.l.b16 %v8178
      %v8245 = vunpack.c.l.b16 %v8179
      %v8246 = vunpack.c.l.b16 %v8180
      %v8247 = vunpack.c.l.b16 %v8181
      %v8248 = vunpack.c.l.b16 %v8182
      %v8249 = vunpack.c.l.b16 %v8183
      %v8250 = vunpack.c.l.b16 %v8184
      %v8251 = vunpack.c.l.b16 %v8185
      %v8252 = vunpack.c.l.b16 %v8186
      %v8253 = vunpack.c.l.b16 %v8187
      %v8254 = vunpack.c.l.b16 %v8188
      %v8255 = vpack.c.b16 %v8224, %v8223
      %v8256 = vpack.c.b16 %v8226, %v8225
      %v8257 = vpack.c.b16 %v8228, %v8227
      %v8258 = vpack.c.b16 %v8230, %v8229
      %v8259 = vpack.c.b16 %v8232, %v8231
      %v8260 = vpack.c.b16 %v8234, %v8233
      %v8261 = vpack.c.b16 %v8236, %v8235
      %v8262 = vpack.c.b16 %v8238, %v8237
      %v8263 = vpack.c.b16 %v8240, %v8239
      %v8264 = vpack.c.b16 %v8242, %v8241
      %v8265 = vpack.c.b16 %v8244, %v8243
      %v8266 = vpack.c.b16 %v8246, %v8245
      %v8267 = vpack.c.b16 %v8248, %v8247
      %v8268 = vpack.c.b16 %v8250, %v8249
      %v8269 = vpack.c.b16 %v8252, %v8251
      %v8270 = vpack.c.b16 %v8254, %v8253
      %v8272 = vsel %vm1540, %v8255, 0
      %v8275 = vsel %vm1540, %v8256, 0
      %v8278 = vsel %vm1540, %v8257, 0
      %v8281 = vsel %vm1540, %v8258, 0
      %v8284 = vsel %vm1540, %v8259, 0
      %v8287 = vsel %vm1540, %v8260, 0
      %v8290 = vsel %vm1540, %v8261, 0
      %v8293 = vsel %vm1540, %v8262, 0
      %v8296 = vsel %vm1540, %v8263, 0
      %v8299 = vsel %vm1540, %v8264, 0
      %v8302 = vsel %vm1540, %v8265, 0
      %v8305 = vsel %vm1540, %v8266, 0
      %v8308 = vsel %vm1540, %v8267, 0
      %v8311 = vsel %vm1540, %v8268, 0
      %v8314 = vsel %vm1540, %v8269, 0
      %v8317 = vsel %vm1540, %v8270, 0
      %v8320 = vsel %vm1589, %v8190, 0
      %8322 = vmatprep.subr.bf16.mxu0 0
      %8323 = vmatpush1.bf16.msra.mxu0 %v8320
      %8324 = vmatprep.subr.bf16.mxu0 0
      %8325 = vmatpush1.bf16.msra.mxu0 0
      %8326 = vmatprep.subr.bf16.mxu0 0
      %8327 = vmatpush1.bf16.msra.mxu0 0
      %8328 = vmatprep.subr.bf16.mxu0 0
      %8329 = vmatpush1.bf16.msra.mxu0 0
      %8330 = vmatprep.subr.bf16.mxu0 0
      %8331 = vmatpush1.bf16.msra.mxu0 0
      %8332 = vmatprep.subr.bf16.mxu0 0
      %8333 = vmatpush1.bf16.msra.mxu0 0
      %8334 = vmatprep.subr.bf16.mxu0 0
      %8335 = vmatpush1.bf16.msra.mxu0 0
      %8336 = vmatprep.subr.bf16.mxu0 0
      %8337 = vmatpush1.bf16.msra.mxu0 0
      %8338 = vmatprep.subr.bf16.mxu0 0
      %8339 = vmatpush1.bf16.msra.mxu0 0
      %8340 = vmatprep.subr.bf16.mxu0 0
      %8341 = vmatpush1.bf16.msra.mxu0 0
      %8342 = vmatprep.subr.bf16.mxu0 0
      %8343 = vmatpush1.bf16.msra.mxu0 0
      %8344 = vmatprep.subr.bf16.mxu0 0
      %8345 = vmatpush1.bf16.msra.mxu0 0
      %8346 = vmatprep.subr.bf16.mxu0 0
      %8347 = vmatpush1.bf16.msra.mxu0 0
      %8348 = vmatprep.subr.bf16.mxu0 0
      %8349 = vmatpush1.bf16.msra.mxu0 0
      %8350 = vmatprep.subr.bf16.mxu0 0
      %8351 = vmatpush1.bf16.msra.mxu0 0
      %8352 = vmatprep.subr.bf16.mxu0 0
      %8353 = vmatpush1.bf16.msra.mxu0 0
      %8354 = vmatprep.mubr.bf16.mxu0 0
      %8355 = vmatmul.mubr.bf16.gmra.mrb[0].mxu0 %v8272
      %v8356 = vpop.f32.mrb[0].mxu0
      %v8357 = vadd.f32 0.0, %v8356
      %v8358 = vpop.f32.mrb[0].mxu0
      %v8359 = vpop.f32.mrb[0].mxu0
      %v8360 = vadd.f32 0.0, %v8359
      %v8361 = vpop.f32.mrb[0].mxu0
      %8362 = vmatprep.mubr.bf16.mxu0 0
      %8363 = vmatmul.mubr.bf16.gmra.mrb[0].mxu0 %v8275
      %v8364 = vpop.f32.mrb[0].mxu0
      %v8365 = vadd.f32 0.0, %v8364
      %v8366 = vpop.f32.mrb[0].mxu0
      %v8367 = vpop.f32.mrb[0].mxu0
      %v8368 = vadd.f32 0.0, %v8367
      %v8369 = vpop.f32.mrb[0].mxu0
      %8370 = vmatprep.mubr.bf16.mxu0 0
      %8371 = vmatmul.mubr.bf16.gmra.mrb[0].mxu0 %v8278
      %v8372 = vpop.f32.mrb[0].mxu0
      %v8373 = vadd.f32 0.0, %v8372
      %v8374 = vpop.f32.mrb[0].mxu0
      %v8375 = vpop.f32.mrb[0].mxu0
      %v8376 = vadd.f32 0.0, %v8375
      %v8377 = vpop.f32.mrb[0].mxu0
      %8378 = vmatprep.mubr.bf16.mxu0 0
      %8379 = vmatmul.mubr.bf16.gmra.mrb[0].mxu0 %v8281
      %v8380 = vpop.f32.mrb[0].mxu0
      %v8381 = vadd.f32 0.0, %v8380
      %v8382 = vpop.f32.mrb[0].mxu0
      %v8383 = vpop.f32.mrb[0].mxu0
      %v8384 = vadd.f32 0.0, %v8383
      %v8385 = vpop.f32.mrb[0].mxu0
      %8386 = vmatprep.mubr.bf16.mxu0 0
      %8387 = vmatmul.mubr.bf16.gmra.mrb[0].mxu0 %v8284
      %v8388 = vpop.f32.mrb[0].mxu0
      %v8389 = vadd.f32 0.0, %v8388
      %v8390 = vpop.f32.mrb[0].mxu0
      %v8391 = vpop.f32.mrb[0].mxu0
      %v8392 = vadd.f32 0.0, %v8391
      %v8393 = vpop.f32.mrb[0].mxu0
      %8394 = vmatprep.mubr.bf16.mxu0 0
      %8395 = vmatmul.mubr.bf16.gmra.mrb[0].mxu0 %v8287
      %v8396 = vpop.f32.mrb[0].mxu0
      %v8397 = vadd.f32 0.0, %v8396
      %v8398 = vpop.f32.mrb[0].mxu0
      %v8399 = vpop.f32.mrb[0].mxu0
      %v8400 = vadd.f32 0.0, %v8399
      %v8401 = vpop.f32.mrb[0].mxu0
      %8402 = vmatprep.mubr.bf16.mxu0 0
      %8403 = vmatmul.mubr.bf16.gmra.mrb[0].mxu0 %v8290
      %v8404 = vpop.f32.mrb[0].mxu0
      %v8405 = vadd.f32 0.0, %v8404
      %v8406 = vpop.f32.mrb[0].mxu0
      %v8407 = vpop.f32.mrb[0].mxu0
      %v8408 = vadd.f32 0.0, %v8407
      %v8409 = vpop.f32.mrb[0].mxu0
      %8410 = vmatprep.mubr.bf16.mxu0 0
      %8411 = vmatmul.mubr.bf16.gmra.mrb[0].mxu0 %v8293
      %v8412 = vpop.f32.mrb[0].mxu0
      %v8413 = vadd.f32 0.0, %v8412
      %v8414 = vpop.f32.mrb[0].mxu0
      %v8415 = vpop.f32.mrb[0].mxu0
      %v8416 = vadd.f32 0.0, %v8415
      %v8417 = vpop.f32.mrb[0].mxu0
      %8418 = vmatprep.mubr.bf16.mxu0 0
      %8419 = vmatmul.mubr.bf16.gmra.mrb[0].mxu0 %v8296
      %v8420 = vpop.f32.mrb[0].mxu0
      %v8421 = vadd.f32 0.0, %v8420
      %v8422 = vpop.f32.mrb[0].mxu0
      %v8423 = vpop.f32.mrb[0].mxu0
      %v8424 = vadd.f32 0.0, %v8423
      %v8425 = vpop.f32.mrb[0].mxu0
      %8426 = vmatprep.mubr.bf16.mxu0 0
      %8427 = vmatmul.mubr.bf16.gmra.mrb[0].mxu0 %v8299
      %v8428 = vpop.f32.mrb[0].mxu0
      %v8429 = vadd.f32 0.0, %v8428
      %v8430 = vpop.f32.mrb[0].mxu0
      %v8431 = vpop.f32.mrb[0].mxu0
      %v8432 = vadd.f32 0.0, %v8431
      %v8433 = vpop.f32.mrb[0].mxu0
      %8434 = vmatprep.mubr.bf16.mxu0 0
      %8435 = vmatmul.mubr.bf16.gmra.mrb[0].mxu0 %v8302
      %v8436 = vpop.f32.mrb[0].mxu0
      %v8437 = vadd.f32 0.0, %v8436
      %v8438 = vpop.f32.mrb[0].mxu0
      %v8439 = vpop.f32.mrb[0].mxu0
      %v8440 = vadd.f32 0.0, %v8439
      %v8441 = vpop.f32.mrb[0].mxu0
      %8442 = vmatprep.mubr.bf16.mxu0 0
      %8443 = vmatmul.mubr.bf16.gmra.mrb[0].mxu0 %v8305
      %v8444 = vpop.f32.mrb[0].mxu0
      %v8445 = vadd.f32 0.0, %v8444
      %v8446 = vpop.f32.mrb[0].mxu0
      %v8447 = vpop.f32.mrb[0].mxu0
      %v8448 = vadd.f32 0.0, %v8447
      %v8449 = vpop.f32.mrb[0].mxu0
      %8450 = vmatprep.mubr.bf16.mxu0 0
      %8451 = vmatmul.mubr.bf16.gmra.mrb[0].mxu0 %v8308
      %v8452 = vpop.f32.mrb[0].mxu0
      %v8453 = vadd.f32 0.0, %v8452
      %v8454 = vpop.f32.mrb[0].mxu0
      %v8455 = vpop.f32.mrb[0].mxu0
      %v8456 = vadd.f32 0.0, %v8455
      %v8457 = vpop.f32.mrb[0].mxu0
      %8458 = vmatprep.mubr.bf16.mxu0 0
      %8459 = vmatmul.mubr.bf16.gmra.mrb[0].mxu0 %v8311
      %v8460 = vpop.f32.mrb[0].mxu0
      %v8461 = vadd.f32 0.0, %v8460
      %v8462 = vpop.f32.mrb[0].mxu0
      %v8463 = vpop.f32.mrb[0].mxu0
      %v8464 = vadd.f32 0.0, %v8463
      %v8465 = vpop.f32.mrb[0].mxu0
      %8466 = vmatprep.mubr.bf16.mxu0 0
      %8467 = vmatmul.mubr.bf16.gmra.mrb[0].mxu0 %v8314
      %v8468 = vpop.f32.mrb[0].mxu0
      %v8469 = vadd.f32 0.0, %v8468
      %v8470 = vpop.f32.mrb[0].mxu0
      %v8471 = vpop.f32.mrb[0].mxu0
      %v8472 = vadd.f32 0.0, %v8471
      %v8473 = vpop.f32.mrb[0].mxu0
      %8474 = vmatprep.mubr.bf16.mxu0 0
      %8475 = vmatmul.mubr.bf16.gmra.mrb[0].mxu0 %v8317
      %v8476 = vpop.f32.mrb[0].mxu0
      %v8477 = vadd.f32 0.0, %v8476
      %v8478 = vpop.f32.mrb[0].mxu0
      %v8479 = vpop.f32.mrb[0].mxu0
      %v8480 = vadd.f32 0.0, %v8479
      %v8481 = vpop.f32.mrb[0].mxu0
      %8482 = vdwg.mxu0
      %v8483 = vadd.f32 %v8125, %v8357
      %v8484 = vadd.f32 %v8126, %v8360
      %v8485 = vadd.f32 %v8127, %v8365
      %v8486 = vadd.f32 %v8128, %v8368
      %v8487 = vadd.f32 %v8129, %v8373
      %v8488 = vadd.f32 %v8130, %v8376
      %v8489 = vadd.f32 %v8131, %v8381
      %v8490 = vadd.f32 %v8132, %v8384
      %v8491 = vadd.f32 %v8133, %v8389
      %v8492 = vadd.f32 %v8134, %v8392
      %v8493 = vadd.f32 %v8135, %v8397
      %v8494 = vadd.f32 %v8136, %v8400
      %v8495 = vadd.f32 %v8137, %v8405
      %v8496 = vadd.f32 %v8138, %v8408
      %v8497 = vadd.f32 %v8139, %v8413
      %v8498 = vadd.f32 %v8140, %v8416
      %v8499 = vadd.f32 %v8141, %v8421
      %v8500 = vadd.f32 %v8142, %v8424
      %v8501 = vadd.f32 %v8143, %v8429
      %v8502 = vadd.f32 %v8144, %v8432
      %v8503 = vadd.f32 %v8145, %v8437
      %v8504 = vadd.f32 %v8146, %v8440
      %v8505 = vadd.f32 %v8147, %v8445
      %v8506 = vadd.f32 %v8148, %v8448
      %v8507 = vadd.f32 %v8149, %v8453
      %v8508 = vadd.f32 %v8150, %v8456
      %v8509 = vadd.f32 %v8151, %v8461
      %v8510 = vadd.f32 %v8152, %v8464
      %v8511 = vadd.f32 %v8153, %v8469
      %v8512 = vadd.f32 %v8154, %v8472
      %v8513 = vadd.f32 %v8155, %v8477
      %v8514 = vadd.f32 %v8156, %v8480
      %v8515 = vld [vmem:[%s623] sm:$0xf]
      %v8516 = vld [vmem:[%s623 + $0x4] sm:$0xf]
      %v8517 = vld [vmem:[%s623 + $0x8] sm:$0x1]
      %v8518 = vld [vmem:[%s623 + $0xc] sm:$0xf]
      %v8519 = vld [vmem:[%s623 + $0x10] sm:$0xf]
      %v8520 = vld [vmem:[%s623 + $0x14] sm:$0x1]
      %v8521 = vld [vmem:[%s623 + $0x18] sm:$0xf]
      %v8522 = vld [vmem:[%s623 + $0x1c] sm:$0xf]
      %v8523 = vld [vmem:[%s623 + $0x20] sm:$0x1]
      %v8524 = vld [vmem:[%s623 + $0x24] sm:$0xf]
      %v8525 = vld [vmem:[%s623 + $0x28] sm:$0xf]
      %v8526 = vld [vmem:[%s623 + $0x2c] sm:$0x1]
      %v8527 = vld [vmem:[%s623 + $0x30] sm:$0xf]
      %v8528 = vld [vmem:[%s623 + $0x34] sm:$0xf]
      %v8529 = vld [vmem:[%s623 + $0x38] sm:$0x1]
      %v8530 = vld [vmem:[%s623 + $0x3c] sm:$0xf]
      %v8531 = vld [vmem:[%s623 + $0x40] sm:$0xf]
      %v8532 = vld [vmem:[%s623 + $0x44] sm:$0x1]
      %v8533 = vld [vmem:[%s623 + $0x48] sm:$0xf]
      %v8534 = vld [vmem:[%s623 + $0x4c] sm:$0xf]
      %v8535 = vld [vmem:[%s623 + $0x50] sm:$0x1]
      %v8536 = vld [vmem:[%s623 + $0x54] sm:$0xf]
      %v8537 = vld [vmem:[%s623 + $0x58] sm:$0xf]
      %v8538 = vld [vmem:[%s623 + $0x5c] sm:$0x1]
      %v8539 = vld [vmem:[%s623 + $0x60] sm:$0xf]
      %v8540 = vld [vmem:[%s623 + $0x64] sm:$0xf]
      %v8541 = vld [vmem:[%s623 + $0x68] sm:$0x1]
      %v8542 = vld [vmem:[%s623 + $0x6c] sm:$0xf]
      %v8543 = vld [vmem:[%s623 + $0x70] sm:$0xf]
      %v8544 = vld [vmem:[%s623 + $0x74] sm:$0x1]
      %v8545 = vld [vmem:[%s623 + $0x78] sm:$0xf]
      %v8546 = vld [vmem:[%s623 + $0x7c] sm:$0xf]
      %v8547 = vld [vmem:[%s623 + $0x80] sm:$0x1]
      %v8548 = vld [vmem:[%s623 + $0x84] sm:$0xf]
      %v8549 = vld [vmem:[%s623 + $0x88] sm:$0xf]
      %v8550 = vld [vmem:[%s623 + $0x8c] sm:$0x1]
      %v8551 = vld [vmem:[%s623 + $0x90] sm:$0xf]
      %v8552 = vld [vmem:[%s623 + $0x94] sm:$0xf]
      %v8553 = vld [vmem:[%s623 + $0x98] sm:$0x1]
      %v8554 = vld [vmem:[%s623 + $0x9c] sm:$0xf]
      %v8555 = vld [vmem:[%s623 + $0xa0] sm:$0xf]
      %v8556 = vld [vmem:[%s623 + $0xa4] sm:$0x1]
      %v8557 = vld [vmem:[%s623 + $0xa8] sm:$0xf]
      %v8558 = vld [vmem:[%s623 + $0xac] sm:$0xf]
      %v8559 = vld [vmem:[%s623 + $0xb0] sm:$0x1]
      %v8560 = vld [vmem:[%s623 + $0xb4] sm:$0xf]
      %v8561 = vld [vmem:[%s623 + $0xb8] sm:$0xf]
      %v8562 = vld [vmem:[%s623 + $0xbc] sm:$0x1]
      %v8564 = vshrl.u32 %v8515, 16
      %v8566 = vrot.slane %v8564, 4
      %v8567 = vshll.u32 %v8515, 16
      %v8569 = vrot.slane %v8567, 5
      %v8570 = vor.u32 %v8566, %v8569
      %v8571 = vrot.slane %v8570, 4
      %v8573 = vshll.u32 %v8516, 16
      %v8575 = vrot.slane %v8573, 5
      %v8576 = vsel %vm1105, %v8571, %v8575
      %v8577 = vshrl.u32 %v8516, 16
      %v8579 = vrot.slane %v8577, 4
      %v8580 = vor.u32 %v8579, %v8575
      %v8581 = vrot.slane %v8580, 4
      %v8583 = vshll.u32 %v8517, 16
      %v8585 = vrot.slane %v8583, 5
      %v8586 = vsel %vm1105, %v8581, %v8585
      %v8588 = vshrl.u32 %v8518, 16
      %v8590 = vrot.slane %v8588, 4
      %v8591 = vshll.u32 %v8518, 16
      %v8593 = vrot.slane %v8591, 5
      %v8594 = vor.u32 %v8590, %v8593
      %v8595 = vrot.slane %v8594, 4
      %v8597 = vshll.u32 %v8519, 16
      %v8599 = vrot.slane %v8597, 5
      %v8600 = vsel %vm1105, %v8595, %v8599
      %v8601 = vshrl.u32 %v8519, 16
      %v8603 = vrot.slane %v8601, 4
      %v8604 = vor.u32 %v8603, %v8599
      %v8605 = vrot.slane %v8604, 4
      %v8607 = vshll.u32 %v8520, 16
      %v8609 = vrot.slane %v8607, 5
      %v8610 = vsel %vm1105, %v8605, %v8609
      %v8612 = vshrl.u32 %v8521, 16
      %v8614 = vrot.slane %v8612, 4
      %v8615 = vshll.u32 %v8521, 16
      %v8617 = vrot.slane %v8615, 5
      %v8618 = vor.u32 %v8614, %v8617
      %v8619 = vrot.slane %v8618, 4
      %v8621 = vshll.u32 %v8522, 16
      %v8623 = vrot.slane %v8621, 5
      %v8624 = vsel %vm1105, %v8619, %v8623
      %v8625 = vshrl.u32 %v8522, 16
      %v8627 = vrot.slane %v8625, 4
      %v8628 = vor.u32 %v8627, %v8623
      %v8629 = vrot.slane %v8628, 4
      %v8631 = vshll.u32 %v8523, 16
      %v8633 = vrot.slane %v8631, 5
      %v8634 = vsel %vm1105, %v8629, %v8633
      %v8636 = vshrl.u32 %v8524, 16
      %v8638 = vrot.slane %v8636, 4
      %v8639 = vshll.u32 %v8524, 16
      %v8641 = vrot.slane %v8639, 5
      %v8642 = vor.u32 %v8638, %v8641
      %v8643 = vrot.slane %v8642, 4
      %v8645 = vshll.u32 %v8525, 16
      %v8647 = vrot.slane %v8645, 5
      %v8648 = vsel %vm1105, %v8643, %v8647
      %v8649 = vshrl.u32 %v8525, 16
      %v8651 = vrot.slane %v8649, 4
      %v8652 = vor.u32 %v8651, %v8647
      %v8653 = vrot.slane %v8652, 4
      %v8655 = vshll.u32 %v8526, 16
      %v8657 = vrot.slane %v8655, 5
      %v8658 = vsel %vm1105, %v8653, %v8657
      %v8660 = vshrl.u32 %v8527, 16
      %v8662 = vrot.slane %v8660, 4
      %v8663 = vshll.u32 %v8527, 16
      %v8665 = vrot.slane %v8663, 5
      %v8666 = vor.u32 %v8662, %v8665
      %v8667 = vrot.slane %v8666, 4
      %v8669 = vshll.u32 %v8528, 16
      %v8671 = vrot.slane %v8669, 5
      %v8672 = vsel %vm1105, %v8667, %v8671
      %v8673 = vshrl.u32 %v8528, 16
      %v8675 = vrot.slane %v8673, 4
      %v8676 = vor.u32 %v8675, %v8671
      %v8677 = vrot.slane %v8676, 4
      %v8679 = vshll.u32 %v8529, 16
      %v8681 = vrot.slane %v8679, 5
      %v8682 = vsel %vm1105, %v8677, %v8681
      %v8684 = vshrl.u32 %v8530, 16
      %v8686 = vrot.slane %v8684, 4
      %v8687 = vshll.u32 %v8530, 16
      %v8689 = vrot.slane %v8687, 5
      %v8690 = vor.u32 %v8686, %v8689
      %v8691 = vrot.slane %v8690, 4
      %v8693 = vshll.u32 %v8531, 16
      %v8695 = vrot.slane %v8693, 5
      %v8696 = vsel %vm1105, %v8691, %v8695
      %v8697 = vshrl.u32 %v8531, 16
      %v8699 = vrot.slane %v8697, 4
      %v8700 = vor.u32 %v8699, %v8695
      %v8701 = vrot.slane %v8700, 4
      %v8703 = vshll.u32 %v8532, 16
      %v8705 = vrot.slane %v8703, 5
      %v8706 = vsel %vm1105, %v8701, %v8705
      %v8708 = vshrl.u32 %v8533, 16
      %v8710 = vrot.slane %v8708, 4
      %v8711 = vshll.u32 %v8533, 16
      %v8713 = vrot.slane %v8711, 5
      %v8714 = vor.u32 %v8710, %v8713
      %v8715 = vrot.slane %v8714, 4
      %v8717 = vshll.u32 %v8534, 16
      %v8719 = vrot.slane %v8717, 5
      %v8720 = vsel %vm1105, %v8715, %v8719
      %v8721 = vshrl.u32 %v8534, 16
      %v8723 = vrot.slane %v8721, 4
      %v8724 = vor.u32 %v8723, %v8719
      %v8725 = vrot.slane %v8724, 4
      %v8727 = vshll.u32 %v8535, 16
      %v8729 = vrot.slane %v8727, 5
      %v8730 = vsel %vm1105, %v8725, %v8729
      %v8732 = vshrl.u32 %v8536, 16
      %v8734 = vrot.slane %v8732, 4
      %v8735 = vshll.u32 %v8536, 16
      %v8737 = vrot.slane %v8735, 5
      %v8738 = vor.u32 %v8734, %v8737
      %v8739 = vrot.slane %v8738, 4
      %v8741 = vshll.u32 %v8537, 16
      %v8743 = vrot.slane %v8741, 5
      %v8744 = vsel %vm1105, %v8739, %v8743
      %v8745 = vshrl.u32 %v8537, 16
      %v8747 = vrot.slane %v8745, 4
      %v8748 = vor.u32 %v8747, %v8743
      %v8749 = vrot.slane %v8748, 4
      %v8751 = vshll.u32 %v8538, 16
      %v8753 = vrot.slane %v8751, 5
      %v8754 = vsel %vm1105, %v8749, %v8753
      %v8756 = vshrl.u32 %v8539, 16
      %v8758 = vrot.slane %v8756, 4
      %v8759 = vshll.u32 %v8539, 16
      %v8761 = vrot.slane %v8759, 5
      %v8762 = vor.u32 %v8758, %v8761
      %v8763 = vrot.slane %v8762, 4
      %v8765 = vshll.u32 %v8540, 16
      %v8767 = vrot.slane %v8765, 5
      %v8768 = vsel %vm1105, %v8763, %v8767
      %v8769 = vshrl.u32 %v8540, 16
      %v8771 = vrot.slane %v8769, 4
      %v8772 = vor.u32 %v8771, %v8767
      %v8773 = vrot.slane %v8772, 4
      %v8775 = vshll.u32 %v8541, 16
      %v8777 = vrot.slane %v8775, 5
      %v8778 = vsel %vm1105, %v8773, %v8777
      %v8780 = vshrl.u32 %v8542, 16
      %v8782 = vrot.slane %v8780, 4
      %v8783 = vshll.u32 %v8542, 16
      %v8785 = vrot.slane %v8783, 5
      %v8786 = vor.u32 %v8782, %v8785
      %v8787 = vrot.slane %v8786, 4
      %v8789 = vshll.u32 %v8543, 16
      %v8791 = vrot.slane %v8789, 5
      %v8792 = vsel %vm1105, %v8787, %v8791
      %v8793 = vshrl.u32 %v8543, 16
      %v8795 = vrot.slane %v8793, 4
      %v8796 = vor.u32 %v8795, %v8791
      %v8797 = vrot.slane %v8796, 4
      %v8799 = vshll.u32 %v8544, 16
      %v8801 = vrot.slane %v8799, 5
      %v8802 = vsel %vm1105, %v8797, %v8801
      %v8804 = vshrl.u32 %v8545, 16
      %v8806 = vrot.slane %v8804, 4
      %v8807 = vshll.u32 %v8545, 16
      %v8809 = vrot.slane %v8807, 5
      %v8810 = vor.u32 %v8806, %v8809
      %v8811 = vrot.slane %v8810, 4
      %v8813 = vshll.u32 %v8546, 16
      %v8815 = vrot.slane %v8813, 5
      %v8816 = vsel %vm1105, %v8811, %v8815
      %v8817 = vshrl.u32 %v8546, 16
      %v8819 = vrot.slane %v8817, 4
      %v8820 = vor.u32 %v8819, %v8815
      %v8821 = vrot.slane %v8820, 4
      %v8823 = vshll.u32 %v8547, 16
      %v8825 = vrot.slane %v8823, 5
      %v8826 = vsel %vm1105, %v8821, %v8825
      %v8828 = vshrl.u32 %v8548, 16
      %v8830 = vrot.slane %v8828, 4
      %v8831 = vshll.u32 %v8548, 16
      %v8833 = vrot.slane %v8831, 5
      %v8834 = vor.u32 %v8830, %v8833
      %v8835 = vrot.slane %v8834, 4
      %v8837 = vshll.u32 %v8549, 16
      %v8839 = vrot.slane %v8837, 5
      %v8840 = vsel %vm1105, %v8835, %v8839
      %v8841 = vshrl.u32 %v8549, 16
      %v8843 = vrot.slane %v8841, 4
      %v8844 = vor.u32 %v8843, %v8839
      %v8845 = vrot.slane %v8844, 4
      %v8847 = vshll.u32 %v8550, 16
      %v8849 = vrot.slane %v8847, 5
      %v8850 = vsel %vm1105, %v8845, %v8849
      %v8852 = vshrl.u32 %v8551, 16
      %v8854 = vrot.slane %v8852, 4
      %v8855 = vshll.u32 %v8551, 16
      %v8857 = vrot.slane %v8855, 5
      %v8858 = vor.u32 %v8854, %v8857
      %v8859 = vrot.slane %v8858, 4
      %v8861 = vshll.u32 %v8552, 16
      %v8863 = vrot.slane %v8861, 5
      %v8864 = vsel %vm1105, %v8859, %v8863
      %v8865 = vshrl.u32 %v8552, 16
      %v8867 = vrot.slane %v8865, 4
      %v8868 = vor.u32 %v8867, %v8863
      %v8869 = vrot.slane %v8868, 4
      %v8871 = vshll.u32 %v8553, 16
      %v8873 = vrot.slane %v8871, 5
      %v8874 = vsel %vm1105, %v8869, %v8873
      %v8876 = vshrl.u32 %v8554, 16
      %v8878 = vrot.slane %v8876, 4
      %v8879 = vshll.u32 %v8554, 16
      %v8881 = vrot.slane %v8879, 5
      %v8882 = vor.u32 %v8878, %v8881
      %v8883 = vrot.slane %v8882, 4
      %v8885 = vshll.u32 %v8555, 16
      %v8887 = vrot.slane %v8885, 5
      %v8888 = vsel %vm1105, %v8883, %v8887
      %v8889 = vshrl.u32 %v8555, 16
      %v8891 = vrot.slane %v8889, 4
      %v8892 = vor.u32 %v8891, %v8887
      %v8893 = vrot.slane %v8892, 4
      %v8895 = vshll.u32 %v8556, 16
      %v8897 = vrot.slane %v8895, 5
      %v8898 = vsel %vm1105, %v8893, %v8897
      %v8900 = vshrl.u32 %v8557, 16
      %v8902 = vrot.slane %v8900, 4
      %v8903 = vshll.u32 %v8557, 16
      %v8905 = vrot.slane %v8903, 5
      %v8906 = vor.u32 %v8902, %v8905
      %v8907 = vrot.slane %v8906, 4
      %v8909 = vshll.u32 %v8558, 16
      %v8911 = vrot.slane %v8909, 5
      %v8912 = vsel %vm1105, %v8907, %v8911
      %v8913 = vshrl.u32 %v8558, 16
      %v8915 = vrot.slane %v8913, 4
      %v8916 = vor.u32 %v8915, %v8911
      %v8917 = vrot.slane %v8916, 4
      %v8919 = vshll.u32 %v8559, 16
      %v8921 = vrot.slane %v8919, 5
      %v8922 = vsel %vm1105, %v8917, %v8921
      %v8924 = vshrl.u32 %v8560, 16
      %v8926 = vrot.slane %v8924, 4
      %v8927 = vshll.u32 %v8560, 16
      %v8929 = vrot.slane %v8927, 5
      %v8930 = vor.u32 %v8926, %v8929
      %v8931 = vrot.slane %v8930, 4
      %v8933 = vshll.u32 %v8561, 16
      %v8935 = vrot.slane %v8933, 5
      %v8936 = vsel %vm1105, %v8931, %v8935
      %v8937 = vshrl.u32 %v8561, 16
      %v8939 = vrot.slane %v8937, 4
      %v8940 = vor.u32 %v8939, %v8935
      %v8941 = vrot.slane %v8940, 4
      %v8943 = vshll.u32 %v8562, 16
      %v8945 = vrot.slane %v8943, 5
      %v8946 = vsel %vm1105, %v8941, %v8945
      %s8947 = scalar_lea.vmem %s2, 8
      %v8948 = vld [vmem:[%s8947] sm:$0x3]
      %v8949 = vunpack.c.l.b16 %v8576
      %v8950 = vunpack.c.l.b16 %v8586
      %v8951 = vunpack.c.l.b16 %v8600
      %v8952 = vunpack.c.l.b16 %v8610
      %v8953 = vunpack.c.l.b16 %v8624
      %v8954 = vunpack.c.l.b16 %v8634
      %v8955 = vunpack.c.l.b16 %v8648
      %v8956 = vunpack.c.l.b16 %v8658
      %v8957 = vunpack.c.l.b16 %v8672
      %v8958 = vunpack.c.l.b16 %v8682
      %v8959 = vunpack.c.l.b16 %v8696
      %v8960 = vunpack.c.l.b16 %v8706
      %v8961 = vunpack.c.l.b16 %v8720
      %v8962 = vunpack.c.l.b16 %v8730
      %v8963 = vunpack.c.l.b16 %v8744
      %v8964 = vunpack.c.l.b16 %v8754
      %v8965 = vunpack.c.l.b16 %v8768
      %v8966 = vunpack.c.l.b16 %v8778
      %v8967 = vunpack.c.l.b16 %v8792
      %v8968 = vunpack.c.l.b16 %v8802
      %v8969 = vunpack.c.l.b16 %v8816
      %v8970 = vunpack.c.l.b16 %v8826
      %v8971 = vunpack.c.l.b16 %v8840
      %v8972 = vunpack.c.l.b16 %v8850
      %v8973 = vunpack.c.l.b16 %v8864
      %v8974 = vunpack.c.l.b16 %v8874
      %v8975 = vunpack.c.l.b16 %v8888
      %v8976 = vunpack.c.l.b16 %v8898
      %v8977 = vunpack.c.l.b16 %v8912
      %v8978 = vunpack.c.l.b16 %v8922
      %v8979 = vunpack.c.l.b16 %v8936
      %v8980 = vunpack.c.l.b16 %v8946
      %v8981 = vpack.c.b16 %v8950, %v8949
      %v8982 = vpack.c.b16 %v8952, %v8951
      %v8983 = vpack.c.b16 %v8954, %v8953
      %v8984 = vpack.c.b16 %v8956, %v8955
      %v8985 = vpack.c.b16 %v8958, %v8957
      %v8986 = vpack.c.b16 %v8960, %v8959
      %v8987 = vpack.c.b16 %v8962, %v8961
      %v8988 = vpack.c.b16 %v8964, %v8963
      %v8989 = vpack.c.b16 %v8966, %v8965
      %v8990 = vpack.c.b16 %v8968, %v8967
      %v8991 = vpack.c.b16 %v8970, %v8969
      %v8992 = vpack.c.b16 %v8972, %v8971
      %v8993 = vpack.c.b16 %v8974, %v8973
      %v8994 = vpack.c.b16 %v8976, %v8975
      %v8995 = vpack.c.b16 %v8978, %v8977
      %v8996 = vpack.c.b16 %v8980, %v8979
      %v8998 = vsel %vm1540, %v8981, 0
      %v9001 = vsel %vm1540, %v8982, 0
      %v9004 = vsel %vm1540, %v8983, 0
      %v9007 = vsel %vm1540, %v8984, 0
      %v9010 = vsel %vm1540, %v8985, 0
      %v9013 = vsel %vm1540, %v8986, 0
      %v9016 = vsel %vm1540, %v8987, 0
      %v9019 = vsel %vm1540, %v8988, 0
      %v9022 = vsel %vm1540, %v8989, 0
      %v9025 = vsel %vm1540, %v8990, 0
      %v9028 = vsel %vm1540, %v8991, 0
      %v9031 = vsel %vm1540, %v8992, 0
      %v9034 = vsel %vm1540, %v8993, 0
      %v9037 = vsel %vm1540, %v8994, 0
      %v9040 = vsel %vm1540, %v8995, 0
      %v9043 = vsel %vm1540, %v8996, 0
      %v9046 = vsel %vm1589, %v8948, 0
      %9048 = vmatprep.subr.bf16.mxu0 0
      %9049 = vmatpush1.bf16.msra.mxu0 %v9046
      %9050 = vmatprep.subr.bf16.mxu0 0
      %9051 = vmatpush1.bf16.msra.mxu0 0
      %9052 = vmatprep.subr.bf16.mxu0 0
      %9053 = vmatpush1.bf16.msra.mxu0 0
      %9054 = vmatprep.subr.bf16.mxu0 0
      %9055 = vmatpush1.bf16.msra.mxu0 0
      %9056 = vmatprep.subr.bf16.mxu0 0
      %9057 = vmatpush1.bf16.msra.mxu0 0
      %9058 = vmatprep.subr.bf16.mxu0 0
      %9059 = vmatpush1.bf16.msra.mxu0 0
      %9060 = vmatprep.subr.bf16.mxu0 0
      %9061 = vmatpush1.bf16.msra.mxu0 0
      %9062 = vmatprep.subr.bf16.mxu0 0
      %9063 = vmatpush1.bf16.msra.mxu0 0
      %9064 = vmatprep.subr.bf16.mxu0 0
      %9065 = vmatpush1.bf16.msra.mxu0 0
      %9066 = vmatprep.subr.bf16.mxu0 0
      %9067 = vmatpush1.bf16.msra.mxu0 0
      %9068 = vmatprep.subr.bf16.mxu0 0
      %9069 = vmatpush1.bf16.msra.mxu0 0
      %9070 = vmatprep.subr.bf16.mxu0 0
      %9071 = vmatpush1.bf16.msra.mxu0 0
      %9072 = vmatprep.subr.bf16.mxu0 0
      %9073 = vmatpush1.bf16.msra.mxu0 0
      %9074 = vmatprep.subr.bf16.mxu0 0
      %9075 = vmatpush1.bf16.msra.mxu0 0
      %9076 = vmatprep.subr.bf16.mxu0 0
      %9077 = vmatpush1.bf16.msra.mxu0 0
      %9078 = vmatprep.subr.bf16.mxu0 0
      %9079 = vmatpush1.bf16.msra.mxu0 0
      %9080 = vmatprep.mubr.bf16.mxu0 0
      %9081 = vmatmul.mubr.bf16.gmra.mrb[0].mxu0 %v8998
      %v9082 = vpop.f32.mrb[0].mxu0
      %v9083 = vadd.f32 0.0, %v9082
      %v9084 = vpop.f32.mrb[0].mxu0
      %v9085 = vpop.f32.mrb[0].mxu0
      %v9086 = vadd.f32 0.0, %v9085
      %v9087 = vpop.f32.mrb[0].mxu0
      %9088 = vmatprep.mubr.bf16.mxu0 0
      %9089 = vmatmul.mubr.bf16.gmra.mrb[0].mxu0 %v9001
      %v9090 = vpop.f32.mrb[0].mxu0
      %v9091 = vadd.f32 0.0, %v9090
      %v9092 = vpop.f32.mrb[0].mxu0
      %v9093 = vpop.f32.mrb[0].mxu0
      %v9094 = vadd.f32 0.0, %v9093
      %v9095 = vpop.f32.mrb[0].mxu0
      %9096 = vmatprep.mubr.bf16.mxu0 0
      %9097 = vmatmul.mubr.bf16.gmra.mrb[0].mxu0 %v9004
      %v9098 = vpop.f32.mrb[0].mxu0
      %v9099 = vadd.f32 0.0, %v9098
      %v9100 = vpop.f32.mrb[0].mxu0
      %v9101 = vpop.f32.mrb[0].mxu0
      %v9102 = vadd.f32 0.0, %v9101
      %v9103 = vpop.f32.mrb[0].mxu0
      %9104 = vmatprep.mubr.bf16.mxu0 0
      %9105 = vmatmul.mubr.bf16.gmra.mrb[0].mxu0 %v9007
      %v9106 = vpop.f32.mrb[0].mxu0
      %v9107 = vadd.f32 0.0, %v9106
      %v9108 = vpop.f32.mrb[0].mxu0
      %v9109 = vpop.f32.mrb[0].mxu0
      %v9110 = vadd.f32 0.0, %v9109
      %v9111 = vpop.f32.mrb[0].mxu0
      %9112 = vmatprep.mubr.bf16.mxu0 0
      %9113 = vmatmul.mubr.bf16.gmra.mrb[0].mxu0 %v9010
      %v9114 = vpop.f32.mrb[0].mxu0
      %v9115 = vadd.f32 0.0, %v9114
      %v9116 = vpop.f32.mrb[0].mxu0
      %v9117 = vpop.f32.mrb[0].mxu0
      %v9118 = vadd.f32 0.0, %v9117
      %v9119 = vpop.f32.mrb[0].mxu0
      %9120 = vmatprep.mubr.bf16.mxu0 0
      %9121 = vmatmul.mubr.bf16.gmra.mrb[0].mxu0 %v9013
      %v9122 = vpop.f32.mrb[0].mxu0
      %v9123 = vadd.f32 0.0, %v9122
      %v9124 = vpop.f32.mrb[0].mxu0
      %v9125 = vpop.f32.mrb[0].mxu0
      %v9126 = vadd.f32 0.0, %v9125
      %v9127 = vpop.f32.mrb[0].mxu0
      %9128 = vmatprep.mubr.bf16.mxu0 0
      %9129 = vmatmul.mubr.bf16.gmra.mrb[0].mxu0 %v9016
      %v9130 = vpop.f32.mrb[0].mxu0
      %v9131 = vadd.f32 0.0, %v9130
      %v9132 = vpop.f32.mrb[0].mxu0
      %v9133 = vpop.f32.mrb[0].mxu0
      %v9134 = vadd.f32 0.0, %v9133
      %v9135 = vpop.f32.mrb[0].mxu0
      %9136 = vmatprep.mubr.bf16.mxu0 0
      %9137 = vmatmul.mubr.bf16.gmra.mrb[0].mxu0 %v9019
      %v9138 = vpop.f32.mrb[0].mxu0
      %v9139 = vadd.f32 0.0, %v9138
      %v9140 = vpop.f32.mrb[0].mxu0
      %v9141 = vpop.f32.mrb[0].mxu0
      %v9142 = vadd.f32 0.0, %v9141
      %v9143 = vpop.f32.mrb[0].mxu0
      %9144 = vmatprep.mubr.bf16.mxu0 0
      %9145 = vmatmul.mubr.bf16.gmra.mrb[0].mxu0 %v9022
      %v9146 = vpop.f32.mrb[0].mxu0
      %v9147 = vadd.f32 0.0, %v9146
      %v9148 = vpop.f32.mrb[0].mxu0
      %v9149 = vpop.f32.mrb[0].mxu0
      %v9150 = vadd.f32 0.0, %v9149
      %v9151 = vpop.f32.mrb[0].mxu0
      %9152 = vmatprep.mubr.bf16.mxu0 0
      %9153 = vmatmul.mubr.bf16.gmra.mrb[0].mxu0 %v9025
      %v9154 = vpop.f32.mrb[0].mxu0
      %v9155 = vadd.f32 0.0, %v9154
      %v9156 = vpop.f32.mrb[0].mxu0
      %v9157 = vpop.f32.mrb[0].mxu0
      %v9158 = vadd.f32 0.0, %v9157
      %v9159 = vpop.f32.mrb[0].mxu0
      %9160 = vmatprep.mubr.bf16.mxu0 0
      %9161 = vmatmul.mubr.bf16.gmra.mrb[0].mxu0 %v9028
      %v9162 = vpop.f32.mrb[0].mxu0
      %v9163 = vadd.f32 0.0, %v9162
      %v9164 = vpop.f32.mrb[0].mxu0
      %v9165 = vpop.f32.mrb[0].mxu0
      %v9166 = vadd.f32 0.0, %v9165
      %v9167 = vpop.f32.mrb[0].mxu0
      %9168 = vmatprep.mubr.bf16.mxu0 0
      %9169 = vmatmul.mubr.bf16.gmra.mrb[0].mxu0 %v9031
      %v9170 = vpop.f32.mrb[0].mxu0
      %v9171 = vadd.f32 0.0, %v9170
      %v9172 = vpop.f32.mrb[0].mxu0
      %v9173 = vpop.f32.mrb[0].mxu0
      %v9174 = vadd.f32 0.0, %v9173
      %v9175 = vpop.f32.mrb[0].mxu0
      %9176 = vmatprep.mubr.bf16.mxu0 0
      %9177 = vmatmul.mubr.bf16.gmra.mrb[0].mxu0 %v9034
      %v9178 = vpop.f32.mrb[0].mxu0
      %v9179 = vadd.f32 0.0, %v9178
      %v9180 = vpop.f32.mrb[0].mxu0
      %v9181 = vpop.f32.mrb[0].mxu0
      %v9182 = vadd.f32 0.0, %v9181
      %v9183 = vpop.f32.mrb[0].mxu0
      %9184 = vmatprep.mubr.bf16.mxu0 0
      %9185 = vmatmul.mubr.bf16.gmra.mrb[0].mxu0 %v9037
      %v9186 = vpop.f32.mrb[0].mxu0
      %v9187 = vadd.f32 0.0, %v9186
      %v9188 = vpop.f32.mrb[0].mxu0
      %v9189 = vpop.f32.mrb[0].mxu0
      %v9190 = vadd.f32 0.0, %v9189
      %v9191 = vpop.f32.mrb[0].mxu0
      %9192 = vmatprep.mubr.bf16.mxu0 0
      %9193 = vmatmul.mubr.bf16.gmra.mrb[0].mxu0 %v9040
      %v9194 = vpop.f32.mrb[0].mxu0
      %v9195 = vadd.f32 0.0, %v9194
      %v9196 = vpop.f32.mrb[0].mxu0
      %v9197 = vpop.f32.mrb[0].mxu0
      %v9198 = vadd.f32 0.0, %v9197
      %v9199 = vpop.f32.mrb[0].mxu0
      %9200 = vmatprep.mubr.bf16.mxu0 0
      %9201 = vmatmul.mubr.bf16.gmra.mrb[0].mxu0 %v9043
      %v9202 = vpop.f32.mrb[0].mxu0
      %v9203 = vadd.f32 0.0, %v9202
      %v9204 = vpop.f32.mrb[0].mxu0
      %v9205 = vpop.f32.mrb[0].mxu0
      %v9206 = vadd.f32 0.0, %v9205
      %v9207 = vpop.f32.mrb[0].mxu0
      %9208 = vdwg.mxu0
      %v9209 = vadd.f32 %v8483, %v9083
      %v9210 = vadd.f32 %v8484, %v9086
      %v9211 = vadd.f32 %v8485, %v9091
      %v9212 = vadd.f32 %v8486, %v9094
      %v9213 = vadd.f32 %v8487, %v9099
      %v9214 = vadd.f32 %v8488, %v9102
      %v9215 = vadd.f32 %v8489, %v9107
      %v9216 = vadd.f32 %v8490, %v9110
      %v9217 = vadd.f32 %v8491, %v9115
      %v9218 = vadd.f32 %v8492, %v9118
      %v9219 = vadd.f32 %v8493, %v9123
      %v9220 = vadd.f32 %v8494, %v9126
      %v9221 = vadd.f32 %v8495, %v9131
      %v9222 = vadd.f32 %v8496, %v9134
      %v9223 = vadd.f32 %v8497, %v9139
      %v9224 = vadd.f32 %v8498, %v9142
      %v9225 = vadd.f32 %v8499, %v9147
      %v9226 = vadd.f32 %v8500, %v9150
      %v9227 = vadd.f32 %v8501, %v9155
      %v9228 = vadd.f32 %v8502, %v9158
      %v9229 = vadd.f32 %v8503, %v9163
      %v9230 = vadd.f32 %v8504, %v9166
      %v9231 = vadd.f32 %v8505, %v9171
      %v9232 = vadd.f32 %v8506, %v9174
      %v9233 = vadd.f32 %v8507, %v9179
      %v9234 = vadd.f32 %v8508, %v9182
      %v9235 = vadd.f32 %v8509, %v9187
      %v9236 = vadd.f32 %v8510, %v9190
      %v9237 = vadd.f32 %v8511, %v9195
      %v9238 = vadd.f32 %v8512, %v9198
      %v9239 = vadd.f32 %v8513, %v9203
      %v9240 = vadd.f32 %v8514, %v9206
      %v9241 = vld [vmem:[%s623] sm:$0xe]
      %v9242 = vld [vmem:[%s623 + $0xc] sm:$0xe]
      %v9243 = vld [vmem:[%s623 + $0x18] sm:$0xe]
      %v9244 = vld [vmem:[%s623 + $0x24] sm:$0xe]
      %v9245 = vld [vmem:[%s623 + $0x30] sm:$0xe]
      %v9246 = vld [vmem:[%s623 + $0x3c] sm:$0xe]
      %v9247 = vld [vmem:[%s623 + $0x48] sm:$0xe]
      %v9248 = vld [vmem:[%s623 + $0x54] sm:$0xe]
      %v9249 = vld [vmem:[%s623 + $0x60] sm:$0xe]
      %v9250 = vld [vmem:[%s623 + $0x6c] sm:$0xe]
      %v9251 = vld [vmem:[%s623 + $0x78] sm:$0xe]
      %v9252 = vld [vmem:[%s623 + $0x84] sm:$0xe]
      %v9253 = vld [vmem:[%s623 + $0x90] sm:$0xe]
      %v9254 = vld [vmem:[%s623 + $0x9c] sm:$0xe]
      %v9255 = vld [vmem:[%s623 + $0xa8] sm:$0xe]
      %v9256 = vld [vmem:[%s623 + $0xb4] sm:$0xe]
      %v9305 = vrot.slane %v9241, 5
      %v9306 = vrot.slane %v9305, 4
      %v9307 = vrot.slane %v8516, 5
      %v9308 = vsel %vm2096, %v9306, %v9307
      %v9309 = vrot.slane %v9307, 4
      %v9310 = vrot.slane %v8517, 5
      %v9311 = vsel %vm2096, %v9309, %v9310
      %v9312 = vrot.slane %v9242, 5
      %v9313 = vrot.slane %v9312, 4
      %v9314 = vrot.slane %v8519, 5
      %v9315 = vsel %vm2096, %v9313, %v9314
      %v9316 = vrot.slane %v9314, 4
      %v9317 = vrot.slane %v8520, 5
      %v9318 = vsel %vm2096, %v9316, %v9317
      %v9319 = vrot.slane %v9243, 5
      %v9320 = vrot.slane %v9319, 4
      %v9321 = vrot.slane %v8522, 5
      %v9322 = vsel %vm2096, %v9320, %v9321
      %v9323 = vrot.slane %v9321, 4
      %v9324 = vrot.slane %v8523, 5
      %v9325 = vsel %vm2096, %v9323, %v9324
      %v9326 = vrot.slane %v9244, 5
      %v9327 = vrot.slane %v9326, 4
      %v9328 = vrot.slane %v8525, 5
      %v9329 = vsel %vm2096, %v9327, %v9328
      %v9330 = vrot.slane %v9328, 4
      %v9331 = vrot.slane %v8526, 5
      %v9332 = vsel %vm2096, %v9330, %v9331
      %v9333 = vrot.slane %v9245, 5
      %v9334 = vrot.slane %v9333, 4
      %v9335 = vrot.slane %v8528, 5
      %v9336 = vsel %vm2096, %v9334, %v9335
      %v9337 = vrot.slane %v9335, 4
      %v9338 = vrot.slane %v8529, 5
      %v9339 = vsel %vm2096, %v9337, %v9338
      %v9340 = vrot.slane %v9246, 5
      %v9341 = vrot.slane %v9340, 4
      %v9342 = vrot.slane %v8531, 5
      %v9343 = vsel %vm2096, %v9341, %v9342
      %v9344 = vrot.slane %v9342, 4
      %v9345 = vrot.slane %v8532, 5
      %v9346 = vsel %vm2096, %v9344, %v9345
      %v9347 = vrot.slane %v9247, 5
      %v9348 = vrot.slane %v9347, 4
      %v9349 = vrot.slane %v8534, 5
      %v9350 = vsel %vm2096, %v9348, %v9349
      %v9351 = vrot.slane %v9349, 4
      %v9352 = vrot.slane %v8535, 5
      %v9353 = vsel %vm2096, %v9351, %v9352
      %v9354 = vrot.slane %v9248, 5
      %v9355 = vrot.slane %v9354, 4
      %v9356 = vrot.slane %v8537, 5
      %v9357 = vsel %vm2096, %v9355, %v9356
      %v9358 = vrot.slane %v9356, 4
      %v9359 = vrot.slane %v8538, 5
      %v9360 = vsel %vm2096, %v9358, %v9359
      %v9361 = vrot.slane %v9249, 5
      %v9362 = vrot.slane %v9361, 4
      %v9363 = vrot.slane %v8540, 5
      %v9364 = vsel %vm2096, %v9362, %v9363
      %v9365 = vrot.slane %v9363, 4
      %v9366 = vrot.slane %v8541, 5
      %v9367 = vsel %vm2096, %v9365, %v9366
      %v9368 = vrot.slane %v9250, 5
      %v9369 = vrot.slane %v9368, 4
      %v9370 = vrot.slane %v8543, 5
      %v9371 = vsel %vm2096, %v9369, %v9370
      %v9372 = vrot.slane %v9370, 4
      %v9373 = vrot.slane %v8544, 5
      %v9374 = vsel %vm2096, %v9372, %v9373
      %v9375 = vrot.slane %v9251, 5
      %v9376 = vrot.slane %v9375, 4
      %v9377 = vrot.slane %v8546, 5
      %v9378 = vsel %vm2096, %v9376, %v9377
      %v9379 = vrot.slane %v9377, 4
      %v9380 = vrot.slane %v8547, 5
      %v9381 = vsel %vm2096, %v9379, %v9380
      %v9382 = vrot.slane %v9252, 5
      %v9383 = vrot.slane %v9382, 4
      %v9384 = vrot.slane %v8549, 5
      %v9385 = vsel %vm2096, %v9383, %v9384
      %v9386 = vrot.slane %v9384, 4
      %v9387 = vrot.slane %v8550, 5
      %v9388 = vsel %vm2096, %v9386, %v9387
      %v9389 = vrot.slane %v9253, 5
      %v9390 = vrot.slane %v9389, 4
      %v9391 = vrot.slane %v8552, 5
      %v9392 = vsel %vm2096, %v9390, %v9391
      %v9393 = vrot.slane %v9391, 4
      %v9394 = vrot.slane %v8553, 5
      %v9395 = vsel %vm2096, %v9393, %v9394
      %v9396 = vrot.slane %v9254, 5
      %v9397 = vrot.slane %v9396, 4
      %v9398 = vrot.slane %v8555, 5
      %v9399 = vsel %vm2096, %v9397, %v9398
      %v9400 = vrot.slane %v9398, 4
      %v9401 = vrot.slane %v8556, 5
      %v9402 = vsel %vm2096, %v9400, %v9401
      %v9403 = vrot.slane %v9255, 5
      %v9404 = vrot.slane %v9403, 4
      %v9405 = vrot.slane %v8558, 5
      %v9406 = vsel %vm2096, %v9404, %v9405
      %v9407 = vrot.slane %v9405, 4
      %v9408 = vrot.slane %v8559, 5
      %v9409 = vsel %vm2096, %v9407, %v9408
      %v9410 = vrot.slane %v9256, 5
      %v9411 = vrot.slane %v9410, 4
      %v9412 = vrot.slane %v8561, 5
      %v9413 = vsel %vm2096, %v9411, %v9412
      %v9414 = vrot.slane %v9412, 4
      %v9415 = vrot.slane %v8562, 5
      %v9416 = vsel %vm2096, %v9414, %v9415
      %s9417 = scalar_lea.vmem %s2, 10
      %v9418 = vld [vmem:[%s9417] sm:$0x3]
      %v9419 = vunpack.c.l.b16 %v9308
      %v9420 = vunpack.c.l.b16 %v9311
      %v9421 = vunpack.c.l.b16 %v9315
      %v9422 = vunpack.c.l.b16 %v9318
      %v9423 = vunpack.c.l.b16 %v9322
      %v9424 = vunpack.c.l.b16 %v9325
      %v9425 = vunpack.c.l.b16 %v9329
      %v9426 = vunpack.c.l.b16 %v9332
      %v9427 = vunpack.c.l.b16 %v9336
      %v9428 = vunpack.c.l.b16 %v9339
      %v9429 = vunpack.c.l.b16 %v9343
      %v9430 = vunpack.c.l.b16 %v9346
      %v9431 = vunpack.c.l.b16 %v9350
      %v9432 = vunpack.c.l.b16 %v9353
      %v9433 = vunpack.c.l.b16 %v9357
      %v9434 = vunpack.c.l.b16 %v9360
      %v9435 = vunpack.c.l.b16 %v9364
      %v9436 = vunpack.c.l.b16 %v9367
      %v9437 = vunpack.c.l.b16 %v9371
      %v9438 = vunpack.c.l.b16 %v9374
      %v9439 = vunpack.c.l.b16 %v9378
      %v9440 = vunpack.c.l.b16 %v9381
      %v9441 = vunpack.c.l.b16 %v9385
      %v9442 = vunpack.c.l.b16 %v9388
      %v9443 = vunpack.c.l.b16 %v9392
      %v9444 = vunpack.c.l.b16 %v9395
      %v9445 = vunpack.c.l.b16 %v9399
      %v9446 = vunpack.c.l.b16 %v9402
      %v9447 = vunpack.c.l.b16 %v9406
      %v9448 = vunpack.c.l.b16 %v9409
      %v9449 = vunpack.c.l.b16 %v9413
      %v9450 = vunpack.c.l.b16 %v9416
      %v9451 = vpack.c.b16 %v9420, %v9419
      %v9452 = vpack.c.b16 %v9422, %v9421
      %v9453 = vpack.c.b16 %v9424, %v9423
      %v9454 = vpack.c.b16 %v9426, %v9425
      %v9455 = vpack.c.b16 %v9428, %v9427
      %v9456 = vpack.c.b16 %v9430, %v9429
      %v9457 = vpack.c.b16 %v9432, %v9431
      %v9458 = vpack.c.b16 %v9434, %v9433
      %v9459 = vpack.c.b16 %v9436, %v9435
      %v9460 = vpack.c.b16 %v9438, %v9437
      %v9461 = vpack.c.b16 %v9440, %v9439
      %v9462 = vpack.c.b16 %v9442, %v9441
      %v9463 = vpack.c.b16 %v9444, %v9443
      %v9464 = vpack.c.b16 %v9446, %v9445
      %v9465 = vpack.c.b16 %v9448, %v9447
      %v9466 = vpack.c.b16 %v9450, %v9449
      %v9468 = vsel %vm1540, %v9451, 0
      %v9471 = vsel %vm1540, %v9452, 0
      %v9474 = vsel %vm1540, %v9453, 0
      %v9477 = vsel %vm1540, %v9454, 0
      %v9480 = vsel %vm1540, %v9455, 0
      %v9483 = vsel %vm1540, %v9456, 0
      %v9486 = vsel %vm1540, %v9457, 0
      %v9489 = vsel %vm1540, %v9458, 0
      %v9492 = vsel %vm1540, %v9459, 0
      %v9495 = vsel %vm1540, %v9460, 0
      %v9498 = vsel %vm1540, %v9461, 0
      %v9501 = vsel %vm1540, %v9462, 0
      %v9504 = vsel %vm1540, %v9463, 0
      %v9507 = vsel %vm1540, %v9464, 0
      %v9510 = vsel %vm1540, %v9465, 0
      %v9513 = vsel %vm1540, %v9466, 0
      %v9516 = vsel %vm1589, %v9418, 0
      %9518 = vmatprep.subr.bf16.mxu0 0
      %9519 = vmatpush1.bf16.msra.mxu0 %v9516
      %9520 = vmatprep.subr.bf16.mxu0 0
      %9521 = vmatpush1.bf16.msra.mxu0 0
      %9522 = vmatprep.subr.bf16.mxu0 0
      %9523 = vmatpush1.bf16.msra.mxu0 0
      %9524 = vmatprep.subr.bf16.mxu0 0
      %9525 = vmatpush1.bf16.msra.mxu0 0
      %9526 = vmatprep.subr.bf16.mxu0 0
      %9527 = vmatpush1.bf16.msra.mxu0 0
      %9528 = vmatprep.subr.bf16.mxu0 0
      %9529 = vmatpush1.bf16.msra.mxu0 0
      %9530 = vmatprep.subr.bf16.mxu0 0
      %9531 = vmatpush1.bf16.msra.mxu0 0
      %9532 = vmatprep.subr.bf16.mxu0 0
      %9533 = vmatpush1.bf16.msra.mxu0 0
      %9534 = vmatprep.subr.bf16.mxu0 0
      %9535 = vmatpush1.bf16.msra.mxu0 0
      %9536 = vmatprep.subr.bf16.mxu0 0
      %9537 = vmatpush1.bf16.msra.mxu0 0
      %9538 = vmatprep.subr.bf16.mxu0 0
      %9539 = vmatpush1.bf16.msra.mxu0 0
      %9540 = vmatprep.subr.bf16.mxu0 0
      %9541 = vmatpush1.bf16.msra.mxu0 0
      %9542 = vmatprep.subr.bf16.mxu0 0
      %9543 = vmatpush1.bf16.msra.mxu0 0
      %9544 = vmatprep.subr.bf16.mxu0 0
      %9545 = vmatpush1.bf16.msra.mxu0 0
      %9546 = vmatprep.subr.bf16.mxu0 0
      %9547 = vmatpush1.bf16.msra.mxu0 0
      %9548 = vmatprep.subr.bf16.mxu0 0
      %9549 = vmatpush1.bf16.msra.mxu0 0
      %9550 = vmatprep.mubr.bf16.mxu0 0
      %9551 = vmatmul.mubr.bf16.gmra.mrb[0].mxu0 %v9468
      %v9552 = vpop.f32.mrb[0].mxu0
      %v9553 = vadd.f32 0.0, %v9552
      %v9554 = vpop.f32.mrb[0].mxu0
      %v9555 = vpop.f32.mrb[0].mxu0
      %v9556 = vadd.f32 0.0, %v9555
      %v9557 = vpop.f32.mrb[0].mxu0
      %9558 = vmatprep.mubr.bf16.mxu0 0
      %9559 = vmatmul.mubr.bf16.gmra.mrb[0].mxu0 %v9471
      %v9560 = vpop.f32.mrb[0].mxu0
      %v9561 = vadd.f32 0.0, %v9560
      %v9562 = vpop.f32.mrb[0].mxu0
      %v9563 = vpop.f32.mrb[0].mxu0
      %v9564 = vadd.f32 0.0, %v9563
      %v9565 = vpop.f32.mrb[0].mxu0
      %9566 = vmatprep.mubr.bf16.mxu0 0
      %9567 = vmatmul.mubr.bf16.gmra.mrb[0].mxu0 %v9474
      %v9568 = vpop.f32.mrb[0].mxu0
      %v9569 = vadd.f32 0.0, %v9568
      %v9570 = vpop.f32.mrb[0].mxu0
      %v9571 = vpop.f32.mrb[0].mxu0
      %v9572 = vadd.f32 0.0, %v9571
      %v9573 = vpop.f32.mrb[0].mxu0
      %9574 = vmatprep.mubr.bf16.mxu0 0
      %9575 = vmatmul.mubr.bf16.gmra.mrb[0].mxu0 %v9477
      %v9576 = vpop.f32.mrb[0].mxu0
      %v9577 = vadd.f32 0.0, %v9576
      %v9578 = vpop.f32.mrb[0].mxu0
      %v9579 = vpop.f32.mrb[0].mxu0
      %v9580 = vadd.f32 0.0, %v9579
      %v9581 = vpop.f32.mrb[0].mxu0
      %9582 = vmatprep.mubr.bf16.mxu0 0
      %9583 = vmatmul.mubr.bf16.gmra.mrb[0].mxu0 %v9480
      %v9584 = vpop.f32.mrb[0].mxu0
      %v9585 = vadd.f32 0.0, %v9584
      %v9586 = vpop.f32.mrb[0].mxu0
      %v9587 = vpop.f32.mrb[0].mxu0
      %v9588 = vadd.f32 0.0, %v9587
      %v9589 = vpop.f32.mrb[0].mxu0
      %9590 = vmatprep.mubr.bf16.mxu0 0
      %9591 = vmatmul.mubr.bf16.gmra.mrb[0].mxu0 %v9483
      %v9592 = vpop.f32.mrb[0].mxu0
      %v9593 = vadd.f32 0.0, %v9592
      %v9594 = vpop.f32.mrb[0].mxu0
      %v9595 = vpop.f32.mrb[0].mxu0
      %v9596 = vadd.f32 0.0, %v9595
      %v9597 = vpop.f32.mrb[0].mxu0
      %9598 = vmatprep.mubr.bf16.mxu0 0
      %9599 = vmatmul.mubr.bf16.gmra.mrb[0].mxu0 %v9486
      %v9600 = vpop.f32.mrb[0].mxu0
      %v9601 = vadd.f32 0.0, %v9600
      %v9602 = vpop.f32.mrb[0].mxu0
      %v9603 = vpop.f32.mrb[0].mxu0
      %v9604 = vadd.f32 0.0, %v9603
      %v9605 = vpop.f32.mrb[0].mxu0
      %9606 = vmatprep.mubr.bf16.mxu0 0
      %9607 = vmatmul.mubr.bf16.gmra.mrb[0].mxu0 %v9489
      %v9608 = vpop.f32.mrb[0].mxu0
      %v9609 = vadd.f32 0.0, %v9608
      %v9610 = vpop.f32.mrb[0].mxu0
      %v9611 = vpop.f32.mrb[0].mxu0
      %v9612 = vadd.f32 0.0, %v9611
      %v9613 = vpop.f32.mrb[0].mxu0
      %9614 = vmatprep.mubr.bf16.mxu0 0
      %9615 = vmatmul.mubr.bf16.gmra.mrb[0].mxu0 %v9492
      %v9616 = vpop.f32.mrb[0].mxu0
      %v9617 = vadd.f32 0.0, %v9616
      %v9618 = vpop.f32.mrb[0].mxu0
      %v9619 = vpop.f32.mrb[0].mxu0
      %v9620 = vadd.f32 0.0, %v9619
      %v9621 = vpop.f32.mrb[0].mxu0
      %9622 = vmatprep.mubr.bf16.mxu0 0
      %9623 = vmatmul.mubr.bf16.gmra.mrb[0].mxu0 %v9495
      %v9624 = vpop.f32.mrb[0].mxu0
      %v9625 = vadd.f32 0.0, %v9624
      %v9626 = vpop.f32.mrb[0].mxu0
      %v9627 = vpop.f32.mrb[0].mxu0
      %v9628 = vadd.f32 0.0, %v9627
      %v9629 = vpop.f32.mrb[0].mxu0
      %9630 = vmatprep.mubr.bf16.mxu0 0
      %9631 = vmatmul.mubr.bf16.gmra.mrb[0].mxu0 %v9498
      %v9632 = vpop.f32.mrb[0].mxu0
      %v9633 = vadd.f32 0.0, %v9632
      %v9634 = vpop.f32.mrb[0].mxu0
      %v9635 = vpop.f32.mrb[0].mxu0
      %v9636 = vadd.f32 0.0, %v9635
      %v9637 = vpop.f32.mrb[0].mxu0
      %9638 = vmatprep.mubr.bf16.mxu0 0
      %9639 = vmatmul.mubr.bf16.gmra.mrb[0].mxu0 %v9501
      %v9640 = vpop.f32.mrb[0].mxu0
      %v9641 = vadd.f32 0.0, %v9640
      %v9642 = vpop.f32.mrb[0].mxu0
      %v9643 = vpop.f32.mrb[0].mxu0
      %v9644 = vadd.f32 0.0, %v9643
      %v9645 = vpop.f32.mrb[0].mxu0
      %9646 = vmatprep.mubr.bf16.mxu0 0
      %9647 = vmatmul.mubr.bf16.gmra.mrb[0].mxu0 %v9504
      %v9648 = vpop.f32.mrb[0].mxu0
      %v9649 = vadd.f32 0.0, %v9648
      %v9650 = vpop.f32.mrb[0].mxu0
      %v9651 = vpop.f32.mrb[0].mxu0
      %v9652 = vadd.f32 0.0, %v9651
      %v9653 = vpop.f32.mrb[0].mxu0
      %9654 = vmatprep.mubr.bf16.mxu0 0
      %9655 = vmatmul.mubr.bf16.gmra.mrb[0].mxu0 %v9507
      %v9656 = vpop.f32.mrb[0].mxu0
      %v9657 = vadd.f32 0.0, %v9656
      %v9658 = vpop.f32.mrb[0].mxu0
      %v9659 = vpop.f32.mrb[0].mxu0
      %v9660 = vadd.f32 0.0, %v9659
      %v9661 = vpop.f32.mrb[0].mxu0
      %9662 = vmatprep.mubr.bf16.mxu0 0
      %9663 = vmatmul.mubr.bf16.gmra.mrb[0].mxu0 %v9510
      %v9664 = vpop.f32.mrb[0].mxu0
      %v9665 = vadd.f32 0.0, %v9664
      %v9666 = vpop.f32.mrb[0].mxu0
      %v9667 = vpop.f32.mrb[0].mxu0
      %v9668 = vadd.f32 0.0, %v9667
      %v9669 = vpop.f32.mrb[0].mxu0
      %9670 = vmatprep.mubr.bf16.mxu0 0
      %9671 = vmatmul.mubr.bf16.gmra.mrb[0].mxu0 %v9513
      %v9672 = vpop.f32.mrb[0].mxu0
      %v9673 = vadd.f32 0.0, %v9672
      %v9674 = vpop.f32.mrb[0].mxu0
      %v9675 = vpop.f32.mrb[0].mxu0
      %v9676 = vadd.f32 0.0, %v9675
      %v9677 = vpop.f32.mrb[0].mxu0
      %9678 = vdwg.mxu0
      %v9679 = vadd.f32 %v9209, %v9553
      %v9680 = vadd.f32 %v9210, %v9556
      %v9681 = vadd.f32 %v9211, %v9561
      %v9682 = vadd.f32 %v9212, %v9564
      %v9683 = vadd.f32 %v9213, %v9569
      %v9684 = vadd.f32 %v9214, %v9572
      %v9685 = vadd.f32 %v9215, %v9577
      %v9686 = vadd.f32 %v9216, %v9580
      %v9687 = vadd.f32 %v9217, %v9585
      %v9688 = vadd.f32 %v9218, %v9588
      %v9689 = vadd.f32 %v9219, %v9593
      %v9690 = vadd.f32 %v9220, %v9596
      %v9691 = vadd.f32 %v9221, %v9601
      %v9692 = vadd.f32 %v9222, %v9604
      %v9693 = vadd.f32 %v9223, %v9609
      %v9694 = vadd.f32 %v9224, %v9612
      %v9695 = vadd.f32 %v9225, %v9617
      %v9696 = vadd.f32 %v9226, %v9620
      %v9697 = vadd.f32 %v9227, %v9625
      %v9698 = vadd.f32 %v9228, %v9628
      %v9699 = vadd.f32 %v9229, %v9633
      %v9700 = vadd.f32 %v9230, %v9636
      %v9701 = vadd.f32 %v9231, %v9641
      %v9702 = vadd.f32 %v9232, %v9644
      %v9703 = vadd.f32 %v9233, %v9649
      %v9704 = vadd.f32 %v9234, %v9652
      %v9705 = vadd.f32 %v9235, %v9657
      %v9706 = vadd.f32 %v9236, %v9660
      %v9707 = vadd.f32 %v9237, %v9665
      %v9708 = vadd.f32 %v9238, %v9668
      %v9709 = vadd.f32 %v9239, %v9673
      %v9710 = vadd.f32 %v9240, %v9676
      %v9711 = vld [vmem:[%s742] sm:$0xf]
      %v9712 = vld [vmem:[%s742 + $0x4] sm:$0xf]
      %v9713 = vld [vmem:[%s742 + $0xc] sm:$0xf]
      %v9714 = vld [vmem:[%s742 + $0x10] sm:$0xf]
      %v9715 = vld [vmem:[%s742 + $0x18] sm:$0xf]
      %v9716 = vld [vmem:[%s742 + $0x1c] sm:$0xf]
      %v9717 = vld [vmem:[%s742 + $0x24] sm:$0xf]
      %v9718 = vld [vmem:[%s742 + $0x28] sm:$0xf]
      %v9719 = vld [vmem:[%s742 + $0x30] sm:$0xf]
      %v9720 = vld [vmem:[%s742 + $0x34] sm:$0xf]
      %v9721 = vld [vmem:[%s742 + $0x3c] sm:$0xf]
      %v9722 = vld [vmem:[%s742 + $0x40] sm:$0xf]
      %v9723 = vld [vmem:[%s742 + $0x48] sm:$0xf]
      %v9724 = vld [vmem:[%s742 + $0x4c] sm:$0xf]
      %v9725 = vld [vmem:[%s742 + $0x54] sm:$0xf]
      %v9726 = vld [vmem:[%s742 + $0x58] sm:$0xf]
      %v9727 = vld [vmem:[%s742 + $0x60] sm:$0xf]
      %v9728 = vld [vmem:[%s742 + $0x64] sm:$0xf]
      %v9729 = vld [vmem:[%s742 + $0x6c] sm:$0xf]
      %v9730 = vld [vmem:[%s742 + $0x70] sm:$0xf]
      %v9731 = vld [vmem:[%s742 + $0x78] sm:$0xf]
      %v9732 = vld [vmem:[%s742 + $0x7c] sm:$0xf]
      %v9733 = vld [vmem:[%s742 + $0x84] sm:$0xf]
      %v9734 = vld [vmem:[%s742 + $0x88] sm:$0xf]
      %v9735 = vld [vmem:[%s742 + $0x90] sm:$0xf]
      %v9736 = vld [vmem:[%s742 + $0x94] sm:$0xf]
      %v9737 = vld [vmem:[%s742 + $0x9c] sm:$0xf]
      %v9738 = vld [vmem:[%s742 + $0xa0] sm:$0xf]
      %v9739 = vld [vmem:[%s742 + $0xa8] sm:$0xf]
      %v9740 = vld [vmem:[%s742 + $0xac] sm:$0xf]
      %v9741 = vld [vmem:[%s742 + $0xb4] sm:$0xf]
      %v9742 = vld [vmem:[%s742 + $0xb8] sm:$0xf]
      %s9743 = scalar_lea.vmem %s2, 12
      %v9744 = vld [vmem:[%s9743] sm:$0x3]
      %v9777 = vunpack.c.l.b16 %v9711
      %v9778 = vunpack.c.l.b16 %v9712
      %v9779 = vunpack.c.l.b16 %v9713
      %v9780 = vunpack.c.l.b16 %v9714
      %v9781 = vunpack.c.l.b16 %v9715
      %v9782 = vunpack.c.l.b16 %v9716
      %v9783 = vunpack.c.l.b16 %v9717
      %v9784 = vunpack.c.l.b16 %v9718
      %v9785 = vunpack.c.l.b16 %v9719
      %v9786 = vunpack.c.l.b16 %v9720
      %v9787 = vunpack.c.l.b16 %v9721
      %v9788 = vunpack.c.l.b16 %v9722
      %v9789 = vunpack.c.l.b16 %v9723
      %v9790 = vunpack.c.l.b16 %v9724
      %v9791 = vunpack.c.l.b16 %v9725
      %v9792 = vunpack.c.l.b16 %v9726
      %v9793 = vunpack.c.l.b16 %v9727
      %v9794 = vunpack.c.l.b16 %v9728
      %v9795 = vunpack.c.l.b16 %v9729
      %v9796 = vunpack.c.l.b16 %v9730
      %v9797 = vunpack.c.l.b16 %v9731
      %v9798 = vunpack.c.l.b16 %v9732
      %v9799 = vunpack.c.l.b16 %v9733
      %v9800 = vunpack.c.l.b16 %v9734
      %v9801 = vunpack.c.l.b16 %v9735
      %v9802 = vunpack.c.l.b16 %v9736
      %v9803 = vunpack.c.l.b16 %v9737
      %v9804 = vunpack.c.l.b16 %v9738
      %v9805 = vunpack.c.l.b16 %v9739
      %v9806 = vunpack.c.l.b16 %v9740
      %v9807 = vunpack.c.l.b16 %v9741
      %v9808 = vunpack.c.l.b16 %v9742
      %v9809 = vpack.c.b16 %v9778, %v9777
      %v9810 = vpack.c.b16 %v9780, %v9779
      %v9811 = vpack.c.b16 %v9782, %v9781
      %v9812 = vpack.c.b16 %v9784, %v9783
      %v9813 = vpack.c.b16 %v9786, %v9785
      %v9814 = vpack.c.b16 %v9788, %v9787
      %v9815 = vpack.c.b16 %v9790, %v9789
      %v9816 = vpack.c.b16 %v9792, %v9791
      %v9817 = vpack.c.b16 %v9794, %v9793
      %v9818 = vpack.c.b16 %v9796, %v9795
      %v9819 = vpack.c.b16 %v9798, %v9797
      %v9820 = vpack.c.b16 %v9800, %v9799
      %v9821 = vpack.c.b16 %v9802, %v9801
      %v9822 = vpack.c.b16 %v9804, %v9803
      %v9823 = vpack.c.b16 %v9806, %v9805
      %v9824 = vpack.c.b16 %v9808, %v9807
      %v9826 = vsel %vm1540, %v9809, 0
      %v9829 = vsel %vm1540, %v9810, 0
      %v9832 = vsel %vm1540, %v9811, 0
      %v9835 = vsel %vm1540, %v9812, 0
      %v9838 = vsel %vm1540, %v9813, 0
      %v9841 = vsel %vm1540, %v9814, 0
      %v9844 = vsel %vm1540, %v9815, 0
      %v9847 = vsel %vm1540, %v9816, 0
      %v9850 = vsel %vm1540, %v9817, 0
      %v9853 = vsel %vm1540, %v9818, 0
      %v9856 = vsel %vm1540, %v9819, 0
      %v9859 = vsel %vm1540, %v9820, 0
      %v9862 = vsel %vm1540, %v9821, 0
      %v9865 = vsel %vm1540, %v9822, 0
      %v9868 = vsel %vm1540, %v9823, 0
      %v9871 = vsel %vm1540, %v9824, 0
      %v9874 = vsel %vm1589, %v9744, 0
      %9876 = vmatprep.subr.bf16.mxu0 0
      %9877 = vmatpush1.bf16.msra.mxu0 %v9874
      %9878 = vmatprep.subr.bf16.mxu0 0
      %9879 = vmatpush1.bf16.msra.mxu0 0
      %9880 = vmatprep.subr.bf16.mxu0 0
      %9881 = vmatpush1.bf16.msra.mxu0 0
      %9882 = vmatprep.subr.bf16.mxu0 0
      %9883 = vmatpush1.bf16.msra.mxu0 0
      %9884 = vmatprep.subr.bf16.mxu0 0
      %9885 = vmatpush1.bf16.msra.mxu0 0
      %9886 = vmatprep.subr.bf16.mxu0 0
      %9887 = vmatpush1.bf16.msra.mxu0 0
      %9888 = vmatprep.subr.bf16.mxu0 0
      %9889 = vmatpush1.bf16.msra.mxu0 0
      %9890 = vmatprep.subr.bf16.mxu0 0
      %9891 = vmatpush1.bf16.msra.mxu0 0
      %9892 = vmatprep.subr.bf16.mxu0 0
      %9893 = vmatpush1.bf16.msra.mxu0 0
      %9894 = vmatprep.subr.bf16.mxu0 0
      %9895 = vmatpush1.bf16.msra.mxu0 0
      %9896 = vmatprep.subr.bf16.mxu0 0
      %9897 = vmatpush1.bf16.msra.mxu0 0
      %9898 = vmatprep.subr.bf16.mxu0 0
      %9899 = vmatpush1.bf16.msra.mxu0 0
      %9900 = vmatprep.subr.bf16.mxu0 0
      %9901 = vmatpush1.bf16.msra.mxu0 0
      %9902 = vmatprep.subr.bf16.mxu0 0
      %9903 = vmatpush1.bf16.msra.mxu0 0
      %9904 = vmatprep.subr.bf16.mxu0 0
      %9905 = vmatpush1.bf16.msra.mxu0 0
      %9906 = vmatprep.subr.bf16.mxu0 0
      %9907 = vmatpush1.bf16.msra.mxu0 0
      %9908 = vmatprep.mubr.bf16.mxu0 0
      %9909 = vmatmul.mubr.bf16.gmra.mrb[0].mxu0 %v9826
      %v9910 = vpop.f32.mrb[0].mxu0
      %v9911 = vadd.f32 0.0, %v9910
      %v9912 = vpop.f32.mrb[0].mxu0
      %v9913 = vpop.f32.mrb[0].mxu0
      %v9914 = vadd.f32 0.0, %v9913
      %v9915 = vpop.f32.mrb[0].mxu0
      %9916 = vmatprep.mubr.bf16.mxu0 0
      %9917 = vmatmul.mubr.bf16.gmra.mrb[0].mxu0 %v9829
      %v9918 = vpop.f32.mrb[0].mxu0
      %v9919 = vadd.f32 0.0, %v9918
      %v9920 = vpop.f32.mrb[0].mxu0
      %v9921 = vpop.f32.mrb[0].mxu0
      %v9922 = vadd.f32 0.0, %v9921
      %v9923 = vpop.f32.mrb[0].mxu0
      %9924 = vmatprep.mubr.bf16.mxu0 0
      %9925 = vmatmul.mubr.bf16.gmra.mrb[0].mxu0 %v9832
      %v9926 = vpop.f32.mrb[0].mxu0
      %v9927 = vadd.f32 0.0, %v9926
      %v9928 = vpop.f32.mrb[0].mxu0
      %v9929 = vpop.f32.mrb[0].mxu0
      %v9930 = vadd.f32 0.0, %v9929
      %v9931 = vpop.f32.mrb[0].mxu0
      %9932 = vmatprep.mubr.bf16.mxu0 0
      %9933 = vmatmul.mubr.bf16.gmra.mrb[0].mxu0 %v9835
      %v9934 = vpop.f32.mrb[0].mxu0
      %v9935 = vadd.f32 0.0, %v9934
      %v9936 = vpop.f32.mrb[0].mxu0
      %v9937 = vpop.f32.mrb[0].mxu0
      %v9938 = vadd.f32 0.0, %v9937
      %v9939 = vpop.f32.mrb[0].mxu0
      %9940 = vmatprep.mubr.bf16.mxu0 0
      %9941 = vmatmul.mubr.bf16.gmra.mrb[0].mxu0 %v9838
      %v9942 = vpop.f32.mrb[0].mxu0
      %v9943 = vadd.f32 0.0, %v9942
      %v9944 = vpop.f32.mrb[0].mxu0
      %v9945 = vpop.f32.mrb[0].mxu0
      %v9946 = vadd.f32 0.0, %v9945
      %v9947 = vpop.f32.mrb[0].mxu0
      %9948 = vmatprep.mubr.bf16.mxu0 0
      %9949 = vmatmul.mubr.bf16.gmra.mrb[0].mxu0 %v9841
      %v9950 = vpop.f32.mrb[0].mxu0
      %v9951 = vadd.f32 0.0, %v9950
      %v9952 = vpop.f32.mrb[0].mxu0
      %v9953 = vpop.f32.mrb[0].mxu0
      %v9954 = vadd.f32 0.0, %v9953
      %v9955 = vpop.f32.mrb[0].mxu0
      %9956 = vmatprep.mubr.bf16.mxu0 0
      %9957 = vmatmul.mubr.bf16.gmra.mrb[0].mxu0 %v9844
      %v9958 = vpop.f32.mrb[0].mxu0
      %v9959 = vadd.f32 0.0, %v9958
      %v9960 = vpop.f32.mrb[0].mxu0
      %v9961 = vpop.f32.mrb[0].mxu0
      %v9962 = vadd.f32 0.0, %v9961
      %v9963 = vpop.f32.mrb[0].mxu0
      %9964 = vmatprep.mubr.bf16.mxu0 0
      %9965 = vmatmul.mubr.bf16.gmra.mrb[0].mxu0 %v9847
      %v9966 = vpop.f32.mrb[0].mxu0
      %v9967 = vadd.f32 0.0, %v9966
      %v9968 = vpop.f32.mrb[0].mxu0
      %v9969 = vpop.f32.mrb[0].mxu0
      %v9970 = vadd.f32 0.0, %v9969
      %v9971 = vpop.f32.mrb[0].mxu0
      %9972 = vmatprep.mubr.bf16.mxu0 0
      %9973 = vmatmul.mubr.bf16.gmra.mrb[0].mxu0 %v9850
      %v9974 = vpop.f32.mrb[0].mxu0
      %v9975 = vadd.f32 0.0, %v9974
      %v9976 = vpop.f32.mrb[0].mxu0
      %v9977 = vpop.f32.mrb[0].mxu0
      %v9978 = vadd.f32 0.0, %v9977
      %v9979 = vpop.f32.mrb[0].mxu0
      %9980 = vmatprep.mubr.bf16.mxu0 0
      %9981 = vmatmul.mubr.bf16.gmra.mrb[0].mxu0 %v9853
      %v9982 = vpop.f32.mrb[0].mxu0
      %v9983 = vadd.f32 0.0, %v9982
      %v9984 = vpop.f32.mrb[0].mxu0
      %v9985 = vpop.f32.mrb[0].mxu0
      %v9986 = vadd.f32 0.0, %v9985
      %v9987 = vpop.f32.mrb[0].mxu0
      %9988 = vmatprep.mubr.bf16.mxu0 0
      %9989 = vmatmul.mubr.bf16.gmra.mrb[0].mxu0 %v9856
      %v9990 = vpop.f32.mrb[0].mxu0
      %v9991 = vadd.f32 0.0, %v9990
      %v9992 = vpop.f32.mrb[0].mxu0
      %v9993 = vpop.f32.mrb[0].mxu0
      %v9994 = vadd.f32 0.0, %v9993
      %v9995 = vpop.f32.mrb[0].mxu0
      %9996 = vmatprep.mubr.bf16.mxu0 0
      %9997 = vmatmul.mubr.bf16.gmra.mrb[0].mxu0 %v9859
      %v9998 = vpop.f32.mrb[0].mxu0
      %v9999 = vadd.f32 0.0, %v9998
      %v10000 = vpop.f32.mrb[0].mxu0
      %v10001 = vpop.f32.mrb[0].mxu0
      %v10002 = vadd.f32 0.0, %v10001
      %v10003 = vpop.f32.mrb[0].mxu0
      %10004 = vmatprep.mubr.bf16.mxu0 0
      %10005 = vmatmul.mubr.bf16.gmra.mrb[0].mxu0 %v9862
      %v10006 = vpop.f32.mrb[0].mxu0
      %v10007 = vadd.f32 0.0, %v10006
      %v10008 = vpop.f32.mrb[0].mxu0
      %v10009 = vpop.f32.mrb[0].mxu0
      %v10010 = vadd.f32 0.0, %v10009
      %v10011 = vpop.f32.mrb[0].mxu0
      %10012 = vmatprep.mubr.bf16.mxu0 0
      %10013 = vmatmul.mubr.bf16.gmra.mrb[0].mxu0 %v9865
      %v10014 = vpop.f32.mrb[0].mxu0
      %v10015 = vadd.f32 0.0, %v10014
      %v10016 = vpop.f32.mrb[0].mxu0
      %v10017 = vpop.f32.mrb[0].mxu0
      %v10018 = vadd.f32 0.0, %v10017
      %v10019 = vpop.f32.mrb[0].mxu0
      %10020 = vmatprep.mubr.bf16.mxu0 0
      %10021 = vmatmul.mubr.bf16.gmra.mrb[0].mxu0 %v9868
      %v10022 = vpop.f32.mrb[0].mxu0
      %v10023 = vadd.f32 0.0, %v10022
      %v10024 = vpop.f32.mrb[0].mxu0
      %v10025 = vpop.f32.mrb[0].mxu0
      %v10026 = vadd.f32 0.0, %v10025
      %v10027 = vpop.f32.mrb[0].mxu0
      %10028 = vmatprep.mubr.bf16.mxu0 0
      %10029 = vmatmul.mubr.bf16.gmra.mrb[0].mxu0 %v9871
      %v10030 = vpop.f32.mrb[0].mxu0
      %v10031 = vadd.f32 0.0, %v10030
      %v10032 = vpop.f32.mrb[0].mxu0
      %v10033 = vpop.f32.mrb[0].mxu0
      %v10034 = vadd.f32 0.0, %v10033
      %v10035 = vpop.f32.mrb[0].mxu0
      %10036 = vdwg.mxu0
      %v10037 = vadd.f32 %v9679, %v9911
      %v10038 = vadd.f32 %v9680, %v9914
      %v10039 = vadd.f32 %v9681, %v9919
      %v10040 = vadd.f32 %v9682, %v9922
      %v10041 = vadd.f32 %v9683, %v9927
      %v10042 = vadd.f32 %v9684, %v9930
      %v10043 = vadd.f32 %v9685, %v9935
      %v10044 = vadd.f32 %v9686, %v9938
      %v10045 = vadd.f32 %v9687, %v9943
      %v10046 = vadd.f32 %v9688, %v9946
      %v10047 = vadd.f32 %v9689, %v9951
      %v10048 = vadd.f32 %v9690, %v9954
      %v10049 = vadd.f32 %v9691, %v9959
      %v10050 = vadd.f32 %v9692, %v9962
      %v10051 = vadd.f32 %v9693, %v9967
      %v10052 = vadd.f32 %v9694, %v9970
      %v10053 = vadd.f32 %v9695, %v9975
      %v10054 = vadd.f32 %v9696, %v9978
      %v10055 = vadd.f32 %v9697, %v9983
      %v10056 = vadd.f32 %v9698, %v9986
      %v10057 = vadd.f32 %v9699, %v9991
      %v10058 = vadd.f32 %v9700, %v9994
      %v10059 = vadd.f32 %v9701, %v9999
      %v10060 = vadd.f32 %v9702, %v10002
      %v10061 = vadd.f32 %v9703, %v10007
      %v10062 = vadd.f32 %v9704, %v10010
      %v10063 = vadd.f32 %v9705, %v10015
      %v10064 = vadd.f32 %v9706, %v10018
      %v10065 = vadd.f32 %v9707, %v10023
      %v10066 = vadd.f32 %v9708, %v10026
      %v10067 = vadd.f32 %v9709, %v10031
      %v10068 = vadd.f32 %v9710, %v10034
      %v10069 = vld [vmem:[%s742] sm:$0xf]
      %v10070 = vld [vmem:[%s742 + $0x4] sm:$0xf]
      %v10071 = vld [vmem:[%s742 + $0x8] sm:$0x1]
      %v10072 = vld [vmem:[%s742 + $0xc] sm:$0xf]
      %v10073 = vld [vmem:[%s742 + $0x10] sm:$0xf]
      %v10074 = vld [vmem:[%s742 + $0x14] sm:$0x1]
      %v10075 = vld [vmem:[%s742 + $0x18] sm:$0xf]
      %v10076 = vld [vmem:[%s742 + $0x1c] sm:$0xf]
      %v10077 = vld [vmem:[%s742 + $0x20] sm:$0x1]
      %v10078 = vld [vmem:[%s742 + $0x24] sm:$0xf]
      %v10079 = vld [vmem:[%s742 + $0x28] sm:$0xf]
      %v10080 = vld [vmem:[%s742 + $0x2c] sm:$0x1]
      %v10081 = vld [vmem:[%s742 + $0x30] sm:$0xf]
      %v10082 = vld [vmem:[%s742 + $0x34] sm:$0xf]
      %v10083 = vld [vmem:[%s742 + $0x38] sm:$0x1]
      %v10084 = vld [vmem:[%s742 + $0x3c] sm:$0xf]
      %v10085 = vld [vmem:[%s742 + $0x40] sm:$0xf]
      %v10086 = vld [vmem:[%s742 + $0x44] sm:$0x1]
      %v10087 = vld [vmem:[%s742 + $0x48] sm:$0xf]
      %v10088 = vld [vmem:[%s742 + $0x4c] sm:$0xf]
      %v10089 = vld [vmem:[%s742 + $0x50] sm:$0x1]
      %v10090 = vld [vmem:[%s742 + $0x54] sm:$0xf]
      %v10091 = vld [vmem:[%s742 + $0x58] sm:$0xf]
      %v10092 = vld [vmem:[%s742 + $0x5c] sm:$0x1]
      %v10093 = vld [vmem:[%s742 + $0x60] sm:$0xf]
      %v10094 = vld [vmem:[%s742 + $0x64] sm:$0xf]
      %v10095 = vld [vmem:[%s742 + $0x68] sm:$0x1]
      %v10096 = vld [vmem:[%s742 + $0x6c] sm:$0xf]
      %v10097 = vld [vmem:[%s742 + $0x70] sm:$0xf]
      %v10098 = vld [vmem:[%s742 + $0x74] sm:$0x1]
      %v10099 = vld [vmem:[%s742 + $0x78] sm:$0xf]
      %v10100 = vld [vmem:[%s742 + $0x7c] sm:$0xf]
      %v10101 = vld [vmem:[%s742 + $0x80] sm:$0x1]
      %v10102 = vld [vmem:[%s742 + $0x84] sm:$0xf]
      %v10103 = vld [vmem:[%s742 + $0x88] sm:$0xf]
      %v10104 = vld [vmem:[%s742 + $0x8c] sm:$0x1]
      %v10105 = vld [vmem:[%s742 + $0x90] sm:$0xf]
      %v10106 = vld [vmem:[%s742 + $0x94] sm:$0xf]
      %v10107 = vld [vmem:[%s742 + $0x98] sm:$0x1]
      %v10108 = vld [vmem:[%s742 + $0x9c] sm:$0xf]
      %v10109 = vld [vmem:[%s742 + $0xa0] sm:$0xf]
      %v10110 = vld [vmem:[%s742 + $0xa4] sm:$0x1]
      %v10111 = vld [vmem:[%s742 + $0xa8] sm:$0xf]
      %v10112 = vld [vmem:[%s742 + $0xac] sm:$0xf]
      %v10113 = vld [vmem:[%s742 + $0xb0] sm:$0x1]
      %v10114 = vld [vmem:[%s742 + $0xb4] sm:$0xf]
      %v10115 = vld [vmem:[%s742 + $0xb8] sm:$0xf]
      %v10116 = vld [vmem:[%s742 + $0xbc] sm:$0x1]
      %v10118 = vshrl.u32 %v10069, 16
      %v10120 = vrot.slane %v10118, 4
      %v10121 = vshll.u32 %v10069, 16
      %v10123 = vrot.slane %v10121, 5
      %v10124 = vor.u32 %v10120, %v10123
      %v10125 = vrot.slane %v10124, 4
      %v10127 = vshll.u32 %v10070, 16
      %v10129 = vrot.slane %v10127, 5
      %v10130 = vsel %vm1105, %v10125, %v10129
      %v10131 = vshrl.u32 %v10070, 16
      %v10133 = vrot.slane %v10131, 4
      %v10134 = vor.u32 %v10133, %v10129
      %v10135 = vrot.slane %v10134, 4
      %v10137 = vshll.u32 %v10071, 16
      %v10139 = vrot.slane %v10137, 5
      %v10140 = vsel %vm1105, %v10135, %v10139
      %v10142 = vshrl.u32 %v10072, 16
      %v10144 = vrot.slane %v10142, 4
      %v10145 = vshll.u32 %v10072, 16
      %v10147 = vrot.slane %v10145, 5
      %v10148 = vor.u32 %v10144, %v10147
      %v10149 = vrot.slane %v10148, 4
      %v10151 = vshll.u32 %v10073, 16
      %v10153 = vrot.slane %v10151, 5
      %v10154 = vsel %vm1105, %v10149, %v10153
      %v10155 = vshrl.u32 %v10073, 16
      %v10157 = vrot.slane %v10155, 4
      %v10158 = vor.u32 %v10157, %v10153
      %v10159 = vrot.slane %v10158, 4
      %v10161 = vshll.u32 %v10074, 16
      %v10163 = vrot.slane %v10161, 5
      %v10164 = vsel %vm1105, %v10159, %v10163
      %v10166 = vshrl.u32 %v10075, 16
      %v10168 = vrot.slane %v10166, 4
      %v10169 = vshll.u32 %v10075, 16
      %v10171 = vrot.slane %v10169, 5
      %v10172 = vor.u32 %v10168, %v10171
      %v10173 = vrot.slane %v10172, 4
      %v10175 = vshll.u32 %v10076, 16
      %v10177 = vrot.slane %v10175, 5
      %v10178 = vsel %vm1105, %v10173, %v10177
      %v10179 = vshrl.u32 %v10076, 16
      %v10181 = vrot.slane %v10179, 4
      %v10182 = vor.u32 %v10181, %v10177
      %v10183 = vrot.slane %v10182, 4
      %v10185 = vshll.u32 %v10077, 16
      %v10187 = vrot.slane %v10185, 5
      %v10188 = vsel %vm1105, %v10183, %v10187
      %v10190 = vshrl.u32 %v10078, 16
      %v10192 = vrot.slane %v10190, 4
      %v10193 = vshll.u32 %v10078, 16
      %v10195 = vrot.slane %v10193, 5
      %v10196 = vor.u32 %v10192, %v10195
      %v10197 = vrot.slane %v10196, 4
      %v10199 = vshll.u32 %v10079, 16
      %v10201 = vrot.slane %v10199, 5
      %v10202 = vsel %vm1105, %v10197, %v10201
      %v10203 = vshrl.u32 %v10079, 16
      %v10205 = vrot.slane %v10203, 4
      %v10206 = vor.u32 %v10205, %v10201
      %v10207 = vrot.slane %v10206, 4
      %v10209 = vshll.u32 %v10080, 16
      %v10211 = vrot.slane %v10209, 5
      %v10212 = vsel %vm1105, %v10207, %v10211
      %v10214 = vshrl.u32 %v10081, 16
      %v10216 = vrot.slane %v10214, 4
      %v10217 = vshll.u32 %v10081, 16
      %v10219 = vrot.slane %v10217, 5
      %v10220 = vor.u32 %v10216, %v10219
      %v10221 = vrot.slane %v10220, 4
      %v10223 = vshll.u32 %v10082, 16
      %v10225 = vrot.slane %v10223, 5
      %v10226 = vsel %vm1105, %v10221, %v10225
      %v10227 = vshrl.u32 %v10082, 16
      %v10229 = vrot.slane %v10227, 4
      %v10230 = vor.u32 %v10229, %v10225
      %v10231 = vrot.slane %v10230, 4
      %v10233 = vshll.u32 %v10083, 16
      %v10235 = vrot.slane %v10233, 5
      %v10236 = vsel %vm1105, %v10231, %v10235
      %v10238 = vshrl.u32 %v10084, 16
      %v10240 = vrot.slane %v10238, 4
      %v10241 = vshll.u32 %v10084, 16
      %v10243 = vrot.slane %v10241, 5
      %v10244 = vor.u32 %v10240, %v10243
      %v10245 = vrot.slane %v10244, 4
      %v10247 = vshll.u32 %v10085, 16
      %v10249 = vrot.slane %v10247, 5
      %v10250 = vsel %vm1105, %v10245, %v10249
      %v10251 = vshrl.u32 %v10085, 16
      %v10253 = vrot.slane %v10251, 4
      %v10254 = vor.u32 %v10253, %v10249
      %v10255 = vrot.slane %v10254, 4
      %v10257 = vshll.u32 %v10086, 16
      %v10259 = vrot.slane %v10257, 5
      %v10260 = vsel %vm1105, %v10255, %v10259
      %v10262 = vshrl.u32 %v10087, 16
      %v10264 = vrot.slane %v10262, 4
      %v10265 = vshll.u32 %v10087, 16
      %v10267 = vrot.slane %v10265, 5
      %v10268 = vor.u32 %v10264, %v10267
      %v10269 = vrot.slane %v10268, 4
      %v10271 = vshll.u32 %v10088, 16
      %v10273 = vrot.slane %v10271, 5
      %v10274 = vsel %vm1105, %v10269, %v10273
      %v10275 = vshrl.u32 %v10088, 16
      %v10277 = vrot.slane %v10275, 4
      %v10278 = vor.u32 %v10277, %v10273
      %v10279 = vrot.slane %v10278, 4
      %v10281 = vshll.u32 %v10089, 16
      %v10283 = vrot.slane %v10281, 5
      %v10284 = vsel %vm1105, %v10279, %v10283
      %v10286 = vshrl.u32 %v10090, 16
      %v10288 = vrot.slane %v10286, 4
      %v10289 = vshll.u32 %v10090, 16
      %v10291 = vrot.slane %v10289, 5
      %v10292 = vor.u32 %v10288, %v10291
      %v10293 = vrot.slane %v10292, 4
      %v10295 = vshll.u32 %v10091, 16
      %v10297 = vrot.slane %v10295, 5
      %v10298 = vsel %vm1105, %v10293, %v10297
      %v10299 = vshrl.u32 %v10091, 16
      %v10301 = vrot.slane %v10299, 4
      %v10302 = vor.u32 %v10301, %v10297
      %v10303 = vrot.slane %v10302, 4
      %v10305 = vshll.u32 %v10092, 16
      %v10307 = vrot.slane %v10305, 5
      %v10308 = vsel %vm1105, %v10303, %v10307
      %v10310 = vshrl.u32 %v10093, 16
      %v10312 = vrot.slane %v10310, 4
      %v10313 = vshll.u32 %v10093, 16
      %v10315 = vrot.slane %v10313, 5
      %v10316 = vor.u32 %v10312, %v10315
      %v10317 = vrot.slane %v10316, 4
      %v10319 = vshll.u32 %v10094, 16
      %v10321 = vrot.slane %v10319, 5
      %v10322 = vsel %vm1105, %v10317, %v10321
      %v10323 = vshrl.u32 %v10094, 16
      %v10325 = vrot.slane %v10323, 4
      %v10326 = vor.u32 %v10325, %v10321
      %v10327 = vrot.slane %v10326, 4
      %v10329 = vshll.u32 %v10095, 16
      %v10331 = vrot.slane %v10329, 5
      %v10332 = vsel %vm1105, %v10327, %v10331
      %v10334 = vshrl.u32 %v10096, 16
      %v10336 = vrot.slane %v10334, 4
      %v10337 = vshll.u32 %v10096, 16
      %v10339 = vrot.slane %v10337, 5
      %v10340 = vor.u32 %v10336, %v10339
      %v10341 = vrot.slane %v10340, 4
      %v10343 = vshll.u32 %v10097, 16
      %v10345 = vrot.slane %v10343, 5
      %v10346 = vsel %vm1105, %v10341, %v10345
      %v10347 = vshrl.u32 %v10097, 16
      %v10349 = vrot.slane %v10347, 4
      %v10350 = vor.u32 %v10349, %v10345
      %v10351 = vrot.slane %v10350, 4
      %v10353 = vshll.u32 %v10098, 16
      %v10355 = vrot.slane %v10353, 5
      %v10356 = vsel %vm1105, %v10351, %v10355
      %v10358 = vshrl.u32 %v10099, 16
      %v10360 = vrot.slane %v10358, 4
      %v10361 = vshll.u32 %v10099, 16
      %v10363 = vrot.slane %v10361, 5
      %v10364 = vor.u32 %v10360, %v10363
      %v10365 = vrot.slane %v10364, 4
      %v10367 = vshll.u32 %v10100, 16
      %v10369 = vrot.slane %v10367, 5
      %v10370 = vsel %vm1105, %v10365, %v10369
      %v10371 = vshrl.u32 %v10100, 16
      %v10373 = vrot.slane %v10371, 4
      %v10374 = vor.u32 %v10373, %v10369
      %v10375 = vrot.slane %v10374, 4
      %v10377 = vshll.u32 %v10101, 16
      %v10379 = vrot.slane %v10377, 5
      %v10380 = vsel %vm1105, %v10375, %v10379
      %v10382 = vshrl.u32 %v10102, 16
      %v10384 = vrot.slane %v10382, 4
      %v10385 = vshll.u32 %v10102, 16
      %v10387 = vrot.slane %v10385, 5
      %v10388 = vor.u32 %v10384, %v10387
      %v10389 = vrot.slane %v10388, 4
      %v10391 = vshll.u32 %v10103, 16
      %v10393 = vrot.slane %v10391, 5
      %v10394 = vsel %vm1105, %v10389, %v10393
      %v10395 = vshrl.u32 %v10103, 16
      %v10397 = vrot.slane %v10395, 4
      %v10398 = vor.u32 %v10397, %v10393
      %v10399 = vrot.slane %v10398, 4
      %v10401 = vshll.u32 %v10104, 16
      %v10403 = vrot.slane %v10401, 5
      %v10404 = vsel %vm1105, %v10399, %v10403
      %v10406 = vshrl.u32 %v10105, 16
      %v10408 = vrot.slane %v10406, 4
      %v10409 = vshll.u32 %v10105, 16
      %v10411 = vrot.slane %v10409, 5
      %v10412 = vor.u32 %v10408, %v10411
      %v10413 = vrot.slane %v10412, 4
      %v10415 = vshll.u32 %v10106, 16
      %v10417 = vrot.slane %v10415, 5
      %v10418 = vsel %vm1105, %v10413, %v10417
      %v10419 = vshrl.u32 %v10106, 16
      %v10421 = vrot.slane %v10419, 4
      %v10422 = vor.u32 %v10421, %v10417
      %v10423 = vrot.slane %v10422, 4
      %v10425 = vshll.u32 %v10107, 16
      %v10427 = vrot.slane %v10425, 5
      %v10428 = vsel %vm1105, %v10423, %v10427
      %v10430 = vshrl.u32 %v10108, 16
      %v10432 = vrot.slane %v10430, 4
      %v10433 = vshll.u32 %v10108, 16
      %v10435 = vrot.slane %v10433, 5
      %v10436 = vor.u32 %v10432, %v10435
      %v10437 = vrot.slane %v10436, 4
      %v10439 = vshll.u32 %v10109, 16
      %v10441 = vrot.slane %v10439, 5
      %v10442 = vsel %vm1105, %v10437, %v10441
      %v10443 = vshrl.u32 %v10109, 16
      %v10445 = vrot.slane %v10443, 4
      %v10446 = vor.u32 %v10445, %v10441
      %v10447 = vrot.slane %v10446, 4
      %v10449 = vshll.u32 %v10110, 16
      %v10451 = vrot.slane %v10449, 5
      %v10452 = vsel %vm1105, %v10447, %v10451
      %v10454 = vshrl.u32 %v10111, 16
      %v10456 = vrot.slane %v10454, 4
      %v10457 = vshll.u32 %v10111, 16
      %v10459 = vrot.slane %v10457, 5
      %v10460 = vor.u32 %v10456, %v10459
      %v10461 = vrot.slane %v10460, 4
      %v10463 = vshll.u32 %v10112, 16
      %v10465 = vrot.slane %v10463, 5
      %v10466 = vsel %vm1105, %v10461, %v10465
      %v10467 = vshrl.u32 %v10112, 16
      %v10469 = vrot.slane %v10467, 4
      %v10470 = vor.u32 %v10469, %v10465
      %v10471 = vrot.slane %v10470, 4
      %v10473 = vshll.u32 %v10113, 16
      %v10475 = vrot.slane %v10473, 5
      %v10476 = vsel %vm1105, %v10471, %v10475
      %v10478 = vshrl.u32 %v10114, 16
      %v10480 = vrot.slane %v10478, 4
      %v10481 = vshll.u32 %v10114, 16
      %v10483 = vrot.slane %v10481, 5
      %v10484 = vor.u32 %v10480, %v10483
      %v10485 = vrot.slane %v10484, 4
      %v10487 = vshll.u32 %v10115, 16
      %v10489 = vrot.slane %v10487, 5
      %v10490 = vsel %vm1105, %v10485, %v10489
      %v10491 = vshrl.u32 %v10115, 16
      %v10493 = vrot.slane %v10491, 4
      %v10494 = vor.u32 %v10493, %v10489
      %v10495 = vrot.slane %v10494, 4
      %v10497 = vshll.u32 %v10116, 16
      %v10499 = vrot.slane %v10497, 5
      %v10500 = vsel %vm1105, %v10495, %v10499
      %s10501 = scalar_lea.vmem %s2, 14
      %v10502 = vld [vmem:[%s10501] sm:$0x3]
      %v10503 = vunpack.c.l.b16 %v10130
      %v10504 = vunpack.c.l.b16 %v10140
      %v10505 = vunpack.c.l.b16 %v10154
      %v10506 = vunpack.c.l.b16 %v10164
      %v10507 = vunpack.c.l.b16 %v10178
      %v10508 = vunpack.c.l.b16 %v10188
      %v10509 = vunpack.c.l.b16 %v10202
      %v10510 = vunpack.c.l.b16 %v10212
      %v10511 = vunpack.c.l.b16 %v10226
      %v10512 = vunpack.c.l.b16 %v10236
      %v10513 = vunpack.c.l.b16 %v10250
      %v10514 = vunpack.c.l.b16 %v10260
      %v10515 = vunpack.c.l.b16 %v10274
      %v10516 = vunpack.c.l.b16 %v10284
      %v10517 = vunpack.c.l.b16 %v10298
      %v10518 = vunpack.c.l.b16 %v10308
      %v10519 = vunpack.c.l.b16 %v10322
      %v10520 = vunpack.c.l.b16 %v10332
      %v10521 = vunpack.c.l.b16 %v10346
      %v10522 = vunpack.c.l.b16 %v10356
      %v10523 = vunpack.c.l.b16 %v10370
      %v10524 = vunpack.c.l.b16 %v10380
      %v10525 = vunpack.c.l.b16 %v10394
      %v10526 = vunpack.c.l.b16 %v10404
      %v10527 = vunpack.c.l.b16 %v10418
      %v10528 = vunpack.c.l.b16 %v10428
      %v10529 = vunpack.c.l.b16 %v10442
      %v10530 = vunpack.c.l.b16 %v10452
      %v10531 = vunpack.c.l.b16 %v10466
      %v10532 = vunpack.c.l.b16 %v10476
      %v10533 = vunpack.c.l.b16 %v10490
      %v10534 = vunpack.c.l.b16 %v10500
      %v10535 = vpack.c.b16 %v10504, %v10503
      %v10536 = vpack.c.b16 %v10506, %v10505
      %v10537 = vpack.c.b16 %v10508, %v10507
      %v10538 = vpack.c.b16 %v10510, %v10509
      %v10539 = vpack.c.b16 %v10512, %v10511
      %v10540 = vpack.c.b16 %v10514, %v10513
      %v10541 = vpack.c.b16 %v10516, %v10515
      %v10542 = vpack.c.b16 %v10518, %v10517
      %v10543 = vpack.c.b16 %v10520, %v10519
      %v10544 = vpack.c.b16 %v10522, %v10521
      %v10545 = vpack.c.b16 %v10524, %v10523
      %v10546 = vpack.c.b16 %v10526, %v10525
      %v10547 = vpack.c.b16 %v10528, %v10527
      %v10548 = vpack.c.b16 %v10530, %v10529
      %v10549 = vpack.c.b16 %v10532, %v10531
      %v10550 = vpack.c.b16 %v10534, %v10533
      %v10552 = vsel %vm1540, %v10535, 0
      %v10555 = vsel %vm1540, %v10536, 0
      %v10558 = vsel %vm1540, %v10537, 0
      %v10561 = vsel %vm1540, %v10538, 0
      %v10564 = vsel %vm1540, %v10539, 0
      %v10567 = vsel %vm1540, %v10540, 0
      %v10570 = vsel %vm1540, %v10541, 0
      %v10573 = vsel %vm1540, %v10542, 0
      %v10576 = vsel %vm1540, %v10543, 0
      %v10579 = vsel %vm1540, %v10544, 0
      %v10582 = vsel %vm1540, %v10545, 0
      %v10585 = vsel %vm1540, %v10546, 0
      %v10588 = vsel %vm1540, %v10547, 0
      %v10591 = vsel %vm1540, %v10548, 0
      %v10594 = vsel %vm1540, %v10549, 0
      %v10597 = vsel %vm1540, %v10550, 0
      %v10600 = vsel %vm1589, %v10502, 0
      %10602 = vmatprep.subr.bf16.mxu0 0
      %10603 = vmatpush1.bf16.msra.mxu0 %v10600
      %10604 = vmatprep.subr.bf16.mxu0 0
      %10605 = vmatpush1.bf16.msra.mxu0 0
      %10606 = vmatprep.subr.bf16.mxu0 0
      %10607 = vmatpush1.bf16.msra.mxu0 0
      %10608 = vmatprep.subr.bf16.mxu0 0
      %10609 = vmatpush1.bf16.msra.mxu0 0
      %10610 = vmatprep.subr.bf16.mxu0 0
      %10611 = vmatpush1.bf16.msra.mxu0 0
      %10612 = vmatprep.subr.bf16.mxu0 0
      %10613 = vmatpush1.bf16.msra.mxu0 0
      %10614 = vmatprep.subr.bf16.mxu0 0
      %10615 = vmatpush1.bf16.msra.mxu0 0
      %10616 = vmatprep.subr.bf16.mxu0 0
      %10617 = vmatpush1.bf16.msra.mxu0 0
      %10618 = vmatprep.subr.bf16.mxu0 0
      %10619 = vmatpush1.bf16.msra.mxu0 0
      %10620 = vmatprep.subr.bf16.mxu0 0
      %10621 = vmatpush1.bf16.msra.mxu0 0
      %10622 = vmatprep.subr.bf16.mxu0 0
      %10623 = vmatpush1.bf16.msra.mxu0 0
      %10624 = vmatprep.subr.bf16.mxu0 0
      %10625 = vmatpush1.bf16.msra.mxu0 0
      %10626 = vmatprep.subr.bf16.mxu0 0
      %10627 = vmatpush1.bf16.msra.mxu0 0
      %10628 = vmatprep.subr.bf16.mxu0 0
      %10629 = vmatpush1.bf16.msra.mxu0 0
      %10630 = vmatprep.subr.bf16.mxu0 0
      %10631 = vmatpush1.bf16.msra.mxu0 0
      %10632 = vmatprep.subr.bf16.mxu0 0
      %10633 = vmatpush1.bf16.msra.mxu0 0
      %10634 = vmatprep.mubr.bf16.mxu0 0
      %10635 = vmatmul.mubr.bf16.gmra.mrb[0].mxu0 %v10552
      %v10636 = vpop.f32.mrb[0].mxu0
      %v10637 = vadd.f32 0.0, %v10636
      %v10638 = vpop.f32.mrb[0].mxu0
      %v10639 = vpop.f32.mrb[0].mxu0
      %v10640 = vadd.f32 0.0, %v10639
      %v10641 = vpop.f32.mrb[0].mxu0
      %10642 = vmatprep.mubr.bf16.mxu0 0
      %10643 = vmatmul.mubr.bf16.gmra.mrb[0].mxu0 %v10555
      %v10644 = vpop.f32.mrb[0].mxu0
      %v10645 = vadd.f32 0.0, %v10644
      %v10646 = vpop.f32.mrb[0].mxu0
      %v10647 = vpop.f32.mrb[0].mxu0
      %v10648 = vadd.f32 0.0, %v10647
      %v10649 = vpop.f32.mrb[0].mxu0
      %10650 = vmatprep.mubr.bf16.mxu0 0
      %10651 = vmatmul.mubr.bf16.gmra.mrb[0].mxu0 %v10558
      %v10652 = vpop.f32.mrb[0].mxu0
      %v10653 = vadd.f32 0.0, %v10652
      %v10654 = vpop.f32.mrb[0].mxu0
      %v10655 = vpop.f32.mrb[0].mxu0
      %v10656 = vadd.f32 0.0, %v10655
      %v10657 = vpop.f32.mrb[0].mxu0
      %10658 = vmatprep.mubr.bf16.mxu0 0
      %10659 = vmatmul.mubr.bf16.gmra.mrb[0].mxu0 %v10561
      %v10660 = vpop.f32.mrb[0].mxu0
      %v10661 = vadd.f32 0.0, %v10660
      %v10662 = vpop.f32.mrb[0].mxu0
      %v10663 = vpop.f32.mrb[0].mxu0
      %v10664 = vadd.f32 0.0, %v10663
      %v10665 = vpop.f32.mrb[0].mxu0
      %10666 = vmatprep.mubr.bf16.mxu0 0
      %10667 = vmatmul.mubr.bf16.gmra.mrb[0].mxu0 %v10564
      %v10668 = vpop.f32.mrb[0].mxu0
      %v10669 = vadd.f32 0.0, %v10668
      %v10670 = vpop.f32.mrb[0].mxu0
      %v10671 = vpop.f32.mrb[0].mxu0
      %v10672 = vadd.f32 0.0, %v10671
      %v10673 = vpop.f32.mrb[0].mxu0
      %10674 = vmatprep.mubr.bf16.mxu0 0
      %10675 = vmatmul.mubr.bf16.gmra.mrb[0].mxu0 %v10567
      %v10676 = vpop.f32.mrb[0].mxu0
      %v10677 = vadd.f32 0.0, %v10676
      %v10678 = vpop.f32.mrb[0].mxu0
      %v10679 = vpop.f32.mrb[0].mxu0
      %v10680 = vadd.f32 0.0, %v10679
      %v10681 = vpop.f32.mrb[0].mxu0
      %10682 = vmatprep.mubr.bf16.mxu0 0
      %10683 = vmatmul.mubr.bf16.gmra.mrb[0].mxu0 %v10570
      %v10684 = vpop.f32.mrb[0].mxu0
      %v10685 = vadd.f32 0.0, %v10684
      %v10686 = vpop.f32.mrb[0].mxu0
      %v10687 = vpop.f32.mrb[0].mxu0
      %v10688 = vadd.f32 0.0, %v10687
      %v10689 = vpop.f32.mrb[0].mxu0
      %10690 = vmatprep.mubr.bf16.mxu0 0
      %10691 = vmatmul.mubr.bf16.gmra.mrb[0].mxu0 %v10573
      %v10692 = vpop.f32.mrb[0].mxu0
      %v10693 = vadd.f32 0.0, %v10692
      %v10694 = vpop.f32.mrb[0].mxu0
      %v10695 = vpop.f32.mrb[0].mxu0
      %v10696 = vadd.f32 0.0, %v10695
      %v10697 = vpop.f32.mrb[0].mxu0
      %10698 = vmatprep.mubr.bf16.mxu0 0
      %10699 = vmatmul.mubr.bf16.gmra.mrb[0].mxu0 %v10576
      %v10700 = vpop.f32.mrb[0].mxu0
      %v10701 = vadd.f32 0.0, %v10700
      %v10702 = vpop.f32.mrb[0].mxu0
      %v10703 = vpop.f32.mrb[0].mxu0
      %v10704 = vadd.f32 0.0, %v10703
      %v10705 = vpop.f32.mrb[0].mxu0
      %10706 = vmatprep.mubr.bf16.mxu0 0
      %10707 = vmatmul.mubr.bf16.gmra.mrb[0].mxu0 %v10579
      %v10708 = vpop.f32.mrb[0].mxu0
      %v10709 = vadd.f32 0.0, %v10708
      %v10710 = vpop.f32.mrb[0].mxu0
      %v10711 = vpop.f32.mrb[0].mxu0
      %v10712 = vadd.f32 0.0, %v10711
      %v10713 = vpop.f32.mrb[0].mxu0
      %10714 = vmatprep.mubr.bf16.mxu0 0
      %10715 = vmatmul.mubr.bf16.gmra.mrb[0].mxu0 %v10582
      %v10716 = vpop.f32.mrb[0].mxu0
      %v10717 = vadd.f32 0.0, %v10716
      %v10718 = vpop.f32.mrb[0].mxu0
      %v10719 = vpop.f32.mrb[0].mxu0
      %v10720 = vadd.f32 0.0, %v10719
      %v10721 = vpop.f32.mrb[0].mxu0
      %10722 = vmatprep.mubr.bf16.mxu0 0
      %10723 = vmatmul.mubr.bf16.gmra.mrb[0].mxu0 %v10585
      %v10724 = vpop.f32.mrb[0].mxu0
      %v10725 = vadd.f32 0.0, %v10724
      %v10726 = vpop.f32.mrb[0].mxu0
      %v10727 = vpop.f32.mrb[0].mxu0
      %v10728 = vadd.f32 0.0, %v10727
      %v10729 = vpop.f32.mrb[0].mxu0
      %10730 = vmatprep.mubr.bf16.mxu0 0
      %10731 = vmatmul.mubr.bf16.gmra.mrb[0].mxu0 %v10588
      %v10732 = vpop.f32.mrb[0].mxu0
      %v10733 = vadd.f32 0.0, %v10732
      %v10734 = vpop.f32.mrb[0].mxu0
      %v10735 = vpop.f32.mrb[0].mxu0
      %v10736 = vadd.f32 0.0, %v10735
      %v10737 = vpop.f32.mrb[0].mxu0
      %10738 = vmatprep.mubr.bf16.mxu0 0
      %10739 = vmatmul.mubr.bf16.gmra.mrb[0].mxu0 %v10591
      %v10740 = vpop.f32.mrb[0].mxu0
      %v10741 = vadd.f32 0.0, %v10740
      %v10742 = vpop.f32.mrb[0].mxu0
      %v10743 = vpop.f32.mrb[0].mxu0
      %v10744 = vadd.f32 0.0, %v10743
      %v10745 = vpop.f32.mrb[0].mxu0
      %10746 = vmatprep.mubr.bf16.mxu0 0
      %10747 = vmatmul.mubr.bf16.gmra.mrb[0].mxu0 %v10594
      %v10748 = vpop.f32.mrb[0].mxu0
      %v10749 = vadd.f32 0.0, %v10748
      %v10750 = vpop.f32.mrb[0].mxu0
      %v10751 = vpop.f32.mrb[0].mxu0
      %v10752 = vadd.f32 0.0, %v10751
      %v10753 = vpop.f32.mrb[0].mxu0
      %10754 = vmatprep.mubr.bf16.mxu0 0
      %10755 = vmatmul.mubr.bf16.gmra.mrb[0].mxu0 %v10597
      %v10756 = vpop.f32.mrb[0].mxu0
      %v10757 = vadd.f32 0.0, %v10756
      %v10758 = vpop.f32.mrb[0].mxu0
      %v10759 = vpop.f32.mrb[0].mxu0
      %v10760 = vadd.f32 0.0, %v10759
      %v10761 = vpop.f32.mrb[0].mxu0
      %10762 = vdwg.mxu0
      %v10763 = vadd.f32 %v10037, %v10637
      %v10764 = vadd.f32 %v10038, %v10640
      %v10765 = vadd.f32 %v10039, %v10645
      %v10766 = vadd.f32 %v10040, %v10648
      %v10767 = vadd.f32 %v10041, %v10653
      %v10768 = vadd.f32 %v10042, %v10656
      %v10769 = vadd.f32 %v10043, %v10661
      %v10770 = vadd.f32 %v10044, %v10664
      %v10771 = vadd.f32 %v10045, %v10669
      %v10772 = vadd.f32 %v10046, %v10672
      %v10773 = vadd.f32 %v10047, %v10677
      %v10774 = vadd.f32 %v10048, %v10680
      %v10775 = vadd.f32 %v10049, %v10685
      %v10776 = vadd.f32 %v10050, %v10688
      %v10777 = vadd.f32 %v10051, %v10693
      %v10778 = vadd.f32 %v10052, %v10696
      %v10779 = vadd.f32 %v10053, %v10701
      %v10780 = vadd.f32 %v10054, %v10704
      %v10781 = vadd.f32 %v10055, %v10709
      %v10782 = vadd.f32 %v10056, %v10712
      %v10783 = vadd.f32 %v10057, %v10717
      %v10784 = vadd.f32 %v10058, %v10720
      %v10785 = vadd.f32 %v10059, %v10725
      %v10786 = vadd.f32 %v10060, %v10728
      %v10787 = vadd.f32 %v10061, %v10733
      %v10788 = vadd.f32 %v10062, %v10736
      %v10789 = vadd.f32 %v10063, %v10741
      %v10790 = vadd.f32 %v10064, %v10744
      %v10791 = vadd.f32 %v10065, %v10749
      %v10792 = vadd.f32 %v10066, %v10752
      %v10793 = vadd.f32 %v10067, %v10757
      %v10794 = vadd.f32 %v10068, %v10760
      %v10795 = vld [vmem:[%s742] sm:$0xe]
      %v10796 = vld [vmem:[%s742 + $0xc] sm:$0xe]
      %v10797 = vld [vmem:[%s742 + $0x18] sm:$0xe]
      %v10798 = vld [vmem:[%s742 + $0x24] sm:$0xe]
      %v10799 = vld [vmem:[%s742 + $0x30] sm:$0xe]
      %v10800 = vld [vmem:[%s742 + $0x3c] sm:$0xe]
      %v10801 = vld [vmem:[%s742 + $0x48] sm:$0xe]
      %v10802 = vld [vmem:[%s742 + $0x54] sm:$0xe]
      %v10803 = vld [vmem:[%s742 + $0x60] sm:$0xe]
      %v10804 = vld [vmem:[%s742 + $0x6c] sm:$0xe]
      %v10805 = vld [vmem:[%s742 + $0x78] sm:$0xe]
      %v10806 = vld [vmem:[%s742 + $0x84] sm:$0xe]
      %v10807 = vld [vmem:[%s742 + $0x90] sm:$0xe]
      %v10808 = vld [vmem:[%s742 + $0x9c] sm:$0xe]
      %v10809 = vld [vmem:[%s742 + $0xa8] sm:$0xe]
      %v10810 = vld [vmem:[%s742 + $0xb4] sm:$0xe]
      %v10859 = vrot.slane %v10795, 5
      %v10860 = vrot.slane %v10859, 4
      %v10861 = vrot.slane %v10070, 5
      %v10862 = vsel %vm2096, %v10860, %v10861
      %v10863 = vrot.slane %v10861, 4
      %v10864 = vrot.slane %v10071, 5
      %v10865 = vsel %vm2096, %v10863, %v10864
      %v10866 = vrot.slane %v10796, 5
      %v10867 = vrot.slane %v10866, 4
      %v10868 = vrot.slane %v10073, 5
      %v10869 = vsel %vm2096, %v10867, %v10868
      %v10870 = vrot.slane %v10868, 4
      %v10871 = vrot.slane %v10074, 5
      %v10872 = vsel %vm2096, %v10870, %v10871
      %v10873 = vrot.slane %v10797, 5
      %v10874 = vrot.slane %v10873, 4
      %v10875 = vrot.slane %v10076, 5
      %v10876 = vsel %vm2096, %v10874, %v10875
      %v10877 = vrot.slane %v10875, 4
      %v10878 = vrot.slane %v10077, 5
      %v10879 = vsel %vm2096, %v10877, %v10878
      %v10880 = vrot.slane %v10798, 5
      %v10881 = vrot.slane %v10880, 4
      %v10882 = vrot.slane %v10079, 5
      %v10883 = vsel %vm2096, %v10881, %v10882
      %v10884 = vrot.slane %v10882, 4
      %v10885 = vrot.slane %v10080, 5
      %v10886 = vsel %vm2096, %v10884, %v10885
      %v10887 = vrot.slane %v10799, 5
      %v10888 = vrot.slane %v10887, 4
      %v10889 = vrot.slane %v10082, 5
      %v10890 = vsel %vm2096, %v10888, %v10889
      %v10891 = vrot.slane %v10889, 4
      %v10892 = vrot.slane %v10083, 5
      %v10893 = vsel %vm2096, %v10891, %v10892
      %v10894 = vrot.slane %v10800, 5
      %v10895 = vrot.slane %v10894, 4
      %v10896 = vrot.slane %v10085, 5
      %v10897 = vsel %vm2096, %v10895, %v10896
      %v10898 = vrot.slane %v10896, 4
      %v10899 = vrot.slane %v10086, 5
      %v10900 = vsel %vm2096, %v10898, %v10899
      %v10901 = vrot.slane %v10801, 5
      %v10902 = vrot.slane %v10901, 4
      %v10903 = vrot.slane %v10088, 5
      %v10904 = vsel %vm2096, %v10902, %v10903
      %v10905 = vrot.slane %v10903, 4
      %v10906 = vrot.slane %v10089, 5
      %v10907 = vsel %vm2096, %v10905, %v10906
      %v10908 = vrot.slane %v10802, 5
      %v10909 = vrot.slane %v10908, 4
      %v10910 = vrot.slane %v10091, 5
      %v10911 = vsel %vm2096, %v10909, %v10910
      %v10912 = vrot.slane %v10910, 4
      %v10913 = vrot.slane %v10092, 5
      %v10914 = vsel %vm2096, %v10912, %v10913
      %v10915 = vrot.slane %v10803, 5
      %v10916 = vrot.slane %v10915, 4
      %v10917 = vrot.slane %v10094, 5
      %v10918 = vsel %vm2096, %v10916, %v10917
      %v10919 = vrot.slane %v10917, 4
      %v10920 = vrot.slane %v10095, 5
      %v10921 = vsel %vm2096, %v10919, %v10920
      %v10922 = vrot.slane %v10804, 5
      %v10923 = vrot.slane %v10922, 4
      %v10924 = vrot.slane %v10097, 5
      %v10925 = vsel %vm2096, %v10923, %v10924
      %v10926 = vrot.slane %v10924, 4
      %v10927 = vrot.slane %v10098, 5
      %v10928 = vsel %vm2096, %v10926, %v10927
      %v10929 = vrot.slane %v10805, 5
      %v10930 = vrot.slane %v10929, 4
      %v10931 = vrot.slane %v10100, 5
      %v10932 = vsel %vm2096, %v10930, %v10931
      %v10933 = vrot.slane %v10931, 4
      %v10934 = vrot.slane %v10101, 5
      %v10935 = vsel %vm2096, %v10933, %v10934
      %v10936 = vrot.slane %v10806, 5
      %v10937 = vrot.slane %v10936, 4
      %v10938 = vrot.slane %v10103, 5
      %v10939 = vsel %vm2096, %v10937, %v10938
      %v10940 = vrot.slane %v10938, 4
      %v10941 = vrot.slane %v10104, 5
      %v10942 = vsel %vm2096, %v10940, %v10941
      %v10943 = vrot.slane %v10807, 5
      %v10944 = vrot.slane %v10943, 4
      %v10945 = vrot.slane %v10106, 5
      %v10946 = vsel %vm2096, %v10944, %v10945
      %v10947 = vrot.slane %v10945, 4
      %v10948 = vrot.slane %v10107, 5
      %v10949 = vsel %vm2096, %v10947, %v10948
      %v10950 = vrot.slane %v10808, 5
      %v10951 = vrot.slane %v10950, 4
      %v10952 = vrot.slane %v10109, 5
      %v10953 = vsel %vm2096, %v10951, %v10952
      %v10954 = vrot.slane %v10952, 4
      %v10955 = vrot.slane %v10110, 5
      %v10956 = vsel %vm2096, %v10954, %v10955
      %v10957 = vrot.slane %v10809, 5
      %v10958 = vrot.slane %v10957, 4
      %v10959 = vrot.slane %v10112, 5
      %v10960 = vsel %vm2096, %v10958, %v10959
      %v10961 = vrot.slane %v10959, 4
      %v10962 = vrot.slane %v10113, 5
      %v10963 = vsel %vm2096, %v10961, %v10962
      %v10964 = vrot.slane %v10810, 5
      %v10965 = vrot.slane %v10964, 4
      %v10966 = vrot.slane %v10115, 5
      %v10967 = vsel %vm2096, %v10965, %v10966
      %v10968 = vrot.slane %v10966, 4
      %v10969 = vrot.slane %v10116, 5
      %v10970 = vsel %vm2096, %v10968, %v10969
      %s10971 = scalar_lea.vmem %s2, 16
      %v10972 = vld [vmem:[%s10971] sm:$0x3]
      %v10973 = vunpack.c.l.b16 %v10862
      %v10974 = vunpack.c.l.b16 %v10865
      %v10975 = vunpack.c.l.b16 %v10869
      %v10976 = vunpack.c.l.b16 %v10872
      %v10977 = vunpack.c.l.b16 %v10876
      %v10978 = vunpack.c.l.b16 %v10879
      %v10979 = vunpack.c.l.b16 %v10883
      %v10980 = vunpack.c.l.b16 %v10886
      %v10981 = vunpack.c.l.b16 %v10890
      %v10982 = vunpack.c.l.b16 %v10893
      %v10983 = vunpack.c.l.b16 %v10897
      %v10984 = vunpack.c.l.b16 %v10900
      %v10985 = vunpack.c.l.b16 %v10904
      %v10986 = vunpack.c.l.b16 %v10907
      %v10987 = vunpack.c.l.b16 %v10911
      %v10988 = vunpack.c.l.b16 %v10914
      %v10989 = vunpack.c.l.b16 %v10918
      %v10990 = vunpack.c.l.b16 %v10921
      %v10991 = vunpack.c.l.b16 %v10925
      %v10992 = vunpack.c.l.b16 %v10928
      %v10993 = vunpack.c.l.b16 %v10932
      %v10994 = vunpack.c.l.b16 %v10935
      %v10995 = vunpack.c.l.b16 %v10939
      %v10996 = vunpack.c.l.b16 %v10942
      %v10997 = vunpack.c.l.b16 %v10946
      %v10998 = vunpack.c.l.b16 %v10949
      %v10999 = vunpack.c.l.b16 %v10953
      %v11000 = vunpack.c.l.b16 %v10956
      %v11001 = vunpack.c.l.b16 %v10960
      %v11002 = vunpack.c.l.b16 %v10963
      %v11003 = vunpack.c.l.b16 %v10967
      %v11004 = vunpack.c.l.b16 %v10970
      %v11005 = vpack.c.b16 %v10974, %v10973
      %v11006 = vpack.c.b16 %v10976, %v10975
      %v11007 = vpack.c.b16 %v10978, %v10977
      %v11008 = vpack.c.b16 %v10980, %v10979
      %v11009 = vpack.c.b16 %v10982, %v10981
      %v11010 = vpack.c.b16 %v10984, %v10983
      %v11011 = vpack.c.b16 %v10986, %v10985
      %v11012 = vpack.c.b16 %v10988, %v10987
      %v11013 = vpack.c.b16 %v10990, %v10989
      %v11014 = vpack.c.b16 %v10992, %v10991
      %v11015 = vpack.c.b16 %v10994, %v10993
      %v11016 = vpack.c.b16 %v10996, %v10995
      %v11017 = vpack.c.b16 %v10998, %v10997
      %v11018 = vpack.c.b16 %v11000, %v10999
      %v11019 = vpack.c.b16 %v11002, %v11001
      %v11020 = vpack.c.b16 %v11004, %v11003
      %v11022 = vsel %vm1540, %v11005, 0
      %v11025 = vsel %vm1540, %v11006, 0
      %v11028 = vsel %vm1540, %v11007, 0
      %v11031 = vsel %vm1540, %v11008, 0
      %v11034 = vsel %vm1540, %v11009, 0
      %v11037 = vsel %vm1540, %v11010, 0
      %v11040 = vsel %vm1540, %v11011, 0
      %v11043 = vsel %vm1540, %v11012, 0
      %v11046 = vsel %vm1540, %v11013, 0
      %v11049 = vsel %vm1540, %v11014, 0
      %v11052 = vsel %vm1540, %v11015, 0
      %v11055 = vsel %vm1540, %v11016, 0
      %v11058 = vsel %vm1540, %v11017, 0
      %v11061 = vsel %vm1540, %v11018, 0
      %v11064 = vsel %vm1540, %v11019, 0
      %v11067 = vsel %vm1540, %v11020, 0
      %v11070 = vsel %vm1589, %v10972, 0
      %11072 = vmatprep.subr.bf16.mxu0 0
      %11073 = vmatpush1.bf16.msra.mxu0 %v11070
      %11074 = vmatprep.subr.bf16.mxu0 0
      %11075 = vmatpush1.bf16.msra.mxu0 0
      %11076 = vmatprep.subr.bf16.mxu0 0
      %11077 = vmatpush1.bf16.msra.mxu0 0
      %11078 = vmatprep.subr.bf16.mxu0 0
      %11079 = vmatpush1.bf16.msra.mxu0 0
      %11080 = vmatprep.subr.bf16.mxu0 0
      %11081 = vmatpush1.bf16.msra.mxu0 0
      %11082 = vmatprep.subr.bf16.mxu0 0
      %11083 = vmatpush1.bf16.msra.mxu0 0
      %11084 = vmatprep.subr.bf16.mxu0 0
      %11085 = vmatpush1.bf16.msra.mxu0 0
      %11086 = vmatprep.subr.bf16.mxu0 0
      %11087 = vmatpush1.bf16.msra.mxu0 0
      %11088 = vmatprep.subr.bf16.mxu0 0
      %11089 = vmatpush1.bf16.msra.mxu0 0
      %11090 = vmatprep.subr.bf16.mxu0 0
      %11091 = vmatpush1.bf16.msra.mxu0 0
      %11092 = vmatprep.subr.bf16.mxu0 0
      %11093 = vmatpush1.bf16.msra.mxu0 0
      %11094 = vmatprep.subr.bf16.mxu0 0
      %11095 = vmatpush1.bf16.msra.mxu0 0
      %11096 = vmatprep.subr.bf16.mxu0 0
      %11097 = vmatpush1.bf16.msra.mxu0 0
      %11098 = vmatprep.subr.bf16.mxu0 0
      %11099 = vmatpush1.bf16.msra.mxu0 0
      %11100 = vmatprep.subr.bf16.mxu0 0
      %11101 = vmatpush1.bf16.msra.mxu0 0
      %11102 = vmatprep.subr.bf16.mxu0 0
      %11103 = vmatpush1.bf16.msra.mxu0 0
      %11104 = vmatprep.mubr.bf16.mxu0 0
      %11105 = vmatmul.mubr.bf16.gmra.mrb[0].mxu0 %v11022
      %v11106 = vpop.f32.mrb[0].mxu0
      %v11107 = vadd.f32 0.0, %v11106
      %v11108 = vpop.f32.mrb[0].mxu0
      %v11109 = vpop.f32.mrb[0].mxu0
      %v11110 = vadd.f32 0.0, %v11109
      %v11111 = vpop.f32.mrb[0].mxu0
      %11112 = vmatprep.mubr.bf16.mxu0 0
      %11113 = vmatmul.mubr.bf16.gmra.mrb[0].mxu0 %v11025
      %v11114 = vpop.f32.mrb[0].mxu0
      %v11115 = vadd.f32 0.0, %v11114
      %v11116 = vpop.f32.mrb[0].mxu0
      %v11117 = vpop.f32.mrb[0].mxu0
      %v11118 = vadd.f32 0.0, %v11117
      %v11119 = vpop.f32.mrb[0].mxu0
      %11120 = vmatprep.mubr.bf16.mxu0 0
      %11121 = vmatmul.mubr.bf16.gmra.mrb[0].mxu0 %v11028
      %v11122 = vpop.f32.mrb[0].mxu0
      %v11123 = vadd.f32 0.0, %v11122
      %v11124 = vpop.f32.mrb[0].mxu0
      %v11125 = vpop.f32.mrb[0].mxu0
      %v11126 = vadd.f32 0.0, %v11125
      %v11127 = vpop.f32.mrb[0].mxu0
      %11128 = vmatprep.mubr.bf16.mxu0 0
      %11129 = vmatmul.mubr.bf16.gmra.mrb[0].mxu0 %v11031
      %v11130 = vpop.f32.mrb[0].mxu0
      %v11131 = vadd.f32 0.0, %v11130
      %v11132 = vpop.f32.mrb[0].mxu0
      %v11133 = vpop.f32.mrb[0].mxu0
      %v11134 = vadd.f32 0.0, %v11133
      %v11135 = vpop.f32.mrb[0].mxu0
      %11136 = vmatprep.mubr.bf16.mxu0 0
      %11137 = vmatmul.mubr.bf16.gmra.mrb[0].mxu0 %v11034
      %v11138 = vpop.f32.mrb[0].mxu0
      %v11139 = vadd.f32 0.0, %v11138
      %v11140 = vpop.f32.mrb[0].mxu0
      %v11141 = vpop.f32.mrb[0].mxu0
      %v11142 = vadd.f32 0.0, %v11141
      %v11143 = vpop.f32.mrb[0].mxu0
      %11144 = vmatprep.mubr.bf16.mxu0 0
      %11145 = vmatmul.mubr.bf16.gmra.mrb[0].mxu0 %v11037
      %v11146 = vpop.f32.mrb[0].mxu0
      %v11147 = vadd.f32 0.0, %v11146
      %v11148 = vpop.f32.mrb[0].mxu0
      %v11149 = vpop.f32.mrb[0].mxu0
      %v11150 = vadd.f32 0.0, %v11149
      %v11151 = vpop.f32.mrb[0].mxu0
      %11152 = vmatprep.mubr.bf16.mxu0 0
      %11153 = vmatmul.mubr.bf16.gmra.mrb[0].mxu0 %v11040
      %v11154 = vpop.f32.mrb[0].mxu0
      %v11155 = vadd.f32 0.0, %v11154
      %v11156 = vpop.f32.mrb[0].mxu0
      %v11157 = vpop.f32.mrb[0].mxu0
      %v11158 = vadd.f32 0.0, %v11157
      %v11159 = vpop.f32.mrb[0].mxu0
      %11160 = vmatprep.mubr.bf16.mxu0 0
      %11161 = vmatmul.mubr.bf16.gmra.mrb[0].mxu0 %v11043
      %v11162 = vpop.f32.mrb[0].mxu0
      %v11163 = vadd.f32 0.0, %v11162
      %v11164 = vpop.f32.mrb[0].mxu0
      %v11165 = vpop.f32.mrb[0].mxu0
      %v11166 = vadd.f32 0.0, %v11165
      %v11167 = vpop.f32.mrb[0].mxu0
      %11168 = vmatprep.mubr.bf16.mxu0 0
      %11169 = vmatmul.mubr.bf16.gmra.mrb[0].mxu0 %v11046
      %v11170 = vpop.f32.mrb[0].mxu0
      %v11171 = vadd.f32 0.0, %v11170
      %v11172 = vpop.f32.mrb[0].mxu0
      %v11173 = vpop.f32.mrb[0].mxu0
      %v11174 = vadd.f32 0.0, %v11173
      %v11175 = vpop.f32.mrb[0].mxu0
      %11176 = vmatprep.mubr.bf16.mxu0 0
      %11177 = vmatmul.mubr.bf16.gmra.mrb[0].mxu0 %v11049
      %v11178 = vpop.f32.mrb[0].mxu0
      %v11179 = vadd.f32 0.0, %v11178
      %v11180 = vpop.f32.mrb[0].mxu0
      %v11181 = vpop.f32.mrb[0].mxu0
      %v11182 = vadd.f32 0.0, %v11181
      %v11183 = vpop.f32.mrb[0].mxu0
      %11184 = vmatprep.mubr.bf16.mxu0 0
      %11185 = vmatmul.mubr.bf16.gmra.mrb[0].mxu0 %v11052
      %v11186 = vpop.f32.mrb[0].mxu0
      %v11187 = vadd.f32 0.0, %v11186
      %v11188 = vpop.f32.mrb[0].mxu0
      %v11189 = vpop.f32.mrb[0].mxu0
      %v11190 = vadd.f32 0.0, %v11189
      %v11191 = vpop.f32.mrb[0].mxu0
      %11192 = vmatprep.mubr.bf16.mxu0 0
      %11193 = vmatmul.mubr.bf16.gmra.mrb[0].mxu0 %v11055
      %v11194 = vpop.f32.mrb[0].mxu0
      %v11195 = vadd.f32 0.0, %v11194
      %v11196 = vpop.f32.mrb[0].mxu0
      %v11197 = vpop.f32.mrb[0].mxu0
      %v11198 = vadd.f32 0.0, %v11197
      %v11199 = vpop.f32.mrb[0].mxu0
      %11200 = vmatprep.mubr.bf16.mxu0 0
      %11201 = vmatmul.mubr.bf16.gmra.mrb[0].mxu0 %v11058
      %v11202 = vpop.f32.mrb[0].mxu0
      %v11203 = vadd.f32 0.0, %v11202
      %v11204 = vpop.f32.mrb[0].mxu0
      %v11205 = vpop.f32.mrb[0].mxu0
      %v11206 = vadd.f32 0.0, %v11205
      %v11207 = vpop.f32.mrb[0].mxu0
      %11208 = vmatprep.mubr.bf16.mxu0 0
      %11209 = vmatmul.mubr.bf16.gmra.mrb[0].mxu0 %v11061
      %v11210 = vpop.f32.mrb[0].mxu0
      %v11211 = vadd.f32 0.0, %v11210
      %v11212 = vpop.f32.mrb[0].mxu0
      %v11213 = vpop.f32.mrb[0].mxu0
      %v11214 = vadd.f32 0.0, %v11213
      %v11215 = vpop.f32.mrb[0].mxu0
      %11216 = vmatprep.mubr.bf16.mxu0 0
      %11217 = vmatmul.mubr.bf16.gmra.mrb[0].mxu0 %v11064
      %v11218 = vpop.f32.mrb[0].mxu0
      %v11219 = vadd.f32 0.0, %v11218
      %v11220 = vpop.f32.mrb[0].mxu0
      %v11221 = vpop.f32.mrb[0].mxu0
      %v11222 = vadd.f32 0.0, %v11221
      %v11223 = vpop.f32.mrb[0].mxu0
      %11224 = vmatprep.mubr.bf16.mxu0 0
      %11225 = vmatmul.mubr.bf16.gmra.mrb[0].mxu0 %v11067
      %v11226 = vpop.f32.mrb[0].mxu0
      %v11227 = vadd.f32 0.0, %v11226
      %v11228 = vpop.f32.mrb[0].mxu0
      %v11229 = vpop.f32.mrb[0].mxu0
      %v11230 = vadd.f32 0.0, %v11229
      %v11231 = vpop.f32.mrb[0].mxu0
      %11232 = vdwg.mxu0
      %v11233 = vadd.f32 %v10763, %v11107
      %v11234 = vadd.f32 %v10764, %v11110
      %v11235 = vadd.f32 %v10765, %v11115
      %v11236 = vadd.f32 %v10766, %v11118
      %v11237 = vadd.f32 %v10767, %v11123
      %v11238 = vadd.f32 %v10768, %v11126
      %v11239 = vadd.f32 %v10769, %v11131
      %v11240 = vadd.f32 %v10770, %v11134
      %v11241 = vadd.f32 %v10771, %v11139
      %v11242 = vadd.f32 %v10772, %v11142
      %v11243 = vadd.f32 %v10773, %v11147
      %v11244 = vadd.f32 %v10774, %v11150
      %v11245 = vadd.f32 %v10775, %v11155
      %v11246 = vadd.f32 %v10776, %v11158
      %v11247 = vadd.f32 %v10777, %v11163
      %v11248 = vadd.f32 %v10778, %v11166
      %v11249 = vadd.f32 %v10779, %v11171
      %v11250 = vadd.f32 %v10780, %v11174
      %v11251 = vadd.f32 %v10781, %v11179
      %v11252 = vadd.f32 %v10782, %v11182
      %v11253 = vadd.f32 %v10783, %v11187
      %v11254 = vadd.f32 %v10784, %v11190
      %v11255 = vadd.f32 %v10785, %v11195
      %v11256 = vadd.f32 %v10786, %v11198
      %v11257 = vadd.f32 %v10787, %v11203
      %v11258 = vadd.f32 %v10788, %v11206
      %v11259 = vadd.f32 %v10789, %v11211
      %v11260 = vadd.f32 %v10790, %v11214
      %v11261 = vadd.f32 %v10791, %v11219
      %v11262 = vadd.f32 %v10792, %v11222
      %v11263 = vadd.f32 %v10793, %v11227
      %v11264 = vadd.f32 %v10794, %v11230
      %v11265 = vsel %vm1540, %v11233, 0.0
      %v11266 = vsel %vm1540, %v11234, 0.0
      %v11267 = vadd.f32 %v11265, %v11266
      %v11268 = vsel %vm1540, %v11235, 0.0
      %v11269 = vadd.f32 %v11267, %v11268
      %v11270 = vsel %vm1540, %v11236, 0.0
      %v11271 = vadd.f32 %v11269, %v11270
      %v11272 = vsel %vm1540, %v11237, 0.0
      %v11273 = vadd.f32 %v11271, %v11272
      %v11274 = vsel %vm1540, %v11238, 0.0
      %v11275 = vadd.f32 %v11273, %v11274
      %v11276 = vsel %vm1540, %v11239, 0.0
      %v11277 = vadd.f32 %v11275, %v11276
      %v11278 = vsel %vm1540, %v11240, 0.0
      %v11279 = vadd.f32 %v11277, %v11278
      %v11280 = vsel %vm1540, %v11241, 0.0
      %v11281 = vadd.f32 %v11279, %v11280
      %v11282 = vsel %vm1540, %v11242, 0.0
      %v11283 = vadd.f32 %v11281, %v11282
      %v11284 = vsel %vm1540, %v11243, 0.0
      %v11285 = vadd.f32 %v11283, %v11284
      %v11286 = vsel %vm1540, %v11244, 0.0
      %v11287 = vadd.f32 %v11285, %v11286
      %v11288 = vsel %vm1540, %v11245, 0.0
      %v11289 = vadd.f32 %v11287, %v11288
      %v11290 = vsel %vm1540, %v11246, 0.0
      %v11291 = vadd.f32 %v11289, %v11290
      %v11292 = vsel %vm1540, %v11247, 0.0
      %v11293 = vadd.f32 %v11291, %v11292
      %v11294 = vsel %vm1540, %v11248, 0.0
      %v11295 = vadd.f32 %v11293, %v11294
      %v11296 = vsel %vm1540, %v11249, 0.0
      %v11297 = vadd.f32 %v11295, %v11296
      %v11298 = vsel %vm1540, %v11250, 0.0
      %v11299 = vadd.f32 %v11297, %v11298
      %v11300 = vsel %vm1540, %v11251, 0.0
      %v11301 = vadd.f32 %v11299, %v11300
      %v11302 = vsel %vm1540, %v11252, 0.0
      %v11303 = vadd.f32 %v11301, %v11302
      %v11304 = vsel %vm1540, %v11253, 0.0
      %v11305 = vadd.f32 %v11303, %v11304
      %v11306 = vsel %vm1540, %v11254, 0.0
      %v11307 = vadd.f32 %v11305, %v11306
      %v11308 = vsel %vm1540, %v11255, 0.0
      %v11309 = vadd.f32 %v11307, %v11308
      %v11310 = vsel %vm1540, %v11256, 0.0
      %v11311 = vadd.f32 %v11309, %v11310
      %v11312 = vsel %vm1540, %v11257, 0.0
      %v11313 = vadd.f32 %v11311, %v11312
      %v11314 = vsel %vm1540, %v11258, 0.0
      %v11315 = vadd.f32 %v11313, %v11314
      %v11316 = vsel %vm1540, %v11259, 0.0
      %v11317 = vadd.f32 %v11315, %v11316
      %v11318 = vsel %vm1540, %v11260, 0.0
      %v11319 = vadd.f32 %v11317, %v11318
      %v11320 = vsel %vm1540, %v11261, 0.0
      %v11321 = vadd.f32 %v11319, %v11320
      %v11322 = vsel %vm1540, %v11262, 0.0
      %v11323 = vadd.f32 %v11321, %v11322
      %v11324 = vsel %vm1540, %v11263, 0.0
      %v11325 = vadd.f32 %v11323, %v11324
      %v11326 = vsel %vm1540, %v11264, 0.0
      %v11327 = vadd.f32 %v11325, %v11326
      %v11328 = vrot.slane %v11327, 4
      %v11329 = vadd.f32 %v11327, %v11328
      %v11330 = vrot.slane %v11329, 2
      %v11331 = vadd.f32 %v11329, %v11330
      %v11332 = vrot.slane %v11331, 1
      %v11333 = vadd.f32 %v11331, %v11332
      %v11334 = vmul.f32 %v11333, 0.00390625
      %v11335 = vsub.f32 %v11233, %v11334
      %v11336 = vsub.f32 %v11234, %v11334
      %v11337 = vsub.f32 %v11235, %v11334
      %v11338 = vsub.f32 %v11236, %v11334
      %v11339 = vsub.f32 %v11237, %v11334
      %v11340 = vsub.f32 %v11238, %v11334
      %v11341 = vsub.f32 %v11239, %v11334
      %v11342 = vsub.f32 %v11240, %v11334
      %v11343 = vsub.f32 %v11241, %v11334
      %v11344 = vsub.f32 %v11242, %v11334
      %v11345 = vsub.f32 %v11243, %v11334
      %v11346 = vsub.f32 %v11244, %v11334
      %v11347 = vsub.f32 %v11245, %v11334
      %v11348 = vsub.f32 %v11246, %v11334
      %v11349 = vsub.f32 %v11247, %v11334
      %v11350 = vsub.f32 %v11248, %v11334
      %v11351 = vsub.f32 %v11249, %v11334
      %v11352 = vsub.f32 %v11250, %v11334
      %v11353 = vsub.f32 %v11251, %v11334
      %v11354 = vsub.f32 %v11252, %v11334
      %v11355 = vsub.f32 %v11253, %v11334
      %v11356 = vsub.f32 %v11254, %v11334
      %v11357 = vsub.f32 %v11255, %v11334
      %v11358 = vsub.f32 %v11256, %v11334
      %v11359 = vsub.f32 %v11257, %v11334
      %v11360 = vsub.f32 %v11258, %v11334
      %v11361 = vsub.f32 %v11259, %v11334
      %v11362 = vsub.f32 %v11260, %v11334
      %v11363 = vsub.f32 %v11261, %v11334
      %v11364 = vsub.f32 %v11262, %v11334
      %v11365 = vsub.f32 %v11263, %v11334
      %v11366 = vsub.f32 %v11264, %v11334
      %v11367 = vmul.f32 %v11335, %v11335
      %v11368 = vmul.f32 %v11336, %v11336
      %v11369 = vmul.f32 %v11337, %v11337
      %v11370 = vmul.f32 %v11338, %v11338
      %v11371 = vmul.f32 %v11339, %v11339
      %v11372 = vmul.f32 %v11340, %v11340
      %v11373 = vmul.f32 %v11341, %v11341
      %v11374 = vmul.f32 %v11342, %v11342
      %v11375 = vmul.f32 %v11343, %v11343
      %v11376 = vmul.f32 %v11344, %v11344
      %v11377 = vmul.f32 %v11345, %v11345
      %v11378 = vmul.f32 %v11346, %v11346
      %v11379 = vmul.f32 %v11347, %v11347
      %v11380 = vmul.f32 %v11348, %v11348
      %v11381 = vmul.f32 %v11349, %v11349
      %v11382 = vmul.f32 %v11350, %v11350
      %v11383 = vmul.f32 %v11351, %v11351
      %v11384 = vmul.f32 %v11352, %v11352
      %v11385 = vmul.f32 %v11353, %v11353
      %v11386 = vmul.f32 %v11354, %v11354
      %v11387 = vmul.f32 %v11355, %v11355
      %v11388 = vmul.f32 %v11356, %v11356
      %v11389 = vmul.f32 %v11357, %v11357
      %v11390 = vmul.f32 %v11358, %v11358
      %v11391 = vmul.f32 %v11359, %v11359
      %v11392 = vmul.f32 %v11360, %v11360
      %v11393 = vmul.f32 %v11361, %v11361
      %v11394 = vmul.f32 %v11362, %v11362
      %v11395 = vmul.f32 %v11363, %v11363
      %v11396 = vmul.f32 %v11364, %v11364
      %v11397 = vmul.f32 %v11365, %v11365
      %v11398 = vmul.f32 %v11366, %v11366
      %v11399 = vsel %vm1540, %v11367, 0.0
      %v11400 = vsel %vm1540, %v11368, 0.0
      %v11401 = vadd.f32 %v11399, %v11400
      %v11402 = vsel %vm1540, %v11369, 0.0
      %v11403 = vadd.f32 %v11401, %v11402
      %v11404 = vsel %vm1540, %v11370, 0.0
      %v11405 = vadd.f32 %v11403, %v11404
      %v11406 = vsel %vm1540, %v11371, 0.0
      %v11407 = vadd.f32 %v11405, %v11406
      %v11408 = vsel %vm1540, %v11372, 0.0
      %v11409 = vadd.f32 %v11407, %v11408
      %v11410 = vsel %vm1540, %v11373, 0.0
      %v11411 = vadd.f32 %v11409, %v11410
      %v11412 = vsel %vm1540, %v11374, 0.0
      %v11413 = vadd.f32 %v11411, %v11412
      %v11414 = vsel %vm1540, %v11375, 0.0
      %v11415 = vadd.f32 %v11413, %v11414
      %v11416 = vsel %vm1540, %v11376, 0.0
      %v11417 = vadd.f32 %v11415, %v11416
      %v11418 = vsel %vm1540, %v11377, 0.0
      %v11419 = vadd.f32 %v11417, %v11418
      %v11420 = vsel %vm1540, %v11378, 0.0
      %v11421 = vadd.f32 %v11419, %v11420
      %v11422 = vsel %vm1540, %v11379, 0.0
      %v11423 = vadd.f32 %v11421, %v11422
      %v11424 = vsel %vm1540, %v11380, 0.0
      %v11425 = vadd.f32 %v11423, %v11424
      %v11426 = vsel %vm1540, %v11381, 0.0
      %v11427 = vadd.f32 %v11425, %v11426
      %v11428 = vsel %vm1540, %v11382, 0.0
      %v11429 = vadd.f32 %v11427, %v11428
      %v11430 = vsel %vm1540, %v11383, 0.0
      %v11431 = vadd.f32 %v11429, %v11430
      %v11432 = vsel %vm1540, %v11384, 0.0
      %v11433 = vadd.f32 %v11431, %v11432
      %v11434 = vsel %vm1540, %v11385, 0.0
      %v11435 = vadd.f32 %v11433, %v11434
      %v11436 = vsel %vm1540, %v11386, 0.0
      %v11437 = vadd.f32 %v11435, %v11436
      %v11438 = vsel %vm1540, %v11387, 0.0
      %v11439 = vadd.f32 %v11437, %v11438
      %v11440 = vsel %vm1540, %v11388, 0.0
      %v11441 = vadd.f32 %v11439, %v11440
      %v11442 = vsel %vm1540, %v11389, 0.0
      %v11443 = vadd.f32 %v11441, %v11442
      %v11444 = vsel %vm1540, %v11390, 0.0
      %v11445 = vadd.f32 %v11443, %v11444
      %v11446 = vsel %vm1540, %v11391, 0.0
      %v11447 = vadd.f32 %v11445, %v11446
      %v11448 = vsel %vm1540, %v11392, 0.0
      %v11449 = vadd.f32 %v11447, %v11448
      %v11450 = vsel %vm1540, %v11393, 0.0
      %v11451 = vadd.f32 %v11449, %v11450
      %v11452 = vsel %vm1540, %v11394, 0.0
      %v11453 = vadd.f32 %v11451, %v11452
      %v11454 = vsel %vm1540, %v11395, 0.0
      %v11455 = vadd.f32 %v11453, %v11454
      %v11456 = vsel %vm1540, %v11396, 0.0
      %v11457 = vadd.f32 %v11455, %v11456
      %v11458 = vsel %vm1540, %v11397, 0.0
      %v11459 = vadd.f32 %v11457, %v11458
      %v11460 = vsel %vm1540, %v11398, 0.0
      %v11461 = vadd.f32 %v11459, %v11460
      %v11462 = vrot.slane %v11461, 4
      %v11463 = vadd.f32 %v11461, %v11462
      %v11464 = vrot.slane %v11463, 2
      %v11465 = vadd.f32 %v11463, %v11464
      %v11466 = vrot.slane %v11465, 1
      %v11467 = vadd.f32 %v11465, %v11466
      %v11468 = vmul.f32 %v11467, 0.00390625
      %v11469 = vadd.f32 %v11468, 1e-05
      %v11470 = vrsqrt.pop %v11469
      %v11471 = vmul.f32 %v11335, %v11470
      %v11472 = vmul.f32 %v11336, %v11470
      %v11473 = vmul.f32 %v11337, %v11470
      %v11474 = vmul.f32 %v11338, %v11470
      %v11475 = vmul.f32 %v11339, %v11470
      %v11476 = vmul.f32 %v11340, %v11470
      %v11477 = vmul.f32 %v11341, %v11470
      %v11478 = vmul.f32 %v11342, %v11470
      %v11479 = vmul.f32 %v11343, %v11470
      %v11480 = vmul.f32 %v11344, %v11470
      %v11481 = vmul.f32 %v11345, %v11470
      %v11482 = vmul.f32 %v11346, %v11470
      %v11483 = vmul.f32 %v11347, %v11470
      %v11484 = vmul.f32 %v11348, %v11470
      %v11485 = vmul.f32 %v11349, %v11470
      %v11486 = vmul.f32 %v11350, %v11470
      %v11487 = vmul.f32 %v11351, %v11470
      %v11488 = vmul.f32 %v11352, %v11470
      %v11489 = vmul.f32 %v11353, %v11470
      %v11490 = vmul.f32 %v11354, %v11470
      %v11491 = vmul.f32 %v11355, %v11470
      %v11492 = vmul.f32 %v11356, %v11470
      %v11493 = vmul.f32 %v11357, %v11470
      %v11494 = vmul.f32 %v11358, %v11470
      %v11495 = vmul.f32 %v11359, %v11470
      %v11496 = vmul.f32 %v11360, %v11470
      %v11497 = vmul.f32 %v11361, %v11470
      %v11498 = vmul.f32 %v11362, %v11470
      %v11499 = vmul.f32 %v11363, %v11470
      %v11500 = vmul.f32 %v11364, %v11470
      %v11501 = vmul.f32 %v11365, %v11470
      %v11502 = vmul.f32 %v11366, %v11470
      %v11503 = vld [vmem:[%s165] sm:$0xff]
      %v11504 = vld [vmem:[%s165 + $0x8] sm:$0xff]
      %v11505 = vld [vmem:[%s165 + $0x10] sm:$0xff]
      %v11506 = vld [vmem:[%s165 + $0x18] sm:$0xff]
      %v11507 = vld [vmem:[%s165 + $0x20] sm:$0xff]
      %v11508 = vld [vmem:[%s165 + $0x28] sm:$0xff]
      %v11509 = vld [vmem:[%s165 + $0x30] sm:$0xff]
      %v11510 = vld [vmem:[%s165 + $0x38] sm:$0xff]
      %v11511 = vld [vmem:[%s165 + $0x40] sm:$0xff]
      %v11512 = vld [vmem:[%s165 + $0x48] sm:$0xff]
      %v11513 = vld [vmem:[%s165 + $0x50] sm:$0xff]
      %v11514 = vld [vmem:[%s165 + $0x58] sm:$0xff]
      %v11515 = vld [vmem:[%s165 + $0x60] sm:$0xff]
      %v11516 = vld [vmem:[%s165 + $0x68] sm:$0xff]
      %v11517 = vld [vmem:[%s165 + $0x70] sm:$0xff]
      %v11518 = vld [vmem:[%s165 + $0x78] sm:$0xff]
      %v11519 = vld [vmem:[%s165 + $0x80] sm:$0xff]
      %v11520 = vld [vmem:[%s165 + $0x88] sm:$0xff]
      %v11521 = vld [vmem:[%s165 + $0x90] sm:$0xff]
      %v11522 = vld [vmem:[%s165 + $0x98] sm:$0xff]
      %v11523 = vld [vmem:[%s165 + $0xa0] sm:$0xff]
      %v11524 = vld [vmem:[%s165 + $0xa8] sm:$0xff]
      %v11525 = vld [vmem:[%s165 + $0xb0] sm:$0xff]
      %v11526 = vld [vmem:[%s165 + $0xb8] sm:$0xff]
      %v11527 = vld [vmem:[%s165 + $0xc0] sm:$0xff]
      %v11528 = vld [vmem:[%s165 + $0xc8] sm:$0xff]
      %v11529 = vld [vmem:[%s165 + $0xd0] sm:$0xff]
      %v11530 = vld [vmem:[%s165 + $0xd8] sm:$0xff]
      %v11531 = vld [vmem:[%s165 + $0xe0] sm:$0xff]
      %v11532 = vld [vmem:[%s165 + $0xe8] sm:$0xff]
      %v11533 = vld [vmem:[%s165 + $0xf0] sm:$0xff]
      %v11534 = vld [vmem:[%s165 + $0xf8] sm:$0xff]
      %v11535 = vadd.f32 %v11503, %v11471
      %v11536 = vadd.f32 %v11504, %v11472
      %v11537 = vadd.f32 %v11505, %v11473
      %v11538 = vadd.f32 %v11506, %v11474
      %v11539 = vadd.f32 %v11507, %v11475
      %v11540 = vadd.f32 %v11508, %v11476
      %v11541 = vadd.f32 %v11509, %v11477
      %v11542 = vadd.f32 %v11510, %v11478
      %v11543 = vadd.f32 %v11511, %v11479
      %v11544 = vadd.f32 %v11512, %v11480
      %v11545 = vadd.f32 %v11513, %v11481
      %v11546 = vadd.f32 %v11514, %v11482
      %v11547 = vadd.f32 %v11515, %v11483
      %v11548 = vadd.f32 %v11516, %v11484
      %v11549 = vadd.f32 %v11517, %v11485
      %v11550 = vadd.f32 %v11518, %v11486
      %v11551 = vadd.f32 %v11519, %v11487
      %v11552 = vadd.f32 %v11520, %v11488
      %v11553 = vadd.f32 %v11521, %v11489
      %v11554 = vadd.f32 %v11522, %v11490
      %v11555 = vadd.f32 %v11523, %v11491
      %v11556 = vadd.f32 %v11524, %v11492
      %v11557 = vadd.f32 %v11525, %v11493
      %v11558 = vadd.f32 %v11526, %v11494
      %v11559 = vadd.f32 %v11527, %v11495
      %v11560 = vadd.f32 %v11528, %v11496
      %v11561 = vadd.f32 %v11529, %v11497
      %v11562 = vadd.f32 %v11530, %v11498
      %v11563 = vadd.f32 %v11531, %v11499
      %v11564 = vadd.f32 %v11532, %v11500
      %v11565 = vadd.f32 %v11533, %v11501
      %v11566 = vadd.f32 %v11534, %v11502
      %11567 = vst.msk [vmem:[%s170] sm:$0xff] %vm1540, %v11535
      %11568 = vst.msk [vmem:[%s170 + $0x8] sm:$0xff] %vm1540, %v11536
      %11569 = vst.msk [vmem:[%s170 + $0x10] sm:$0xff] %vm1540, %v11537
      %11570 = vst.msk [vmem:[%s170 + $0x18] sm:$0xff] %vm1540, %v11538
      %11571 = vst.msk [vmem:[%s170 + $0x20] sm:$0xff] %vm1540, %v11539
      %11572 = vst.msk [vmem:[%s170 + $0x28] sm:$0xff] %vm1540, %v11540
      %11573 = vst.msk [vmem:[%s170 + $0x30] sm:$0xff] %vm1540, %v11541
      %11574 = vst.msk [vmem:[%s170 + $0x38] sm:$0xff] %vm1540, %v11542
      %11575 = vst.msk [vmem:[%s170 + $0x40] sm:$0xff] %vm1540, %v11543
      %11576 = vst.msk [vmem:[%s170 + $0x48] sm:$0xff] %vm1540, %v11544
      %11577 = vst.msk [vmem:[%s170 + $0x50] sm:$0xff] %vm1540, %v11545
      %11578 = vst.msk [vmem:[%s170 + $0x58] sm:$0xff] %vm1540, %v11546
      %11579 = vst.msk [vmem:[%s170 + $0x60] sm:$0xff] %vm1540, %v11547
      %11580 = vst.msk [vmem:[%s170 + $0x68] sm:$0xff] %vm1540, %v11548
      %11581 = vst.msk [vmem:[%s170 + $0x70] sm:$0xff] %vm1540, %v11549
      %11582 = vst.msk [vmem:[%s170 + $0x78] sm:$0xff] %vm1540, %v11550
      %11583 = vst.msk [vmem:[%s170 + $0x80] sm:$0xff] %vm1540, %v11551
      %11584 = vst.msk [vmem:[%s170 + $0x88] sm:$0xff] %vm1540, %v11552
      %11585 = vst.msk [vmem:[%s170 + $0x90] sm:$0xff] %vm1540, %v11553
      %11586 = vst.msk [vmem:[%s170 + $0x98] sm:$0xff] %vm1540, %v11554
      %11587 = vst.msk [vmem:[%s170 + $0xa0] sm:$0xff] %vm1540, %v11555
      %11588 = vst.msk [vmem:[%s170 + $0xa8] sm:$0xff] %vm1540, %v11556
      %11589 = vst.msk [vmem:[%s170 + $0xb0] sm:$0xff] %vm1540, %v11557
      %11590 = vst.msk [vmem:[%s170 + $0xb8] sm:$0xff] %vm1540, %v11558
      %11591 = vst.msk [vmem:[%s170 + $0xc0] sm:$0xff] %vm1540, %v11559
      %11592 = vst.msk [vmem:[%s170 + $0xc8] sm:$0xff] %vm1540, %v11560
      %11593 = vst.msk [vmem:[%s170 + $0xd0] sm:$0xff] %vm1540, %v11561
      %11594 = vst.msk [vmem:[%s170 + $0xd8] sm:$0xff] %vm1540, %v11562
      %11595 = vst.msk [vmem:[%s170 + $0xe0] sm:$0xff] %vm1540, %v11563
      %11596 = vst.msk [vmem:[%s170 + $0xe8] sm:$0xff] %vm1540, %v11564
      %11597 = vst.msk [vmem:[%s170 + $0xf0] sm:$0xff] %vm1540, %v11565
      %11598 = vst.msk [vmem:[%s170 + $0xf8] sm:$0xff] %vm1540, %v11566
      %p11599 = scmp.lt.s32.totalorder %s14, 1
      %s11600 = scalar_select %p11599, %s14, 1
      %s11601 = smul.addr %s11600, 32
      %s11602 = smul.addr %s11601, 8
      %s11603 = scalar_lea.vmem %s3, %s11602
      // Predicated region
      $region33: #{tpu_custom_call.1} parent=31 // pred_check
        %p11604 = pneg %p100
      $region34: #{tpu_custom_call.1} parent=31 // pred_check_branch
        %11606 = sbr.rel (%p11604) target = $region36
      $region35: #{tpu_custom_call.1} parent=31 // pred_region
        _
      $region36: #{tpu_custom_call.1} parent=31 // pred_fallthru
        _
    $region32: #{tpu_custom_call.1} parent=5 // pred_fallthru
      _
    %p11607 = scmp.le.s32.totalorder 2, %s9
    // Predicated region
    $region37: #{tpu_custom_call.1} parent=5 // pred_check
      %p11608 = pneg %p11607
    $region38: #{tpu_custom_call.1} parent=5 // pred_check_branch
      %11610 = sbr.rel (%p11608) target = $region40
    $region39: #{tpu_custom_call.1} parent=5 // pred_region
      %s11611 = ssub.s32 %s9, 2
      // Predicated region
      $region41: #{tpu_custom_call.1} parent=39 // pred_check
        %p11612 = pneg %p106
      $region42: #{tpu_custom_call.1} parent=39 // pred_check_branch
        %11614 = sbr.rel (%p11612) target = $region44
      $region43: #{tpu_custom_call.1} parent=39 // pred_region
        %p11615 = scmp.lt.s32.totalorder %s15, 1
        %s11616 = scalar_select %p11615, %s15, 1
        %s11617 = smul.addr %s11616, 32
        %s11618 = smul.addr %s11617, 8
        %s11619 = scalar_lea.vmem %s3, %s11618
      $region44: #{tpu_custom_call.1} parent=39 // pred_fallthru
        _
    $region40: #{tpu_custom_call.1} parent=5 // pred_fallthru
      _
  $region6: #{tpu_custom_call.1} parent=0 // loop_footer
    %s13 = sadd.s32 1, %s9
  $region7: #{tpu_custom_call.1} parent=0 // loop_footer_branch
    %8 = sbr.rel target = $region3
  $region8: #{tpu_custom_call.1} parent=0 // loop_exit
    _

</llo_original>
